<compile_context>
chip_gen: v7x
topology: tpu7x:2x2x1
jax: 0.10.0
libtpu: 0.0.40
codegen_flags: <defaults>
</compile_context>

<pallas_src>
import functools

import jax
import jax.numpy as jnp
from jax.experimental import pallas as pl
from jax.experimental.pallas import tpu as pltpu


# ----------------------------------------------------------------------------
# Helpers
# ----------------------------------------------------------------------------
_TR = 512  # row tile for the elementwise / stats kernels


def _round_up(x, m):
    return (x + m - 1) // m * m


def _pick_tile(dim_padded, candidates):
    for t in candidates:
        if dim_padded % t == 0:
            return t
    return candidates[-1]


# ----------------------------------------------------------------------------
# Tiled matmul kernel (bf16 MXU inputs, f32 accumulator, fused bias / tanh)
# ----------------------------------------------------------------------------
def _mm_kernel(a_ref, b_ref, *rest, has_bias, activation):
    if has_bias:
        bias_ref, o_ref, acc_ref = rest
    else:
        o_ref, acc_ref = rest
        bias_ref = None
    k = pl.program_id(2)

    @pl.when(k == 0)
    def _():
        acc_ref[...] = jnp.zeros_like(acc_ref)

    acc_ref[...] += jnp.dot(a_ref[...], b_ref[...],
                            preferred_element_type=jnp.float32)

    @pl.when(k == pl.num_programs(2) - 1)
    def _():
        y = acc_ref[...]
        if has_bias:
            y = y + bias_ref[...]
        if activation == "tanh":
            y = jnp.tanh(y)
        o_ref[...] = y.astype(o_ref.dtype)


def pallas_matmul(a, b, bias=None, activation=None, out_dtype=jnp.bfloat16):
    """a: [M, K], b: [K, N], optional bias [N] -> [M, N]."""
    M, K = a.shape
    K2, N = b.shape
    assert K == K2
    Mp, Np, Kp = _round_up(M, 128), _round_up(N, 128), _round_up(K, 128)
    tm = 256 if Mp % 256 == 0 else 128
    tn = 256 if Np % 256 == 0 else 128
    tk = _pick_tile(Kp, (512, 384, 256, 128))

    a_p = jnp.pad(a.astype(jnp.bfloat16), ((0, Mp - M), (0, Kp - K)))
    b_p = jnp.pad(b.astype(jnp.bfloat16), ((0, Kp - K), (0, Np - N)))
    args = [a_p, b_p]
    in_specs = [pl.BlockSpec((tm, tk), lambda i, j, k: (i, k)),
                pl.BlockSpec((tk, tn), lambda i, j, k: (k, j))]
    has_bias = bias is not None
    if has_bias:
        bias_p = jnp.pad(bias.astype(jnp.float32), (0, Np - N)).reshape(1, Np)
        args.append(bias_p)
        in_specs.append(pl.BlockSpec((1, tn), lambda i, j, k: (0, j)))

    out = pl.pallas_call(
        functools.partial(_mm_kernel, has_bias=has_bias, activation=activation),
        out_shape=jax.ShapeDtypeStruct((Mp, Np), out_dtype),
        grid=(Mp // tm, Np // tn, Kp // tk),
        in_specs=in_specs,
        out_specs=pl.BlockSpec((tm, tn), lambda i, j, k: (i, j)),
        scratch_shapes=[pltpu.VMEM((tm, tn), jnp.float32)],
        compiler_params=pltpu.CompilerParams(
            dimension_semantics=("parallel", "parallel", "arbitrary"),
            vmem_limit_bytes=32 * 1024 * 1024),
    )(*args)
    return out[:M, :N]


# ----------------------------------------------------------------------------
# BatchNorm (training-mode batch statistics) as two Pallas passes
# ----------------------------------------------------------------------------
def _stats_kernel(x_ref, sum_ref, sq_ref):
    @pl.when(pl.program_id(1) == 0)
    def _():
        sum_ref[...] = jnp.zeros_like(sum_ref)
        sq_ref[...] = jnp.zeros_like(sq_ref)

    x = x_ref[...].astype(jnp.float32)
    sum_ref[...] += jnp.sum(x, axis=0, keepdims=True)
    sq_ref[...] += jnp.sum(x * x, axis=0, keepdims=True)


def batch_stats(x2d):
    """Per-channel mean / biased variance over rows of x2d [M, C]."""
    M, C = x2d.shape
    Cp = _round_up(C, 128)
    nsplit = 2 if M >= 4 * _TR else 1            # engage both TCs (v7x) on big maps
    tR = _TR if M >= _TR else _round_up(M, 16)
    Mp = _round_up(M, nsplit * tR)
    nT = Mp // (nsplit * tR)
    x_p = jnp.pad(x2d, ((0, Mp - M), (0, Cp - C)))

    s, sq = pl.pallas_call(
        _stats_kernel,
        out_shape=(jax.ShapeDtypeStruct((nsplit, Cp), jnp.float32),
                   jax.ShapeDtypeStruct((nsplit, Cp), jnp.float32)),
        grid=(nsplit, nT),
        in_specs=[pl.BlockSpec((tR, Cp), lambda c, t: (c * nT + t, 0))],
        out_specs=(pl.BlockSpec((1, Cp), lambda c, t: (c, 0)),
                   pl.BlockSpec((1, Cp), lambda c, t: (c, 0))),
        compiler_params=pltpu.CompilerParams(
            dimension_semantics=("parallel", "arbitrary")),
    )(x_p)
    s = jnp.sum(s, axis=0)[:C]
    sq = jnp.sum(sq, axis=0)[:C]
    mean = s / M
    var = jnp.maximum(sq / M - mean * mean, 0.0)   # clamp f32 cancellation
    return mean, var


def _affine_kernel(x_ref, s_ref, b_ref, o_ref, *, relu):
    y = x_ref[...].astype(jnp.float32) * s_ref[...] + b_ref[...]
    if relu:
        y = jnp.maximum(y, 0.0)
    o_ref[...] = y.astype(o_ref.dtype)


def scale_shift(x2d, scale, shift, relu, out_dtype=jnp.bfloat16):
    M, C = x2d.shape
    Cp = _round_up(C, 128)
    tR = _TR if M >= _TR else _round_up(M, 16)
    Mp = _round_up(M, tR)
    x_p = jnp.pad(x2d, ((0, Mp - M), (0, Cp - C)))
    s_p = jnp.pad(scale.astype(jnp.float32), (0, Cp - C)).reshape(1, Cp)
    b_p = jnp.pad(shift.astype(jnp.float32), (0, Cp - C)).reshape(1, Cp)
    out = pl.pallas_call(
        functools.partial(_affine_kernel, relu=relu),
        out_shape=jax.ShapeDtypeStruct((Mp, Cp), out_dtype),
        grid=(Mp // tR,),
        in_specs=[pl.BlockSpec((tR, Cp), lambda i: (i, 0)),
                  pl.BlockSpec((1, Cp), lambda i: (0, 0)),
                  pl.BlockSpec((1, Cp), lambda i: (0, 0))],
        out_specs=pl.BlockSpec((tR, Cp), lambda i: (i, 0)),
        compiler_params=pltpu.CompilerParams(dimension_semantics=("parallel",)),
    )(x_p, s_p, b_p)
    return out[:M, :C]


def batchnorm_relu(x_nhwc, gamma, beta, eps=1e-5):
    N, H, W, C = x_nhwc.shape
    x2d = x_nhwc.reshape(-1, C)
    mean, var = batch_stats(x2d)
    inv = jax.lax.rsqrt(var + eps)
    scale = gamma * inv
    shift = beta - mean * scale
    return scale_shift(x2d, scale, shift, relu=True).reshape(N, H, W, C)


# ----------------------------------------------------------------------------
# Convolutions (im2col + Pallas matmul) and sub-pixel transposed conv
# ----------------------------------------------------------------------------
def _conv_w2d(w):
    """PyTorch Conv2d weight [Cout, Cin, kh, kw] -> im2col matrix [kh*kw*Cin, Cout]."""
    Cout, Cin, kh, kw = w.shape
    return jnp.transpose(w, (2, 3, 1, 0)).reshape(kh * kw * Cin, Cout)


def conv2d(x, w2d, ksize, bias=None, stride=1, pad=0, pad_mode="zero",
           activation=None, out_dtype=jnp.bfloat16):
    """x: [N, H, W, Cin] (bf16); w2d: precomputed [kh*kw*Cin, Cout]."""
    N, H, W, Cin = x.shape
    kh = kw = ksize
    if pad > 0:
        mode = "reflect" if pad_mode == "reflect" else "constant"
        x = jnp.pad(x, ((0, 0), (pad, pad), (pad, pad), (0, 0)), mode=mode)
    Hp, Wp = x.shape[1], x.shape[2]
    Ho = (Hp - kh) // stride + 1
    Wo = (Wp - kw) // stride + 1
    taps = [x[:, i:i + stride * Ho:stride, j:j + stride * Wo:stride, :]
            for i in range(kh) for j in range(kw)]
    patches = jnp.concatenate(taps, axis=-1).reshape(N * Ho * Wo, kh * kw * Cin)
    out = pallas_matmul(patches, w2d, bias=bias, activation=activation,
                        out_dtype=out_dtype)
    return out.reshape(N, Ho, Wo, w2d.shape[1])


# sub-pixel decomposition tables for ConvTranspose2d(k=3, stride=2, pad=1, out_pad=1)
_SUBPIX_TAPS = {0: ((0, 1),), 1: ((0, 0), (1, 2))}   # output parity -> ((offset, kernel_idx), ...)


def _subpix_taps(r, s):
    return [((dy, dx), (ki, kj))
            for (dy, ki) in _SUBPIX_TAPS[r]
            for (dx, kj) in _SUBPIX_TAPS[s]]


def _deconv_subpixel_w2d(w_t):
    """PyTorch ConvTranspose2d weight [Cin, Cout, 3, 3] -> 4 stacked im2col matrices."""
    table = {}
    for r in (0, 1):
        for s in (0, 1):
            mats = [w_t[:, :, 2 - ki, 2 - kj]            # spatially flipped tap
                    for (_, (ki, kj)) in _subpix_taps(r, s)]
            table[f"{r}{s}"] = jnp.concatenate(mats, axis=0)   # [ntaps*Cin, Cout]
    return table


def conv_transpose2d(x, w2d_rs):
    """ConvTranspose2d(k=3, stride=2, pad=1, output_padding=1) via sub-pixel decomposition."""
    N, H, W, Cin = x.shape
    Cout = w2d_rs["00"].shape[1]
    xp = jnp.pad(x, ((0, 0), (0, 1), (0, 1), (0, 0)))     # zeros for the +1 taps
    out = jnp.zeros((N, 2 * H, 2 * W, Cout), jnp.bfloat16)
    for r in (0, 1):
        for s in (0, 1):
            taps = _subpix_taps(r, s)
            patches = jnp.concatenate(
                [xp[:, dy:dy + H, dx:dx + W, :] for ((dy, dx), _) in taps], axis=-1)
            patches = patches.reshape(N * H * W, len(taps) * Cin)
            res = pallas_matmul(patches, w2d_rs[f"{r}{s}"])
            out = out.at[:, r::2, s::2, :].set(res.reshape(N, H, W, Cout))
    return out


# ----------------------------------------------------------------------------
# Instance-wise average pooling (Encoder.forward's per-instance mean loop)
# ----------------------------------------------------------------------------
def _seg_sum_kernel(oht_ref, x_ref, o_ref, acc_ref):
    t = pl.program_id(1)

    @pl.when(t == 0)
    def _():
        acc_ref[...] = jnp.zeros_like(acc_ref)

    acc_ref[...] += jnp.dot(oht_ref[0], x_ref[0],
                            preferred_element_type=jnp.float32)

    @pl.when(t == pl.num_programs(1) - 1)
    def _():
        o_ref[0] = acc_ref[...]


def _inst_gather_kernel(oh_ref, m_ref, o_ref):
    o_ref[0] = jnp.dot(oh_ref[0], m_ref[0],
                       preferred_element_type=jnp.float32).astype(o_ref.dtype)


def instance_mean_pool(y_nhwc, inst, num_inst):
    """Replace every pixel with the mean of its (batch, instance-id) group per channel.
    Instance labels are assumed to lie in [0, num_inst) (static bound for np.unique)."""
    N, H, W, C = y_nhwc.shape
    HW = H * W
    inst_flat = inst.reshape(N, HW).astype(jnp.int32)
    ids = jnp.arange(num_inst, dtype=jnp.int32)
    onehot = (inst_flat[:, :, None] == ids[None, None, :]).astype(jnp.float32)    # [N,HW,NI]
    onehot_t = (inst_flat[:, None, :] == ids[None, :, None]).astype(jnp.float32)  # [N,NI,HW]

    tR = 256 if HW >= 256 else _round_up(HW, 16)
    HWp = _round_up(HW, tR)
    NIp = _round_up(num_inst, 128)
    Ca = _round_up(C + 1, 128)      # features + a ones column (yields the counts)
    Cg = _round_up(C, 128)
    nT = HWp // tR

    x_aug = jnp.concatenate(
        [y_nhwc.reshape(N, HW, C).astype(jnp.float32),
         jnp.ones((N, HW, 1), jnp.float32)], axis=-1)
    x_aug = jnp.pad(x_aug, ((0, 0), (0, HWp - HW), (0, Ca - (C + 1))))
    oh_p = jnp.pad(onehot, ((0, 0), (0, HWp - HW), (0, NIp - num_inst)))
    oht_p = jnp.pad(onehot_t, ((0, 0), (0, NIp - num_inst), (0, HWp - HW)))

    sums = pl.pallas_call(
        _seg_sum_kernel,
        out_shape=jax.ShapeDtypeStruct((N, NIp, Ca), jnp.float32),
        grid=(N, nT),
        in_specs=[pl.BlockSpec((1, NIp, tR), lambda b, t: (b, 0, t)),
                  pl.BlockSpec((1, tR, Ca), lambda b, t: (b, t, 0))],
        out_specs=pl.BlockSpec((1, NIp, Ca), lambda b, t: (b, 0, 0)),
        scratch_shapes=[pltpu.VMEM((NIp, Ca), jnp.float32)],
        compiler_params=pltpu.CompilerParams(
            dimension_semantics=("parallel", "arbitrary")),
    )(oht_p, x_aug)

    counts = sums[:, :, C]                                        # [N, NIp]
    means = sums[:, :, :C] / jnp.maximum(counts, 1.0)[:, :, None]  # [N, NIp, C]
    means_p = jnp.pad(means, ((0, 0), (0, 0), (0, Cg - C)))

    pooled = pl.pallas_call(
        _inst_gather_kernel,
        out_shape=jax.ShapeDtypeStruct((N, HWp, Cg), jnp.float32),
        grid=(N, nT),
        in_specs=[pl.BlockSpec((1, tR, NIp), lambda b, t: (b, t, 0)),
                  pl.BlockSpec((1, NIp, Cg), lambda b, t: (b, 0, 0))],
        out_specs=pl.BlockSpec((1, tR, Cg), lambda b, t: (b, t, 0)),
        compiler_params=pltpu.CompilerParams(
            dimension_semantics=("parallel", "parallel")),
    )(oh_p, means_p)

    return pooled[:, :HW, :C].reshape(N, H, W, C)


# ----------------------------------------------------------------------------
# Parameter init (deterministic synthetic weights, layouts precomputed) + forward
# ----------------------------------------------------------------------------
def init_params(key, input_nc, output_nc, ngf, n_downsampling):
    n_layers = 2 + 2 * n_downsampling
    keys = iter(jax.random.split(key, 2 * n_layers + 4))

    def nrm(shape, std):
        return jax.random.normal(next(keys), shape, jnp.float32) * std

    def bn(c):
        return {"gamma": jnp.ones((c,), jnp.float32),
                "beta": jnp.zeros((c,), jnp.float32)}

    params = {}
    # Conv biases that feed a training-mode BatchNorm cancel exactly -> omitted.
    params["head"] = {"w2d": _conv_w2d(nrm((ngf, input_nc, 7, 7), 0.1)), **bn(ngf)}

    params["down"] = []
    for i in range(n_downsampling):
        cin, cout = ngf * 2 ** i, ngf * 2 ** (i + 1)
        params["down"].append({"w2d": _conv_w2d(nrm((cout, cin, 3, 3), 0.1)),
                               **bn(cout)})

    params["up"] = []
    for i in range(n_downsampling):
        cin = ngf * 2 ** (n_downsampling - i)
        cout = cin // 2
        w_t = nrm((cin, cout, 3, 3), 0.1)          # PyTorch ConvTranspose layout
        params["up"].append({"w2d_rs": _deconv_subpixel_w2d(w_t), **bn(cout)})

    params["tail"] = {"w2d": _conv_w2d(nrm((output_nc, ngf, 7, 7), 0.1)),
                      "b": nrm((output_nc,), 0.02)}
    return params


def encoder_forward(params, x_nchw, inst, num_inst):
    x = jnp.transpose(x_nchw, (0, 2, 3, 1)).astype(jnp.bfloat16)   # NCHW -> NHWC

    # ReflectionPad(3) + Conv7x7 + BN + ReLU
    p = params["head"]
    x = conv2d(x, p["w2d"], 7, pad=3, pad_mode="reflect")
    x = batchnorm_relu(x, p["gamma"], p["beta"])

    # strided downsampling convs
    for p in params["down"]:
        x = conv2d(x, p["w2d"], 3, stride=2, pad=1)
        x = batchnorm_relu(x, p["gamma"], p["beta"])

    # ConvTranspose upsampling (sub-pixel) + BN + ReLU
    for p in params["up"]:
        x = conv_transpose2d(x, p["w2d_rs"])
        x = batchnorm_relu(x, p["gamma"], p["beta"])

    # ReflectionPad(3) + Conv7x7 + Tanh (bias + tanh fused into the matmul epilogue)
    p = params["tail"]
    y = conv2d(x, p["w2d"], 7, bias=p["b"], pad=3, pad_mode="reflect",
               activation="tanh", out_dtype=jnp.float32)

    # instance-wise average pooling of the encoded features
    y = instance_mean_pool(y, inst, num_inst)
    return jnp.transpose(y, (0, 3, 1, 2))          # NHWC -> NCHW


if __name__ == "__main__":
    BATCH, INPUT_NC, OUTPUT_NC, SPATIAL = 2, 3, 4, 16
    NGF, N_DOWN, NUM_INST = 16, 2, 4

    key = jax.random.PRNGKey(0)
    k_par, k_x, k_i = jax.random.split(key, 3)
    params = init_params(k_par, INPUT_NC, OUTPUT_NC, NGF, N_DOWN)
    x = jax.random.normal(k_x, (BATCH, INPUT_NC, SPATIAL, SPATIAL), jnp.float32)
    inst = jax.random.randint(k_i, (BATCH, 1, SPATIAL, SPATIAL), 0, NUM_INST, jnp.int32)

    fwd = jax.jit(functools.partial(encoder_forward, num_inst=NUM_INST))
    out = jax.block_until_ready(fwd(params, x, inst))

    assert out.shape == (BATCH, OUTPUT_NC, SPATIAL, SPATIAL), out.shape
    assert bool(jnp.all(jnp.isfinite(out)))
    # instance pooling sanity: within each (batch, instance-id) group, channel-0
    # values of the pooled output must be constant.
    inst_b0 = inst[0, 0]
    for i in range(NUM_INST):
        mask = inst_b0 == i
        if bool(jnp.any(mask)):
            vals = out[0, 0][mask]
            assert bool(jnp.max(jnp.abs(vals - vals[0])) < 1e-4)
    print("KERNEL_OK")
</pallas_src>

<mosaic_0001>
module attributes {stable_mosaic.version = 11 : i64} {
  func.func @_mm_kernel(%arg0: i32, %arg1: i32, %arg2: i32, %arg3: memref<256x256xbf16, #tpu.memory_space<vmem>>, %arg4: memref<256x128xbf16, #tpu.memory_space<vmem>>, %arg5: memref<256x128xbf16, #tpu.memory_space<vmem>>, %arg6: memref<256x128xf32, #tpu.memory_space<vmem>>) attributes {dimension_semantics = [#tpu.dimension_semantics<parallel>, #tpu.dimension_semantics<parallel>, #tpu.dimension_semantics<arbitrary>], iteration_bounds = array<i64: 2, 1, 1>, scalar_prefetch = 0 : i64, scratch_operands = 1 : i64, tpu.core_type = #tpu.core_type<tc>, window_params = [{transform_indices = @transform_0, window_bounds = array<i64: 256, 256>}, {transform_indices = @transform_1, window_bounds = array<i64: 256, 128>}, {transform_indices = @transform_2, window_bounds = array<i64: 256, 128>}]} {
    %c0_i32 = arith.constant 0 : i32
    %0 = arith.cmpi eq, %arg2, %c0_i32 : i32
    %1 = arith.extui %0 : i1 to i32
    %c0_i32_0 = arith.constant 0 : i32
    %2 = arith.cmpi ne, %1, %c0_i32_0 : i32
    scf.if %2 {
      %cst_10 = arith.constant 0.000000e+00 : f32
      %12 = vector.broadcast %cst_10 : f32 to vector<256x128xf32>
      %c0_11 = arith.constant 0 : index
      %c0_12 = arith.constant 0 : index
      %13 = vector.load %arg6[%c0_11, %c0_12] : memref<256x128xf32, #tpu.memory_space<vmem>>, vector<256x128xf32>
      tpu.vector_store %arg6[%c0_11, %c0_12], %12 {strides = array<i32>} : memref<256x128xf32, #tpu.memory_space<vmem>>, vector<256x128xf32>,
    } else {
    }
    %c0 = arith.constant 0 : index
    %c0_1 = arith.constant 0 : index
    %3 = vector.load %arg6[%c0, %c0_1] : memref<256x128xf32, #tpu.memory_space<vmem>>, vector<256x128xf32>
    %c0_2 = arith.constant 0 : index
    %c0_3 = arith.constant 0 : index
    %4 = vector.load %arg3[%c0_2, %c0_3] : memref<256x256xbf16, #tpu.memory_space<vmem>>, vector<256x256xbf16>
    %c0_4 = arith.constant 0 : index
    %c0_5 = arith.constant 0 : index
    %5 = vector.load %arg4[%c0_4, %c0_5] : memref<256x128xbf16, #tpu.memory_space<vmem>>, vector<256x128xbf16>
    %cst = arith.constant dense<0.000000e+00> : vector<256x128xf32>
    %6 = tpu.matmul %4, %5, %cst {dimension_numbers = #tpu.dot_dimension_numbers<[1], [0], [0], [1], [0, 0, 1, 1], [], []>} : vector<256x256xbf16>, vector<256x128xbf16>, vector<256x128xf32> -> vector<256x128xf32>
    %7 = arith.addf %3, %6 : vector<256x128xf32>
    %c0_6 = arith.constant 0 : index
    %c0_7 = arith.constant 0 : index
    %8 = vector.load %arg6[%c0_6, %c0_7] : memref<256x128xf32, #tpu.memory_space<vmem>>, vector<256x128xf32>
    tpu.vector_store %arg6[%c0_6, %c0_7], %7 {strides = array<i32>} : memref<256x128xf32, #tpu.memory_space<vmem>>, vector<256x128xf32>,
    %c0_i32_8 = arith.constant 0 : i32
    %9 = arith.cmpi eq, %arg2, %c0_i32_8 : i32
    %10 = arith.extui %9 : i1 to i32
    %c0_i32_9 = arith.constant 0 : i32
    %11 = arith.cmpi ne, %10, %c0_i32_9 : i32
    scf.if %11 {
      %c0_10 = arith.constant 0 : index
      %c0_11 = arith.constant 0 : index
      %12 = vector.load %arg6[%c0_10, %c0_11] : memref<256x128xf32, #tpu.memory_space<vmem>>, vector<256x128xf32>
      %13 = arith.truncf %12 : vector<256x128xf32> to vector<256x128xbf16>
      %c0_12 = arith.constant 0 : index
      %c0_13 = arith.constant 0 : index
      %14 = vector.load %arg5[%c0_12, %c0_13] : memref<256x128xbf16, #tpu.memory_space<vmem>>, vector<256x128xbf16>
      tpu.vector_store %arg5[%c0_12, %c0_13], %13 {strides = array<i32>} : memref<256x128xbf16, #tpu.memory_space<vmem>>, vector<256x128xbf16>,
    } else {
    }
    return
  }
  func.func @transform_0(%arg0: i32, %arg1: i32, %arg2: i32) -> (i32, i32) {
    %c0_i32 = arith.constant 0 : i32
    return %arg0, %arg2 : i32, i32
  }
  func.func @transform_1(%arg0: i32, %arg1: i32, %arg2: i32) -> (i32, i32) {
    %c0_i32 = arith.constant 0 : i32
    return %arg2, %arg1 : i32, i32
  }
  func.func @transform_2(%arg0: i32, %arg1: i32, %arg2: i32) -> (i32, i32) {
    %c0_i32 = arith.constant 0 : i32
    return %arg0, %arg1 : i32, i32
  }
}

module attributes {stable_mosaic.version = 11 : i64} {
  func.func @_stats_kernel(%arg0: i32, %arg1: i32, %arg2: memref<512x128xbf16, #tpu.memory_space<vmem>>, %arg3: memref<1x128xf32, #tpu.memory_space<vmem>>, %arg4: memref<1x128xf32, #tpu.memory_space<vmem>>) attributes {dimension_semantics = [#tpu.dimension_semantics<parallel>, #tpu.dimension_semantics<arbitrary>], iteration_bounds = array<i64: 1, 1>, scalar_prefetch = 0 : i64, scratch_operands = 0 : i64, tpu.core_type = #tpu.core_type<tc>, window_params = [{transform_indices = @transform_0, window_bounds = array<i64: 512, 128>}, {transform_indices = @transform_1, window_bounds = array<i64: 1, 128>}, {transform_indices = @transform_2, window_bounds = array<i64: 1, 128>}]} {
    %c0_i32 = arith.constant 0 : i32
    %0 = arith.cmpi eq, %arg1, %c0_i32 : i32
    %1 = arith.extui %0 : i1 to i32
    %c0_i32_0 = arith.constant 0 : i32
    %2 = arith.cmpi ne, %1, %c0_i32_0 : i32
    scf.if %2 {
      %cst_11 = arith.constant 0.000000e+00 : f32
      %16 = vector.broadcast %cst_11 : f32 to vector<1x128xf32>
      %c0_12 = arith.constant 0 : index
      %c0_13 = arith.constant 0 : index
      %17 = vector.load %arg3[%c0_12, %c0_13] : memref<1x128xf32, #tpu.memory_space<vmem>>, vector<1x128xf32>
      tpu.vector_store %arg3[%c0_12, %c0_13], %16 {strides = array<i32>} : memref<1x128xf32, #tpu.memory_space<vmem>>, vector<1x128xf32>,
      %cst_14 = arith.constant 0.000000e+00 : f32
      %18 = vector.broadcast %cst_14 : f32 to vector<1x128xf32>
      %c0_15 = arith.constant 0 : index
      %c0_16 = arith.constant 0 : index
      %19 = vector.load %arg4[%c0_15, %c0_16] : memref<1x128xf32, #tpu.memory_space<vmem>>, vector<1x128xf32>
      tpu.vector_store %arg4[%c0_15, %c0_16], %18 {strides = array<i32>} : memref<1x128xf32, #tpu.memory_space<vmem>>, vector<1x128xf32>,
    } else {
    }
    %c0 = arith.constant 0 : index
    %c0_1 = arith.constant 0 : index
    %3 = vector.load %arg2[%c0, %c0_1] : memref<512x128xbf16, #tpu.memory_space<vmem>>, vector<512x128xbf16>
    %4 = arith.extf %3 : vector<512x128xbf16> to vector<512x128xf32>
    %c0_2 = arith.constant 0 : index
    %c0_3 = arith.constant 0 : index
    %5 = vector.load %arg3[%c0_2, %c0_3] : memref<1x128xf32, #tpu.memory_space<vmem>>, vector<1x128xf32>
    %cst = arith.constant dense<0.000000e+00> : vector<128xf32>
    %6 = vector.multi_reduction <add>, %4, %cst [0] : vector<512x128xf32> to vector<128xf32>
    %7 = vector.shape_cast %6 : vector<128xf32> to vector<1x128xf32>
    %8 = arith.addf %5, %7 : vector<1x128xf32>
    %c0_4 = arith.constant 0 : index
    %c0_5 = arith.constant 0 : index
    %9 = vector.load %arg3[%c0_4, %c0_5] : memref<1x128xf32, #tpu.memory_space<vmem>>, vector<1x128xf32>
    tpu.vector_store %arg3[%c0_4, %c0_5], %8 {strides = array<i32>} : memref<1x128xf32, #tpu.memory_space<vmem>>, vector<1x128xf32>,
    %c0_6 = arith.constant 0 : index
    %c0_7 = arith.constant 0 : index
    %10 = vector.load %arg4[%c0_6, %c0_7] : memref<1x128xf32, #tpu.memory_space<vmem>>, vector<1x128xf32>
    %11 = arith.mulf %4, %4 : vector<512x128xf32>
    %cst_8 = arith.constant dense<0.000000e+00> : vector<128xf32>
    %12 = vector.multi_reduction <add>, %11, %cst_8 [0] : vector<512x128xf32> to vector<128xf32>
    %13 = vector.shape_cast %12 : vector<128xf32> to vector<1x128xf32>
    %14 = arith.addf %10, %13 : vector<1x128xf32>
    %c0_9 = arith.constant 0 : index
    %c0_10 = arith.constant 0 : index
    %15 = vector.load %arg4[%c0_9, %c0_10] : memref<1x128xf32, #tpu.memory_space<vmem>>, vector<1x128xf32>
    tpu.vector_store %arg4[%c0_9, %c0_10], %14 {strides = array<i32>} : memref<1x128xf32, #tpu.memory_space<vmem>>, vector<1x128xf32>,
    return
  }
  func.func @transform_0(%arg0: i32, %arg1: i32) -> (i32, i32) {
    %c1_i32 = arith.constant 1 : i32
    %0 = arith.muli %arg0, %c1_i32 : i32
    %1 = arith.addi %0, %arg1 : i32
    %c0_i32 = arith.constant 0 : i32
    %c0_i32_0 = arith.constant 0 : i32
    return %1, %c0_i32 : i32, i32
  }
  func.func @transform_1(%arg0: i32, %arg1: i32) -> (i32, i32) {
    %c0_i32 = arith.constant 0 : i32
    %c0_i32_0 = arith.constant 0 : i32
    return %arg0, %c0_i32 : i32, i32
  }
  func.func @transform_2(%arg0: i32, %arg1: i32) -> (i32, i32) {
    %c0_i32 = arith.constant 0 : i32
    %c0_i32_0 = arith.constant 0 : i32
    return %arg0, %c0_i32 : i32, i32
  }
}

module attributes {stable_mosaic.version = 11 : i64} {
  func.func @_affine_kernel(%arg0: i32, %arg1: memref<512x128xbf16, #tpu.memory_space<vmem>>, %arg2: memref<1x128xf32, #tpu.memory_space<vmem>>, %arg3: memref<1x128xf32, #tpu.memory_space<vmem>>, %arg4: memref<512x128xbf16, #tpu.memory_space<vmem>>) attributes {dimension_semantics = [#tpu.dimension_semantics<parallel>], iteration_bounds = array<i64: 1>, scalar_prefetch = 0 : i64, scratch_operands = 0 : i64, tpu.core_type = #tpu.core_type<tc>, window_params = [{transform_indices = @transform_0, window_bounds = array<i64: 512, 128>}, {pipeline_mode = #tpu.pipeline_mode<synchronous>, transform_indices = @transform_1, window_bounds = array<i64: 1, 128>}, {pipeline_mode = #tpu.pipeline_mode<synchronous>, transform_indices = @transform_2, window_bounds = array<i64: 1, 128>}, {transform_indices = @transform_3, window_bounds = array<i64: 512, 128>}]} {
    %c0 = arith.constant 0 : index
    %c0_0 = arith.constant 0 : index
    %0 = vector.load %arg1[%c0, %c0_0] : memref<512x128xbf16, #tpu.memory_space<vmem>>, vector<512x128xbf16>
    %1 = arith.extf %0 : vector<512x128xbf16> to vector<512x128xf32>
    %c0_1 = arith.constant 0 : index
    %c0_2 = arith.constant 0 : index
    %2 = vector.load %arg2[%c0_1, %c0_2] : memref<1x128xf32, #tpu.memory_space<vmem>>, vector<1x128xf32>
    %3 = vector.broadcast %2 : vector<1x128xf32> to vector<512x128xf32>
    %4 = arith.mulf %1, %3 : vector<512x128xf32>
    %c0_3 = arith.constant 0 : index
    %c0_4 = arith.constant 0 : index
    %5 = vector.load %arg3[%c0_3, %c0_4] : memref<1x128xf32, #tpu.memory_space<vmem>>, vector<1x128xf32>
    %6 = vector.broadcast %5 : vector<1x128xf32> to vector<512x128xf32>
    %7 = arith.addf %4, %6 : vector<512x128xf32>
    %cst = arith.constant 0.000000e+00 : f32
    %8 = vector.broadcast %cst : f32 to vector<512x128xf32>
    %9 = arith.maximumf %7, %8 : vector<512x128xf32>
    %10 = arith.truncf %9 : vector<512x128xf32> to vector<512x128xbf16>
    %c0_5 = arith.constant 0 : index
    %c0_6 = arith.constant 0 : index
    %11 = vector.load %arg4[%c0_5, %c0_6] : memref<512x128xbf16, #tpu.memory_space<vmem>>, vector<512x128xbf16>
    tpu.vector_store %arg4[%c0_5, %c0_6], %10 {strides = array<i32>} : memref<512x128xbf16, #tpu.memory_space<vmem>>, vector<512x128xbf16>,
    return
  }
  func.func @transform_0(%arg0: i32) -> (i32, i32) {
    %c0_i32 = arith.constant 0 : i32
    %c0_i32_0 = arith.constant 0 : i32
    return %arg0, %c0_i32 : i32, i32
  }
  func.func @transform_1(%arg0: i32) -> (i32, i32) {
    %c0_i32 = arith.constant 0 : i32
    %c0_i32_0 = arith.constant 0 : i32
    %c0_i32_1 = arith.constant 0 : i32
    return %c0_i32, %c0_i32_0 : i32, i32
  }
  func.func @transform_2(%arg0: i32) -> (i32, i32) {
    %c0_i32 = arith.constant 0 : i32
    %c0_i32_0 = arith.constant 0 : i32
    %c0_i32_1 = arith.constant 0 : i32
    return %c0_i32, %c0_i32_0 : i32, i32
  }
  func.func @transform_3(%arg0: i32) -> (i32, i32) {
    %c0_i32 = arith.constant 0 : i32
    %c0_i32_0 = arith.constant 0 : i32
    return %arg0, %c0_i32 : i32, i32
  }
}

module attributes {stable_mosaic.version = 11 : i64} {
  func.func @_mm_kernel(%arg0: i32, %arg1: i32, %arg2: i32, %arg3: memref<128x256xbf16, #tpu.memory_space<vmem>>, %arg4: memref<256x128xbf16, #tpu.memory_space<vmem>>, %arg5: memref<128x128xbf16, #tpu.memory_space<vmem>>, %arg6: memref<128x128xf32, #tpu.memory_space<vmem>>) attributes {dimension_semantics = [#tpu.dimension_semantics<parallel>, #tpu.dimension_semantics<parallel>, #tpu.dimension_semantics<arbitrary>], iteration_bounds = array<i64: 1, 1, 1>, scalar_prefetch = 0 : i64, scratch_operands = 1 : i64, tpu.core_type = #tpu.core_type<tc>, window_params = [{transform_indices = @transform_0, window_bounds = array<i64: 128, 256>}, {transform_indices = @transform_1, window_bounds = array<i64: 256, 128>}, {transform_indices = @transform_2, window_bounds = array<i64: 128, 128>}]} {
    %c0_i32 = arith.constant 0 : i32
    %0 = arith.cmpi eq, %arg2, %c0_i32 : i32
    %1 = arith.extui %0 : i1 to i32
    %c0_i32_0 = arith.constant 0 : i32
    %2 = arith.cmpi ne, %1, %c0_i32_0 : i32
    scf.if %2 {
      %cst_10 = arith.constant 0.000000e+00 : f32
      %12 = vector.broadcast %cst_10 : f32 to vector<128x128xf32>
      %c0_11 = arith.constant 0 : index
      %c0_12 = arith.constant 0 : index
      %13 = vector.load %arg6[%c0_11, %c0_12] : memref<128x128xf32, #tpu.memory_space<vmem>>, vector<128x128xf32>
      tpu.vector_store %arg6[%c0_11, %c0_12], %12 {strides = array<i32>} : memref<128x128xf32, #tpu.memory_space<vmem>>, vector<128x128xf32>,
    } else {
    }
    %c0 = arith.constant 0 : index
    %c0_1 = arith.constant 0 : index
    %3 = vector.load %arg6[%c0, %c0_1] : memref<128x128xf32, #tpu.memory_space<vmem>>, vector<128x128xf32>
    %c0_2 = arith.constant 0 : index
    %c0_3 = arith.constant 0 : index
    %4 = vector.load %arg3[%c0_2, %c0_3] : memref<128x256xbf16, #tpu.memory_space<vmem>>, vector<128x256xbf16>
    %c0_4 = arith.constant 0 : index
    %c0_5 = arith.constant 0 : index
    %5 = vector.load %arg4[%c0_4, %c0_5] : memref<256x128xbf16, #tpu.memory_space<vmem>>, vector<256x128xbf16>
    %cst = arith.constant dense<0.000000e+00> : vector<128x128xf32>
    %6 = tpu.matmul %4, %5, %cst {dimension_numbers = #tpu.dot_dimension_numbers<[1], [0], [0], [1], [0, 0, 1, 1], [], []>} : vector<128x256xbf16>, vector<256x128xbf16>, vector<128x128xf32> -> vector<128x128xf32>
    %7 = arith.addf %3, %6 : vector<128x128xf32>
    %c0_6 = arith.constant 0 : index
    %c0_7 = arith.constant 0 : index
    %8 = vector.load %arg6[%c0_6, %c0_7] : memref<128x128xf32, #tpu.memory_space<vmem>>, vector<128x128xf32>
    tpu.vector_store %arg6[%c0_6, %c0_7], %7 {strides = array<i32>} : memref<128x128xf32, #tpu.memory_space<vmem>>, vector<128x128xf32>,
    %c0_i32_8 = arith.constant 0 : i32
    %9 = arith.cmpi eq, %arg2, %c0_i32_8 : i32
    %10 = arith.extui %9 : i1 to i32
    %c0_i32_9 = arith.constant 0 : i32
    %11 = arith.cmpi ne, %10, %c0_i32_9 : i32
    scf.if %11 {
      %c0_10 = arith.constant 0 : index
      %c0_11 = arith.constant 0 : index
      %12 = vector.load %arg6[%c0_10, %c0_11] : memref<128x128xf32, #tpu.memory_space<vmem>>, vector<128x128xf32>
      %13 = arith.truncf %12 : vector<128x128xf32> to vector<128x128xbf16>
      %c0_12 = arith.constant 0 : index
      %c0_13 = arith.constant 0 : index
      %14 = vector.load %arg5[%c0_12, %c0_13] : memref<128x128xbf16, #tpu.memory_space<vmem>>, vector<128x128xbf16>
      tpu.vector_store %arg5[%c0_12, %c0_13], %13 {strides = array<i32>} : memref<128x128xbf16, #tpu.memory_space<vmem>>, vector<128x128xbf16>,
    } else {
    }
    return
  }
  func.func @transform_0(%arg0: i32, %arg1: i32, %arg2: i32) -> (i32, i32) {
    %c0_i32 = arith.constant 0 : i32
    return %arg0, %arg2 : i32, i32
  }
  func.func @transform_1(%arg0: i32, %arg1: i32, %arg2: i32) -> (i32, i32) {
    %c0_i32 = arith.constant 0 : i32
    return %arg2, %arg1 : i32, i32
  }
  func.func @transform_2(%arg0: i32, %arg1: i32, %arg2: i32) -> (i32, i32) {
    %c0_i32 = arith.constant 0 : i32
    return %arg0, %arg1 : i32, i32
  }
}

module attributes {stable_mosaic.version = 11 : i64} {
  func.func @_affine_kernel(%arg0: i32, %arg1: memref<128x128xbf16, #tpu.memory_space<vmem>>, %arg2: memref<1x128xf32, #tpu.memory_space<vmem>>, %arg3: memref<1x128xf32, #tpu.memory_space<vmem>>, %arg4: memref<128x128xbf16, #tpu.memory_space<vmem>>) attributes {dimension_semantics = [#tpu.dimension_semantics<parallel>], iteration_bounds = array<i64: 1>, scalar_prefetch = 0 : i64, scratch_operands = 0 : i64, tpu.core_type = #tpu.core_type<tc>, window_params = [{transform_indices = @transform_0, window_bounds = array<i64: 128, 128>}, {pipeline_mode = #tpu.pipeline_mode<synchronous>, transform_indices = @transform_1, window_bounds = array<i64: 1, 128>}, {pipeline_mode = #tpu.pipeline_mode<synchronous>, transform_indices = @transform_2, window_bounds = array<i64: 1, 128>}, {transform_indices = @transform_3, window_bounds = array<i64: 128, 128>}]} {
    %c0 = arith.constant 0 : index
    %c0_0 = arith.constant 0 : index
    %0 = vector.load %arg1[%c0, %c0_0] : memref<128x128xbf16, #tpu.memory_space<vmem>>, vector<128x128xbf16>
    %1 = arith.extf %0 : vector<128x128xbf16> to vector<128x128xf32>
    %c0_1 = arith.constant 0 : index
    %c0_2 = arith.constant 0 : index
    %2 = vector.load %arg2[%c0_1, %c0_2] : memref<1x128xf32, #tpu.memory_space<vmem>>, vector<1x128xf32>
    %3 = vector.broadcast %2 : vector<1x128xf32> to vector<128x128xf32>
    %4 = arith.mulf %1, %3 : vector<128x128xf32>
    %c0_3 = arith.constant 0 : index
    %c0_4 = arith.constant 0 : index
    %5 = vector.load %arg3[%c0_3, %c0_4] : memref<1x128xf32, #tpu.memory_space<vmem>>, vector<1x128xf32>
    %6 = vector.broadcast %5 : vector<1x128xf32> to vector<128x128xf32>
    %7 = arith.addf %4, %6 : vector<128x128xf32>
    %cst = arith.constant 0.000000e+00 : f32
    %8 = vector.broadcast %cst : f32 to vector<128x128xf32>
    %9 = arith.maximumf %7, %8 : vector<128x128xf32>
    %10 = arith.truncf %9 : vector<128x128xf32> to vector<128x128xbf16>
    %c0_5 = arith.constant 0 : index
    %c0_6 = arith.constant 0 : index
    %11 = vector.load %arg4[%c0_5, %c0_6] : memref<128x128xbf16, #tpu.memory_space<vmem>>, vector<128x128xbf16>
    tpu.vector_store %arg4[%c0_5, %c0_6], %10 {strides = array<i32>} : memref<128x128xbf16, #tpu.memory_space<vmem>>, vector<128x128xbf16>,
    return
  }
  func.func @transform_0(%arg0: i32) -> (i32, i32) {
    %c0_i32 = arith.constant 0 : i32
    %c0_i32_0 = arith.constant 0 : i32
    return %arg0, %c0_i32 : i32, i32
  }
  func.func @transform_1(%arg0: i32) -> (i32, i32) {
    %c0_i32 = arith.constant 0 : i32
    %c0_i32_0 = arith.constant 0 : i32
    %c0_i32_1 = arith.constant 0 : i32
    return %c0_i32, %c0_i32_0 : i32, i32
  }
  func.func @transform_2(%arg0: i32) -> (i32, i32) {
    %c0_i32 = arith.constant 0 : i32
    %c0_i32_0 = arith.constant 0 : i32
    %c0_i32_1 = arith.constant 0 : i32
    return %c0_i32, %c0_i32_0 : i32, i32
  }
  func.func @transform_3(%arg0: i32) -> (i32, i32) {
    %c0_i32 = arith.constant 0 : i32
    %c0_i32_0 = arith.constant 0 : i32
    return %arg0, %c0_i32 : i32, i32
  }
}

module attributes {stable_mosaic.version = 11 : i64} {
  func.func @_stats_kernel(%arg0: i32, %arg1: i32, %arg2: memref<128x128xbf16, #tpu.memory_space<vmem>>, %arg3: memref<1x128xf32, #tpu.memory_space<vmem>>, %arg4: memref<1x128xf32, #tpu.memory_space<vmem>>) attributes {dimension_semantics = [#tpu.dimension_semantics<parallel>, #tpu.dimension_semantics<arbitrary>], iteration_bounds = array<i64: 1, 1>, scalar_prefetch = 0 : i64, scratch_operands = 0 : i64, tpu.core_type = #tpu.core_type<tc>, window_params = [{transform_indices = @transform_0, window_bounds = array<i64: 128, 128>}, {transform_indices = @transform_1, window_bounds = array<i64: 1, 128>}, {transform_indices = @transform_2, window_bounds = array<i64: 1, 128>}]} {
    %c0_i32 = arith.constant 0 : i32
    %0 = arith.cmpi eq, %arg1, %c0_i32 : i32
    %1 = arith.extui %0 : i1 to i32
    %c0_i32_0 = arith.constant 0 : i32
    %2 = arith.cmpi ne, %1, %c0_i32_0 : i32
    scf.if %2 {
      %cst_11 = arith.constant 0.000000e+00 : f32
      %16 = vector.broadcast %cst_11 : f32 to vector<1x128xf32>
      %c0_12 = arith.constant 0 : index
      %c0_13 = arith.constant 0 : index
      %17 = vector.load %arg3[%c0_12, %c0_13] : memref<1x128xf32, #tpu.memory_space<vmem>>, vector<1x128xf32>
      tpu.vector_store %arg3[%c0_12, %c0_13], %16 {strides = array<i32>} : memref<1x128xf32, #tpu.memory_space<vmem>>, vector<1x128xf32>,
      %cst_14 = arith.constant 0.000000e+00 : f32
      %18 = vector.broadcast %cst_14 : f32 to vector<1x128xf32>
      %c0_15 = arith.constant 0 : index
      %c0_16 = arith.constant 0 : index
      %19 = vector.load %arg4[%c0_15, %c0_16] : memref<1x128xf32, #tpu.memory_space<vmem>>, vector<1x128xf32>
      tpu.vector_store %arg4[%c0_15, %c0_16], %18 {strides = array<i32>} : memref<1x128xf32, #tpu.memory_space<vmem>>, vector<1x128xf32>,
    } else {
    }
    %c0 = arith.constant 0 : index
    %c0_1 = arith.constant 0 : index
    %3 = vector.load %arg2[%c0, %c0_1] : memref<128x128xbf16, #tpu.memory_space<vmem>>, vector<128x128xbf16>
    %4 = arith.extf %3 : vector<128x128xbf16> to vector<128x128xf32>
    %c0_2 = arith.constant 0 : index
    %c0_3 = arith.constant 0 : index
    %5 = vector.load %arg3[%c0_2, %c0_3] : memref<1x128xf32, #tpu.memory_space<vmem>>, vector<1x128xf32>
    %cst = arith.constant dense<0.000000e+00> : vector<128xf32>
    %6 = vector.multi_reduction <add>, %4, %cst [0] : vector<128x128xf32> to vector<128xf32>
    %7 = vector.shape_cast %6 : vector<128xf32> to vector<1x128xf32>
    %8 = arith.addf %5, %7 : vector<1x128xf32>
    %c0_4 = arith.constant 0 : index
    %c0_5 = arith.constant 0 : index
    %9 = vector.load %arg3[%c0_4, %c0_5] : memref<1x128xf32, #tpu.memory_space<vmem>>, vector<1x128xf32>
    tpu.vector_store %arg3[%c0_4, %c0_5], %8 {strides = array<i32>} : memref<1x128xf32, #tpu.memory_space<vmem>>, vector<1x128xf32>,
    %c0_6 = arith.constant 0 : index
    %c0_7 = arith.constant 0 : index
    %10 = vector.load %arg4[%c0_6, %c0_7] : memref<1x128xf32, #tpu.memory_space<vmem>>, vector<1x128xf32>
    %11 = arith.mulf %4, %4 : vector<128x128xf32>
    %cst_8 = arith.constant dense<0.000000e+00> : vector<128xf32>
    %12 = vector.multi_reduction <add>, %11, %cst_8 [0] : vector<128x128xf32> to vector<128xf32>
    %13 = vector.shape_cast %12 : vector<128xf32> to vector<1x128xf32>
    %14 = arith.addf %10, %13 : vector<1x128xf32>
    %c0_9 = arith.constant 0 : index
    %c0_10 = arith.constant 0 : index
    %15 = vector.load %arg4[%c0_9, %c0_10] : memref<1x128xf32, #tpu.memory_space<vmem>>, vector<1x128xf32>
    tpu.vector_store %arg4[%c0_9, %c0_10], %14 {strides = array<i32>} : memref<1x128xf32, #tpu.memory_space<vmem>>, vector<1x128xf32>,
    return
  }
  func.func @transform_0(%arg0: i32, %arg1: i32) -> (i32, i32) {
    %c1_i32 = arith.constant 1 : i32
    %0 = arith.muli %arg0, %c1_i32 : i32
    %1 = arith.addi %0, %arg1 : i32
    %c0_i32 = arith.constant 0 : i32
    %c0_i32_0 = arith.constant 0 : i32
    return %1, %c0_i32 : i32, i32
  }
  func.func @transform_1(%arg0: i32, %arg1: i32) -> (i32, i32) {
    %c0_i32 = arith.constant 0 : i32
    %c0_i32_0 = arith.constant 0 : i32
    return %arg0, %c0_i32 : i32, i32
  }
  func.func @transform_2(%arg0: i32, %arg1: i32) -> (i32, i32) {
    %c0_i32 = arith.constant 0 : i32
    %c0_i32_0 = arith.constant 0 : i32
    return %arg0, %c0_i32 : i32, i32
  }
}

module attributes {stable_mosaic.version = 11 : i64} {
  func.func @_mm_kernel(%arg0: i32, %arg1: i32, %arg2: i32, %arg3: memref<128x384xbf16, #tpu.memory_space<vmem>>, %arg4: memref<384x128xbf16, #tpu.memory_space<vmem>>, %arg5: memref<128x128xbf16, #tpu.memory_space<vmem>>, %arg6: memref<128x128xf32, #tpu.memory_space<vmem>>) attributes {dimension_semantics = [#tpu.dimension_semantics<parallel>, #tpu.dimension_semantics<parallel>, #tpu.dimension_semantics<arbitrary>], iteration_bounds = array<i64: 1, 1, 1>, scalar_prefetch = 0 : i64, scratch_operands = 1 : i64, tpu.core_type = #tpu.core_type<tc>, window_params = [{transform_indices = @transform_0, window_bounds = array<i64: 128, 384>}, {transform_indices = @transform_1, window_bounds = array<i64: 384, 128>}, {transform_indices = @transform_2, window_bounds = array<i64: 128, 128>}]} {
    %c0_i32 = arith.constant 0 : i32
    %0 = arith.cmpi eq, %arg2, %c0_i32 : i32
    %1 = arith.extui %0 : i1 to i32
    %c0_i32_0 = arith.constant 0 : i32
    %2 = arith.cmpi ne, %1, %c0_i32_0 : i32
    scf.if %2 {
      %cst_10 = arith.constant 0.000000e+00 : f32
      %12 = vector.broadcast %cst_10 : f32 to vector<128x128xf32>
      %c0_11 = arith.constant 0 : index
      %c0_12 = arith.constant 0 : index
      %13 = vector.load %arg6[%c0_11, %c0_12] : memref<128x128xf32, #tpu.memory_space<vmem>>, vector<128x128xf32>
      tpu.vector_store %arg6[%c0_11, %c0_12], %12 {strides = array<i32>} : memref<128x128xf32, #tpu.memory_space<vmem>>, vector<128x128xf32>,
    } else {
    }
    %c0 = arith.constant 0 : index
    %c0_1 = arith.constant 0 : index
    %3 = vector.load %arg6[%c0, %c0_1] : memref<128x128xf32, #tpu.memory_space<vmem>>, vector<128x128xf32>
    %c0_2 = arith.constant 0 : index
    %c0_3 = arith.constant 0 : index
    %4 = vector.load %arg3[%c0_2, %c0_3] : memref<128x384xbf16, #tpu.memory_space<vmem>>, vector<128x384xbf16>
    %c0_4 = arith.constant 0 : index
    %c0_5 = arith.constant 0 : index
    %5 = vector.load %arg4[%c0_4, %c0_5] : memref<384x128xbf16, #tpu.memory_space<vmem>>, vector<384x128xbf16>
    %cst = arith.constant dense<0.000000e+00> : vector<128x128xf32>
    %6 = tpu.matmul %4, %5, %cst {dimension_numbers = #tpu.dot_dimension_numbers<[1], [0], [0], [1], [0, 0, 1, 1], [], []>} : vector<128x384xbf16>, vector<384x128xbf16>, vector<128x128xf32> -> vector<128x128xf32>
    %7 = arith.addf %3, %6 : vector<128x128xf32>
    %c0_6 = arith.constant 0 : index
    %c0_7 = arith.constant 0 : index
    %8 = vector.load %arg6[%c0_6, %c0_7] : memref<128x128xf32, #tpu.memory_space<vmem>>, vector<128x128xf32>
    tpu.vector_store %arg6[%c0_6, %c0_7], %7 {strides = array<i32>} : memref<128x128xf32, #tpu.memory_space<vmem>>, vector<128x128xf32>,
    %c0_i32_8 = arith.constant 0 : i32
    %9 = arith.cmpi eq, %arg2, %c0_i32_8 : i32
    %10 = arith.extui %9 : i1 to i32
    %c0_i32_9 = arith.constant 0 : i32
    %11 = arith.cmpi ne, %10, %c0_i32_9 : i32
    scf.if %11 {
      %c0_10 = arith.constant 0 : index
      %c0_11 = arith.constant 0 : index
      %12 = vector.load %arg6[%c0_10, %c0_11] : memref<128x128xf32, #tpu.memory_space<vmem>>, vector<128x128xf32>
      %13 = arith.truncf %12 : vector<128x128xf32> to vector<128x128xbf16>
      %c0_12 = arith.constant 0 : index
      %c0_13 = arith.constant 0 : index
      %14 = vector.load %arg5[%c0_12, %c0_13] : memref<128x128xbf16, #tpu.memory_space<vmem>>, vector<128x128xbf16>
      tpu.vector_store %arg5[%c0_12, %c0_13], %13 {strides = array<i32>} : memref<128x128xbf16, #tpu.memory_space<vmem>>, vector<128x128xbf16>,
    } else {
    }
    return
  }
  func.func @transform_0(%arg0: i32, %arg1: i32, %arg2: i32) -> (i32, i32) {
    %c0_i32 = arith.constant 0 : i32
    return %arg0, %arg2 : i32, i32
  }
  func.func @transform_1(%arg0: i32, %arg1: i32, %arg2: i32) -> (i32, i32) {
    %c0_i32 = arith.constant 0 : i32
    return %arg2, %arg1 : i32, i32
  }
  func.func @transform_2(%arg0: i32, %arg1: i32, %arg2: i32) -> (i32, i32) {
    %c0_i32 = arith.constant 0 : i32
    return %arg0, %arg1 : i32, i32
  }
}

module attributes {stable_mosaic.version = 11 : i64} {
  func.func @_stats_kernel(%arg0: i32, %arg1: i32, %arg2: memref<32x128xbf16, #tpu.memory_space<vmem>>, %arg3: memref<1x128xf32, #tpu.memory_space<vmem>>, %arg4: memref<1x128xf32, #tpu.memory_space<vmem>>) attributes {dimension_semantics = [#tpu.dimension_semantics<parallel>, #tpu.dimension_semantics<arbitrary>], iteration_bounds = array<i64: 1, 1>, scalar_prefetch = 0 : i64, scratch_operands = 0 : i64, tpu.core_type = #tpu.core_type<tc>, window_params = [{transform_indices = @transform_0, window_bounds = array<i64: 32, 128>}, {transform_indices = @transform_1, window_bounds = array<i64: 1, 128>}, {transform_indices = @transform_2, window_bounds = array<i64: 1, 128>}]} {
    %c0_i32 = arith.constant 0 : i32
    %0 = arith.cmpi eq, %arg1, %c0_i32 : i32
    %1 = arith.extui %0 : i1 to i32
    %c0_i32_0 = arith.constant 0 : i32
    %2 = arith.cmpi ne, %1, %c0_i32_0 : i32
    scf.if %2 {
      %cst_11 = arith.constant 0.000000e+00 : f32
      %16 = vector.broadcast %cst_11 : f32 to vector<1x128xf32>
      %c0_12 = arith.constant 0 : index
      %c0_13 = arith.constant 0 : index
      %17 = vector.load %arg3[%c0_12, %c0_13] : memref<1x128xf32, #tpu.memory_space<vmem>>, vector<1x128xf32>
      tpu.vector_store %arg3[%c0_12, %c0_13], %16 {strides = array<i32>} : memref<1x128xf32, #tpu.memory_space<vmem>>, vector<1x128xf32>,
      %cst_14 = arith.constant 0.000000e+00 : f32
      %18 = vector.broadcast %cst_14 : f32 to vector<1x128xf32>
      %c0_15 = arith.constant 0 : index
      %c0_16 = arith.constant 0 : index
      %19 = vector.load %arg4[%c0_15, %c0_16] : memref<1x128xf32, #tpu.memory_space<vmem>>, vector<1x128xf32>
      tpu.vector_store %arg4[%c0_15, %c0_16], %18 {strides = array<i32>} : memref<1x128xf32, #tpu.memory_space<vmem>>, vector<1x128xf32>,
    } else {
    }
    %c0 = arith.constant 0 : index
    %c0_1 = arith.constant 0 : index
    %3 = vector.load %arg2[%c0, %c0_1] : memref<32x128xbf16, #tpu.memory_space<vmem>>, vector<32x128xbf16>
    %4 = arith.extf %3 : vector<32x128xbf16> to vector<32x128xf32>
    %c0_2 = arith.constant 0 : index
    %c0_3 = arith.constant 0 : index
    %5 = vector.load %arg3[%c0_2, %c0_3] : memref<1x128xf32, #tpu.memory_space<vmem>>, vector<1x128xf32>
    %cst = arith.constant dense<0.000000e+00> : vector<128xf32>
    %6 = vector.multi_reduction <add>, %4, %cst [0] : vector<32x128xf32> to vector<128xf32>
    %7 = vector.shape_cast %6 : vector<128xf32> to vector<1x128xf32>
    %8 = arith.addf %5, %7 : vector<1x128xf32>
    %c0_4 = arith.constant 0 : index
    %c0_5 = arith.constant 0 : index
    %9 = vector.load %arg3[%c0_4, %c0_5] : memref<1x128xf32, #tpu.memory_space<vmem>>, vector<1x128xf32>
    tpu.vector_store %arg3[%c0_4, %c0_5], %8 {strides = array<i32>} : memref<1x128xf32, #tpu.memory_space<vmem>>, vector<1x128xf32>,
    %c0_6 = arith.constant 0 : index
    %c0_7 = arith.constant 0 : index
    %10 = vector.load %arg4[%c0_6, %c0_7] : memref<1x128xf32, #tpu.memory_space<vmem>>, vector<1x128xf32>
    %11 = arith.mulf %4, %4 : vector<32x128xf32>
    %cst_8 = arith.constant dense<0.000000e+00> : vector<128xf32>
    %12 = vector.multi_reduction <add>, %11, %cst_8 [0] : vector<32x128xf32> to vector<128xf32>
    %13 = vector.shape_cast %12 : vector<128xf32> to vector<1x128xf32>
    %14 = arith.addf %10, %13 : vector<1x128xf32>
    %c0_9 = arith.constant 0 : index
    %c0_10 = arith.constant 0 : index
    %15 = vector.load %arg4[%c0_9, %c0_10] : memref<1x128xf32, #tpu.memory_space<vmem>>, vector<1x128xf32>
    tpu.vector_store %arg4[%c0_9, %c0_10], %14 {strides = array<i32>} : memref<1x128xf32, #tpu.memory_space<vmem>>, vector<1x128xf32>,
    return
  }
  func.func @transform_0(%arg0: i32, %arg1: i32) -> (i32, i32) {
    %c1_i32 = arith.constant 1 : i32
    %0 = arith.muli %arg0, %c1_i32 : i32
    %1 = arith.addi %0, %arg1 : i32
    %c0_i32 = arith.constant 0 : i32
    %c0_i32_0 = arith.constant 0 : i32
    return %1, %c0_i32 : i32, i32
  }
  func.func @transform_1(%arg0: i32, %arg1: i32) -> (i32, i32) {
    %c0_i32 = arith.constant 0 : i32
    %c0_i32_0 = arith.constant 0 : i32
    return %arg0, %c0_i32 : i32, i32
  }
  func.func @transform_2(%arg0: i32, %arg1: i32) -> (i32, i32) {
    %c0_i32 = arith.constant 0 : i32
    %c0_i32_0 = arith.constant 0 : i32
    return %arg0, %c0_i32 : i32, i32
  }
}

module attributes {stable_mosaic.version = 11 : i64} {
  func.func @_affine_kernel(%arg0: i32, %arg1: memref<32x128xbf16, #tpu.memory_space<vmem>>, %arg2: memref<1x128xf32, #tpu.memory_space<vmem>>, %arg3: memref<1x128xf32, #tpu.memory_space<vmem>>, %arg4: memref<32x128xbf16, #tpu.memory_space<vmem>>) attributes {dimension_semantics = [#tpu.dimension_semantics<parallel>], iteration_bounds = array<i64: 1>, scalar_prefetch = 0 : i64, scratch_operands = 0 : i64, tpu.core_type = #tpu.core_type<tc>, window_params = [{transform_indices = @transform_0, window_bounds = array<i64: 32, 128>}, {pipeline_mode = #tpu.pipeline_mode<synchronous>, transform_indices = @transform_1, window_bounds = array<i64: 1, 128>}, {pipeline_mode = #tpu.pipeline_mode<synchronous>, transform_indices = @transform_2, window_bounds = array<i64: 1, 128>}, {transform_indices = @transform_3, window_bounds = array<i64: 32, 128>}]} {
    %c0 = arith.constant 0 : index
    %c0_0 = arith.constant 0 : index
    %0 = vector.load %arg1[%c0, %c0_0] : memref<32x128xbf16, #tpu.memory_space<vmem>>, vector<32x128xbf16>
    %1 = arith.extf %0 : vector<32x128xbf16> to vector<32x128xf32>
    %c0_1 = arith.constant 0 : index
    %c0_2 = arith.constant 0 : index
    %2 = vector.load %arg2[%c0_1, %c0_2] : memref<1x128xf32, #tpu.memory_space<vmem>>, vector<1x128xf32>
    %3 = vector.broadcast %2 : vector<1x128xf32> to vector<32x128xf32>
    %4 = arith.mulf %1, %3 : vector<32x128xf32>
    %c0_3 = arith.constant 0 : index
    %c0_4 = arith.constant 0 : index
    %5 = vector.load %arg3[%c0_3, %c0_4] : memref<1x128xf32, #tpu.memory_space<vmem>>, vector<1x128xf32>
    %6 = vector.broadcast %5 : vector<1x128xf32> to vector<32x128xf32>
    %7 = arith.addf %4, %6 : vector<32x128xf32>
    %cst = arith.constant 0.000000e+00 : f32
    %8 = vector.broadcast %cst : f32 to vector<32x128xf32>
    %9 = arith.maximumf %7, %8 : vector<32x128xf32>
    %10 = arith.truncf %9 : vector<32x128xf32> to vector<32x128xbf16>
    %c0_5 = arith.constant 0 : index
    %c0_6 = arith.constant 0 : index
    %11 = vector.load %arg4[%c0_5, %c0_6] : memref<32x128xbf16, #tpu.memory_space<vmem>>, vector<32x128xbf16>
    tpu.vector_store %arg4[%c0_5, %c0_6], %10 {strides = array<i32>} : memref<32x128xbf16, #tpu.memory_space<vmem>>, vector<32x128xbf16>,
    return
  }
  func.func @transform_0(%arg0: i32) -> (i32, i32) {
    %c0_i32 = arith.constant 0 : i32
    %c0_i32_0 = arith.constant 0 : i32
    return %arg0, %c0_i32 : i32, i32
  }
  func.func @transform_1(%arg0: i32) -> (i32, i32) {
    %c0_i32 = arith.constant 0 : i32
    %c0_i32_0 = arith.constant 0 : i32
    %c0_i32_1 = arith.constant 0 : i32
    return %c0_i32, %c0_i32_0 : i32, i32
  }
  func.func @transform_2(%arg0: i32) -> (i32, i32) {
    %c0_i32 = arith.constant 0 : i32
    %c0_i32_0 = arith.constant 0 : i32
    %c0_i32_1 = arith.constant 0 : i32
    return %c0_i32, %c0_i32_0 : i32, i32
  }
  func.func @transform_3(%arg0: i32) -> (i32, i32) {
    %c0_i32 = arith.constant 0 : i32
    %c0_i32_0 = arith.constant 0 : i32
    return %arg0, %c0_i32 : i32, i32
  }
}

module attributes {stable_mosaic.version = 11 : i64} {
  func.func @_mm_kernel(%arg0: i32, %arg1: i32, %arg2: i32, %arg3: memref<128x128xbf16, #tpu.memory_space<vmem>>, %arg4: memref<128x128xbf16, #tpu.memory_space<vmem>>, %arg5: memref<128x128xbf16, #tpu.memory_space<vmem>>, %arg6: memref<128x128xf32, #tpu.memory_space<vmem>>) attributes {dimension_semantics = [#tpu.dimension_semantics<parallel>, #tpu.dimension_semantics<parallel>, #tpu.dimension_semantics<arbitrary>], iteration_bounds = array<i64: 1, 1, 1>, scalar_prefetch = 0 : i64, scratch_operands = 1 : i64, tpu.core_type = #tpu.core_type<tc>, window_params = [{transform_indices = @transform_0, window_bounds = array<i64: 128, 128>}, {transform_indices = @transform_1, window_bounds = array<i64: 128, 128>}, {transform_indices = @transform_2, window_bounds = array<i64: 128, 128>}]} {
    %c0_i32 = arith.constant 0 : i32
    %0 = arith.cmpi eq, %arg2, %c0_i32 : i32
    %1 = arith.extui %0 : i1 to i32
    %c0_i32_0 = arith.constant 0 : i32
    %2 = arith.cmpi ne, %1, %c0_i32_0 : i32
    scf.if %2 {
      %cst_10 = arith.constant 0.000000e+00 : f32
      %12 = vector.broadcast %cst_10 : f32 to vector<128x128xf32>
      %c0_11 = arith.constant 0 : index
      %c0_12 = arith.constant 0 : index
      %13 = vector.load %arg6[%c0_11, %c0_12] : memref<128x128xf32, #tpu.memory_space<vmem>>, vector<128x128xf32>
      tpu.vector_store %arg6[%c0_11, %c0_12], %12 {strides = array<i32>} : memref<128x128xf32, #tpu.memory_space<vmem>>, vector<128x128xf32>,
    } else {
    }
    %c0 = arith.constant 0 : index
    %c0_1 = arith.constant 0 : index
    %3 = vector.load %arg6[%c0, %c0_1] : memref<128x128xf32, #tpu.memory_space<vmem>>, vector<128x128xf32>
    %c0_2 = arith.constant 0 : index
    %c0_3 = arith.constant 0 : index
    %4 = vector.load %arg3[%c0_2, %c0_3] : memref<128x128xbf16, #tpu.memory_space<vmem>>, vector<128x128xbf16>
    %c0_4 = arith.constant 0 : index
    %c0_5 = arith.constant 0 : index
    %5 = vector.load %arg4[%c0_4, %c0_5] : memref<128x128xbf16, #tpu.memory_space<vmem>>, vector<128x128xbf16>
    %cst = arith.constant dense<0.000000e+00> : vector<128x128xf32>
    %6 = tpu.matmul %4, %5, %cst {dimension_numbers = #tpu.dot_dimension_numbers<[1], [0], [0], [1], [0, 0, 1, 1], [], []>} : vector<128x128xbf16>, vector<128x128xbf16>, vector<128x128xf32> -> vector<128x128xf32>
    %7 = arith.addf %3, %6 : vector<128x128xf32>
    %c0_6 = arith.constant 0 : index
    %c0_7 = arith.constant 0 : index
    %8 = vector.load %arg6[%c0_6, %c0_7] : memref<128x128xf32, #tpu.memory_space<vmem>>, vector<128x128xf32>
    tpu.vector_store %arg6[%c0_6, %c0_7], %7 {strides = array<i32>} : memref<128x128xf32, #tpu.memory_space<vmem>>, vector<128x128xf32>,
    %c0_i32_8 = arith.constant 0 : i32
    %9 = arith.cmpi eq, %arg2, %c0_i32_8 : i32
    %10 = arith.extui %9 : i1 to i32
    %c0_i32_9 = arith.constant 0 : i32
    %11 = arith.cmpi ne, %10, %c0_i32_9 : i32
    scf.if %11 {
      %c0_10 = arith.constant 0 : index
      %c0_11 = arith.constant 0 : index
      %12 = vector.load %arg6[%c0_10, %c0_11] : memref<128x128xf32, #tpu.memory_space<vmem>>, vector<128x128xf32>
      %13 = arith.truncf %12 : vector<128x128xf32> to vector<128x128xbf16>
      %c0_12 = arith.constant 0 : index
      %c0_13 = arith.constant 0 : index
      %14 = vector.load %arg5[%c0_12, %c0_13] : memref<128x128xbf16, #tpu.memory_space<vmem>>, vector<128x128xbf16>
      tpu.vector_store %arg5[%c0_12, %c0_13], %13 {strides = array<i32>} : memref<128x128xbf16, #tpu.memory_space<vmem>>, vector<128x128xbf16>,
    } else {
    }
    return
  }
  func.func @transform_0(%arg0: i32, %arg1: i32, %arg2: i32) -> (i32, i32) {
    %c0_i32 = arith.constant 0 : i32
    return %arg0, %arg2 : i32, i32
  }
  func.func @transform_1(%arg0: i32, %arg1: i32, %arg2: i32) -> (i32, i32) {
    %c0_i32 = arith.constant 0 : i32
    return %arg2, %arg1 : i32, i32
  }
  func.func @transform_2(%arg0: i32, %arg1: i32, %arg2: i32) -> (i32, i32) {
    %c0_i32 = arith.constant 0 : i32
    return %arg0, %arg1 : i32, i32
  }
}

module attributes {stable_mosaic.version = 11 : i64} {
  func.func @_mm_kernel(%arg0: i32, %arg1: i32, %arg2: i32, %arg3: memref<256x128xbf16, #tpu.memory_space<vmem>>, %arg4: memref<128x128xbf16, #tpu.memory_space<vmem>>, %arg5: memref<1x128xf32, #tpu.memory_space<vmem>>, %arg6: memref<256x128xf32, #tpu.memory_space<vmem>>, %arg7: memref<256x128xf32, #tpu.memory_space<vmem>>) attributes {dimension_semantics = [#tpu.dimension_semantics<parallel>, #tpu.dimension_semantics<parallel>, #tpu.dimension_semantics<arbitrary>], iteration_bounds = array<i64: 2, 1, 7>, scalar_prefetch = 0 : i64, scratch_operands = 1 : i64, tpu.core_type = #tpu.core_type<tc>, window_params = [{transform_indices = @transform_0, window_bounds = array<i64: 256, 128>}, {transform_indices = @transform_1, window_bounds = array<i64: 128, 128>}, {transform_indices = @transform_2, window_bounds = array<i64: 1, 128>}, {transform_indices = @transform_3, window_bounds = array<i64: 256, 128>}]} {
    %c0_i32 = arith.constant 0 : i32
    %0 = arith.cmpi eq, %arg2, %c0_i32 : i32
    %1 = arith.extui %0 : i1 to i32
    %c0_i32_0 = arith.constant 0 : i32
    %2 = arith.cmpi ne, %1, %c0_i32_0 : i32
    scf.if %2 {
      %cst_9 = arith.constant 0.000000e+00 : f32
      %12 = vector.broadcast %cst_9 : f32 to vector<256x128xf32>
      %c0_10 = arith.constant 0 : index
      %c0_11 = arith.constant 0 : index
      %13 = vector.load %arg7[%c0_10, %c0_11] : memref<256x128xf32, #tpu.memory_space<vmem>>, vector<256x128xf32>
      tpu.vector_store %arg7[%c0_10, %c0_11], %12 {strides = array<i32>} : memref<256x128xf32, #tpu.memory_space<vmem>>, vector<256x128xf32>,
    } else {
    }
    %c0 = arith.constant 0 : index
    %c0_1 = arith.constant 0 : index
    %3 = vector.load %arg7[%c0, %c0_1] : memref<256x128xf32, #tpu.memory_space<vmem>>, vector<256x128xf32>
    %c0_2 = arith.constant 0 : index
    %c0_3 = arith.constant 0 : index
    %4 = vector.load %arg3[%c0_2, %c0_3] : memref<256x128xbf16, #tpu.memory_space<vmem>>, vector<256x128xbf16>
    %c0_4 = arith.constant 0 : index
    %c0_5 = arith.constant 0 : index
    %5 = vector.load %arg4[%c0_4, %c0_5] : memref<128x128xbf16, #tpu.memory_space<vmem>>, vector<128x128xbf16>
    %cst = arith.constant dense<0.000000e+00> : vector<256x128xf32>
    %6 = tpu.matmul %4, %5, %cst {dimension_numbers = #tpu.dot_dimension_numbers<[1], [0], [0], [1], [0, 0, 1, 1], [], []>} : vector<256x128xbf16>, vector<128x128xbf16>, vector<256x128xf32> -> vector<256x128xf32>
    %7 = arith.addf %3, %6 : vector<256x128xf32>
    %c0_6 = arith.constant 0 : index
    %c0_7 = arith.constant 0 : index
    %8 = vector.load %arg7[%c0_6, %c0_7] : memref<256x128xf32, #tpu.memory_space<vmem>>, vector<256x128xf32>
    tpu.vector_store %arg7[%c0_6, %c0_7], %7 {strides = array<i32>} : memref<256x128xf32, #tpu.memory_space<vmem>>, vector<256x128xf32>,
    %c6_i32 = arith.constant 6 : i32
    %9 = arith.cmpi eq, %arg2, %c6_i32 : i32
    %10 = arith.extui %9 : i1 to i32
    %c0_i32_8 = arith.constant 0 : i32
    %11 = arith.cmpi ne, %10, %c0_i32_8 : i32
    scf.if %11 {
      %c0_9 = arith.constant 0 : index
      %c0_10 = arith.constant 0 : index
      %12 = vector.load %arg7[%c0_9, %c0_10] : memref<256x128xf32, #tpu.memory_space<vmem>>, vector<256x128xf32>
      %c0_11 = arith.constant 0 : index
      %c0_12 = arith.constant 0 : index
      %13 = vector.load %arg5[%c0_11, %c0_12] : memref<1x128xf32, #tpu.memory_space<vmem>>, vector<1x128xf32>
      %14 = vector.broadcast %13 : vector<1x128xf32> to vector<256x128xf32>
      %15 = arith.addf %12, %14 : vector<256x128xf32>
      %16 = math.tanh %15 : vector<256x128xf32>
      %c0_13 = arith.constant 0 : index
      %c0_14 = arith.constant 0 : index
      %17 = vector.load %arg6[%c0_13, %c0_14] : memref<256x128xf32, #tpu.memory_space<vmem>>, vector<256x128xf32>
      tpu.vector_store %arg6[%c0_13, %c0_14], %16 {strides = array<i32>} : memref<256x128xf32, #tpu.memory_space<vmem>>, vector<256x128xf32>,
    } else {
    }
    return
  }
  func.func @transform_0(%arg0: i32, %arg1: i32, %arg2: i32) -> (i32, i32) {
    %c0_i32 = arith.constant 0 : i32
    return %arg0, %arg2 : i32, i32
  }
  func.func @transform_1(%arg0: i32, %arg1: i32, %arg2: i32) -> (i32, i32) {
    %c0_i32 = arith.constant 0 : i32
    return %arg2, %arg1 : i32, i32
  }
  func.func @transform_2(%arg0: i32, %arg1: i32, %arg2: i32) -> (i32, i32) {
    %c0_i32 = arith.constant 0 : i32
    %c0_i32_0 = arith.constant 0 : i32
    return %c0_i32, %arg1 : i32, i32
  }
  func.func @transform_3(%arg0: i32, %arg1: i32, %arg2: i32) -> (i32, i32) {
    %c0_i32 = arith.constant 0 : i32
    return %arg0, %arg1 : i32, i32
  }
}

module attributes {stable_mosaic.version = 11 : i64} {
  func.func @_seg_sum_kernel(%arg0: i32, %arg1: i32, %arg2: memref<1x128x256xf32, #tpu.memory_space<vmem>>, %arg3: memref<1x256x128xf32, #tpu.memory_space<vmem>>, %arg4: memref<1x128x128xf32, #tpu.memory_space<vmem>>, %arg5: memref<128x128xf32, #tpu.memory_space<vmem>>) attributes {dimension_semantics = [#tpu.dimension_semantics<parallel>, #tpu.dimension_semantics<arbitrary>], iteration_bounds = array<i64: 2, 1>, scalar_prefetch = 0 : i64, scratch_operands = 1 : i64, tpu.core_type = #tpu.core_type<tc>, window_params = [{transform_indices = @transform_0, window_bounds = array<i64: 1, 128, 256>}, {transform_indices = @transform_1, window_bounds = array<i64: 1, 256, 128>}, {transform_indices = @transform_2, window_bounds = array<i64: 1, 128, 128>}]} {
    %c0_i32 = arith.constant 0 : i32
    %0 = arith.cmpi eq, %arg1, %c0_i32 : i32
    %1 = arith.extui %0 : i1 to i32
    %c0_i32_0 = arith.constant 0 : i32
    %2 = arith.cmpi ne, %1, %c0_i32_0 : i32
    scf.if %2 {
      %cst_12 = arith.constant 0.000000e+00 : f32
      %14 = vector.broadcast %cst_12 : f32 to vector<128x128xf32>
      %c0_13 = arith.constant 0 : index
      %c0_14 = arith.constant 0 : index
      %15 = vector.load %arg5[%c0_13, %c0_14] : memref<128x128xf32, #tpu.memory_space<vmem>>, vector<128x128xf32>
      tpu.vector_store %arg5[%c0_13, %c0_14], %14 {strides = array<i32>} : memref<128x128xf32, #tpu.memory_space<vmem>>, vector<128x128xf32>,
    } else {
    }
    %c0 = arith.constant 0 : index
    %c0_1 = arith.constant 0 : index
    %3 = vector.load %arg5[%c0, %c0_1] : memref<128x128xf32, #tpu.memory_space<vmem>>, vector<128x128xf32>
    %c0_2 = arith.constant 0 : index
    %c0_3 = arith.constant 0 : index
    %c0_4 = arith.constant 0 : index
    %4 = vector.load %arg2[%c0_2, %c0_3, %c0_4] : memref<1x128x256xf32, #tpu.memory_space<vmem>>, vector<1x128x256xf32>
    %5 = vector.shape_cast %4 : vector<1x128x256xf32> to vector<128x256xf32>
    %c0_5 = arith.constant 0 : index
    %c0_6 = arith.constant 0 : index
    %c0_7 = arith.constant 0 : index
    %6 = vector.load %arg3[%c0_5, %c0_6, %c0_7] : memref<1x256x128xf32, #tpu.memory_space<vmem>>, vector<1x256x128xf32>
    %7 = vector.shape_cast %6 : vector<1x256x128xf32> to vector<256x128xf32>
    %cst = arith.constant dense<0.000000e+00> : vector<128x128xf32>
    %8 = tpu.matmul %5, %7, %cst {dimension_numbers = #tpu.dot_dimension_numbers<[1], [0], [0], [1], [0, 0, 1, 1], [], []>} : vector<128x256xf32>, vector<256x128xf32>, vector<128x128xf32> -> vector<128x128xf32>
    %9 = arith.addf %3, %8 : vector<128x128xf32>
    %c0_8 = arith.constant 0 : index
    %c0_9 = arith.constant 0 : index
    %10 = vector.load %arg5[%c0_8, %c0_9] : memref<128x128xf32, #tpu.memory_space<vmem>>, vector<128x128xf32>
    tpu.vector_store %arg5[%c0_8, %c0_9], %9 {strides = array<i32>} : memref<128x128xf32, #tpu.memory_space<vmem>>, vector<128x128xf32>,
    %c0_i32_10 = arith.constant 0 : i32
    %11 = arith.cmpi eq, %arg1, %c0_i32_10 : i32
    %12 = arith.extui %11 : i1 to i32
    %c0_i32_11 = arith.constant 0 : i32
    %13 = arith.cmpi ne, %12, %c0_i32_11 : i32
    scf.if %13 {
      %c0_12 = arith.constant 0 : index
      %c0_13 = arith.constant 0 : index
      %14 = vector.load %arg5[%c0_12, %c0_13] : memref<128x128xf32, #tpu.memory_space<vmem>>, vector<128x128xf32>
      %c0_14 = arith.constant 0 : index
      %c0_15 = arith.constant 0 : index
      %c0_16 = arith.constant 0 : index
      %15 = vector.load %arg4[%c0_14, %c0_15, %c0_16] : memref<1x128x128xf32, #tpu.memory_space<vmem>>, vector<1x128x128xf32>
      %16 = vector.shape_cast %15 : vector<1x128x128xf32> to vector<128x128xf32>
      %17 = vector.shape_cast %14 : vector<128x128xf32> to vector<1x128x128xf32>
      tpu.vector_store %arg4[%c0_14, %c0_15, %c0_16], %17 {strides = array<i32>} : memref<1x128x128xf32, #tpu.memory_space<vmem>>, vector<1x128x128xf32>,
    } else {
    }
    return
  }
  func.func @transform_0(%arg0: i32, %arg1: i32) -> (i32, i32, i32) {
    %c0_i32 = arith.constant 0 : i32
    %c0_i32_0 = arith.constant 0 : i32
    return %arg0, %c0_i32, %arg1 : i32, i32, i32
  }
  func.func @transform_1(%arg0: i32, %arg1: i32) -> (i32, i32, i32) {
    %c0_i32 = arith.constant 0 : i32
    %c0_i32_0 = arith.constant 0 : i32
    return %arg0, %arg1, %c0_i32 : i32, i32, i32
  }
  func.func @transform_2(%arg0: i32, %arg1: i32) -> (i32, i32, i32) {
    %c0_i32 = arith.constant 0 : i32
    %c0_i32_0 = arith.constant 0 : i32
    %c0_i32_1 = arith.constant 0 : i32
    return %arg0, %c0_i32, %c0_i32_0 : i32, i32, i32
  }
}

module attributes {stable_mosaic.version = 11 : i64} {
  func.func @_inst_gather_kernel(%arg0: i32, %arg1: i32, %arg2: memref<1x256x128xf32, #tpu.memory_space<vmem>>, %arg3: memref<1x128x128xf32, #tpu.memory_space<vmem>>, %arg4: memref<1x256x128xf32, #tpu.memory_space<vmem>>) attributes {dimension_semantics = [#tpu.dimension_semantics<parallel>, #tpu.dimension_semantics<parallel>], iteration_bounds = array<i64: 2, 1>, scalar_prefetch = 0 : i64, scratch_operands = 0 : i64, tpu.core_type = #tpu.core_type<tc>, window_params = [{transform_indices = @transform_0, window_bounds = array<i64: 1, 256, 128>}, {transform_indices = @transform_1, window_bounds = array<i64: 1, 128, 128>}, {transform_indices = @transform_2, window_bounds = array<i64: 1, 256, 128>}]} {
    %c0 = arith.constant 0 : index
    %c0_0 = arith.constant 0 : index
    %c0_1 = arith.constant 0 : index
    %0 = vector.load %arg2[%c0, %c0_0, %c0_1] : memref<1x256x128xf32, #tpu.memory_space<vmem>>, vector<1x256x128xf32>
    %1 = vector.shape_cast %0 : vector<1x256x128xf32> to vector<256x128xf32>
    %c0_2 = arith.constant 0 : index
    %c0_3 = arith.constant 0 : index
    %c0_4 = arith.constant 0 : index
    %2 = vector.load %arg3[%c0_2, %c0_3, %c0_4] : memref<1x128x128xf32, #tpu.memory_space<vmem>>, vector<1x128x128xf32>
    %3 = vector.shape_cast %2 : vector<1x128x128xf32> to vector<128x128xf32>
    %cst = arith.constant dense<0.000000e+00> : vector<256x128xf32>
    %4 = tpu.matmul %1, %3, %cst {dimension_numbers = #tpu.dot_dimension_numbers<[1], [0], [0], [1], [0, 0, 1, 1], [], []>} : vector<256x128xf32>, vector<128x128xf32>, vector<256x128xf32> -> vector<256x128xf32>
    %c0_5 = arith.constant 0 : index
    %c0_6 = arith.constant 0 : index
    %c0_7 = arith.constant 0 : index
    %5 = vector.load %arg4[%c0_5, %c0_6, %c0_7] : memref<1x256x128xf32, #tpu.memory_space<vmem>>, vector<1x256x128xf32>
    %6 = vector.shape_cast %5 : vector<1x256x128xf32> to vector<256x128xf32>
    %7 = vector.shape_cast %4 : vector<256x128xf32> to vector<1x256x128xf32>
    tpu.vector_store %arg4[%c0_5, %c0_6, %c0_7], %7 {strides = array<i32>} : memref<1x256x128xf32, #tpu.memory_space<vmem>>, vector<1x256x128xf32>,
    return
  }
  func.func @transform_0(%arg0: i32, %arg1: i32) -> (i32, i32, i32) {
    %c0_i32 = arith.constant 0 : i32
    %c0_i32_0 = arith.constant 0 : i32
    return %arg0, %arg1, %c0_i32 : i32, i32, i32
  }
  func.func @transform_1(%arg0: i32, %arg1: i32) -> (i32, i32, i32) {
    %c0_i32 = arith.constant 0 : i32
    %c0_i32_0 = arith.constant 0 : i32
    %c0_i32_1 = arith.constant 0 : i32
    return %arg0, %c0_i32, %c0_i32_0 : i32, i32, i32
  }
  func.func @transform_2(%arg0: i32, %arg1: i32) -> (i32, i32, i32) {
    %c0_i32 = arith.constant 0 : i32
    %c0_i32_0 = arith.constant 0 : i32
    return %arg0, %arg1, %c0_i32 : i32, i32, i32
  }
}

</mosaic_0001>

<llo_original>
// kernel: encoder_forward.25
$region0: #{encoder_forward.25}
  #allocation0 [shape = 'u32[]', space=smem, size = 0x4, offset = 0x4, fixed_abs, tag = 'smem constant byte address 0x4 - core index']
  #allocation1 [shape = 'u32[144,128]{1,0:T(1,128)}', space=vmem, size = 0x12000, scoped, tag = 'internal scratch']
  %s0 = inlined_call_operand.vmem [shape: bf16[512,128], index: 0, kind: input, shape index: {}]
  %s1 = inlined_call_operand.vmem [shape: f32[1,128], index: 1, kind: output, shape index: {0}]
  %s2 = inlined_call_operand.vmem [shape: f32[1,128], index: 2, kind: output, shape index: {1}]
  %3 = xla_tuple %s1, %s2
  %s4 = sld [smem:[#allocation0]]
  $region26: #{encoder_forward.25} parent=0
    _
  %s6 = ssub.s32 1, %s4
  %s7 = scalar_select 0, %s6, %s4
  // Predicated region
  $region2: #{encoder_forward.25} parent=0 // pred_check
    _
  $region3: #{encoder_forward.25} parent=0 // pred_check_branch
    %9 = sbr.rel (0) target = $region5
  $region4: #{encoder_forward.25} parent=0 // pred_region
    %s10 = sadd.s32 0, 0
    %s11 = smul.u32 64, %s10
    %p12 = scmp.lt.s32.totalorder %s11, 63
    %s13 = scalar_select %p12, %s11, 63
    %s14 = smul.addr %s13, 4
    %s15 = scalar_lea.vmem %s0, %s14
    %s16 = sadd.s32 0, 0
    %s17 = smul.u32 64, %s16
  $region5: #{encoder_forward.25} parent=0 // pred_fallthru
    _
  %s18 = sadd.s32 0, 0
  %s19 = smul.u32 64, %s18
  %p20 = scmp.lt.s32.totalorder %s19, 63
  %s21 = scalar_select %p20, %s19, 63
  %s22 = smul.addr %s21, 4
  %s23 = scalar_lea.vmem %s0, %s22
  %s24 = sadd.s32 0, 0
  %s25 = smul.u32 64, %s24
  %p26 = scmp.lt.s32.totalorder %s25, 63
  %s27 = scalar_select %p26, %s25, 63
  %s28 = smul.addr %s27, 4
  %s29 = scalar_lea.vmem %s0, %s28
  %s30 = sadd.s32 0, 0
  %s31 = smul.u32 64, %s30
  %p32 = scmp.eq.s32.totalorder 0, 0
  // Predicated region
  $region6: #{encoder_forward.25} parent=0 // pred_check
    %p33 = pneg %p32
  $region7: #{encoder_forward.25} parent=0 // pred_check_branch
    %35 = sbr.rel (%p33) target = $region9
  $region8: #{encoder_forward.25} parent=0 // pred_region
    %36 = vst [vmem:[%s1] sm:$0x1] 0.0
    %37 = vst [vmem:[%s2] sm:$0x1] 0.0
  $region9: #{encoder_forward.25} parent=0 // pred_fallthru
    _
  %v38 = vld [vmem:[%s29] sm:$0xf]
  %v39 = vld [vmem:[%s29 + $0x4] sm:$0xf]
  %v40 = vld [vmem:[%s29 + $0x8] sm:$0xf]
  %v41 = vld [vmem:[%s29 + $0xc] sm:$0xf]
  %v42 = vld [vmem:[%s29 + $0x10] sm:$0xf]
  %v43 = vld [vmem:[%s29 + $0x14] sm:$0xf]
  %v44 = vld [vmem:[%s29 + $0x18] sm:$0xf]
  %v45 = vld [vmem:[%s29 + $0x1c] sm:$0xf]
  %v46 = vld [vmem:[%s29 + $0x20] sm:$0xf]
  %v47 = vld [vmem:[%s29 + $0x24] sm:$0xf]
  %v48 = vld [vmem:[%s29 + $0x28] sm:$0xf]
  %v49 = vld [vmem:[%s29 + $0x2c] sm:$0xf]
  %v50 = vld [vmem:[%s29 + $0x30] sm:$0xf]
  %v51 = vld [vmem:[%s29 + $0x34] sm:$0xf]
  %v52 = vld [vmem:[%s29 + $0x38] sm:$0xf]
  %v53 = vld [vmem:[%s29 + $0x3c] sm:$0xf]
  %v54 = vld [vmem:[%s29 + $0x40] sm:$0xf]
  %v55 = vld [vmem:[%s29 + $0x44] sm:$0xf]
  %v56 = vld [vmem:[%s29 + $0x48] sm:$0xf]
  %v57 = vld [vmem:[%s29 + $0x4c] sm:$0xf]
  %v58 = vld [vmem:[%s29 + $0x50] sm:$0xf]
  %v59 = vld [vmem:[%s29 + $0x54] sm:$0xf]
  %v60 = vld [vmem:[%s29 + $0x58] sm:$0xf]
  %v61 = vld [vmem:[%s29 + $0x5c] sm:$0xf]
  %v62 = vld [vmem:[%s29 + $0x60] sm:$0xf]
  %v63 = vld [vmem:[%s29 + $0x64] sm:$0xf]
  %v64 = vld [vmem:[%s29 + $0x68] sm:$0xf]
  %v65 = vld [vmem:[%s29 + $0x6c] sm:$0xf]
  %v66 = vld [vmem:[%s29 + $0x70] sm:$0xf]
  %v67 = vld [vmem:[%s29 + $0x74] sm:$0xf]
  %v68 = vld [vmem:[%s29 + $0x78] sm:$0xf]
  %v69 = vld [vmem:[%s29 + $0x7c] sm:$0xf]
  %v70 = vld [vmem:[%s29 + $0x80] sm:$0xf]
  %v71 = vld [vmem:[%s29 + $0x84] sm:$0xf]
  %v72 = vld [vmem:[%s29 + $0x88] sm:$0xf]
  %v73 = vld [vmem:[%s29 + $0x8c] sm:$0xf]
  %v74 = vld [vmem:[%s29 + $0x90] sm:$0xf]
  %v75 = vld [vmem:[%s29 + $0x94] sm:$0xf]
  %v76 = vld [vmem:[%s29 + $0x98] sm:$0xf]
  %v77 = vld [vmem:[%s29 + $0x9c] sm:$0xf]
  %v78 = vld [vmem:[%s29 + $0xa0] sm:$0xf]
  %v79 = vld [vmem:[%s29 + $0xa4] sm:$0xf]
  %v80 = vld [vmem:[%s29 + $0xa8] sm:$0xf]
  %v81 = vld [vmem:[%s29 + $0xac] sm:$0xf]
  %v82 = vld [vmem:[%s29 + $0xb0] sm:$0xf]
  %v83 = vld [vmem:[%s29 + $0xb4] sm:$0xf]
  %v84 = vld [vmem:[%s29 + $0xb8] sm:$0xf]
  %v85 = vld [vmem:[%s29 + $0xbc] sm:$0xf]
  %v86 = vld [vmem:[%s29 + $0xc0] sm:$0xf]
  %v87 = vld [vmem:[%s29 + $0xc4] sm:$0xf]
  %v88 = vld [vmem:[%s29 + $0xc8] sm:$0xf]
  %v89 = vld [vmem:[%s29 + $0xcc] sm:$0xf]
  %v90 = vld [vmem:[%s29 + $0xd0] sm:$0xf]
  %v91 = vld [vmem:[%s29 + $0xd4] sm:$0xf]
  %v92 = vld [vmem:[%s29 + $0xd8] sm:$0xf]
  %v93 = vld [vmem:[%s29 + $0xdc] sm:$0xf]
  %v94 = vld [vmem:[%s29 + $0xe0] sm:$0xf]
  %v95 = vld [vmem:[%s29 + $0xe4] sm:$0xf]
  %v96 = vld [vmem:[%s29 + $0xe8] sm:$0xf]
  %v97 = vld [vmem:[%s29 + $0xec] sm:$0xf]
  %v98 = vld [vmem:[%s29 + $0xf0] sm:$0xf]
  %v99 = vld [vmem:[%s29 + $0xf4] sm:$0xf]
  %v100 = vld [vmem:[%s29 + $0xf8] sm:$0xf]
  %v101 = vld [vmem:[%s29 + $0xfc] sm:$0xf]
  %v102 = vunpack.c.l.bf16 %v38
  %v103 = vunpack.c.l.bf16 %v39
  %v104 = vunpack.c.l.bf16 %v40
  %v105 = vunpack.c.l.bf16 %v41
  %v106 = vunpack.c.l.bf16 %v42
  %v107 = vunpack.c.l.bf16 %v43
  %v108 = vunpack.c.l.bf16 %v44
  %v109 = vunpack.c.l.bf16 %v45
  %v110 = vunpack.c.l.bf16 %v46
  %v111 = vunpack.c.l.bf16 %v47
  %v112 = vunpack.c.l.bf16 %v48
  %v113 = vunpack.c.l.bf16 %v49
  %v114 = vunpack.c.l.bf16 %v50
  %v115 = vunpack.c.l.bf16 %v51
  %v116 = vunpack.c.l.bf16 %v52
  %v117 = vunpack.c.l.bf16 %v53
  %v118 = vunpack.c.l.bf16 %v54
  %v119 = vunpack.c.l.bf16 %v55
  %v120 = vunpack.c.l.bf16 %v56
  %v121 = vunpack.c.l.bf16 %v57
  %v122 = vunpack.c.l.bf16 %v58
  %v123 = vunpack.c.l.bf16 %v59
  %v124 = vunpack.c.l.bf16 %v60
  %v125 = vunpack.c.l.bf16 %v61
  %v126 = vunpack.c.l.bf16 %v62
  %v127 = vunpack.c.l.bf16 %v63
  %v128 = vunpack.c.l.bf16 %v64
  %v129 = vunpack.c.l.bf16 %v65
  %v130 = vunpack.c.l.bf16 %v66
  %v131 = vunpack.c.l.bf16 %v67
  %v132 = vunpack.c.l.bf16 %v68
  %v133 = vunpack.c.l.bf16 %v69
  %v134 = vunpack.c.l.bf16 %v70
  %v135 = vunpack.c.l.bf16 %v71
  %v136 = vunpack.c.l.bf16 %v72
  %v137 = vunpack.c.l.bf16 %v73
  %v138 = vunpack.c.l.bf16 %v74
  %v139 = vunpack.c.l.bf16 %v75
  %v140 = vunpack.c.l.bf16 %v76
  %v141 = vunpack.c.l.bf16 %v77
  %v142 = vunpack.c.l.bf16 %v78
  %v143 = vunpack.c.l.bf16 %v79
  %v144 = vunpack.c.l.bf16 %v80
  %v145 = vunpack.c.l.bf16 %v81
  %v146 = vunpack.c.l.bf16 %v82
  %v147 = vunpack.c.l.bf16 %v83
  %v148 = vunpack.c.l.bf16 %v84
  %v149 = vunpack.c.l.bf16 %v85
  %v150 = vunpack.c.l.bf16 %v86
  %v151 = vunpack.c.l.bf16 %v87
  %v152 = vunpack.c.l.bf16 %v88
  %v153 = vunpack.c.l.bf16 %v89
  %v154 = vunpack.c.l.bf16 %v90
  %v155 = vunpack.c.l.bf16 %v91
  %v156 = vunpack.c.l.bf16 %v92
  %v157 = vunpack.c.l.bf16 %v93
  %v158 = vunpack.c.l.bf16 %v94
  %v159 = vunpack.c.l.bf16 %v95
  %v160 = vunpack.c.l.bf16 %v96
  %v161 = vunpack.c.l.bf16 %v97
  %v162 = vunpack.c.l.bf16 %v98
  %v163 = vunpack.c.l.bf16 %v99
  %v164 = vunpack.c.l.bf16 %v100
  %v165 = vunpack.c.l.bf16 %v101
  %v166 = vld [vmem:[%s1] sm:$0x1]
  %v167 = vadd.f32 %v102, %v103
  %v168 = vadd.f32 %v167, %v104
  %v169 = vadd.f32 %v168, %v105
  %v170 = vadd.f32 %v169, %v106
  %v171 = vadd.f32 %v170, %v107
  %v172 = vadd.f32 %v171, %v108
  %v173 = vadd.f32 %v172, %v109
  %v174 = vadd.f32 %v173, %v110
  %v175 = vadd.f32 %v174, %v111
  %v176 = vadd.f32 %v175, %v112
  %v177 = vadd.f32 %v176, %v113
  %v178 = vadd.f32 %v177, %v114
  %v179 = vadd.f32 %v178, %v115
  %v180 = vadd.f32 %v179, %v116
  %v181 = vadd.f32 %v180, %v117
  %v182 = vadd.f32 %v181, %v118
  %v183 = vadd.f32 %v182, %v119
  %v184 = vadd.f32 %v183, %v120
  %v185 = vadd.f32 %v184, %v121
  %v186 = vadd.f32 %v185, %v122
  %v187 = vadd.f32 %v186, %v123
  %v188 = vadd.f32 %v187, %v124
  %v189 = vadd.f32 %v188, %v125
  %v190 = vadd.f32 %v189, %v126
  %v191 = vadd.f32 %v190, %v127
  %v192 = vadd.f32 %v191, %v128
  %v193 = vadd.f32 %v192, %v129
  %v194 = vadd.f32 %v193, %v130
  %v195 = vadd.f32 %v194, %v131
  %v196 = vadd.f32 %v195, %v132
  %v197 = vadd.f32 %v196, %v133
  %v198 = vadd.f32 %v197, %v134
  %v199 = vadd.f32 %v198, %v135
  %v200 = vadd.f32 %v199, %v136
  %v201 = vadd.f32 %v200, %v137
  %v202 = vadd.f32 %v201, %v138
  %v203 = vadd.f32 %v202, %v139
  %v204 = vadd.f32 %v203, %v140
  %v205 = vadd.f32 %v204, %v141
  %v206 = vadd.f32 %v205, %v142
  %v207 = vadd.f32 %v206, %v143
  %v208 = vadd.f32 %v207, %v144
  %v209 = vadd.f32 %v208, %v145
  %v210 = vadd.f32 %v209, %v146
  %v211 = vadd.f32 %v210, %v147
  %v212 = vadd.f32 %v211, %v148
  %v213 = vadd.f32 %v212, %v149
  %v214 = vadd.f32 %v213, %v150
  %v215 = vadd.f32 %v214, %v151
  %v216 = vadd.f32 %v215, %v152
  %v217 = vadd.f32 %v216, %v153
  %v218 = vadd.f32 %v217, %v154
  %v219 = vadd.f32 %v218, %v155
  %v220 = vadd.f32 %v219, %v156
  %v221 = vadd.f32 %v220, %v157
  %v222 = vadd.f32 %v221, %v158
  %v223 = vadd.f32 %v222, %v159
  %v224 = vadd.f32 %v223, %v160
  %v225 = vadd.f32 %v224, %v161
  %v226 = vadd.f32 %v225, %v162
  %v227 = vadd.f32 %v226, %v163
  %v228 = vadd.f32 %v227, %v164
  %v229 = vadd.f32 %v228, %v165
  %v230 = vrot.slane %v229, 4
  %v231 = vadd.f32 %v229, %v230
  %v232 = vrot.slane %v231, 2
  %v233 = vadd.f32 %v231, %v232
  %v234 = vrot.slane %v233, 1
  %v235 = vadd.f32 %v233, %v234
  %v236 = vadd.f32 %v166, %v235
  %237 = vst [vmem:[%s1] sm:$0x1] %v236
  %v238 = vld [vmem:[%s2] sm:$0x1]
  %v239 = vmul.f32 %v102, %v102
  %v240 = vmul.f32 %v103, %v103
  %v241 = vmul.f32 %v104, %v104
  %v242 = vmul.f32 %v105, %v105
  %v243 = vmul.f32 %v106, %v106
  %v244 = vmul.f32 %v107, %v107
  %v245 = vmul.f32 %v108, %v108
  %v246 = vmul.f32 %v109, %v109
  %v247 = vmul.f32 %v110, %v110
  %v248 = vmul.f32 %v111, %v111
  %v249 = vmul.f32 %v112, %v112
  %v250 = vmul.f32 %v113, %v113
  %v251 = vmul.f32 %v114, %v114
  %v252 = vmul.f32 %v115, %v115
  %v253 = vmul.f32 %v116, %v116
  %v254 = vmul.f32 %v117, %v117
  %v255 = vmul.f32 %v118, %v118
  %v256 = vmul.f32 %v119, %v119
  %v257 = vmul.f32 %v120, %v120
  %v258 = vmul.f32 %v121, %v121
  %v259 = vmul.f32 %v122, %v122
  %v260 = vmul.f32 %v123, %v123
  %v261 = vmul.f32 %v124, %v124
  %v262 = vmul.f32 %v125, %v125
  %v263 = vmul.f32 %v126, %v126
  %v264 = vmul.f32 %v127, %v127
  %v265 = vmul.f32 %v128, %v128
  %v266 = vmul.f32 %v129, %v129
  %v267 = vmul.f32 %v130, %v130
  %v268 = vmul.f32 %v131, %v131
  %v269 = vmul.f32 %v132, %v132
  %v270 = vmul.f32 %v133, %v133
  %v271 = vmul.f32 %v134, %v134
  %v272 = vmul.f32 %v135, %v135
  %v273 = vmul.f32 %v136, %v136
  %v274 = vmul.f32 %v137, %v137
  %v275 = vmul.f32 %v138, %v138
  %v276 = vmul.f32 %v139, %v139
  %v277 = vmul.f32 %v140, %v140
  %v278 = vmul.f32 %v141, %v141
  %v279 = vmul.f32 %v142, %v142
  %v280 = vmul.f32 %v143, %v143
  %v281 = vmul.f32 %v144, %v144
  %v282 = vmul.f32 %v145, %v145
  %v283 = vmul.f32 %v146, %v146
  %v284 = vmul.f32 %v147, %v147
  %v285 = vmul.f32 %v148, %v148
  %v286 = vmul.f32 %v149, %v149
  %v287 = vmul.f32 %v150, %v150
  %v288 = vmul.f32 %v151, %v151
  %v289 = vmul.f32 %v152, %v152
  %v290 = vmul.f32 %v153, %v153
  %v291 = vmul.f32 %v154, %v154
  %v292 = vmul.f32 %v155, %v155
  %v293 = vmul.f32 %v156, %v156
  %v294 = vmul.f32 %v157, %v157
  %v295 = vmul.f32 %v158, %v158
  %v296 = vmul.f32 %v159, %v159
  %v297 = vmul.f32 %v160, %v160
  %v298 = vmul.f32 %v161, %v161
  %v299 = vmul.f32 %v162, %v162
  %v300 = vmul.f32 %v163, %v163
  %v301 = vmul.f32 %v164, %v164
  %v302 = vmul.f32 %v165, %v165
  %v303 = vadd.f32 %v239, %v240
  %v304 = vadd.f32 %v303, %v241
  %v305 = vadd.f32 %v304, %v242
  %v306 = vadd.f32 %v305, %v243
  %v307 = vadd.f32 %v306, %v244
  %v308 = vadd.f32 %v307, %v245
  %v309 = vadd.f32 %v308, %v246
  %v310 = vadd.f32 %v309, %v247
  %v311 = vadd.f32 %v310, %v248
  %v312 = vadd.f32 %v311, %v249
  %v313 = vadd.f32 %v312, %v250
  %v314 = vadd.f32 %v313, %v251
  %v315 = vadd.f32 %v314, %v252
  %v316 = vadd.f32 %v315, %v253
  %v317 = vadd.f32 %v316, %v254
  %v318 = vadd.f32 %v317, %v255
  %v319 = vadd.f32 %v318, %v256
  %v320 = vadd.f32 %v319, %v257
  %v321 = vadd.f32 %v320, %v258
  %v322 = vadd.f32 %v321, %v259
  %v323 = vadd.f32 %v322, %v260
  %v324 = vadd.f32 %v323, %v261
  %v325 = vadd.f32 %v324, %v262
  %v326 = vadd.f32 %v325, %v263
  %v327 = vadd.f32 %v326, %v264
  %v328 = vadd.f32 %v327, %v265
  %v329 = vadd.f32 %v328, %v266
  %v330 = vadd.f32 %v329, %v267
  %v331 = vadd.f32 %v330, %v268
  %v332 = vadd.f32 %v331, %v269
  %v333 = vadd.f32 %v332, %v270
  %v334 = vadd.f32 %v333, %v271
  %v335 = vadd.f32 %v334, %v272
  %v336 = vadd.f32 %v335, %v273
  %v337 = vadd.f32 %v336, %v274
  %v338 = vadd.f32 %v337, %v275
  %v339 = vadd.f32 %v338, %v276
  %v340 = vadd.f32 %v339, %v277
  %v341 = vadd.f32 %v340, %v278
  %v342 = vadd.f32 %v341, %v279
  %v343 = vadd.f32 %v342, %v280
  %v344 = vadd.f32 %v343, %v281
  %v345 = vadd.f32 %v344, %v282
  %v346 = vadd.f32 %v345, %v283
  %v347 = vadd.f32 %v346, %v284
  %v348 = vadd.f32 %v347, %v285
  %v349 = vadd.f32 %v348, %v286
  %v350 = vadd.f32 %v349, %v287
  %v351 = vadd.f32 %v350, %v288
  %v352 = vadd.f32 %v351, %v289
  %v353 = vadd.f32 %v352, %v290
  %v354 = vadd.f32 %v353, %v291
  %v355 = vadd.f32 %v354, %v292
  %v356 = vadd.f32 %v355, %v293
  %v357 = vadd.f32 %v356, %v294
  %v358 = vadd.f32 %v357, %v295
  %v359 = vadd.f32 %v358, %v296
  %v360 = vadd.f32 %v359, %v297
  %v361 = vadd.f32 %v360, %v298
  %v362 = vadd.f32 %v361, %v299
  %v363 = vadd.f32 %v362, %v300
  %v364 = vadd.f32 %v363, %v301
  %v365 = vadd.f32 %v364, %v302
  %v366 = vrot.slane %v365, 4
  %v367 = vadd.f32 %v365, %v366
  %v368 = vrot.slane %v367, 2
  %v369 = vadd.f32 %v367, %v368
  %v370 = vrot.slane %v369, 1
  %v371 = vadd.f32 %v369, %v370
  %v372 = vadd.f32 %v238, %v371
  %373 = vst [vmem:[%s2] sm:$0x1] %v372
  // Predicated region
  $region10: #{encoder_forward.25} parent=0 // pred_check
    _
  $region11: #{encoder_forward.25} parent=0 // pred_check_branch
    %375 = sbr.rel (0) target = $region13
  $region12: #{encoder_forward.25} parent=0 // pred_region
    _
  $region13: #{encoder_forward.25} parent=0 // pred_fallthru
    _
  // Predicated region
  $region14: #{encoder_forward.25} parent=0 // pred_check
    _
  $region15: #{encoder_forward.25} parent=0 // pred_check_branch
    %377 = sbr.rel (0) target = $region17
  $region16: #{encoder_forward.25} parent=0 // pred_region
    _
  $region17: #{encoder_forward.25} parent=0 // pred_fallthru
    _
  // Predicated region
  $region18: #{encoder_forward.25} parent=0 // pred_check
    _
  $region19: #{encoder_forward.25} parent=0 // pred_check_branch
    %379 = sbr.rel (0) target = $region21
  $region20: #{encoder_forward.25} parent=0 // pred_region
    _
  $region21: #{encoder_forward.25} parent=0 // pred_fallthru
    _
  // Predicated region
  $region22: #{encoder_forward.25} parent=0 // pred_check
    _
  $region23: #{encoder_forward.25} parent=0 // pred_check_branch
    %381 = sbr.rel (0) target = $region25
  $region24: #{encoder_forward.25} parent=0 // pred_region
    _
  $region25: #{encoder_forward.25} parent=0 // pred_fallthru
    _

// kernel: encoder_forward.24
$region0: #{encoder_forward.24}
  #allocation0 [shape = 'u32[]', space=smem, size = 0x4, offset = 0x4, fixed_abs, tag = 'smem constant byte address 0x4 - core index']
  #allocation1 [shape = 'u32[144,128]{1,0:T(1,128)}', space=vmem, size = 0x12000, scoped, tag = 'internal scratch']
  #allocation2 [shape = 'f32[256,128]{1,0:T(8,128)}', space=vmem, size = 0x20000, scoped, tag = 'scratch operand']
  %s0 = inlined_call_operand.vmem [shape: bf16[512,256], index: 0, kind: input, shape index: {}]
  %s1 = inlined_call_operand.vmem [shape: bf16[256,128], index: 1, kind: input, shape index: {}]
  %s2 = inlined_call_operand.vmem [shape: bf16[512,128], index: 2, kind: output, shape index: {}]
  %s3 = sld [smem:[#allocation0]]
  $region49: #{encoder_forward.24} parent=0
    _
  %s5 = ssub.s32 1, %s3
  %s6 = scalar_select 0, %s5, %s3
  loop: start=0, step=1, limit=4
  $region2: #{encoder_forward.24} parent=0 // loop_pre_header
    _
  $region3: #{encoder_forward.24} parent=0 // loop_header
    %s8 = sphi 0, %s12
    %p9 = scmp.ge.s32.totalorder %s8, 4
    %s15 = sphi 0, %s34
    %s16 = sphi 0, %s30
    %s17 = sphi 0, %s26
    %s18 = sphi 0, %s15
    %s19 = sphi 0, %s16
    %s20 = sphi 0, %s17
    %s21 = sphi 0, %s18
    %s22 = sphi 0, %s19
    %s23 = sphi 0, %s20
    %s39 = sphi 0, %s41
    %s42 = sphi 0, %s39
    %s43 = sphi 0, %s42
    %s59 = sphi 0, %s43
    %s67 = sphi 0, %s69
    %s70 = sphi 0, %s67
    %s71 = sphi 0, %s70
    %s87 = sphi 0, %s71
    %s95 = sphi 0, %s97
    %s98 = sphi 0, %s95
    %s99 = sphi 0, %s98
    %s115 = sphi 0, %s99
  $region4: #{encoder_forward.24} parent=0 // loop_header_branch
    %11 = sbr.rel (%p9) target = $region8
  $region5: #{encoder_forward.24} parent=0 // loop_body
    %s13 = ssub.s32 %s8, 1
    %s14 = ssub.s32 %s8, 2
    %s24 = sadd.s32 1, %s17
    %p25 = scmp.ge.s32.totalorder %s24, 1
    %s26 = scalar_select %p25, 0, %s24
    %s27 = sadd.s32 1, %s16
    %s28 = scalar_select %p25, %s27, %s16
    %p29 = scmp.ge.s32.totalorder %s28, 1
    %s30 = scalar_select %p29, 0, %s28
    %s31 = sadd.s32 1, %s15
    %s32 = scalar_select %p29, %s31, %s15
    %p33 = scmp.ge.s32.totalorder %s32, 2
    %s34 = scalar_select %p33, 0, %s32
    %s35 = ssub.s32 %s15, %s34
    %s36 = ssub.s32 %s17, %s26
    %s37 = sor.u32 %s35, %s36
    %p38 = scmp.eq.s32.totalorder %s37, 0
    %s40 = sadd.s32 %s39, 1
    %s41 = scalar_select %p38, %s39, %s40
    %p44 = pneg %p38
    %p45 = scmp.eq.s32.totalorder %s8, 1
    %p46 = por %p44, %p45
    %p47 = scmp.ne.s32.totalorder %s39, %s42
    %p48 = scmp.eq.s32.totalorder %s8, 0
    %p49 = por %p47, %p48
    %p50 = scmp.ne.s32.totalorder %s39, %s42
    %p51 = scmp.eq.s32.totalorder %s13, 1
    %p52 = por %p50, %p51
    %p53 = scmp.ne.s32.totalorder %s42, %s43
    %p54 = scmp.eq.s32.totalorder %s13, 0
    %p55 = por %p53, %p54
    %p56 = scmp.ne.s32.totalorder %s42, %s43
    %p57 = scmp.eq.s32.totalorder %s14, 1
    %p58 = por %p56, %p57
    %p60 = scmp.ne.s32.totalorder %s43, %s59
    %p61 = scmp.eq.s32.totalorder %s14, 0
    %p62 = por %p60, %p61
    %s63 = ssub.s32 %s17, %s26
    %s64 = ssub.s32 %s16, %s30
    %s65 = sor.u32 %s63, %s64
    %p66 = scmp.eq.s32.totalorder %s65, 0
    %s68 = sadd.s32 %s67, 1
    %s69 = scalar_select %p66, %s67, %s68
    %p72 = pneg %p66
    %p73 = scmp.eq.s32.totalorder %s8, 1
    %p74 = por %p72, %p73
    %p75 = scmp.ne.s32.totalorder %s67, %s70
    %p76 = scmp.eq.s32.totalorder %s8, 0
    %p77 = por %p75, %p76
    %p78 = scmp.ne.s32.totalorder %s67, %s70
    %p79 = scmp.eq.s32.totalorder %s13, 1
    %p80 = por %p78, %p79
    %p81 = scmp.ne.s32.totalorder %s70, %s71
    %p82 = scmp.eq.s32.totalorder %s13, 0
    %p83 = por %p81, %p82
    %p84 = scmp.ne.s32.totalorder %s70, %s71
    %p85 = scmp.eq.s32.totalorder %s14, 1
    %p86 = por %p84, %p85
    %p88 = scmp.ne.s32.totalorder %s71, %s87
    %p89 = scmp.eq.s32.totalorder %s14, 0
    %p90 = por %p88, %p89
    %s91 = ssub.s32 %s15, %s34
    %s92 = ssub.s32 %s16, %s30
    %s93 = sor.u32 %s91, %s92
    %p94 = scmp.eq.s32.totalorder %s93, 0
    %s96 = sadd.s32 %s95, 1
    %s97 = scalar_select %p94, %s95, %s96
    %p100 = pneg %p94
    %p101 = scmp.eq.s32.totalorder %s8, 1
    %p102 = por %p100, %p101
    %p103 = scmp.ne.s32.totalorder %s95, %s98
    %p104 = scmp.eq.s32.totalorder %s8, 0
    %p105 = por %p103, %p104
    %p106 = scmp.ne.s32.totalorder %s95, %s98
    %p107 = scmp.eq.s32.totalorder %s13, 1
    %p108 = por %p106, %p107
    %p109 = scmp.ne.s32.totalorder %s98, %s99
    %p110 = scmp.eq.s32.totalorder %s13, 0
    %p111 = por %p109, %p110
    %p112 = scmp.ne.s32.totalorder %s98, %s99
    %p113 = scmp.eq.s32.totalorder %s14, 1
    %p114 = por %p112, %p113
    %p116 = scmp.ne.s32.totalorder %s99, %s115
    %p117 = scmp.eq.s32.totalorder %s14, 0
    %p118 = por %p116, %p117
    %p119 = scmp.le.s32.totalorder 1, %s8
    %p120 = scmp.lt.s32.totalorder %s8, 3
    %p121 = pnand %p119, %p120
    %p122 = pneg %p121
    // Predicated region
    $region9: #{encoder_forward.24} parent=5 // pred_check
      _
    $region10: #{encoder_forward.24} parent=5 // pred_check_branch
      %124 = sbr.rel (%p121) target = $region12
    $region11: #{encoder_forward.24} parent=5 // pred_region
      %s125 = ssub.s32 %s8, 1
      // Predicated region
      $region13: #{encoder_forward.24} parent=11 // pred_check
        %p126 = pneg %p83
      $region14: #{encoder_forward.24} parent=11 // pred_check_branch
        %128 = sbr.rel (%p126) target = $region16
      $region15: #{encoder_forward.24} parent=11 // pred_region
        %s129 = smul.u32 32, %s20
        %p130 = scmp.lt.s32.totalorder %s129, 31
        %s131 = scalar_select %p130, %s129, 31
        %p132 = scmp.lt.s32.totalorder %s19, 0
        %s133 = scalar_select %p132, %s19, 0
        %s134 = sadd.s32 %s133, %s131
        %s135 = smul.addr %s134, 4
        %s136 = scalar_lea.vmem %s1, %s135
        %s137 = smul.u32 32, %s20
      $region16: #{encoder_forward.24} parent=11 // pred_fallthru
        _
    $region12: #{encoder_forward.24} parent=5 // pred_fallthru
      _
    %p138 = scmp.lt.s32.totalorder %s8, 2
    // Predicated region
    $region17: #{encoder_forward.24} parent=5 // pred_check
      %p139 = pneg %p138
    $region18: #{encoder_forward.24} parent=5 // pred_check_branch
      %141 = sbr.rel (%p139) target = $region20
    $region19: #{encoder_forward.24} parent=5 // pred_region
      // Predicated region
      $region21: #{encoder_forward.24} parent=19 // pred_check
        %p142 = pneg %p49
      $region22: #{encoder_forward.24} parent=19 // pred_check_branch
        %144 = sbr.rel (%p142) target = $region24
      $region23: #{encoder_forward.24} parent=19 // pred_region
        %s145 = smul.u32 32, %s15
        %s146 = smul.u32 2, %s17
        %p147 = scmp.lt.s32.totalorder %s145, 63
        %s148 = scalar_select %p147, %s145, 63
        %p149 = scmp.lt.s32.totalorder %s146, 1
        %s150 = scalar_select %p149, %s146, 1
        %s151 = smul.addr %s148, 2
        %s152 = sadd.s32 %s150, %s151
        %s153 = smul.addr %s152, 4
        %s154 = scalar_lea.vmem %s0, %s153
        %s155 = smul.u32 32, %s15
        %s156 = smul.u32 2, %s17
      $region24: #{encoder_forward.24} parent=19 // pred_fallthru
        _
    $region20: #{encoder_forward.24} parent=5 // pred_fallthru
      _
    %p157 = scmp.le.s32.totalorder 1, %s8
    %p158 = scmp.lt.s32.totalorder %s8, 3
    %p159 = pnand %p157, %p158
    %p160 = pneg %p159
    // Predicated region
    $region25: #{encoder_forward.24} parent=5 // pred_check
      _
    $region26: #{encoder_forward.24} parent=5 // pred_check_branch
      %162 = sbr.rel (%p159) target = $region28
    $region27: #{encoder_forward.24} parent=5 // pred_region
      %s163 = ssub.s32 %s8, 1
      %s164 = smul.u32 32, %s18
      %s165 = smul.u32 2, %s20
      %p166 = scmp.lt.s32.totalorder %s164, 63
      %s167 = scalar_select %p166, %s164, 63
      %p168 = scmp.lt.s32.totalorder %s165, 1
      %s169 = scalar_select %p168, %s165, 1
      %s170 = smul.addr %s167, 2
      %s171 = sadd.s32 %s169, %s170
      %s172 = smul.addr %s171, 4
      %s173 = scalar_lea.vmem %s0, %s172
      %p174 = pneg %p55
      %p175 = pneg %p52
      %s176 = smul.u32 32, %s20
      %p177 = scmp.lt.s32.totalorder %s176, 31
      %s178 = scalar_select %p177, %s176, 31
      %p179 = scmp.lt.s32.totalorder %s19, 0
      %s180 = scalar_select %p179, %s19, 0
      %s181 = sadd.s32 %s180, %s178
      %s182 = smul.addr %s181, 4
      %s183 = scalar_lea.vmem %s1, %s182
      %p184 = pneg %p83
      %p185 = pneg %p80
      %p186 = pneg %p111
      %p187 = pneg %p108
      %s188 = smul.u32 32, %s18
      %p189 = scmp.lt.s32.totalorder %s188, 63
      %s190 = scalar_select %p189, %s188, 63
      %p191 = scmp.lt.s32.totalorder %s19, 0
      %s192 = scalar_select %p191, %s19, 0
      %s193 = sadd.s32 %s192, %s190
      %s194 = smul.addr %s193, 4
      %s195 = scalar_lea.vmem %s2, %s194
      %s196 = smul.u32 32, %s18
      %s197 = smul.u32 2, %s20
      %p198 = scmp.lt.s32.totalorder %s196, 63
      %s199 = scalar_select %p198, %s196, 63
      %p200 = scmp.lt.s32.totalorder %s197, 1
      %s201 = scalar_select %p200, %s197, 1
      %s202 = smul.addr %s199, 2
      %s203 = sadd.s32 %s201, %s202
      %s204 = smul.addr %s203, 4
      %s205 = scalar_lea.vmem %s0, %s204
      %s206 = smul.u32 32, %s18
      %s207 = smul.u32 2, %s20
      %s208 = smul.u32 32, %s20
      %p209 = scmp.lt.s32.totalorder %s208, 31
      %s210 = scalar_select %p209, %s208, 31
      %p211 = scmp.lt.s32.totalorder %s19, 0
      %s212 = scalar_select %p211, %s19, 0
      %s213 = sadd.s32 %s212, %s210
      %s214 = smul.addr %s213, 4
      %s215 = scalar_lea.vmem %s1, %s214
      %s216 = smul.u32 32, %s20
      %s217 = smul.u32 32, %s18
      %p218 = scmp.lt.s32.totalorder %s217, 63
      %s219 = scalar_select %p218, %s217, 63
      %p220 = scmp.lt.s32.totalorder %s19, 0
      %s221 = scalar_select %p220, %s19, 0
      %s222 = sadd.s32 %s221, %s219
      %s223 = smul.addr %s222, 4
      %s224 = scalar_lea.vmem %s2, %s223
      %s225 = smul.u32 32, %s18
      %p227 = scmp.eq.s32.totalorder %s20, 0
      // Predicated region
      $region29: #{encoder_forward.24} parent=27 // pred_check
        %p228 = pneg %p227
      $region30: #{encoder_forward.24} parent=27 // pred_check_branch
        %230 = sbr.rel (%p228) target = $region32
      $region31: #{encoder_forward.24} parent=27 // pred_region
        %231 = vst [vmem:[#allocation2] sm:$0xff] 0.0
        %232 = vst [vmem:[#allocation2 + $0x8] sm:$0xff] 0.0
        %233 = vst [vmem:[#allocation2 + $0x10] sm:$0xff] 0.0
        %234 = vst [vmem:[#allocation2 + $0x18] sm:$0xff] 0.0
        %235 = vst [vmem:[#allocation2 + $0x20] sm:$0xff] 0.0
        %236 = vst [vmem:[#allocation2 + $0x28] sm:$0xff] 0.0
        %237 = vst [vmem:[#allocation2 + $0x30] sm:$0xff] 0.0
        %238 = vst [vmem:[#allocation2 + $0x38] sm:$0xff] 0.0
        %239 = vst [vmem:[#allocation2 + $0x40] sm:$0xff] 0.0
        %240 = vst [vmem:[#allocation2 + $0x48] sm:$0xff] 0.0
        %241 = vst [vmem:[#allocation2 + $0x50] sm:$0xff] 0.0
        %242 = vst [vmem:[#allocation2 + $0x58] sm:$0xff] 0.0
        %243 = vst [vmem:[#allocation2 + $0x60] sm:$0xff] 0.0
        %244 = vst [vmem:[#allocation2 + $0x68] sm:$0xff] 0.0
        %245 = vst [vmem:[#allocation2 + $0x70] sm:$0xff] 0.0
        %246 = vst [vmem:[#allocation2 + $0x78] sm:$0xff] 0.0
        %247 = vst [vmem:[#allocation2 + $0x80] sm:$0xff] 0.0
        %248 = vst [vmem:[#allocation2 + $0x88] sm:$0xff] 0.0
        %249 = vst [vmem:[#allocation2 + $0x90] sm:$0xff] 0.0
        %250 = vst [vmem:[#allocation2 + $0x98] sm:$0xff] 0.0
        %251 = vst [vmem:[#allocation2 + $0xa0] sm:$0xff] 0.0
        %252 = vst [vmem:[#allocation2 + $0xa8] sm:$0xff] 0.0
        %253 = vst [vmem:[#allocation2 + $0xb0] sm:$0xff] 0.0
        %254 = vst [vmem:[#allocation2 + $0xb8] sm:$0xff] 0.0
        %255 = vst [vmem:[#allocation2 + $0xc0] sm:$0xff] 0.0
        %256 = vst [vmem:[#allocation2 + $0xc8] sm:$0xff] 0.0
        %257 = vst [vmem:[#allocation2 + $0xd0] sm:$0xff] 0.0
        %258 = vst [vmem:[#allocation2 + $0xd8] sm:$0xff] 0.0
        %259 = vst [vmem:[#allocation2 + $0xe0] sm:$0xff] 0.0
        %260 = vst [vmem:[#allocation2 + $0xe8] sm:$0xff] 0.0
        %261 = vst [vmem:[#allocation2 + $0xf0] sm:$0xff] 0.0
        %262 = vst [vmem:[#allocation2 + $0xf8] sm:$0xff] 0.0
      $region32: #{encoder_forward.24} parent=27 // pred_fallthru
        _
      %v263 = vld [vmem:[#allocation2] sm:$0xff]
      %v264 = vld [vmem:[#allocation2 + $0x8] sm:$0xff]
      %v265 = vld [vmem:[#allocation2 + $0x10] sm:$0xff]
      %v266 = vld [vmem:[#allocation2 + $0x18] sm:$0xff]
      %v267 = vld [vmem:[#allocation2 + $0x20] sm:$0xff]
      %v268 = vld [vmem:[#allocation2 + $0x28] sm:$0xff]
      %v269 = vld [vmem:[#allocation2 + $0x30] sm:$0xff]
      %v270 = vld [vmem:[#allocation2 + $0x38] sm:$0xff]
      %v271 = vld [vmem:[#allocation2 + $0x40] sm:$0xff]
      %v272 = vld [vmem:[#allocation2 + $0x48] sm:$0xff]
      %v273 = vld [vmem:[#allocation2 + $0x50] sm:$0xff]
      %v274 = vld [vmem:[#allocation2 + $0x58] sm:$0xff]
      %v275 = vld [vmem:[#allocation2 + $0x60] sm:$0xff]
      %v276 = vld [vmem:[#allocation2 + $0x68] sm:$0xff]
      %v277 = vld [vmem:[#allocation2 + $0x70] sm:$0xff]
      %v278 = vld [vmem:[#allocation2 + $0x78] sm:$0xff]
      %v279 = vld [vmem:[#allocation2 + $0x80] sm:$0xff]
      %v280 = vld [vmem:[#allocation2 + $0x88] sm:$0xff]
      %v281 = vld [vmem:[#allocation2 + $0x90] sm:$0xff]
      %v282 = vld [vmem:[#allocation2 + $0x98] sm:$0xff]
      %v283 = vld [vmem:[#allocation2 + $0xa0] sm:$0xff]
      %v284 = vld [vmem:[#allocation2 + $0xa8] sm:$0xff]
      %v285 = vld [vmem:[#allocation2 + $0xb0] sm:$0xff]
      %v286 = vld [vmem:[#allocation2 + $0xb8] sm:$0xff]
      %v287 = vld [vmem:[#allocation2 + $0xc0] sm:$0xff]
      %v288 = vld [vmem:[#allocation2 + $0xc8] sm:$0xff]
      %v289 = vld [vmem:[#allocation2 + $0xd0] sm:$0xff]
      %v290 = vld [vmem:[#allocation2 + $0xd8] sm:$0xff]
      %v291 = vld [vmem:[#allocation2 + $0xe0] sm:$0xff]
      %v292 = vld [vmem:[#allocation2 + $0xe8] sm:$0xff]
      %v293 = vld [vmem:[#allocation2 + $0xf0] sm:$0xff]
      %v294 = vld [vmem:[#allocation2 + $0xf8] sm:$0xff]
      %v295 = vld [vmem:[%s205] sm:$0xff]
      %v296 = vld [vmem:[%s205 + $0x8] sm:$0xff]
      %v297 = vld [vmem:[%s205 + $0x10] sm:$0xff]
      %v298 = vld [vmem:[%s205 + $0x18] sm:$0xff]
      %v299 = vld [vmem:[%s205 + $0x20] sm:$0xff]
      %v300 = vld [vmem:[%s205 + $0x28] sm:$0xff]
      %v301 = vld [vmem:[%s205 + $0x30] sm:$0xff]
      %v302 = vld [vmem:[%s205 + $0x38] sm:$0xff]
      %v303 = vld [vmem:[%s205 + $0x40] sm:$0xff]
      %v304 = vld [vmem:[%s205 + $0x48] sm:$0xff]
      %v305 = vld [vmem:[%s205 + $0x50] sm:$0xff]
      %v306 = vld [vmem:[%s205 + $0x58] sm:$0xff]
      %v307 = vld [vmem:[%s205 + $0x60] sm:$0xff]
      %v308 = vld [vmem:[%s205 + $0x68] sm:$0xff]
      %v309 = vld [vmem:[%s205 + $0x70] sm:$0xff]
      %v310 = vld [vmem:[%s205 + $0x78] sm:$0xff]
      %v311 = vld [vmem:[%s205 + $0x80] sm:$0xff]
      %v312 = vld [vmem:[%s205 + $0x88] sm:$0xff]
      %v313 = vld [vmem:[%s205 + $0x90] sm:$0xff]
      %v314 = vld [vmem:[%s205 + $0x98] sm:$0xff]
      %v315 = vld [vmem:[%s205 + $0xa0] sm:$0xff]
      %v316 = vld [vmem:[%s205 + $0xa8] sm:$0xff]
      %v317 = vld [vmem:[%s205 + $0xb0] sm:$0xff]
      %v318 = vld [vmem:[%s205 + $0xb8] sm:$0xff]
      %v319 = vld [vmem:[%s205 + $0xc0] sm:$0xff]
      %v320 = vld [vmem:[%s205 + $0xc8] sm:$0xff]
      %v321 = vld [vmem:[%s205 + $0xd0] sm:$0xff]
      %v322 = vld [vmem:[%s205 + $0xd8] sm:$0xff]
      %v323 = vld [vmem:[%s205 + $0xe0] sm:$0xff]
      %v324 = vld [vmem:[%s205 + $0xe8] sm:$0xff]
      %v325 = vld [vmem:[%s205 + $0xf0] sm:$0xff]
      %v326 = vld [vmem:[%s205 + $0xf8] sm:$0xff]
      %v327 = vld [vmem:[%s215] sm:$0xf]
      %v328 = vld [vmem:[%s215 + $0x4] sm:$0xf]
      %v329 = vld [vmem:[%s215 + $0x8] sm:$0xf]
      %v330 = vld [vmem:[%s215 + $0xc] sm:$0xf]
      %v331 = vld [vmem:[%s215 + $0x10] sm:$0xf]
      %v332 = vld [vmem:[%s215 + $0x14] sm:$0xf]
      %v333 = vld [vmem:[%s215 + $0x18] sm:$0xf]
      %v334 = vld [vmem:[%s215 + $0x1c] sm:$0xf]
      %v335 = vld [vmem:[%s215 + $0x20] sm:$0xf]
      %v336 = vld [vmem:[%s215 + $0x24] sm:$0xf]
      %v337 = vld [vmem:[%s215 + $0x28] sm:$0xf]
      %v338 = vld [vmem:[%s215 + $0x2c] sm:$0xf]
      %v339 = vld [vmem:[%s215 + $0x30] sm:$0xf]
      %v340 = vld [vmem:[%s215 + $0x34] sm:$0xf]
      %v341 = vld [vmem:[%s215 + $0x38] sm:$0xf]
      %v342 = vld [vmem:[%s215 + $0x3c] sm:$0xf]
      %v343 = vld [vmem:[%s215 + $0x40] sm:$0xf]
      %v344 = vld [vmem:[%s215 + $0x44] sm:$0xf]
      %v345 = vld [vmem:[%s215 + $0x48] sm:$0xf]
      %v346 = vld [vmem:[%s215 + $0x4c] sm:$0xf]
      %v347 = vld [vmem:[%s215 + $0x50] sm:$0xf]
      %v348 = vld [vmem:[%s215 + $0x54] sm:$0xf]
      %v349 = vld [vmem:[%s215 + $0x58] sm:$0xf]
      %v350 = vld [vmem:[%s215 + $0x5c] sm:$0xf]
      %v351 = vld [vmem:[%s215 + $0x60] sm:$0xf]
      %v352 = vld [vmem:[%s215 + $0x64] sm:$0xf]
      %v353 = vld [vmem:[%s215 + $0x68] sm:$0xf]
      %v354 = vld [vmem:[%s215 + $0x6c] sm:$0xf]
      %v355 = vld [vmem:[%s215 + $0x70] sm:$0xf]
      %v356 = vld [vmem:[%s215 + $0x74] sm:$0xf]
      %v357 = vld [vmem:[%s215 + $0x78] sm:$0xf]
      %v358 = vld [vmem:[%s215 + $0x7c] sm:$0xf]
      %v391 = vunpack.c.l.b16 %v295
      %v392 = vunpack.c.h.b16 %v295
      %v393 = vunpack.c.l.b16 %v296
      %v394 = vunpack.c.h.b16 %v296
      %v395 = vunpack.c.l.b16 %v297
      %v396 = vunpack.c.h.b16 %v297
      %v397 = vunpack.c.l.b16 %v298
      %v398 = vunpack.c.h.b16 %v298
      %v399 = vunpack.c.l.b16 %v299
      %v400 = vunpack.c.h.b16 %v299
      %v401 = vunpack.c.l.b16 %v300
      %v402 = vunpack.c.h.b16 %v300
      %v403 = vunpack.c.l.b16 %v301
      %v404 = vunpack.c.h.b16 %v301
      %v405 = vunpack.c.l.b16 %v302
      %v406 = vunpack.c.h.b16 %v302
      %v407 = vunpack.c.l.b16 %v303
      %v408 = vunpack.c.h.b16 %v303
      %v409 = vunpack.c.l.b16 %v304
      %v410 = vunpack.c.h.b16 %v304
      %v411 = vunpack.c.l.b16 %v305
      %v412 = vunpack.c.h.b16 %v305
      %v413 = vunpack.c.l.b16 %v306
      %v414 = vunpack.c.h.b16 %v306
      %v415 = vunpack.c.l.b16 %v307
      %v416 = vunpack.c.h.b16 %v307
      %v417 = vunpack.c.l.b16 %v308
      %v418 = vunpack.c.h.b16 %v308
      %v419 = vunpack.c.l.b16 %v309
      %v420 = vunpack.c.h.b16 %v309
      %v421 = vunpack.c.l.b16 %v310
      %v422 = vunpack.c.h.b16 %v310
      %v423 = vunpack.c.l.b16 %v311
      %v424 = vunpack.c.h.b16 %v311
      %v425 = vunpack.c.l.b16 %v312
      %v426 = vunpack.c.h.b16 %v312
      %v427 = vunpack.c.l.b16 %v313
      %v428 = vunpack.c.h.b16 %v313
      %v429 = vunpack.c.l.b16 %v314
      %v430 = vunpack.c.h.b16 %v314
      %v431 = vunpack.c.l.b16 %v315
      %v432 = vunpack.c.h.b16 %v315
      %v433 = vunpack.c.l.b16 %v316
      %v434 = vunpack.c.h.b16 %v316
      %v435 = vunpack.c.l.b16 %v317
      %v436 = vunpack.c.h.b16 %v317
      %v437 = vunpack.c.l.b16 %v318
      %v438 = vunpack.c.h.b16 %v318
      %v439 = vunpack.c.l.b16 %v319
      %v440 = vunpack.c.h.b16 %v319
      %v441 = vunpack.c.l.b16 %v320
      %v442 = vunpack.c.h.b16 %v320
      %v443 = vunpack.c.l.b16 %v321
      %v444 = vunpack.c.h.b16 %v321
      %v445 = vunpack.c.l.b16 %v322
      %v446 = vunpack.c.h.b16 %v322
      %v447 = vunpack.c.l.b16 %v323
      %v448 = vunpack.c.h.b16 %v323
      %v449 = vunpack.c.l.b16 %v324
      %v450 = vunpack.c.h.b16 %v324
      %v451 = vunpack.c.l.b16 %v325
      %v452 = vunpack.c.h.b16 %v325
      %v453 = vunpack.c.l.b16 %v326
      %v454 = vunpack.c.h.b16 %v326
      %v455 = vpack.c.b16 %v393, %v391
      %v456 = vpack.c.b16 %v394, %v392
      %v457 = vpack.c.b16 %v397, %v395
      %v458 = vpack.c.b16 %v398, %v396
      %v459 = vpack.c.b16 %v401, %v399
      %v460 = vpack.c.b16 %v402, %v400
      %v461 = vpack.c.b16 %v405, %v403
      %v462 = vpack.c.b16 %v406, %v404
      %v463 = vpack.c.b16 %v409, %v407
      %v464 = vpack.c.b16 %v410, %v408
      %v465 = vpack.c.b16 %v413, %v411
      %v466 = vpack.c.b16 %v414, %v412
      %v467 = vpack.c.b16 %v417, %v415
      %v468 = vpack.c.b16 %v418, %v416
      %v469 = vpack.c.b16 %v421, %v419
      %v470 = vpack.c.b16 %v422, %v420
      %v471 = vpack.c.b16 %v425, %v423
      %v472 = vpack.c.b16 %v426, %v424
      %v473 = vpack.c.b16 %v429, %v427
      %v474 = vpack.c.b16 %v430, %v428
      %v475 = vpack.c.b16 %v433, %v431
      %v476 = vpack.c.b16 %v434, %v432
      %v477 = vpack.c.b16 %v437, %v435
      %v478 = vpack.c.b16 %v438, %v436
      %v479 = vpack.c.b16 %v441, %v439
      %v480 = vpack.c.b16 %v442, %v440
      %v481 = vpack.c.b16 %v445, %v443
      %v482 = vpack.c.b16 %v446, %v444
      %v483 = vpack.c.b16 %v449, %v447
      %v484 = vpack.c.b16 %v450, %v448
      %v485 = vpack.c.b16 %v453, %v451
      %v486 = vpack.c.b16 %v454, %v452
      %v551 = vunpack.c.l.b16 %v327
      %v552 = vunpack.c.l.b16 %v328
      %v553 = vunpack.c.l.b16 %v329
      %v554 = vunpack.c.l.b16 %v330
      %v555 = vunpack.c.l.b16 %v331
      %v556 = vunpack.c.l.b16 %v332
      %v557 = vunpack.c.l.b16 %v333
      %v558 = vunpack.c.l.b16 %v334
      %v559 = vunpack.c.l.b16 %v335
      %v560 = vunpack.c.l.b16 %v336
      %v561 = vunpack.c.l.b16 %v337
      %v562 = vunpack.c.l.b16 %v338
      %v563 = vunpack.c.l.b16 %v339
      %v564 = vunpack.c.l.b16 %v340
      %v565 = vunpack.c.l.b16 %v341
      %v566 = vunpack.c.l.b16 %v342
      %v567 = vunpack.c.l.b16 %v343
      %v568 = vunpack.c.l.b16 %v344
      %v569 = vunpack.c.l.b16 %v345
      %v570 = vunpack.c.l.b16 %v346
      %v571 = vunpack.c.l.b16 %v347
      %v572 = vunpack.c.l.b16 %v348
      %v573 = vunpack.c.l.b16 %v349
      %v574 = vunpack.c.l.b16 %v350
      %v575 = vunpack.c.l.b16 %v351
      %v576 = vunpack.c.l.b16 %v352
      %v577 = vunpack.c.l.b16 %v353
      %v578 = vunpack.c.l.b16 %v354
      %v579 = vunpack.c.l.b16 %v355
      %v580 = vunpack.c.l.b16 %v356
      %v581 = vunpack.c.l.b16 %v357
      %v582 = vunpack.c.l.b16 %v358
      %v583 = vpack.c.b16 %v552, %v551
      %v584 = vpack.c.b16 %v554, %v553
      %v585 = vpack.c.b16 %v556, %v555
      %v586 = vpack.c.b16 %v558, %v557
      %v587 = vpack.c.b16 %v560, %v559
      %v588 = vpack.c.b16 %v562, %v561
      %v589 = vpack.c.b16 %v564, %v563
      %v590 = vpack.c.b16 %v566, %v565
      %v591 = vpack.c.b16 %v568, %v567
      %v592 = vpack.c.b16 %v570, %v569
      %v593 = vpack.c.b16 %v572, %v571
      %v594 = vpack.c.b16 %v574, %v573
      %v595 = vpack.c.b16 %v576, %v575
      %v596 = vpack.c.b16 %v578, %v577
      %v597 = vpack.c.b16 %v580, %v579
      %v598 = vpack.c.b16 %v582, %v581
      %615 = vmatprep.subr.bf16.mxu0 0
      %616 = vmatpush1.bf16.msra.mxu0 %v583
      %617 = vmatprep.subr.bf16.mxu0 0
      %618 = vmatpush1.bf16.msra.mxu0 %v584
      %619 = vmatprep.subr.bf16.mxu0 0
      %620 = vmatpush1.bf16.msra.mxu0 %v585
      %621 = vmatprep.subr.bf16.mxu0 0
      %622 = vmatpush1.bf16.msra.mxu0 %v586
      %623 = vmatprep.subr.bf16.mxu0 0
      %624 = vmatpush1.bf16.msra.mxu0 %v587
      %625 = vmatprep.subr.bf16.mxu0 0
      %626 = vmatpush1.bf16.msra.mxu0 %v588
      %627 = vmatprep.subr.bf16.mxu0 0
      %628 = vmatpush1.bf16.msra.mxu0 %v589
      %629 = vmatprep.subr.bf16.mxu0 0
      %630 = vmatpush1.bf16.msra.mxu0 %v590
      %631 = vmatprep.subr.bf16.mxu0 0
      %632 = vmatpush1.bf16.msra.mxu0 %v591
      %633 = vmatprep.subr.bf16.mxu0 0
      %634 = vmatpush1.bf16.msra.mxu0 %v592
      %635 = vmatprep.subr.bf16.mxu0 0
      %636 = vmatpush1.bf16.msra.mxu0 %v593
      %637 = vmatprep.subr.bf16.mxu0 0
      %638 = vmatpush1.bf16.msra.mxu0 %v594
      %639 = vmatprep.subr.bf16.mxu0 0
      %640 = vmatpush1.bf16.msra.mxu0 %v595
      %641 = vmatprep.subr.bf16.mxu0 0
      %642 = vmatpush1.bf16.msra.mxu0 %v596
      %643 = vmatprep.subr.bf16.mxu0 0
      %644 = vmatpush1.bf16.msra.mxu0 %v597
      %645 = vmatprep.subr.bf16.mxu0 0
      %646 = vmatpush1.bf16.msra.mxu0 %v598
      %647 = vmatprep.mubr.bf16.mxu0 %v456
      %648 = vmatmul.mubr.bf16.gmra.mrb[0].mxu0 %v455
      %v649 = vpop.f32.mrb[0].mxu0
      %v650 = vadd.f32 0.0, %v649
      %v651 = vpop.f32.mrb[0].mxu0
      %v652 = vpop.f32.mrb[0].mxu0
      %v653 = vadd.f32 0.0, %v652
      %v654 = vpop.f32.mrb[0].mxu0
      %655 = vmatprep.mubr.bf16.mxu0 %v458
      %656 = vmatmul.mubr.bf16.gmra.mrb[0].mxu0 %v457
      %v657 = vpop.f32.mrb[0].mxu0
      %v658 = vadd.f32 0.0, %v657
      %v659 = vpop.f32.mrb[0].mxu0
      %v660 = vpop.f32.mrb[0].mxu0
      %v661 = vadd.f32 0.0, %v660
      %v662 = vpop.f32.mrb[0].mxu0
      %663 = vmatprep.mubr.bf16.mxu0 %v460
      %664 = vmatmul.mubr.bf16.gmra.mrb[0].mxu0 %v459
      %v665 = vpop.f32.mrb[0].mxu0
      %v666 = vadd.f32 0.0, %v665
      %v667 = vpop.f32.mrb[0].mxu0
      %v668 = vpop.f32.mrb[0].mxu0
      %v669 = vadd.f32 0.0, %v668
      %v670 = vpop.f32.mrb[0].mxu0
      %671 = vmatprep.mubr.bf16.mxu0 %v462
      %672 = vmatmul.mubr.bf16.gmra.mrb[0].mxu0 %v461
      %v673 = vpop.f32.mrb[0].mxu0
      %v674 = vadd.f32 0.0, %v673
      %v675 = vpop.f32.mrb[0].mxu0
      %v676 = vpop.f32.mrb[0].mxu0
      %v677 = vadd.f32 0.0, %v676
      %v678 = vpop.f32.mrb[0].mxu0
      %679 = vmatprep.mubr.bf16.mxu0 %v464
      %680 = vmatmul.mubr.bf16.gmra.mrb[0].mxu0 %v463
      %v681 = vpop.f32.mrb[0].mxu0
      %v682 = vadd.f32 0.0, %v681
      %v683 = vpop.f32.mrb[0].mxu0
      %v684 = vpop.f32.mrb[0].mxu0
      %v685 = vadd.f32 0.0, %v684
      %v686 = vpop.f32.mrb[0].mxu0
      %687 = vmatprep.mubr.bf16.mxu0 %v466
      %688 = vmatmul.mubr.bf16.gmra.mrb[0].mxu0 %v465
      %v689 = vpop.f32.mrb[0].mxu0
      %v690 = vadd.f32 0.0, %v689
      %v691 = vpop.f32.mrb[0].mxu0
      %v692 = vpop.f32.mrb[0].mxu0
      %v693 = vadd.f32 0.0, %v692
      %v694 = vpop.f32.mrb[0].mxu0
      %695 = vmatprep.mubr.bf16.mxu0 %v468
      %696 = vmatmul.mubr.bf16.gmra.mrb[0].mxu0 %v467
      %v697 = vpop.f32.mrb[0].mxu0
      %v698 = vadd.f32 0.0, %v697
      %v699 = vpop.f32.mrb[0].mxu0
      %v700 = vpop.f32.mrb[0].mxu0
      %v701 = vadd.f32 0.0, %v700
      %v702 = vpop.f32.mrb[0].mxu0
      %703 = vmatprep.mubr.bf16.mxu0 %v470
      %704 = vmatmul.mubr.bf16.gmra.mrb[0].mxu0 %v469
      %v705 = vpop.f32.mrb[0].mxu0
      %v706 = vadd.f32 0.0, %v705
      %v707 = vpop.f32.mrb[0].mxu0
      %v708 = vpop.f32.mrb[0].mxu0
      %v709 = vadd.f32 0.0, %v708
      %v710 = vpop.f32.mrb[0].mxu0
      %711 = vmatprep.mubr.bf16.mxu0 %v472
      %712 = vmatmul.mubr.bf16.gmra.mrb[0].mxu0 %v471
      %v713 = vpop.f32.mrb[0].mxu0
      %v714 = vadd.f32 0.0, %v713
      %v715 = vpop.f32.mrb[0].mxu0
      %v716 = vpop.f32.mrb[0].mxu0
      %v717 = vadd.f32 0.0, %v716
      %v718 = vpop.f32.mrb[0].mxu0
      %719 = vmatprep.mubr.bf16.mxu0 %v474
      %720 = vmatmul.mubr.bf16.gmra.mrb[0].mxu0 %v473
      %v721 = vpop.f32.mrb[0].mxu0
      %v722 = vadd.f32 0.0, %v721
      %v723 = vpop.f32.mrb[0].mxu0
      %v724 = vpop.f32.mrb[0].mxu0
      %v725 = vadd.f32 0.0, %v724
      %v726 = vpop.f32.mrb[0].mxu0
      %727 = vmatprep.mubr.bf16.mxu0 %v476
      %728 = vmatmul.mubr.bf16.gmra.mrb[0].mxu0 %v475
      %v729 = vpop.f32.mrb[0].mxu0
      %v730 = vadd.f32 0.0, %v729
      %v731 = vpop.f32.mrb[0].mxu0
      %v732 = vpop.f32.mrb[0].mxu0
      %v733 = vadd.f32 0.0, %v732
      %v734 = vpop.f32.mrb[0].mxu0
      %735 = vmatprep.mubr.bf16.mxu0 %v478
      %736 = vmatmul.mubr.bf16.gmra.mrb[0].mxu0 %v477
      %v737 = vpop.f32.mrb[0].mxu0
      %v738 = vadd.f32 0.0, %v737
      %v739 = vpop.f32.mrb[0].mxu0
      %v740 = vpop.f32.mrb[0].mxu0
      %v741 = vadd.f32 0.0, %v740
      %v742 = vpop.f32.mrb[0].mxu0
      %743 = vmatprep.mubr.bf16.mxu0 %v480
      %744 = vmatmul.mubr.bf16.gmra.mrb[0].mxu0 %v479
      %v745 = vpop.f32.mrb[0].mxu0
      %v746 = vadd.f32 0.0, %v745
      %v747 = vpop.f32.mrb[0].mxu0
      %v748 = vpop.f32.mrb[0].mxu0
      %v749 = vadd.f32 0.0, %v748
      %v750 = vpop.f32.mrb[0].mxu0
      %751 = vmatprep.mubr.bf16.mxu0 %v482
      %752 = vmatmul.mubr.bf16.gmra.mrb[0].mxu0 %v481
      %v753 = vpop.f32.mrb[0].mxu0
      %v754 = vadd.f32 0.0, %v753
      %v755 = vpop.f32.mrb[0].mxu0
      %v756 = vpop.f32.mrb[0].mxu0
      %v757 = vadd.f32 0.0, %v756
      %v758 = vpop.f32.mrb[0].mxu0
      %759 = vmatprep.mubr.bf16.mxu0 %v484
      %760 = vmatmul.mubr.bf16.gmra.mrb[0].mxu0 %v483
      %v761 = vpop.f32.mrb[0].mxu0
      %v762 = vadd.f32 0.0, %v761
      %v763 = vpop.f32.mrb[0].mxu0
      %v764 = vpop.f32.mrb[0].mxu0
      %v765 = vadd.f32 0.0, %v764
      %v766 = vpop.f32.mrb[0].mxu0
      %767 = vmatprep.mubr.bf16.mxu0 %v486
      %768 = vmatmul.mubr.bf16.gmra.mrb[0].mxu0 %v485
      %v769 = vpop.f32.mrb[0].mxu0
      %v770 = vadd.f32 0.0, %v769
      %v771 = vpop.f32.mrb[0].mxu0
      %v772 = vpop.f32.mrb[0].mxu0
      %v773 = vadd.f32 0.0, %v772
      %v774 = vpop.f32.mrb[0].mxu0
      %775 = vdwg.mxu0
      %v776 = vadd.f32 %v263, %v650
      %v777 = vadd.f32 %v264, %v653
      %v778 = vadd.f32 %v265, %v658
      %v779 = vadd.f32 %v266, %v661
      %v780 = vadd.f32 %v267, %v666
      %v781 = vadd.f32 %v268, %v669
      %v782 = vadd.f32 %v269, %v674
      %v783 = vadd.f32 %v270, %v677
      %v784 = vadd.f32 %v271, %v682
      %v785 = vadd.f32 %v272, %v685
      %v786 = vadd.f32 %v273, %v690
      %v787 = vadd.f32 %v274, %v693
      %v788 = vadd.f32 %v275, %v698
      %v789 = vadd.f32 %v276, %v701
      %v790 = vadd.f32 %v277, %v706
      %v791 = vadd.f32 %v278, %v709
      %v792 = vadd.f32 %v279, %v714
      %v793 = vadd.f32 %v280, %v717
      %v794 = vadd.f32 %v281, %v722
      %v795 = vadd.f32 %v282, %v725
      %v796 = vadd.f32 %v283, %v730
      %v797 = vadd.f32 %v284, %v733
      %v798 = vadd.f32 %v285, %v738
      %v799 = vadd.f32 %v286, %v741
      %v800 = vadd.f32 %v287, %v746
      %v801 = vadd.f32 %v288, %v749
      %v802 = vadd.f32 %v289, %v754
      %v803 = vadd.f32 %v290, %v757
      %v804 = vadd.f32 %v291, %v762
      %v805 = vadd.f32 %v292, %v765
      %v806 = vadd.f32 %v293, %v770
      %v807 = vadd.f32 %v294, %v773
      %808 = vst [vmem:[#allocation2] sm:$0xff] %v776
      %809 = vst [vmem:[#allocation2 + $0x8] sm:$0xff] %v777
      %810 = vst [vmem:[#allocation2 + $0x10] sm:$0xff] %v778
      %811 = vst [vmem:[#allocation2 + $0x18] sm:$0xff] %v779
      %812 = vst [vmem:[#allocation2 + $0x20] sm:$0xff] %v780
      %813 = vst [vmem:[#allocation2 + $0x28] sm:$0xff] %v781
      %814 = vst [vmem:[#allocation2 + $0x30] sm:$0xff] %v782
      %815 = vst [vmem:[#allocation2 + $0x38] sm:$0xff] %v783
      %816 = vst [vmem:[#allocation2 + $0x40] sm:$0xff] %v784
      %817 = vst [vmem:[#allocation2 + $0x48] sm:$0xff] %v785
      %818 = vst [vmem:[#allocation2 + $0x50] sm:$0xff] %v786
      %819 = vst [vmem:[#allocation2 + $0x58] sm:$0xff] %v787
      %820 = vst [vmem:[#allocation2 + $0x60] sm:$0xff] %v788
      %821 = vst [vmem:[#allocation2 + $0x68] sm:$0xff] %v789
      %822 = vst [vmem:[#allocation2 + $0x70] sm:$0xff] %v790
      %823 = vst [vmem:[#allocation2 + $0x78] sm:$0xff] %v791
      %824 = vst [vmem:[#allocation2 + $0x80] sm:$0xff] %v792
      %825 = vst [vmem:[#allocation2 + $0x88] sm:$0xff] %v793
      %826 = vst [vmem:[#allocation2 + $0x90] sm:$0xff] %v794
      %827 = vst [vmem:[#allocation2 + $0x98] sm:$0xff] %v795
      %828 = vst [vmem:[#allocation2 + $0xa0] sm:$0xff] %v796
      %829 = vst [vmem:[#allocation2 + $0xa8] sm:$0xff] %v797
      %830 = vst [vmem:[#allocation2 + $0xb0] sm:$0xff] %v798
      %831 = vst [vmem:[#allocation2 + $0xb8] sm:$0xff] %v799
      %832 = vst [vmem:[#allocation2 + $0xc0] sm:$0xff] %v800
      %833 = vst [vmem:[#allocation2 + $0xc8] sm:$0xff] %v801
      %834 = vst [vmem:[#allocation2 + $0xd0] sm:$0xff] %v802
      %835 = vst [vmem:[#allocation2 + $0xd8] sm:$0xff] %v803
      %836 = vst [vmem:[#allocation2 + $0xe0] sm:$0xff] %v804
      %837 = vst [vmem:[#allocation2 + $0xe8] sm:$0xff] %v805
      %838 = vst [vmem:[#allocation2 + $0xf0] sm:$0xff] %v806
      %839 = vst [vmem:[#allocation2 + $0xf8] sm:$0xff] %v807
      // Predicated region
      $region33: #{encoder_forward.24} parent=27 // pred_check
        %p840 = pneg %p227
      $region34: #{encoder_forward.24} parent=27 // pred_check_branch
        %842 = sbr.rel (%p840) target = $region36
      $region35: #{encoder_forward.24} parent=27 // pred_region
        %v843 = vld [vmem:[#allocation2] sm:$0xff]
        %v844 = vld [vmem:[#allocation2 + $0x8] sm:$0xff]
        %v845 = vld [vmem:[#allocation2 + $0x10] sm:$0xff]
        %v846 = vld [vmem:[#allocation2 + $0x18] sm:$0xff]
        %v847 = vld [vmem:[#allocation2 + $0x20] sm:$0xff]
        %v848 = vld [vmem:[#allocation2 + $0x28] sm:$0xff]
        %v849 = vld [vmem:[#allocation2 + $0x30] sm:$0xff]
        %v850 = vld [vmem:[#allocation2 + $0x38] sm:$0xff]
        %v851 = vld [vmem:[#allocation2 + $0x40] sm:$0xff]
        %v852 = vld [vmem:[#allocation2 + $0x48] sm:$0xff]
        %v853 = vld [vmem:[#allocation2 + $0x50] sm:$0xff]
        %v854 = vld [vmem:[#allocation2 + $0x58] sm:$0xff]
        %v855 = vld [vmem:[#allocation2 + $0x60] sm:$0xff]
        %v856 = vld [vmem:[#allocation2 + $0x68] sm:$0xff]
        %v857 = vld [vmem:[#allocation2 + $0x70] sm:$0xff]
        %v858 = vld [vmem:[#allocation2 + $0x78] sm:$0xff]
        %v859 = vld [vmem:[#allocation2 + $0x80] sm:$0xff]
        %v860 = vld [vmem:[#allocation2 + $0x88] sm:$0xff]
        %v861 = vld [vmem:[#allocation2 + $0x90] sm:$0xff]
        %v862 = vld [vmem:[#allocation2 + $0x98] sm:$0xff]
        %v863 = vld [vmem:[#allocation2 + $0xa0] sm:$0xff]
        %v864 = vld [vmem:[#allocation2 + $0xa8] sm:$0xff]
        %v865 = vld [vmem:[#allocation2 + $0xb0] sm:$0xff]
        %v866 = vld [vmem:[#allocation2 + $0xb8] sm:$0xff]
        %v867 = vld [vmem:[#allocation2 + $0xc0] sm:$0xff]
        %v868 = vld [vmem:[#allocation2 + $0xc8] sm:$0xff]
        %v869 = vld [vmem:[#allocation2 + $0xd0] sm:$0xff]
        %v870 = vld [vmem:[#allocation2 + $0xd8] sm:$0xff]
        %v871 = vld [vmem:[#allocation2 + $0xe0] sm:$0xff]
        %v872 = vld [vmem:[#allocation2 + $0xe8] sm:$0xff]
        %v873 = vld [vmem:[#allocation2 + $0xf0] sm:$0xff]
        %v874 = vld [vmem:[#allocation2 + $0xf8] sm:$0xff]
        %v875 = vpack.c.bf16 %v844, %v843
        %v876 = vpack.c.bf16 %v846, %v845
        %v877 = vpack.c.bf16 %v848, %v847
        %v878 = vpack.c.bf16 %v850, %v849
        %v879 = vpack.c.bf16 %v852, %v851
        %v880 = vpack.c.bf16 %v854, %v853
        %v881 = vpack.c.bf16 %v856, %v855
        %v882 = vpack.c.bf16 %v858, %v857
        %v883 = vpack.c.bf16 %v860, %v859
        %v884 = vpack.c.bf16 %v862, %v861
        %v885 = vpack.c.bf16 %v864, %v863
        %v886 = vpack.c.bf16 %v866, %v865
        %v887 = vpack.c.bf16 %v868, %v867
        %v888 = vpack.c.bf16 %v870, %v869
        %v889 = vpack.c.bf16 %v872, %v871
        %v890 = vpack.c.bf16 %v874, %v873
        %v907 = vunpack.c.l.b16 %v875
        %v908 = vunpack.c.h.b16 %v875
        %v909 = vunpack.c.l.b16 %v876
        %v910 = vunpack.c.h.b16 %v876
        %v911 = vunpack.c.l.b16 %v877
        %v912 = vunpack.c.h.b16 %v877
        %v913 = vunpack.c.l.b16 %v878
        %v914 = vunpack.c.h.b16 %v878
        %v915 = vunpack.c.l.b16 %v879
        %v916 = vunpack.c.h.b16 %v879
        %v917 = vunpack.c.l.b16 %v880
        %v918 = vunpack.c.h.b16 %v880
        %v919 = vunpack.c.l.b16 %v881
        %v920 = vunpack.c.h.b16 %v881
        %v921 = vunpack.c.l.b16 %v882
        %v922 = vunpack.c.h.b16 %v882
        %v923 = vunpack.c.l.b16 %v883
        %v924 = vunpack.c.h.b16 %v883
        %v925 = vunpack.c.l.b16 %v884
        %v926 = vunpack.c.h.b16 %v884
        %v927 = vunpack.c.l.b16 %v885
        %v928 = vunpack.c.h.b16 %v885
        %v929 = vunpack.c.l.b16 %v886
        %v930 = vunpack.c.h.b16 %v886
        %v931 = vunpack.c.l.b16 %v887
        %v932 = vunpack.c.h.b16 %v887
        %v933 = vunpack.c.l.b16 %v888
        %v934 = vunpack.c.h.b16 %v888
        %v935 = vunpack.c.l.b16 %v889
        %v936 = vunpack.c.h.b16 %v889
        %v937 = vunpack.c.l.b16 %v890
        %v938 = vunpack.c.h.b16 %v890
        %v939 = vpack.c.b16 %v907, %v907
        %v940 = vpack.c.b16 %v908, %v908
        %v941 = vpack.c.b16 %v909, %v909
        %v942 = vpack.c.b16 %v910, %v910
        %v943 = vpack.c.b16 %v911, %v911
        %v944 = vpack.c.b16 %v912, %v912
        %v945 = vpack.c.b16 %v913, %v913
        %v946 = vpack.c.b16 %v914, %v914
        %v947 = vpack.c.b16 %v915, %v915
        %v948 = vpack.c.b16 %v916, %v916
        %v949 = vpack.c.b16 %v917, %v917
        %v950 = vpack.c.b16 %v918, %v918
        %v951 = vpack.c.b16 %v919, %v919
        %v952 = vpack.c.b16 %v920, %v920
        %v953 = vpack.c.b16 %v921, %v921
        %v954 = vpack.c.b16 %v922, %v922
        %v955 = vpack.c.b16 %v923, %v923
        %v956 = vpack.c.b16 %v924, %v924
        %v957 = vpack.c.b16 %v925, %v925
        %v958 = vpack.c.b16 %v926, %v926
        %v959 = vpack.c.b16 %v927, %v927
        %v960 = vpack.c.b16 %v928, %v928
        %v961 = vpack.c.b16 %v929, %v929
        %v962 = vpack.c.b16 %v930, %v930
        %v963 = vpack.c.b16 %v931, %v931
        %v964 = vpack.c.b16 %v932, %v932
        %v965 = vpack.c.b16 %v933, %v933
        %v966 = vpack.c.b16 %v934, %v934
        %v967 = vpack.c.b16 %v935, %v935
        %v968 = vpack.c.b16 %v936, %v936
        %v969 = vpack.c.b16 %v937, %v937
        %v970 = vpack.c.b16 %v938, %v938
        %1003 = vst [vmem:[%s224] sm:$0xf] %v939
        %1004 = vst [vmem:[%s224 + $0x4] sm:$0xf] %v940
        %1005 = vst [vmem:[%s224 + $0x8] sm:$0xf] %v941
        %1006 = vst [vmem:[%s224 + $0xc] sm:$0xf] %v942
        %1007 = vst [vmem:[%s224 + $0x10] sm:$0xf] %v943
        %1008 = vst [vmem:[%s224 + $0x14] sm:$0xf] %v944
        %1009 = vst [vmem:[%s224 + $0x18] sm:$0xf] %v945
        %1010 = vst [vmem:[%s224 + $0x1c] sm:$0xf] %v946
        %1011 = vst [vmem:[%s224 + $0x20] sm:$0xf] %v947
        %1012 = vst [vmem:[%s224 + $0x24] sm:$0xf] %v948
        %1013 = vst [vmem:[%s224 + $0x28] sm:$0xf] %v949
        %1014 = vst [vmem:[%s224 + $0x2c] sm:$0xf] %v950
        %1015 = vst [vmem:[%s224 + $0x30] sm:$0xf] %v951
        %1016 = vst [vmem:[%s224 + $0x34] sm:$0xf] %v952
        %1017 = vst [vmem:[%s224 + $0x38] sm:$0xf] %v953
        %1018 = vst [vmem:[%s224 + $0x3c] sm:$0xf] %v954
        %1019 = vst [vmem:[%s224 + $0x40] sm:$0xf] %v955
        %1020 = vst [vmem:[%s224 + $0x44] sm:$0xf] %v956
        %1021 = vst [vmem:[%s224 + $0x48] sm:$0xf] %v957
        %1022 = vst [vmem:[%s224 + $0x4c] sm:$0xf] %v958
        %1023 = vst [vmem:[%s224 + $0x50] sm:$0xf] %v959
        %1024 = vst [vmem:[%s224 + $0x54] sm:$0xf] %v960
        %1025 = vst [vmem:[%s224 + $0x58] sm:$0xf] %v961
        %1026 = vst [vmem:[%s224 + $0x5c] sm:$0xf] %v962
        %1027 = vst [vmem:[%s224 + $0x60] sm:$0xf] %v963
        %1028 = vst [vmem:[%s224 + $0x64] sm:$0xf] %v964
        %1029 = vst [vmem:[%s224 + $0x68] sm:$0xf] %v965
        %1030 = vst [vmem:[%s224 + $0x6c] sm:$0xf] %v966
        %1031 = vst [vmem:[%s224 + $0x70] sm:$0xf] %v967
        %1032 = vst [vmem:[%s224 + $0x74] sm:$0xf] %v968
        %1033 = vst [vmem:[%s224 + $0x78] sm:$0xf] %v969
        %1034 = vst [vmem:[%s224 + $0x7c] sm:$0xf] %v970
      $region36: #{encoder_forward.24} parent=27 // pred_fallthru
        _
      %s1035 = smul.u32 32, %s18
      %p1036 = scmp.lt.s32.totalorder %s1035, 63
      %s1037 = scalar_select %p1036, %s1035, 63
      %p1038 = scmp.lt.s32.totalorder %s19, 0
      %s1039 = scalar_select %p1038, %s19, 0
      %s1040 = sadd.s32 %s1039, %s1037
      %s1041 = smul.addr %s1040, 4
      %s1042 = scalar_lea.vmem %s2, %s1041
      // Predicated region
      $region37: #{encoder_forward.24} parent=27 // pred_check
        %p1043 = pneg %p108
      $region38: #{encoder_forward.24} parent=27 // pred_check_branch
        %1045 = sbr.rel (%p1043) target = $region40
      $region39: #{encoder_forward.24} parent=27 // pred_region
        %s1046 = smul.u32 32, %s18
      $region40: #{encoder_forward.24} parent=27 // pred_fallthru
        _
    $region28: #{encoder_forward.24} parent=5 // pred_fallthru
      _
    %p1047 = scmp.le.s32.totalorder 2, %s8
    // Predicated region
    $region41: #{encoder_forward.24} parent=5 // pred_check
      %p1048 = pneg %p1047
    $region42: #{encoder_forward.24} parent=5 // pred_check_branch
      %1050 = sbr.rel (%p1048) target = $region44
    $region43: #{encoder_forward.24} parent=5 // pred_region
      %s1051 = ssub.s32 %s8, 2
      // Predicated region
      $region45: #{encoder_forward.24} parent=43 // pred_check
        %p1052 = pneg %p114
      $region46: #{encoder_forward.24} parent=43 // pred_check_branch
        %1054 = sbr.rel (%p1052) target = $region48
      $region47: #{encoder_forward.24} parent=43 // pred_region
        %s1055 = smul.u32 32, %s21
        %p1056 = scmp.lt.s32.totalorder %s1055, 63
        %s1057 = scalar_select %p1056, %s1055, 63
        %p1058 = scmp.lt.s32.totalorder %s22, 0
        %s1059 = scalar_select %p1058, %s22, 0
        %s1060 = sadd.s32 %s1059, %s1057
        %s1061 = smul.addr %s1060, 4
        %s1062 = scalar_lea.vmem %s2, %s1061
      $region48: #{encoder_forward.24} parent=43 // pred_fallthru
        _
    $region44: #{encoder_forward.24} parent=5 // pred_fallthru
      _
  $region6: #{encoder_forward.24} parent=0 // loop_footer
    %s12 = sadd.s32 1, %s8
  $region7: #{encoder_forward.24} parent=0 // loop_footer_branch
    %7 = sbr.rel target = $region3
  $region8: #{encoder_forward.24} parent=0 // loop_exit
    _

// kernel: encoder_forward.26
$region0: #{encoder_forward.26}
  #allocation0 [shape = 'u32[]', space=smem, size = 0x4, offset = 0x4, fixed_abs, tag = 'smem constant byte address 0x4 - core index']
  #allocation1 [shape = 'u32[144,128]{1,0:T(1,128)}', space=vmem, size = 0x12000, scoped, tag = 'internal scratch']
  %s0 = inlined_call_operand.vmem [shape: bf16[512,128], index: 0, kind: input, shape index: {}]
  %s1 = inlined_call_operand.vmem [shape: f32[1,128], index: 1, kind: input, shape index: {}]
  %s2 = inlined_call_operand.vmem [shape: f32[1,128], index: 2, kind: input, shape index: {}]
  %s3 = inlined_call_operand.vmem [shape: bf16[512,128], index: 3, kind: output, shape index: {}]
  %s4 = sld [smem:[#allocation0]]
  $region22: #{encoder_forward.26} parent=0
    _
  %s6 = ssub.s32 1, %s4
  %s7 = scalar_select 0, %s6, %s4
  // Predicated region
  $region2: #{encoder_forward.26} parent=0 // pred_check
    _
  $region3: #{encoder_forward.26} parent=0 // pred_check_branch
    %9 = sbr.rel (0) target = $region5
  $region4: #{encoder_forward.26} parent=0 // pred_region
    _
  $region5: #{encoder_forward.26} parent=0 // pred_fallthru
    _
  // Predicated region
  $region6: #{encoder_forward.26} parent=0 // pred_check
    _
  $region7: #{encoder_forward.26} parent=0 // pred_check_branch
    %11 = sbr.rel (0) target = $region9
  $region8: #{encoder_forward.26} parent=0 // pred_region
    _
  $region9: #{encoder_forward.26} parent=0 // pred_fallthru
    _
  // Predicated region
  $region10: #{encoder_forward.26} parent=0 // pred_check
    _
  $region11: #{encoder_forward.26} parent=0 // pred_check_branch
    %13 = sbr.rel (0) target = $region13
  $region12: #{encoder_forward.26} parent=0 // pred_region
    _
  $region13: #{encoder_forward.26} parent=0 // pred_fallthru
    _
  %v14 = vld [vmem:[%s0] sm:$0xf]
  %v15 = vld [vmem:[%s0 + $0x4] sm:$0xf]
  %v16 = vld [vmem:[%s0 + $0x8] sm:$0xf]
  %v17 = vld [vmem:[%s0 + $0xc] sm:$0xf]
  %v18 = vld [vmem:[%s0 + $0x10] sm:$0xf]
  %v19 = vld [vmem:[%s0 + $0x14] sm:$0xf]
  %v20 = vld [vmem:[%s0 + $0x18] sm:$0xf]
  %v21 = vld [vmem:[%s0 + $0x1c] sm:$0xf]
  %v22 = vld [vmem:[%s0 + $0x20] sm:$0xf]
  %v23 = vld [vmem:[%s0 + $0x24] sm:$0xf]
  %v24 = vld [vmem:[%s0 + $0x28] sm:$0xf]
  %v25 = vld [vmem:[%s0 + $0x2c] sm:$0xf]
  %v26 = vld [vmem:[%s0 + $0x30] sm:$0xf]
  %v27 = vld [vmem:[%s0 + $0x34] sm:$0xf]
  %v28 = vld [vmem:[%s0 + $0x38] sm:$0xf]
  %v29 = vld [vmem:[%s0 + $0x3c] sm:$0xf]
  %v30 = vld [vmem:[%s0 + $0x40] sm:$0xf]
  %v31 = vld [vmem:[%s0 + $0x44] sm:$0xf]
  %v32 = vld [vmem:[%s0 + $0x48] sm:$0xf]
  %v33 = vld [vmem:[%s0 + $0x4c] sm:$0xf]
  %v34 = vld [vmem:[%s0 + $0x50] sm:$0xf]
  %v35 = vld [vmem:[%s0 + $0x54] sm:$0xf]
  %v36 = vld [vmem:[%s0 + $0x58] sm:$0xf]
  %v37 = vld [vmem:[%s0 + $0x5c] sm:$0xf]
  %v38 = vld [vmem:[%s0 + $0x60] sm:$0xf]
  %v39 = vld [vmem:[%s0 + $0x64] sm:$0xf]
  %v40 = vld [vmem:[%s0 + $0x68] sm:$0xf]
  %v41 = vld [vmem:[%s0 + $0x6c] sm:$0xf]
  %v42 = vld [vmem:[%s0 + $0x70] sm:$0xf]
  %v43 = vld [vmem:[%s0 + $0x74] sm:$0xf]
  %v44 = vld [vmem:[%s0 + $0x78] sm:$0xf]
  %v45 = vld [vmem:[%s0 + $0x7c] sm:$0xf]
  %v46 = vld [vmem:[%s0 + $0x80] sm:$0xf]
  %v47 = vld [vmem:[%s0 + $0x84] sm:$0xf]
  %v48 = vld [vmem:[%s0 + $0x88] sm:$0xf]
  %v49 = vld [vmem:[%s0 + $0x8c] sm:$0xf]
  %v50 = vld [vmem:[%s0 + $0x90] sm:$0xf]
  %v51 = vld [vmem:[%s0 + $0x94] sm:$0xf]
  %v52 = vld [vmem:[%s0 + $0x98] sm:$0xf]
  %v53 = vld [vmem:[%s0 + $0x9c] sm:$0xf]
  %v54 = vld [vmem:[%s0 + $0xa0] sm:$0xf]
  %v55 = vld [vmem:[%s0 + $0xa4] sm:$0xf]
  %v56 = vld [vmem:[%s0 + $0xa8] sm:$0xf]
  %v57 = vld [vmem:[%s0 + $0xac] sm:$0xf]
  %v58 = vld [vmem:[%s0 + $0xb0] sm:$0xf]
  %v59 = vld [vmem:[%s0 + $0xb4] sm:$0xf]
  %v60 = vld [vmem:[%s0 + $0xb8] sm:$0xf]
  %v61 = vld [vmem:[%s0 + $0xbc] sm:$0xf]
  %v62 = vld [vmem:[%s0 + $0xc0] sm:$0xf]
  %v63 = vld [vmem:[%s0 + $0xc4] sm:$0xf]
  %v64 = vld [vmem:[%s0 + $0xc8] sm:$0xf]
  %v65 = vld [vmem:[%s0 + $0xcc] sm:$0xf]
  %v66 = vld [vmem:[%s0 + $0xd0] sm:$0xf]
  %v67 = vld [vmem:[%s0 + $0xd4] sm:$0xf]
  %v68 = vld [vmem:[%s0 + $0xd8] sm:$0xf]
  %v69 = vld [vmem:[%s0 + $0xdc] sm:$0xf]
  %v70 = vld [vmem:[%s0 + $0xe0] sm:$0xf]
  %v71 = vld [vmem:[%s0 + $0xe4] sm:$0xf]
  %v72 = vld [vmem:[%s0 + $0xe8] sm:$0xf]
  %v73 = vld [vmem:[%s0 + $0xec] sm:$0xf]
  %v74 = vld [vmem:[%s0 + $0xf0] sm:$0xf]
  %v75 = vld [vmem:[%s0 + $0xf4] sm:$0xf]
  %v76 = vld [vmem:[%s0 + $0xf8] sm:$0xf]
  %v77 = vld [vmem:[%s0 + $0xfc] sm:$0xf]
  %v78 = vunpack.c.l.bf16 %v14
  %v79 = vunpack.c.l.bf16 %v15
  %v80 = vunpack.c.l.bf16 %v16
  %v81 = vunpack.c.l.bf16 %v17
  %v82 = vunpack.c.l.bf16 %v18
  %v83 = vunpack.c.l.bf16 %v19
  %v84 = vunpack.c.l.bf16 %v20
  %v85 = vunpack.c.l.bf16 %v21
  %v86 = vunpack.c.l.bf16 %v22
  %v87 = vunpack.c.l.bf16 %v23
  %v88 = vunpack.c.l.bf16 %v24
  %v89 = vunpack.c.l.bf16 %v25
  %v90 = vunpack.c.l.bf16 %v26
  %v91 = vunpack.c.l.bf16 %v27
  %v92 = vunpack.c.l.bf16 %v28
  %v93 = vunpack.c.l.bf16 %v29
  %v94 = vunpack.c.l.bf16 %v30
  %v95 = vunpack.c.l.bf16 %v31
  %v96 = vunpack.c.l.bf16 %v32
  %v97 = vunpack.c.l.bf16 %v33
  %v98 = vunpack.c.l.bf16 %v34
  %v99 = vunpack.c.l.bf16 %v35
  %v100 = vunpack.c.l.bf16 %v36
  %v101 = vunpack.c.l.bf16 %v37
  %v102 = vunpack.c.l.bf16 %v38
  %v103 = vunpack.c.l.bf16 %v39
  %v104 = vunpack.c.l.bf16 %v40
  %v105 = vunpack.c.l.bf16 %v41
  %v106 = vunpack.c.l.bf16 %v42
  %v107 = vunpack.c.l.bf16 %v43
  %v108 = vunpack.c.l.bf16 %v44
  %v109 = vunpack.c.l.bf16 %v45
  %v110 = vunpack.c.l.bf16 %v46
  %v111 = vunpack.c.l.bf16 %v47
  %v112 = vunpack.c.l.bf16 %v48
  %v113 = vunpack.c.l.bf16 %v49
  %v114 = vunpack.c.l.bf16 %v50
  %v115 = vunpack.c.l.bf16 %v51
  %v116 = vunpack.c.l.bf16 %v52
  %v117 = vunpack.c.l.bf16 %v53
  %v118 = vunpack.c.l.bf16 %v54
  %v119 = vunpack.c.l.bf16 %v55
  %v120 = vunpack.c.l.bf16 %v56
  %v121 = vunpack.c.l.bf16 %v57
  %v122 = vunpack.c.l.bf16 %v58
  %v123 = vunpack.c.l.bf16 %v59
  %v124 = vunpack.c.l.bf16 %v60
  %v125 = vunpack.c.l.bf16 %v61
  %v126 = vunpack.c.l.bf16 %v62
  %v127 = vunpack.c.l.bf16 %v63
  %v128 = vunpack.c.l.bf16 %v64
  %v129 = vunpack.c.l.bf16 %v65
  %v130 = vunpack.c.l.bf16 %v66
  %v131 = vunpack.c.l.bf16 %v67
  %v132 = vunpack.c.l.bf16 %v68
  %v133 = vunpack.c.l.bf16 %v69
  %v134 = vunpack.c.l.bf16 %v70
  %v135 = vunpack.c.l.bf16 %v71
  %v136 = vunpack.c.l.bf16 %v72
  %v137 = vunpack.c.l.bf16 %v73
  %v138 = vunpack.c.l.bf16 %v74
  %v139 = vunpack.c.l.bf16 %v75
  %v140 = vunpack.c.l.bf16 %v76
  %v141 = vunpack.c.l.bf16 %v77
  %v142 = vld [vmem:[%s1] sm:$0x1]
  %v144 = vlaneseq
  %v145 = vshrl.u32 %v144, 7
  %v146 = vsub.s32 0, %v145
  %v147 = vrot.slane %v142, %v146
  %v149 = vmul.f32 %v78, %v147
  %v150 = vmul.f32 %v79, %v147
  %v151 = vmul.f32 %v80, %v147
  %v152 = vmul.f32 %v81, %v147
  %v153 = vmul.f32 %v82, %v147
  %v154 = vmul.f32 %v83, %v147
  %v155 = vmul.f32 %v84, %v147
  %v156 = vmul.f32 %v85, %v147
  %v157 = vmul.f32 %v86, %v147
  %v158 = vmul.f32 %v87, %v147
  %v159 = vmul.f32 %v88, %v147
  %v160 = vmul.f32 %v89, %v147
  %v161 = vmul.f32 %v90, %v147
  %v162 = vmul.f32 %v91, %v147
  %v163 = vmul.f32 %v92, %v147
  %v164 = vmul.f32 %v93, %v147
  %v165 = vmul.f32 %v94, %v147
  %v166 = vmul.f32 %v95, %v147
  %v167 = vmul.f32 %v96, %v147
  %v168 = vmul.f32 %v97, %v147
  %v169 = vmul.f32 %v98, %v147
  %v170 = vmul.f32 %v99, %v147
  %v171 = vmul.f32 %v100, %v147
  %v172 = vmul.f32 %v101, %v147
  %v173 = vmul.f32 %v102, %v147
  %v174 = vmul.f32 %v103, %v147
  %v175 = vmul.f32 %v104, %v147
  %v176 = vmul.f32 %v105, %v147
  %v177 = vmul.f32 %v106, %v147
  %v178 = vmul.f32 %v107, %v147
  %v179 = vmul.f32 %v108, %v147
  %v180 = vmul.f32 %v109, %v147
  %v181 = vmul.f32 %v110, %v147
  %v182 = vmul.f32 %v111, %v147
  %v183 = vmul.f32 %v112, %v147
  %v184 = vmul.f32 %v113, %v147
  %v185 = vmul.f32 %v114, %v147
  %v186 = vmul.f32 %v115, %v147
  %v187 = vmul.f32 %v116, %v147
  %v188 = vmul.f32 %v117, %v147
  %v189 = vmul.f32 %v118, %v147
  %v190 = vmul.f32 %v119, %v147
  %v191 = vmul.f32 %v120, %v147
  %v192 = vmul.f32 %v121, %v147
  %v193 = vmul.f32 %v122, %v147
  %v194 = vmul.f32 %v123, %v147
  %v195 = vmul.f32 %v124, %v147
  %v196 = vmul.f32 %v125, %v147
  %v197 = vmul.f32 %v126, %v147
  %v198 = vmul.f32 %v127, %v147
  %v199 = vmul.f32 %v128, %v147
  %v200 = vmul.f32 %v129, %v147
  %v201 = vmul.f32 %v130, %v147
  %v202 = vmul.f32 %v131, %v147
  %v203 = vmul.f32 %v132, %v147
  %v204 = vmul.f32 %v133, %v147
  %v205 = vmul.f32 %v134, %v147
  %v206 = vmul.f32 %v135, %v147
  %v207 = vmul.f32 %v136, %v147
  %v208 = vmul.f32 %v137, %v147
  %v209 = vmul.f32 %v138, %v147
  %v210 = vmul.f32 %v139, %v147
  %v211 = vmul.f32 %v140, %v147
  %v212 = vmul.f32 %v141, %v147
  %v213 = vld [vmem:[%s2] sm:$0x1]
  %v215 = vlaneseq
  %v216 = vshrl.u32 %v215, 7
  %v217 = vsub.s32 0, %v216
  %v218 = vrot.slane %v213, %v217
  %v220 = vadd.f32 %v149, %v218
  %v221 = vadd.f32 %v150, %v218
  %v222 = vadd.f32 %v151, %v218
  %v223 = vadd.f32 %v152, %v218
  %v224 = vadd.f32 %v153, %v218
  %v225 = vadd.f32 %v154, %v218
  %v226 = vadd.f32 %v155, %v218
  %v227 = vadd.f32 %v156, %v218
  %v228 = vadd.f32 %v157, %v218
  %v229 = vadd.f32 %v158, %v218
  %v230 = vadd.f32 %v159, %v218
  %v231 = vadd.f32 %v160, %v218
  %v232 = vadd.f32 %v161, %v218
  %v233 = vadd.f32 %v162, %v218
  %v234 = vadd.f32 %v163, %v218
  %v235 = vadd.f32 %v164, %v218
  %v236 = vadd.f32 %v165, %v218
  %v237 = vadd.f32 %v166, %v218
  %v238 = vadd.f32 %v167, %v218
  %v239 = vadd.f32 %v168, %v218
  %v240 = vadd.f32 %v169, %v218
  %v241 = vadd.f32 %v170, %v218
  %v242 = vadd.f32 %v171, %v218
  %v243 = vadd.f32 %v172, %v218
  %v244 = vadd.f32 %v173, %v218
  %v245 = vadd.f32 %v174, %v218
  %v246 = vadd.f32 %v175, %v218
  %v247 = vadd.f32 %v176, %v218
  %v248 = vadd.f32 %v177, %v218
  %v249 = vadd.f32 %v178, %v218
  %v250 = vadd.f32 %v179, %v218
  %v251 = vadd.f32 %v180, %v218
  %v252 = vadd.f32 %v181, %v218
  %v253 = vadd.f32 %v182, %v218
  %v254 = vadd.f32 %v183, %v218
  %v255 = vadd.f32 %v184, %v218
  %v256 = vadd.f32 %v185, %v218
  %v257 = vadd.f32 %v186, %v218
  %v258 = vadd.f32 %v187, %v218
  %v259 = vadd.f32 %v188, %v218
  %v260 = vadd.f32 %v189, %v218
  %v261 = vadd.f32 %v190, %v218
  %v262 = vadd.f32 %v191, %v218
  %v263 = vadd.f32 %v192, %v218
  %v264 = vadd.f32 %v193, %v218
  %v265 = vadd.f32 %v194, %v218
  %v266 = vadd.f32 %v195, %v218
  %v267 = vadd.f32 %v196, %v218
  %v268 = vadd.f32 %v197, %v218
  %v269 = vadd.f32 %v198, %v218
  %v270 = vadd.f32 %v199, %v218
  %v271 = vadd.f32 %v200, %v218
  %v272 = vadd.f32 %v201, %v218
  %v273 = vadd.f32 %v202, %v218
  %v274 = vadd.f32 %v203, %v218
  %v275 = vadd.f32 %v204, %v218
  %v276 = vadd.f32 %v205, %v218
  %v277 = vadd.f32 %v206, %v218
  %v278 = vadd.f32 %v207, %v218
  %v279 = vadd.f32 %v208, %v218
  %v280 = vadd.f32 %v209, %v218
  %v281 = vadd.f32 %v210, %v218
  %v282 = vadd.f32 %v211, %v218
  %v283 = vadd.f32 %v212, %v218
  %v284 = vmax.f32 %v220, 0.0
  %v285 = vmax.f32 %v221, 0.0
  %v286 = vmax.f32 %v222, 0.0
  %v287 = vmax.f32 %v223, 0.0
  %v288 = vmax.f32 %v224, 0.0
  %v289 = vmax.f32 %v225, 0.0
  %v290 = vmax.f32 %v226, 0.0
  %v291 = vmax.f32 %v227, 0.0
  %v292 = vmax.f32 %v228, 0.0
  %v293 = vmax.f32 %v229, 0.0
  %v294 = vmax.f32 %v230, 0.0
  %v295 = vmax.f32 %v231, 0.0
  %v296 = vmax.f32 %v232, 0.0
  %v297 = vmax.f32 %v233, 0.0
  %v298 = vmax.f32 %v234, 0.0
  %v299 = vmax.f32 %v235, 0.0
  %v300 = vmax.f32 %v236, 0.0
  %v301 = vmax.f32 %v237, 0.0
  %v302 = vmax.f32 %v238, 0.0
  %v303 = vmax.f32 %v239, 0.0
  %v304 = vmax.f32 %v240, 0.0
  %v305 = vmax.f32 %v241, 0.0
  %v306 = vmax.f32 %v242, 0.0
  %v307 = vmax.f32 %v243, 0.0
  %v308 = vmax.f32 %v244, 0.0
  %v309 = vmax.f32 %v245, 0.0
  %v310 = vmax.f32 %v246, 0.0
  %v311 = vmax.f32 %v247, 0.0
  %v312 = vmax.f32 %v248, 0.0
  %v313 = vmax.f32 %v249, 0.0
  %v314 = vmax.f32 %v250, 0.0
  %v315 = vmax.f32 %v251, 0.0
  %v316 = vmax.f32 %v252, 0.0
  %v317 = vmax.f32 %v253, 0.0
  %v318 = vmax.f32 %v254, 0.0
  %v319 = vmax.f32 %v255, 0.0
  %v320 = vmax.f32 %v256, 0.0
  %v321 = vmax.f32 %v257, 0.0
  %v322 = vmax.f32 %v258, 0.0
  %v323 = vmax.f32 %v259, 0.0
  %v324 = vmax.f32 %v260, 0.0
  %v325 = vmax.f32 %v261, 0.0
  %v326 = vmax.f32 %v262, 0.0
  %v327 = vmax.f32 %v263, 0.0
  %v328 = vmax.f32 %v264, 0.0
  %v329 = vmax.f32 %v265, 0.0
  %v330 = vmax.f32 %v266, 0.0
  %v331 = vmax.f32 %v267, 0.0
  %v332 = vmax.f32 %v268, 0.0
  %v333 = vmax.f32 %v269, 0.0
  %v334 = vmax.f32 %v270, 0.0
  %v335 = vmax.f32 %v271, 0.0
  %v336 = vmax.f32 %v272, 0.0
  %v337 = vmax.f32 %v273, 0.0
  %v338 = vmax.f32 %v274, 0.0
  %v339 = vmax.f32 %v275, 0.0
  %v340 = vmax.f32 %v276, 0.0
  %v341 = vmax.f32 %v277, 0.0
  %v342 = vmax.f32 %v278, 0.0
  %v343 = vmax.f32 %v279, 0.0
  %v344 = vmax.f32 %v280, 0.0
  %v345 = vmax.f32 %v281, 0.0
  %v346 = vmax.f32 %v282, 0.0
  %v347 = vmax.f32 %v283, 0.0
  %v348 = vpack.c.bf16 %v285, %v284
  %v349 = vpack.c.bf16 %v287, %v286
  %v350 = vpack.c.bf16 %v289, %v288
  %v351 = vpack.c.bf16 %v291, %v290
  %v352 = vpack.c.bf16 %v293, %v292
  %v353 = vpack.c.bf16 %v295, %v294
  %v354 = vpack.c.bf16 %v297, %v296
  %v355 = vpack.c.bf16 %v299, %v298
  %v356 = vpack.c.bf16 %v301, %v300
  %v357 = vpack.c.bf16 %v303, %v302
  %v358 = vpack.c.bf16 %v305, %v304
  %v359 = vpack.c.bf16 %v307, %v306
  %v360 = vpack.c.bf16 %v309, %v308
  %v361 = vpack.c.bf16 %v311, %v310
  %v362 = vpack.c.bf16 %v313, %v312
  %v363 = vpack.c.bf16 %v315, %v314
  %v364 = vpack.c.bf16 %v317, %v316
  %v365 = vpack.c.bf16 %v319, %v318
  %v366 = vpack.c.bf16 %v321, %v320
  %v367 = vpack.c.bf16 %v323, %v322
  %v368 = vpack.c.bf16 %v325, %v324
  %v369 = vpack.c.bf16 %v327, %v326
  %v370 = vpack.c.bf16 %v329, %v328
  %v371 = vpack.c.bf16 %v331, %v330
  %v372 = vpack.c.bf16 %v333, %v332
  %v373 = vpack.c.bf16 %v335, %v334
  %v374 = vpack.c.bf16 %v337, %v336
  %v375 = vpack.c.bf16 %v339, %v338
  %v376 = vpack.c.bf16 %v341, %v340
  %v377 = vpack.c.bf16 %v343, %v342
  %v378 = vpack.c.bf16 %v345, %v344
  %v379 = vpack.c.bf16 %v347, %v346
  %v412 = vunpack.c.l.b16 %v348
  %v413 = vunpack.c.h.b16 %v348
  %v414 = vunpack.c.l.b16 %v349
  %v415 = vunpack.c.h.b16 %v349
  %v416 = vunpack.c.l.b16 %v350
  %v417 = vunpack.c.h.b16 %v350
  %v418 = vunpack.c.l.b16 %v351
  %v419 = vunpack.c.h.b16 %v351
  %v420 = vunpack.c.l.b16 %v352
  %v421 = vunpack.c.h.b16 %v352
  %v422 = vunpack.c.l.b16 %v353
  %v423 = vunpack.c.h.b16 %v353
  %v424 = vunpack.c.l.b16 %v354
  %v425 = vunpack.c.h.b16 %v354
  %v426 = vunpack.c.l.b16 %v355
  %v427 = vunpack.c.h.b16 %v355
  %v428 = vunpack.c.l.b16 %v356
  %v429 = vunpack.c.h.b16 %v356
  %v430 = vunpack.c.l.b16 %v357
  %v431 = vunpack.c.h.b16 %v357
  %v432 = vunpack.c.l.b16 %v358
  %v433 = vunpack.c.h.b16 %v358
  %v434 = vunpack.c.l.b16 %v359
  %v435 = vunpack.c.h.b16 %v359
  %v436 = vunpack.c.l.b16 %v360
  %v437 = vunpack.c.h.b16 %v360
  %v438 = vunpack.c.l.b16 %v361
  %v439 = vunpack.c.h.b16 %v361
  %v440 = vunpack.c.l.b16 %v362
  %v441 = vunpack.c.h.b16 %v362
  %v442 = vunpack.c.l.b16 %v363
  %v443 = vunpack.c.h.b16 %v363
  %v444 = vunpack.c.l.b16 %v364
  %v445 = vunpack.c.h.b16 %v364
  %v446 = vunpack.c.l.b16 %v365
  %v447 = vunpack.c.h.b16 %v365
  %v448 = vunpack.c.l.b16 %v366
  %v449 = vunpack.c.h.b16 %v366
  %v450 = vunpack.c.l.b16 %v367
  %v451 = vunpack.c.h.b16 %v367
  %v452 = vunpack.c.l.b16 %v368
  %v453 = vunpack.c.h.b16 %v368
  %v454 = vunpack.c.l.b16 %v369
  %v455 = vunpack.c.h.b16 %v369
  %v456 = vunpack.c.l.b16 %v370
  %v457 = vunpack.c.h.b16 %v370
  %v458 = vunpack.c.l.b16 %v371
  %v459 = vunpack.c.h.b16 %v371
  %v460 = vunpack.c.l.b16 %v372
  %v461 = vunpack.c.h.b16 %v372
  %v462 = vunpack.c.l.b16 %v373
  %v463 = vunpack.c.h.b16 %v373
  %v464 = vunpack.c.l.b16 %v374
  %v465 = vunpack.c.h.b16 %v374
  %v466 = vunpack.c.l.b16 %v375
  %v467 = vunpack.c.h.b16 %v375
  %v468 = vunpack.c.l.b16 %v376
  %v469 = vunpack.c.h.b16 %v376
  %v470 = vunpack.c.l.b16 %v377
  %v471 = vunpack.c.h.b16 %v377
  %v472 = vunpack.c.l.b16 %v378
  %v473 = vunpack.c.h.b16 %v378
  %v474 = vunpack.c.l.b16 %v379
  %v475 = vunpack.c.h.b16 %v379
  %v476 = vpack.c.b16 %v412, %v412
  %v477 = vpack.c.b16 %v413, %v413
  %v478 = vpack.c.b16 %v414, %v414
  %v479 = vpack.c.b16 %v415, %v415
  %v480 = vpack.c.b16 %v416, %v416
  %v481 = vpack.c.b16 %v417, %v417
  %v482 = vpack.c.b16 %v418, %v418
  %v483 = vpack.c.b16 %v419, %v419
  %v484 = vpack.c.b16 %v420, %v420
  %v485 = vpack.c.b16 %v421, %v421
  %v486 = vpack.c.b16 %v422, %v422
  %v487 = vpack.c.b16 %v423, %v423
  %v488 = vpack.c.b16 %v424, %v424
  %v489 = vpack.c.b16 %v425, %v425
  %v490 = vpack.c.b16 %v426, %v426
  %v491 = vpack.c.b16 %v427, %v427
  %v492 = vpack.c.b16 %v428, %v428
  %v493 = vpack.c.b16 %v429, %v429
  %v494 = vpack.c.b16 %v430, %v430
  %v495 = vpack.c.b16 %v431, %v431
  %v496 = vpack.c.b16 %v432, %v432
  %v497 = vpack.c.b16 %v433, %v433
  %v498 = vpack.c.b16 %v434, %v434
  %v499 = vpack.c.b16 %v435, %v435
  %v500 = vpack.c.b16 %v436, %v436
  %v501 = vpack.c.b16 %v437, %v437
  %v502 = vpack.c.b16 %v438, %v438
  %v503 = vpack.c.b16 %v439, %v439
  %v504 = vpack.c.b16 %v440, %v440
  %v505 = vpack.c.b16 %v441, %v441
  %v506 = vpack.c.b16 %v442, %v442
  %v507 = vpack.c.b16 %v443, %v443
  %v508 = vpack.c.b16 %v444, %v444
  %v509 = vpack.c.b16 %v445, %v445
  %v510 = vpack.c.b16 %v446, %v446
  %v511 = vpack.c.b16 %v447, %v447
  %v512 = vpack.c.b16 %v448, %v448
  %v513 = vpack.c.b16 %v449, %v449
  %v514 = vpack.c.b16 %v450, %v450
  %v515 = vpack.c.b16 %v451, %v451
  %v516 = vpack.c.b16 %v452, %v452
  %v517 = vpack.c.b16 %v453, %v453
  %v518 = vpack.c.b16 %v454, %v454
  %v519 = vpack.c.b16 %v455, %v455
  %v520 = vpack.c.b16 %v456, %v456
  %v521 = vpack.c.b16 %v457, %v457
  %v522 = vpack.c.b16 %v458, %v458
  %v523 = vpack.c.b16 %v459, %v459
  %v524 = vpack.c.b16 %v460, %v460
  %v525 = vpack.c.b16 %v461, %v461
  %v526 = vpack.c.b16 %v462, %v462
  %v527 = vpack.c.b16 %v463, %v463
  %v528 = vpack.c.b16 %v464, %v464
  %v529 = vpack.c.b16 %v465, %v465
  %v530 = vpack.c.b16 %v466, %v466
  %v531 = vpack.c.b16 %v467, %v467
  %v532 = vpack.c.b16 %v468, %v468
  %v533 = vpack.c.b16 %v469, %v469
  %v534 = vpack.c.b16 %v470, %v470
  %v535 = vpack.c.b16 %v471, %v471
  %v536 = vpack.c.b16 %v472, %v472
  %v537 = vpack.c.b16 %v473, %v473
  %v538 = vpack.c.b16 %v474, %v474
  %v539 = vpack.c.b16 %v475, %v475
  %604 = vst [vmem:[%s3] sm:$0xf] %v476
  %605 = vst [vmem:[%s3 + $0x4] sm:$0xf] %v477
  %606 = vst [vmem:[%s3 + $0x8] sm:$0xf] %v478
  %607 = vst [vmem:[%s3 + $0xc] sm:$0xf] %v479
  %608 = vst [vmem:[%s3 + $0x10] sm:$0xf] %v480
  %609 = vst [vmem:[%s3 + $0x14] sm:$0xf] %v481
  %610 = vst [vmem:[%s3 + $0x18] sm:$0xf] %v482
  %611 = vst [vmem:[%s3 + $0x1c] sm:$0xf] %v483
  %612 = vst [vmem:[%s3 + $0x20] sm:$0xf] %v484
  %613 = vst [vmem:[%s3 + $0x24] sm:$0xf] %v485
  %614 = vst [vmem:[%s3 + $0x28] sm:$0xf] %v486
  %615 = vst [vmem:[%s3 + $0x2c] sm:$0xf] %v487
  %616 = vst [vmem:[%s3 + $0x30] sm:$0xf] %v488
  %617 = vst [vmem:[%s3 + $0x34] sm:$0xf] %v489
  %618 = vst [vmem:[%s3 + $0x38] sm:$0xf] %v490
  %619 = vst [vmem:[%s3 + $0x3c] sm:$0xf] %v491
  %620 = vst [vmem:[%s3 + $0x40] sm:$0xf] %v492
  %621 = vst [vmem:[%s3 + $0x44] sm:$0xf] %v493
  %622 = vst [vmem:[%s3 + $0x48] sm:$0xf] %v494
  %623 = vst [vmem:[%s3 + $0x4c] sm:$0xf] %v495
  %624 = vst [vmem:[%s3 + $0x50] sm:$0xf] %v496
  %625 = vst [vmem:[%s3 + $0x54] sm:$0xf] %v497
  %626 = vst [vmem:[%s3 + $0x58] sm:$0xf] %v498
  %627 = vst [vmem:[%s3 + $0x5c] sm:$0xf] %v499
  %628 = vst [vmem:[%s3 + $0x60] sm:$0xf] %v500
  %629 = vst [vmem:[%s3 + $0x64] sm:$0xf] %v501
  %630 = vst [vmem:[%s3 + $0x68] sm:$0xf] %v502
  %631 = vst [vmem:[%s3 + $0x6c] sm:$0xf] %v503
  %632 = vst [vmem:[%s3 + $0x70] sm:$0xf] %v504
  %633 = vst [vmem:[%s3 + $0x74] sm:$0xf] %v505
  %634 = vst [vmem:[%s3 + $0x78] sm:$0xf] %v506
  %635 = vst [vmem:[%s3 + $0x7c] sm:$0xf] %v507
  %636 = vst [vmem:[%s3 + $0x80] sm:$0xf] %v508
  %637 = vst [vmem:[%s3 + $0x84] sm:$0xf] %v509
  %638 = vst [vmem:[%s3 + $0x88] sm:$0xf] %v510
  %639 = vst [vmem:[%s3 + $0x8c] sm:$0xf] %v511
  %640 = vst [vmem:[%s3 + $0x90] sm:$0xf] %v512
  %641 = vst [vmem:[%s3 + $0x94] sm:$0xf] %v513
  %642 = vst [vmem:[%s3 + $0x98] sm:$0xf] %v514
  %643 = vst [vmem:[%s3 + $0x9c] sm:$0xf] %v515
  %644 = vst [vmem:[%s3 + $0xa0] sm:$0xf] %v516
  %645 = vst [vmem:[%s3 + $0xa4] sm:$0xf] %v517
  %646 = vst [vmem:[%s3 + $0xa8] sm:$0xf] %v518
  %647 = vst [vmem:[%s3 + $0xac] sm:$0xf] %v519
  %648 = vst [vmem:[%s3 + $0xb0] sm:$0xf] %v520
  %649 = vst [vmem:[%s3 + $0xb4] sm:$0xf] %v521
  %650 = vst [vmem:[%s3 + $0xb8] sm:$0xf] %v522
  %651 = vst [vmem:[%s3 + $0xbc] sm:$0xf] %v523
  %652 = vst [vmem:[%s3 + $0xc0] sm:$0xf] %v524
  %653 = vst [vmem:[%s3 + $0xc4] sm:$0xf] %v525
  %654 = vst [vmem:[%s3 + $0xc8] sm:$0xf] %v526
  %655 = vst [vmem:[%s3 + $0xcc] sm:$0xf] %v527
  %656 = vst [vmem:[%s3 + $0xd0] sm:$0xf] %v528
  %657 = vst [vmem:[%s3 + $0xd4] sm:$0xf] %v529
  %658 = vst [vmem:[%s3 + $0xd8] sm:$0xf] %v530
  %659 = vst [vmem:[%s3 + $0xdc] sm:$0xf] %v531
  %660 = vst [vmem:[%s3 + $0xe0] sm:$0xf] %v532
  %661 = vst [vmem:[%s3 + $0xe4] sm:$0xf] %v533
  %662 = vst [vmem:[%s3 + $0xe8] sm:$0xf] %v534
  %663 = vst [vmem:[%s3 + $0xec] sm:$0xf] %v535
  %664 = vst [vmem:[%s3 + $0xf0] sm:$0xf] %v536
  %665 = vst [vmem:[%s3 + $0xf4] sm:$0xf] %v537
  %666 = vst [vmem:[%s3 + $0xf8] sm:$0xf] %v538
  %667 = vst [vmem:[%s3 + $0xfc] sm:$0xf] %v539
  // Predicated region
  $region14: #{encoder_forward.26} parent=0 // pred_check
    _
  $region15: #{encoder_forward.26} parent=0 // pred_check_branch
    %669 = sbr.rel (0) target = $region17
  $region16: #{encoder_forward.26} parent=0 // pred_region
    _
  $region17: #{encoder_forward.26} parent=0 // pred_fallthru
    _
  // Predicated region
  $region18: #{encoder_forward.26} parent=0 // pred_check
    _
  $region19: #{encoder_forward.26} parent=0 // pred_check_branch
    %671 = sbr.rel (0) target = $region21
  $region20: #{encoder_forward.26} parent=0 // pred_region
    _
  $region21: #{encoder_forward.26} parent=0 // pred_fallthru
    _

// kernel: encoder_forward.27
$region0: #{encoder_forward.27}
  #allocation0 [shape = 'u32[]', space=smem, size = 0x4, offset = 0x4, fixed_abs, tag = 'smem constant byte address 0x4 - core index']
  #allocation1 [shape = 'u32[144,128]{1,0:T(1,128)}', space=vmem, size = 0x12000, scoped, tag = 'internal scratch']
  #allocation2 [shape = 'f32[128,128]{1,0:T(8,128)}', space=vmem, size = 0x10000, scoped, tag = 'scratch operand']
  %s0 = inlined_call_operand.vmem [shape: bf16[128,256], index: 0, kind: input, shape index: {}]
  %s1 = inlined_call_operand.vmem [shape: bf16[256,128], index: 1, kind: input, shape index: {}]
  %s2 = inlined_call_operand.vmem [shape: bf16[128,128], index: 2, kind: output, shape index: {}]
  %s3 = sld [smem:[#allocation0]]
  $region26: #{encoder_forward.27} parent=0
    _
  %s5 = ssub.s32 1, %s3
  %s6 = scalar_select 0, %s5, %s3
  // Predicated region
  $region2: #{encoder_forward.27} parent=0 // pred_check
    _
  $region3: #{encoder_forward.27} parent=0 // pred_check_branch
    %8 = sbr.rel (0) target = $region5
  $region4: #{encoder_forward.27} parent=0 // pred_region
    _
  $region5: #{encoder_forward.27} parent=0 // pred_fallthru
    _
  // Predicated region
  $region6: #{encoder_forward.27} parent=0 // pred_check
    _
  $region7: #{encoder_forward.27} parent=0 // pred_check_branch
    %10 = sbr.rel (0) target = $region9
  $region8: #{encoder_forward.27} parent=0 // pred_region
    _
  $region9: #{encoder_forward.27} parent=0 // pred_fallthru
    _
  %p12 = scmp.eq.s32.totalorder 0, 0
  // Predicated region
  $region10: #{encoder_forward.27} parent=0 // pred_check
    %p13 = pneg %p12
  $region11: #{encoder_forward.27} parent=0 // pred_check_branch
    %15 = sbr.rel (%p13) target = $region13
  $region12: #{encoder_forward.27} parent=0 // pred_region
    %16 = vst [vmem:[#allocation2] sm:$0xff] 0.0
    %17 = vst [vmem:[#allocation2 + $0x8] sm:$0xff] 0.0
    %18 = vst [vmem:[#allocation2 + $0x10] sm:$0xff] 0.0
    %19 = vst [vmem:[#allocation2 + $0x18] sm:$0xff] 0.0
    %20 = vst [vmem:[#allocation2 + $0x20] sm:$0xff] 0.0
    %21 = vst [vmem:[#allocation2 + $0x28] sm:$0xff] 0.0
    %22 = vst [vmem:[#allocation2 + $0x30] sm:$0xff] 0.0
    %23 = vst [vmem:[#allocation2 + $0x38] sm:$0xff] 0.0
    %24 = vst [vmem:[#allocation2 + $0x40] sm:$0xff] 0.0
    %25 = vst [vmem:[#allocation2 + $0x48] sm:$0xff] 0.0
    %26 = vst [vmem:[#allocation2 + $0x50] sm:$0xff] 0.0
    %27 = vst [vmem:[#allocation2 + $0x58] sm:$0xff] 0.0
    %28 = vst [vmem:[#allocation2 + $0x60] sm:$0xff] 0.0
    %29 = vst [vmem:[#allocation2 + $0x68] sm:$0xff] 0.0
    %30 = vst [vmem:[#allocation2 + $0x70] sm:$0xff] 0.0
    %31 = vst [vmem:[#allocation2 + $0x78] sm:$0xff] 0.0
  $region13: #{encoder_forward.27} parent=0 // pred_fallthru
    _
  %v32 = vld [vmem:[#allocation2] sm:$0xff]
  %v33 = vld [vmem:[#allocation2 + $0x8] sm:$0xff]
  %v34 = vld [vmem:[#allocation2 + $0x10] sm:$0xff]
  %v35 = vld [vmem:[#allocation2 + $0x18] sm:$0xff]
  %v36 = vld [vmem:[#allocation2 + $0x20] sm:$0xff]
  %v37 = vld [vmem:[#allocation2 + $0x28] sm:$0xff]
  %v38 = vld [vmem:[#allocation2 + $0x30] sm:$0xff]
  %v39 = vld [vmem:[#allocation2 + $0x38] sm:$0xff]
  %v40 = vld [vmem:[#allocation2 + $0x40] sm:$0xff]
  %v41 = vld [vmem:[#allocation2 + $0x48] sm:$0xff]
  %v42 = vld [vmem:[#allocation2 + $0x50] sm:$0xff]
  %v43 = vld [vmem:[#allocation2 + $0x58] sm:$0xff]
  %v44 = vld [vmem:[#allocation2 + $0x60] sm:$0xff]
  %v45 = vld [vmem:[#allocation2 + $0x68] sm:$0xff]
  %v46 = vld [vmem:[#allocation2 + $0x70] sm:$0xff]
  %v47 = vld [vmem:[#allocation2 + $0x78] sm:$0xff]
  %v48 = vld [vmem:[%s0] sm:$0xff]
  %v49 = vld [vmem:[%s0 + $0x8] sm:$0xff]
  %v50 = vld [vmem:[%s0 + $0x10] sm:$0xff]
  %v51 = vld [vmem:[%s0 + $0x18] sm:$0xff]
  %v52 = vld [vmem:[%s0 + $0x20] sm:$0xff]
  %v53 = vld [vmem:[%s0 + $0x28] sm:$0xff]
  %v54 = vld [vmem:[%s0 + $0x30] sm:$0xff]
  %v55 = vld [vmem:[%s0 + $0x38] sm:$0xff]
  %v56 = vld [vmem:[%s0 + $0x40] sm:$0xff]
  %v57 = vld [vmem:[%s0 + $0x48] sm:$0xff]
  %v58 = vld [vmem:[%s0 + $0x50] sm:$0xff]
  %v59 = vld [vmem:[%s0 + $0x58] sm:$0xff]
  %v60 = vld [vmem:[%s0 + $0x60] sm:$0xff]
  %v61 = vld [vmem:[%s0 + $0x68] sm:$0xff]
  %v62 = vld [vmem:[%s0 + $0x70] sm:$0xff]
  %v63 = vld [vmem:[%s0 + $0x78] sm:$0xff]
  %v64 = vld [vmem:[%s1] sm:$0xf]
  %v65 = vld [vmem:[%s1 + $0x4] sm:$0xf]
  %v66 = vld [vmem:[%s1 + $0x8] sm:$0xf]
  %v67 = vld [vmem:[%s1 + $0xc] sm:$0xf]
  %v68 = vld [vmem:[%s1 + $0x10] sm:$0xf]
  %v69 = vld [vmem:[%s1 + $0x14] sm:$0xf]
  %v70 = vld [vmem:[%s1 + $0x18] sm:$0xf]
  %v71 = vld [vmem:[%s1 + $0x1c] sm:$0xf]
  %v72 = vld [vmem:[%s1 + $0x20] sm:$0xf]
  %v73 = vld [vmem:[%s1 + $0x24] sm:$0xf]
  %v74 = vld [vmem:[%s1 + $0x28] sm:$0xf]
  %v75 = vld [vmem:[%s1 + $0x2c] sm:$0xf]
  %v76 = vld [vmem:[%s1 + $0x30] sm:$0xf]
  %v77 = vld [vmem:[%s1 + $0x34] sm:$0xf]
  %v78 = vld [vmem:[%s1 + $0x38] sm:$0xf]
  %v79 = vld [vmem:[%s1 + $0x3c] sm:$0xf]
  %v80 = vld [vmem:[%s1 + $0x40] sm:$0xf]
  %v81 = vld [vmem:[%s1 + $0x44] sm:$0xf]
  %v82 = vld [vmem:[%s1 + $0x48] sm:$0xf]
  %v83 = vld [vmem:[%s1 + $0x4c] sm:$0xf]
  %v84 = vld [vmem:[%s1 + $0x50] sm:$0xf]
  %v85 = vld [vmem:[%s1 + $0x54] sm:$0xf]
  %v86 = vld [vmem:[%s1 + $0x58] sm:$0xf]
  %v87 = vld [vmem:[%s1 + $0x5c] sm:$0xf]
  %v88 = vld [vmem:[%s1 + $0x60] sm:$0xf]
  %v89 = vld [vmem:[%s1 + $0x64] sm:$0xf]
  %v90 = vld [vmem:[%s1 + $0x68] sm:$0xf]
  %v91 = vld [vmem:[%s1 + $0x6c] sm:$0xf]
  %v92 = vld [vmem:[%s1 + $0x70] sm:$0xf]
  %v93 = vld [vmem:[%s1 + $0x74] sm:$0xf]
  %v94 = vld [vmem:[%s1 + $0x78] sm:$0xf]
  %v95 = vld [vmem:[%s1 + $0x7c] sm:$0xf]
  %v112 = vunpack.c.l.b16 %v48
  %v113 = vunpack.c.h.b16 %v48
  %v114 = vunpack.c.l.b16 %v49
  %v115 = vunpack.c.h.b16 %v49
  %v116 = vunpack.c.l.b16 %v50
  %v117 = vunpack.c.h.b16 %v50
  %v118 = vunpack.c.l.b16 %v51
  %v119 = vunpack.c.h.b16 %v51
  %v120 = vunpack.c.l.b16 %v52
  %v121 = vunpack.c.h.b16 %v52
  %v122 = vunpack.c.l.b16 %v53
  %v123 = vunpack.c.h.b16 %v53
  %v124 = vunpack.c.l.b16 %v54
  %v125 = vunpack.c.h.b16 %v54
  %v126 = vunpack.c.l.b16 %v55
  %v127 = vunpack.c.h.b16 %v55
  %v128 = vunpack.c.l.b16 %v56
  %v129 = vunpack.c.h.b16 %v56
  %v130 = vunpack.c.l.b16 %v57
  %v131 = vunpack.c.h.b16 %v57
  %v132 = vunpack.c.l.b16 %v58
  %v133 = vunpack.c.h.b16 %v58
  %v134 = vunpack.c.l.b16 %v59
  %v135 = vunpack.c.h.b16 %v59
  %v136 = vunpack.c.l.b16 %v60
  %v137 = vunpack.c.h.b16 %v60
  %v138 = vunpack.c.l.b16 %v61
  %v139 = vunpack.c.h.b16 %v61
  %v140 = vunpack.c.l.b16 %v62
  %v141 = vunpack.c.h.b16 %v62
  %v142 = vunpack.c.l.b16 %v63
  %v143 = vunpack.c.h.b16 %v63
  %v144 = vpack.c.b16 %v114, %v112
  %v145 = vpack.c.b16 %v115, %v113
  %v146 = vpack.c.b16 %v118, %v116
  %v147 = vpack.c.b16 %v119, %v117
  %v148 = vpack.c.b16 %v122, %v120
  %v149 = vpack.c.b16 %v123, %v121
  %v150 = vpack.c.b16 %v126, %v124
  %v151 = vpack.c.b16 %v127, %v125
  %v152 = vpack.c.b16 %v130, %v128
  %v153 = vpack.c.b16 %v131, %v129
  %v154 = vpack.c.b16 %v134, %v132
  %v155 = vpack.c.b16 %v135, %v133
  %v156 = vpack.c.b16 %v138, %v136
  %v157 = vpack.c.b16 %v139, %v137
  %v158 = vpack.c.b16 %v142, %v140
  %v159 = vpack.c.b16 %v143, %v141
  %v208 = vunpack.c.l.b16 %v64
  %v209 = vunpack.c.l.b16 %v65
  %v210 = vunpack.c.l.b16 %v66
  %v211 = vunpack.c.l.b16 %v67
  %v212 = vunpack.c.l.b16 %v68
  %v213 = vunpack.c.l.b16 %v69
  %v214 = vunpack.c.l.b16 %v70
  %v215 = vunpack.c.l.b16 %v71
  %v216 = vunpack.c.l.b16 %v72
  %v217 = vunpack.c.l.b16 %v73
  %v218 = vunpack.c.l.b16 %v74
  %v219 = vunpack.c.l.b16 %v75
  %v220 = vunpack.c.l.b16 %v76
  %v221 = vunpack.c.l.b16 %v77
  %v222 = vunpack.c.l.b16 %v78
  %v223 = vunpack.c.l.b16 %v79
  %v224 = vunpack.c.l.b16 %v80
  %v225 = vunpack.c.l.b16 %v81
  %v226 = vunpack.c.l.b16 %v82
  %v227 = vunpack.c.l.b16 %v83
  %v228 = vunpack.c.l.b16 %v84
  %v229 = vunpack.c.l.b16 %v85
  %v230 = vunpack.c.l.b16 %v86
  %v231 = vunpack.c.l.b16 %v87
  %v232 = vunpack.c.l.b16 %v88
  %v233 = vunpack.c.l.b16 %v89
  %v234 = vunpack.c.l.b16 %v90
  %v235 = vunpack.c.l.b16 %v91
  %v236 = vunpack.c.l.b16 %v92
  %v237 = vunpack.c.l.b16 %v93
  %v238 = vunpack.c.l.b16 %v94
  %v239 = vunpack.c.l.b16 %v95
  %v240 = vpack.c.b16 %v209, %v208
  %v241 = vpack.c.b16 %v211, %v210
  %v242 = vpack.c.b16 %v213, %v212
  %v243 = vpack.c.b16 %v215, %v214
  %v244 = vpack.c.b16 %v217, %v216
  %v245 = vpack.c.b16 %v219, %v218
  %v246 = vpack.c.b16 %v221, %v220
  %v247 = vpack.c.b16 %v223, %v222
  %v248 = vpack.c.b16 %v225, %v224
  %v249 = vpack.c.b16 %v227, %v226
  %v250 = vpack.c.b16 %v229, %v228
  %v251 = vpack.c.b16 %v231, %v230
  %v252 = vpack.c.b16 %v233, %v232
  %v253 = vpack.c.b16 %v235, %v234
  %v254 = vpack.c.b16 %v237, %v236
  %v255 = vpack.c.b16 %v239, %v238
  %272 = vmatprep.subr.bf16.mxu0 0
  %273 = vmatpush1.bf16.msra.mxu0 %v240
  %274 = vmatprep.subr.bf16.mxu0 0
  %275 = vmatpush1.bf16.msra.mxu0 %v241
  %276 = vmatprep.subr.bf16.mxu0 0
  %277 = vmatpush1.bf16.msra.mxu0 %v242
  %278 = vmatprep.subr.bf16.mxu0 0
  %279 = vmatpush1.bf16.msra.mxu0 %v243
  %280 = vmatprep.subr.bf16.mxu0 0
  %281 = vmatpush1.bf16.msra.mxu0 %v244
  %282 = vmatprep.subr.bf16.mxu0 0
  %283 = vmatpush1.bf16.msra.mxu0 %v245
  %284 = vmatprep.subr.bf16.mxu0 0
  %285 = vmatpush1.bf16.msra.mxu0 %v246
  %286 = vmatprep.subr.bf16.mxu0 0
  %287 = vmatpush1.bf16.msra.mxu0 %v247
  %288 = vmatprep.subr.bf16.mxu0 0
  %289 = vmatpush1.bf16.msra.mxu0 %v248
  %290 = vmatprep.subr.bf16.mxu0 0
  %291 = vmatpush1.bf16.msra.mxu0 %v249
  %292 = vmatprep.subr.bf16.mxu0 0
  %293 = vmatpush1.bf16.msra.mxu0 %v250
  %294 = vmatprep.subr.bf16.mxu0 0
  %295 = vmatpush1.bf16.msra.mxu0 %v251
  %296 = vmatprep.subr.bf16.mxu0 0
  %297 = vmatpush1.bf16.msra.mxu0 %v252
  %298 = vmatprep.subr.bf16.mxu0 0
  %299 = vmatpush1.bf16.msra.mxu0 %v253
  %300 = vmatprep.subr.bf16.mxu0 0
  %301 = vmatpush1.bf16.msra.mxu0 %v254
  %302 = vmatprep.subr.bf16.mxu0 0
  %303 = vmatpush1.bf16.msra.mxu0 %v255
  %304 = vmatprep.mubr.bf16.mxu0 %v145
  %305 = vmatmul.mubr.bf16.gmra.mrb[0].mxu0 %v144
  %v306 = vpop.f32.mrb[0].mxu0
  %v307 = vadd.f32 0.0, %v306
  %v308 = vpop.f32.mrb[0].mxu0
  %v309 = vpop.f32.mrb[0].mxu0
  %v310 = vadd.f32 0.0, %v309
  %v311 = vpop.f32.mrb[0].mxu0
  %312 = vmatprep.mubr.bf16.mxu0 %v147
  %313 = vmatmul.mubr.bf16.gmra.mrb[0].mxu0 %v146
  %v314 = vpop.f32.mrb[0].mxu0
  %v315 = vadd.f32 0.0, %v314
  %v316 = vpop.f32.mrb[0].mxu0
  %v317 = vpop.f32.mrb[0].mxu0
  %v318 = vadd.f32 0.0, %v317
  %v319 = vpop.f32.mrb[0].mxu0
  %320 = vmatprep.mubr.bf16.mxu0 %v149
  %321 = vmatmul.mubr.bf16.gmra.mrb[0].mxu0 %v148
  %v322 = vpop.f32.mrb[0].mxu0
  %v323 = vadd.f32 0.0, %v322
  %v324 = vpop.f32.mrb[0].mxu0
  %v325 = vpop.f32.mrb[0].mxu0
  %v326 = vadd.f32 0.0, %v325
  %v327 = vpop.f32.mrb[0].mxu0
  %328 = vmatprep.mubr.bf16.mxu0 %v151
  %329 = vmatmul.mubr.bf16.gmra.mrb[0].mxu0 %v150
  %v330 = vpop.f32.mrb[0].mxu0
  %v331 = vadd.f32 0.0, %v330
  %v332 = vpop.f32.mrb[0].mxu0
  %v333 = vpop.f32.mrb[0].mxu0
  %v334 = vadd.f32 0.0, %v333
  %v335 = vpop.f32.mrb[0].mxu0
  %336 = vmatprep.mubr.bf16.mxu0 %v153
  %337 = vmatmul.mubr.bf16.gmra.mrb[0].mxu0 %v152
  %v338 = vpop.f32.mrb[0].mxu0
  %v339 = vadd.f32 0.0, %v338
  %v340 = vpop.f32.mrb[0].mxu0
  %v341 = vpop.f32.mrb[0].mxu0
  %v342 = vadd.f32 0.0, %v341
  %v343 = vpop.f32.mrb[0].mxu0
  %344 = vmatprep.mubr.bf16.mxu0 %v155
  %345 = vmatmul.mubr.bf16.gmra.mrb[0].mxu0 %v154
  %v346 = vpop.f32.mrb[0].mxu0
  %v347 = vadd.f32 0.0, %v346
  %v348 = vpop.f32.mrb[0].mxu0
  %v349 = vpop.f32.mrb[0].mxu0
  %v350 = vadd.f32 0.0, %v349
  %v351 = vpop.f32.mrb[0].mxu0
  %352 = vmatprep.mubr.bf16.mxu0 %v157
  %353 = vmatmul.mubr.bf16.gmra.mrb[0].mxu0 %v156
  %v354 = vpop.f32.mrb[0].mxu0
  %v355 = vadd.f32 0.0, %v354
  %v356 = vpop.f32.mrb[0].mxu0
  %v357 = vpop.f32.mrb[0].mxu0
  %v358 = vadd.f32 0.0, %v357
  %v359 = vpop.f32.mrb[0].mxu0
  %360 = vmatprep.mubr.bf16.mxu0 %v159
  %361 = vmatmul.mubr.bf16.gmra.mrb[0].mxu0 %v158
  %v362 = vpop.f32.mrb[0].mxu0
  %v363 = vadd.f32 0.0, %v362
  %v364 = vpop.f32.mrb[0].mxu0
  %v365 = vpop.f32.mrb[0].mxu0
  %v366 = vadd.f32 0.0, %v365
  %v367 = vpop.f32.mrb[0].mxu0
  %368 = vdwg.mxu0
  %v369 = vadd.f32 %v32, %v307
  %v370 = vadd.f32 %v33, %v310
  %v371 = vadd.f32 %v34, %v315
  %v372 = vadd.f32 %v35, %v318
  %v373 = vadd.f32 %v36, %v323
  %v374 = vadd.f32 %v37, %v326
  %v375 = vadd.f32 %v38, %v331
  %v376 = vadd.f32 %v39, %v334
  %v377 = vadd.f32 %v40, %v339
  %v378 = vadd.f32 %v41, %v342
  %v379 = vadd.f32 %v42, %v347
  %v380 = vadd.f32 %v43, %v350
  %v381 = vadd.f32 %v44, %v355
  %v382 = vadd.f32 %v45, %v358
  %v383 = vadd.f32 %v46, %v363
  %v384 = vadd.f32 %v47, %v366
  %385 = vst [vmem:[#allocation2] sm:$0xff] %v369
  %386 = vst [vmem:[#allocation2 + $0x8] sm:$0xff] %v370
  %387 = vst [vmem:[#allocation2 + $0x10] sm:$0xff] %v371
  %388 = vst [vmem:[#allocation2 + $0x18] sm:$0xff] %v372
  %389 = vst [vmem:[#allocation2 + $0x20] sm:$0xff] %v373
  %390 = vst [vmem:[#allocation2 + $0x28] sm:$0xff] %v374
  %391 = vst [vmem:[#allocation2 + $0x30] sm:$0xff] %v375
  %392 = vst [vmem:[#allocation2 + $0x38] sm:$0xff] %v376
  %393 = vst [vmem:[#allocation2 + $0x40] sm:$0xff] %v377
  %394 = vst [vmem:[#allocation2 + $0x48] sm:$0xff] %v378
  %395 = vst [vmem:[#allocation2 + $0x50] sm:$0xff] %v379
  %396 = vst [vmem:[#allocation2 + $0x58] sm:$0xff] %v380
  %397 = vst [vmem:[#allocation2 + $0x60] sm:$0xff] %v381
  %398 = vst [vmem:[#allocation2 + $0x68] sm:$0xff] %v382
  %399 = vst [vmem:[#allocation2 + $0x70] sm:$0xff] %v383
  %400 = vst [vmem:[#allocation2 + $0x78] sm:$0xff] %v384
  // Predicated region
  $region14: #{encoder_forward.27} parent=0 // pred_check
    %p401 = pneg %p12
  $region15: #{encoder_forward.27} parent=0 // pred_check_branch
    %403 = sbr.rel (%p401) target = $region17
  $region16: #{encoder_forward.27} parent=0 // pred_region
    %v404 = vld [vmem:[#allocation2] sm:$0xff]
    %v405 = vld [vmem:[#allocation2 + $0x8] sm:$0xff]
    %v406 = vld [vmem:[#allocation2 + $0x10] sm:$0xff]
    %v407 = vld [vmem:[#allocation2 + $0x18] sm:$0xff]
    %v408 = vld [vmem:[#allocation2 + $0x20] sm:$0xff]
    %v409 = vld [vmem:[#allocation2 + $0x28] sm:$0xff]
    %v410 = vld [vmem:[#allocation2 + $0x30] sm:$0xff]
    %v411 = vld [vmem:[#allocation2 + $0x38] sm:$0xff]
    %v412 = vld [vmem:[#allocation2 + $0x40] sm:$0xff]
    %v413 = vld [vmem:[#allocation2 + $0x48] sm:$0xff]
    %v414 = vld [vmem:[#allocation2 + $0x50] sm:$0xff]
    %v415 = vld [vmem:[#allocation2 + $0x58] sm:$0xff]
    %v416 = vld [vmem:[#allocation2 + $0x60] sm:$0xff]
    %v417 = vld [vmem:[#allocation2 + $0x68] sm:$0xff]
    %v418 = vld [vmem:[#allocation2 + $0x70] sm:$0xff]
    %v419 = vld [vmem:[#allocation2 + $0x78] sm:$0xff]
    %v420 = vpack.c.bf16 %v405, %v404
    %v421 = vpack.c.bf16 %v407, %v406
    %v422 = vpack.c.bf16 %v409, %v408
    %v423 = vpack.c.bf16 %v411, %v410
    %v424 = vpack.c.bf16 %v413, %v412
    %v425 = vpack.c.bf16 %v415, %v414
    %v426 = vpack.c.bf16 %v417, %v416
    %v427 = vpack.c.bf16 %v419, %v418
    %v436 = vunpack.c.l.b16 %v420
    %v437 = vunpack.c.h.b16 %v420
    %v438 = vunpack.c.l.b16 %v421
    %v439 = vunpack.c.h.b16 %v421
    %v440 = vunpack.c.l.b16 %v422
    %v441 = vunpack.c.h.b16 %v422
    %v442 = vunpack.c.l.b16 %v423
    %v443 = vunpack.c.h.b16 %v423
    %v444 = vunpack.c.l.b16 %v424
    %v445 = vunpack.c.h.b16 %v424
    %v446 = vunpack.c.l.b16 %v425
    %v447 = vunpack.c.h.b16 %v425
    %v448 = vunpack.c.l.b16 %v426
    %v449 = vunpack.c.h.b16 %v426
    %v450 = vunpack.c.l.b16 %v427
    %v451 = vunpack.c.h.b16 %v427
    %v452 = vpack.c.b16 %v436, %v436
    %v453 = vpack.c.b16 %v437, %v437
    %v454 = vpack.c.b16 %v438, %v438
    %v455 = vpack.c.b16 %v439, %v439
    %v456 = vpack.c.b16 %v440, %v440
    %v457 = vpack.c.b16 %v441, %v441
    %v458 = vpack.c.b16 %v442, %v442
    %v459 = vpack.c.b16 %v443, %v443
    %v460 = vpack.c.b16 %v444, %v444
    %v461 = vpack.c.b16 %v445, %v445
    %v462 = vpack.c.b16 %v446, %v446
    %v463 = vpack.c.b16 %v447, %v447
    %v464 = vpack.c.b16 %v448, %v448
    %v465 = vpack.c.b16 %v449, %v449
    %v466 = vpack.c.b16 %v450, %v450
    %v467 = vpack.c.b16 %v451, %v451
    %484 = vst [vmem:[%s2] sm:$0xf] %v452
    %485 = vst [vmem:[%s2 + $0x4] sm:$0xf] %v453
    %486 = vst [vmem:[%s2 + $0x8] sm:$0xf] %v454
    %487 = vst [vmem:[%s2 + $0xc] sm:$0xf] %v455
    %488 = vst [vmem:[%s2 + $0x10] sm:$0xf] %v456
    %489 = vst [vmem:[%s2 + $0x14] sm:$0xf] %v457
    %490 = vst [vmem:[%s2 + $0x18] sm:$0xf] %v458
    %491 = vst [vmem:[%s2 + $0x1c] sm:$0xf] %v459
    %492 = vst [vmem:[%s2 + $0x20] sm:$0xf] %v460
    %493 = vst [vmem:[%s2 + $0x24] sm:$0xf] %v461
    %494 = vst [vmem:[%s2 + $0x28] sm:$0xf] %v462
    %495 = vst [vmem:[%s2 + $0x2c] sm:$0xf] %v463
    %496 = vst [vmem:[%s2 + $0x30] sm:$0xf] %v464
    %497 = vst [vmem:[%s2 + $0x34] sm:$0xf] %v465
    %498 = vst [vmem:[%s2 + $0x38] sm:$0xf] %v466
    %499 = vst [vmem:[%s2 + $0x3c] sm:$0xf] %v467
  $region17: #{encoder_forward.27} parent=0 // pred_fallthru
    _
  // Predicated region
  $region18: #{encoder_forward.27} parent=0 // pred_check
    _
  $region19: #{encoder_forward.27} parent=0 // pred_check_branch
    %501 = sbr.rel (0) target = $region21
  $region20: #{encoder_forward.27} parent=0 // pred_region
    _
  $region21: #{encoder_forward.27} parent=0 // pred_fallthru
    _
  // Predicated region
  $region22: #{encoder_forward.27} parent=0 // pred_check
    _
  $region23: #{encoder_forward.27} parent=0 // pred_check_branch
    %503 = sbr.rel (0) target = $region25
  $region24: #{encoder_forward.27} parent=0 // pred_region
    _
  $region25: #{encoder_forward.27} parent=0 // pred_fallthru
    _

// kernel: encoder_forward.28
$region0: #{encoder_forward.28}
  #allocation0 [shape = 'u32[]', space=smem, size = 0x4, offset = 0x4, fixed_abs, tag = 'smem constant byte address 0x4 - core index']
  #allocation1 [shape = 'u32[144,128]{1,0:T(1,128)}', space=vmem, size = 0x12000, scoped, tag = 'internal scratch']
  %s0 = inlined_call_operand.vmem [shape: bf16[128,128], index: 0, kind: input, shape index: {}]
  %s1 = inlined_call_operand.vmem [shape: f32[1,128], index: 1, kind: output, shape index: {0}]
  %s2 = inlined_call_operand.vmem [shape: f32[1,128], index: 2, kind: output, shape index: {1}]
  %3 = xla_tuple %s1, %s2
  %s4 = sld [smem:[#allocation0]]
  $region26: #{encoder_forward.28} parent=0
    _
  %s6 = ssub.s32 1, %s4
  %s7 = scalar_select 0, %s6, %s4
  // Predicated region
  $region2: #{encoder_forward.28} parent=0 // pred_check
    _
  $region3: #{encoder_forward.28} parent=0 // pred_check_branch
    %9 = sbr.rel (0) target = $region5
  $region4: #{encoder_forward.28} parent=0 // pred_region
    %s10 = sadd.s32 0, 0
    %s11 = smul.u32 16, %s10
    %p12 = scmp.lt.s32.totalorder %s11, 15
    %s13 = scalar_select %p12, %s11, 15
    %s14 = smul.addr %s13, 4
    %s15 = scalar_lea.vmem %s0, %s14
    %s16 = sadd.s32 0, 0
    %s17 = smul.u32 16, %s16
  $region5: #{encoder_forward.28} parent=0 // pred_fallthru
    _
  %s18 = sadd.s32 0, 0
  %s19 = smul.u32 16, %s18
  %p20 = scmp.lt.s32.totalorder %s19, 15
  %s21 = scalar_select %p20, %s19, 15
  %s22 = smul.addr %s21, 4
  %s23 = scalar_lea.vmem %s0, %s22
  %s24 = sadd.s32 0, 0
  %s25 = smul.u32 16, %s24
  %p26 = scmp.lt.s32.totalorder %s25, 15
  %s27 = scalar_select %p26, %s25, 15
  %s28 = smul.addr %s27, 4
  %s29 = scalar_lea.vmem %s0, %s28
  %s30 = sadd.s32 0, 0
  %s31 = smul.u32 16, %s30
  %p32 = scmp.eq.s32.totalorder 0, 0
  // Predicated region
  $region6: #{encoder_forward.28} parent=0 // pred_check
    %p33 = pneg %p32
  $region7: #{encoder_forward.28} parent=0 // pred_check_branch
    %35 = sbr.rel (%p33) target = $region9
  $region8: #{encoder_forward.28} parent=0 // pred_region
    %36 = vst [vmem:[%s1] sm:$0x1] 0.0
    %37 = vst [vmem:[%s2] sm:$0x1] 0.0
  $region9: #{encoder_forward.28} parent=0 // pred_fallthru
    _
  %v38 = vld [vmem:[%s29] sm:$0xf]
  %v39 = vld [vmem:[%s29 + $0x4] sm:$0xf]
  %v40 = vld [vmem:[%s29 + $0x8] sm:$0xf]
  %v41 = vld [vmem:[%s29 + $0xc] sm:$0xf]
  %v42 = vld [vmem:[%s29 + $0x10] sm:$0xf]
  %v43 = vld [vmem:[%s29 + $0x14] sm:$0xf]
  %v44 = vld [vmem:[%s29 + $0x18] sm:$0xf]
  %v45 = vld [vmem:[%s29 + $0x1c] sm:$0xf]
  %v46 = vld [vmem:[%s29 + $0x20] sm:$0xf]
  %v47 = vld [vmem:[%s29 + $0x24] sm:$0xf]
  %v48 = vld [vmem:[%s29 + $0x28] sm:$0xf]
  %v49 = vld [vmem:[%s29 + $0x2c] sm:$0xf]
  %v50 = vld [vmem:[%s29 + $0x30] sm:$0xf]
  %v51 = vld [vmem:[%s29 + $0x34] sm:$0xf]
  %v52 = vld [vmem:[%s29 + $0x38] sm:$0xf]
  %v53 = vld [vmem:[%s29 + $0x3c] sm:$0xf]
  %v54 = vunpack.c.l.bf16 %v38
  %v55 = vunpack.c.l.bf16 %v39
  %v56 = vunpack.c.l.bf16 %v40
  %v57 = vunpack.c.l.bf16 %v41
  %v58 = vunpack.c.l.bf16 %v42
  %v59 = vunpack.c.l.bf16 %v43
  %v60 = vunpack.c.l.bf16 %v44
  %v61 = vunpack.c.l.bf16 %v45
  %v62 = vunpack.c.l.bf16 %v46
  %v63 = vunpack.c.l.bf16 %v47
  %v64 = vunpack.c.l.bf16 %v48
  %v65 = vunpack.c.l.bf16 %v49
  %v66 = vunpack.c.l.bf16 %v50
  %v67 = vunpack.c.l.bf16 %v51
  %v68 = vunpack.c.l.bf16 %v52
  %v69 = vunpack.c.l.bf16 %v53
  %v70 = vld [vmem:[%s1] sm:$0x1]
  %v71 = vadd.f32 %v54, %v55
  %v72 = vadd.f32 %v71, %v56
  %v73 = vadd.f32 %v72, %v57
  %v74 = vadd.f32 %v73, %v58
  %v75 = vadd.f32 %v74, %v59
  %v76 = vadd.f32 %v75, %v60
  %v77 = vadd.f32 %v76, %v61
  %v78 = vadd.f32 %v77, %v62
  %v79 = vadd.f32 %v78, %v63
  %v80 = vadd.f32 %v79, %v64
  %v81 = vadd.f32 %v80, %v65
  %v82 = vadd.f32 %v81, %v66
  %v83 = vadd.f32 %v82, %v67
  %v84 = vadd.f32 %v83, %v68
  %v85 = vadd.f32 %v84, %v69
  %v86 = vrot.slane %v85, 4
  %v87 = vadd.f32 %v85, %v86
  %v88 = vrot.slane %v87, 2
  %v89 = vadd.f32 %v87, %v88
  %v90 = vrot.slane %v89, 1
  %v91 = vadd.f32 %v89, %v90
  %v92 = vadd.f32 %v70, %v91
  %93 = vst [vmem:[%s1] sm:$0x1] %v92
  %v94 = vld [vmem:[%s2] sm:$0x1]
  %v95 = vmul.f32 %v54, %v54
  %v96 = vmul.f32 %v55, %v55
  %v97 = vmul.f32 %v56, %v56
  %v98 = vmul.f32 %v57, %v57
  %v99 = vmul.f32 %v58, %v58
  %v100 = vmul.f32 %v59, %v59
  %v101 = vmul.f32 %v60, %v60
  %v102 = vmul.f32 %v61, %v61
  %v103 = vmul.f32 %v62, %v62
  %v104 = vmul.f32 %v63, %v63
  %v105 = vmul.f32 %v64, %v64
  %v106 = vmul.f32 %v65, %v65
  %v107 = vmul.f32 %v66, %v66
  %v108 = vmul.f32 %v67, %v67
  %v109 = vmul.f32 %v68, %v68
  %v110 = vmul.f32 %v69, %v69
  %v111 = vadd.f32 %v95, %v96
  %v112 = vadd.f32 %v111, %v97
  %v113 = vadd.f32 %v112, %v98
  %v114 = vadd.f32 %v113, %v99
  %v115 = vadd.f32 %v114, %v100
  %v116 = vadd.f32 %v115, %v101
  %v117 = vadd.f32 %v116, %v102
  %v118 = vadd.f32 %v117, %v103
  %v119 = vadd.f32 %v118, %v104
  %v120 = vadd.f32 %v119, %v105
  %v121 = vadd.f32 %v120, %v106
  %v122 = vadd.f32 %v121, %v107
  %v123 = vadd.f32 %v122, %v108
  %v124 = vadd.f32 %v123, %v109
  %v125 = vadd.f32 %v124, %v110
  %v126 = vrot.slane %v125, 4
  %v127 = vadd.f32 %v125, %v126
  %v128 = vrot.slane %v127, 2
  %v129 = vadd.f32 %v127, %v128
  %v130 = vrot.slane %v129, 1
  %v131 = vadd.f32 %v129, %v130
  %v132 = vadd.f32 %v94, %v131
  %133 = vst [vmem:[%s2] sm:$0x1] %v132
  // Predicated region
  $region10: #{encoder_forward.28} parent=0 // pred_check
    _
  $region11: #{encoder_forward.28} parent=0 // pred_check_branch
    %135 = sbr.rel (0) target = $region13
  $region12: #{encoder_forward.28} parent=0 // pred_region
    _
  $region13: #{encoder_forward.28} parent=0 // pred_fallthru
    _
  // Predicated region
  $region14: #{encoder_forward.28} parent=0 // pred_check
    _
  $region15: #{encoder_forward.28} parent=0 // pred_check_branch
    %137 = sbr.rel (0) target = $region17
  $region16: #{encoder_forward.28} parent=0 // pred_region
    _
  $region17: #{encoder_forward.28} parent=0 // pred_fallthru
    _
  // Predicated region
  $region18: #{encoder_forward.28} parent=0 // pred_check
    _
  $region19: #{encoder_forward.28} parent=0 // pred_check_branch
    %139 = sbr.rel (0) target = $region21
  $region20: #{encoder_forward.28} parent=0 // pred_region
    _
  $region21: #{encoder_forward.28} parent=0 // pred_fallthru
    _
  // Predicated region
  $region22: #{encoder_forward.28} parent=0 // pred_check
    _
  $region23: #{encoder_forward.28} parent=0 // pred_check_branch
    %141 = sbr.rel (0) target = $region25
  $region24: #{encoder_forward.28} parent=0 // pred_region
    _
  $region25: #{encoder_forward.28} parent=0 // pred_fallthru
    _

// kernel: encoder_forward.29
$region0: #{encoder_forward.29}
  #allocation0 [shape = 'u32[]', space=smem, size = 0x4, offset = 0x4, fixed_abs, tag = 'smem constant byte address 0x4 - core index']
  #allocation1 [shape = 'u32[144,128]{1,0:T(1,128)}', space=vmem, size = 0x12000, scoped, tag = 'internal scratch']
  %s0 = inlined_call_operand.vmem [shape: bf16[128,128], index: 0, kind: input, shape index: {}]
  %s1 = inlined_call_operand.vmem [shape: f32[1,128], index: 1, kind: input, shape index: {}]
  %s2 = inlined_call_operand.vmem [shape: f32[1,128], index: 2, kind: input, shape index: {}]
  %s3 = inlined_call_operand.vmem [shape: bf16[128,128], index: 3, kind: output, shape index: {}]
  %s4 = sld [smem:[#allocation0]]
  $region22: #{encoder_forward.29} parent=0
    _
  %s6 = ssub.s32 1, %s4
  %s7 = scalar_select 0, %s6, %s4
  // Predicated region
  $region2: #{encoder_forward.29} parent=0 // pred_check
    _
  $region3: #{encoder_forward.29} parent=0 // pred_check_branch
    %9 = sbr.rel (0) target = $region5
  $region4: #{encoder_forward.29} parent=0 // pred_region
    _
  $region5: #{encoder_forward.29} parent=0 // pred_fallthru
    _
  // Predicated region
  $region6: #{encoder_forward.29} parent=0 // pred_check
    _
  $region7: #{encoder_forward.29} parent=0 // pred_check_branch
    %11 = sbr.rel (0) target = $region9
  $region8: #{encoder_forward.29} parent=0 // pred_region
    _
  $region9: #{encoder_forward.29} parent=0 // pred_fallthru
    _
  // Predicated region
  $region10: #{encoder_forward.29} parent=0 // pred_check
    _
  $region11: #{encoder_forward.29} parent=0 // pred_check_branch
    %13 = sbr.rel (0) target = $region13
  $region12: #{encoder_forward.29} parent=0 // pred_region
    _
  $region13: #{encoder_forward.29} parent=0 // pred_fallthru
    _
  %v14 = vld [vmem:[%s0] sm:$0xf]
  %v15 = vld [vmem:[%s0 + $0x4] sm:$0xf]
  %v16 = vld [vmem:[%s0 + $0x8] sm:$0xf]
  %v17 = vld [vmem:[%s0 + $0xc] sm:$0xf]
  %v18 = vld [vmem:[%s0 + $0x10] sm:$0xf]
  %v19 = vld [vmem:[%s0 + $0x14] sm:$0xf]
  %v20 = vld [vmem:[%s0 + $0x18] sm:$0xf]
  %v21 = vld [vmem:[%s0 + $0x1c] sm:$0xf]
  %v22 = vld [vmem:[%s0 + $0x20] sm:$0xf]
  %v23 = vld [vmem:[%s0 + $0x24] sm:$0xf]
  %v24 = vld [vmem:[%s0 + $0x28] sm:$0xf]
  %v25 = vld [vmem:[%s0 + $0x2c] sm:$0xf]
  %v26 = vld [vmem:[%s0 + $0x30] sm:$0xf]
  %v27 = vld [vmem:[%s0 + $0x34] sm:$0xf]
  %v28 = vld [vmem:[%s0 + $0x38] sm:$0xf]
  %v29 = vld [vmem:[%s0 + $0x3c] sm:$0xf]
  %v30 = vunpack.c.l.bf16 %v14
  %v31 = vunpack.c.l.bf16 %v15
  %v32 = vunpack.c.l.bf16 %v16
  %v33 = vunpack.c.l.bf16 %v17
  %v34 = vunpack.c.l.bf16 %v18
  %v35 = vunpack.c.l.bf16 %v19
  %v36 = vunpack.c.l.bf16 %v20
  %v37 = vunpack.c.l.bf16 %v21
  %v38 = vunpack.c.l.bf16 %v22
  %v39 = vunpack.c.l.bf16 %v23
  %v40 = vunpack.c.l.bf16 %v24
  %v41 = vunpack.c.l.bf16 %v25
  %v42 = vunpack.c.l.bf16 %v26
  %v43 = vunpack.c.l.bf16 %v27
  %v44 = vunpack.c.l.bf16 %v28
  %v45 = vunpack.c.l.bf16 %v29
  %v46 = vld [vmem:[%s1] sm:$0x1]
  %v48 = vlaneseq
  %v49 = vshrl.u32 %v48, 7
  %v50 = vsub.s32 0, %v49
  %v51 = vrot.slane %v46, %v50
  %v53 = vmul.f32 %v30, %v51
  %v54 = vmul.f32 %v31, %v51
  %v55 = vmul.f32 %v32, %v51
  %v56 = vmul.f32 %v33, %v51
  %v57 = vmul.f32 %v34, %v51
  %v58 = vmul.f32 %v35, %v51
  %v59 = vmul.f32 %v36, %v51
  %v60 = vmul.f32 %v37, %v51
  %v61 = vmul.f32 %v38, %v51
  %v62 = vmul.f32 %v39, %v51
  %v63 = vmul.f32 %v40, %v51
  %v64 = vmul.f32 %v41, %v51
  %v65 = vmul.f32 %v42, %v51
  %v66 = vmul.f32 %v43, %v51
  %v67 = vmul.f32 %v44, %v51
  %v68 = vmul.f32 %v45, %v51
  %v69 = vld [vmem:[%s2] sm:$0x1]
  %v71 = vlaneseq
  %v72 = vshrl.u32 %v71, 7
  %v73 = vsub.s32 0, %v72
  %v74 = vrot.slane %v69, %v73
  %v76 = vadd.f32 %v53, %v74
  %v77 = vadd.f32 %v54, %v74
  %v78 = vadd.f32 %v55, %v74
  %v79 = vadd.f32 %v56, %v74
  %v80 = vadd.f32 %v57, %v74
  %v81 = vadd.f32 %v58, %v74
  %v82 = vadd.f32 %v59, %v74
  %v83 = vadd.f32 %v60, %v74
  %v84 = vadd.f32 %v61, %v74
  %v85 = vadd.f32 %v62, %v74
  %v86 = vadd.f32 %v63, %v74
  %v87 = vadd.f32 %v64, %v74
  %v88 = vadd.f32 %v65, %v74
  %v89 = vadd.f32 %v66, %v74
  %v90 = vadd.f32 %v67, %v74
  %v91 = vadd.f32 %v68, %v74
  %v92 = vmax.f32 %v76, 0.0
  %v93 = vmax.f32 %v77, 0.0
  %v94 = vmax.f32 %v78, 0.0
  %v95 = vmax.f32 %v79, 0.0
  %v96 = vmax.f32 %v80, 0.0
  %v97 = vmax.f32 %v81, 0.0
  %v98 = vmax.f32 %v82, 0.0
  %v99 = vmax.f32 %v83, 0.0
  %v100 = vmax.f32 %v84, 0.0
  %v101 = vmax.f32 %v85, 0.0
  %v102 = vmax.f32 %v86, 0.0
  %v103 = vmax.f32 %v87, 0.0
  %v104 = vmax.f32 %v88, 0.0
  %v105 = vmax.f32 %v89, 0.0
  %v106 = vmax.f32 %v90, 0.0
  %v107 = vmax.f32 %v91, 0.0
  %v108 = vpack.c.bf16 %v93, %v92
  %v109 = vpack.c.bf16 %v95, %v94
  %v110 = vpack.c.bf16 %v97, %v96
  %v111 = vpack.c.bf16 %v99, %v98
  %v112 = vpack.c.bf16 %v101, %v100
  %v113 = vpack.c.bf16 %v103, %v102
  %v114 = vpack.c.bf16 %v105, %v104
  %v115 = vpack.c.bf16 %v107, %v106
  %v124 = vunpack.c.l.b16 %v108
  %v125 = vunpack.c.h.b16 %v108
  %v126 = vunpack.c.l.b16 %v109
  %v127 = vunpack.c.h.b16 %v109
  %v128 = vunpack.c.l.b16 %v110
  %v129 = vunpack.c.h.b16 %v110
  %v130 = vunpack.c.l.b16 %v111
  %v131 = vunpack.c.h.b16 %v111
  %v132 = vunpack.c.l.b16 %v112
  %v133 = vunpack.c.h.b16 %v112
  %v134 = vunpack.c.l.b16 %v113
  %v135 = vunpack.c.h.b16 %v113
  %v136 = vunpack.c.l.b16 %v114
  %v137 = vunpack.c.h.b16 %v114
  %v138 = vunpack.c.l.b16 %v115
  %v139 = vunpack.c.h.b16 %v115
  %v140 = vpack.c.b16 %v124, %v124
  %v141 = vpack.c.b16 %v125, %v125
  %v142 = vpack.c.b16 %v126, %v126
  %v143 = vpack.c.b16 %v127, %v127
  %v144 = vpack.c.b16 %v128, %v128
  %v145 = vpack.c.b16 %v129, %v129
  %v146 = vpack.c.b16 %v130, %v130
  %v147 = vpack.c.b16 %v131, %v131
  %v148 = vpack.c.b16 %v132, %v132
  %v149 = vpack.c.b16 %v133, %v133
  %v150 = vpack.c.b16 %v134, %v134
  %v151 = vpack.c.b16 %v135, %v135
  %v152 = vpack.c.b16 %v136, %v136
  %v153 = vpack.c.b16 %v137, %v137
  %v154 = vpack.c.b16 %v138, %v138
  %v155 = vpack.c.b16 %v139, %v139
  %172 = vst [vmem:[%s3] sm:$0xf] %v140
  %173 = vst [vmem:[%s3 + $0x4] sm:$0xf] %v141
  %174 = vst [vmem:[%s3 + $0x8] sm:$0xf] %v142
  %175 = vst [vmem:[%s3 + $0xc] sm:$0xf] %v143
  %176 = vst [vmem:[%s3 + $0x10] sm:$0xf] %v144
  %177 = vst [vmem:[%s3 + $0x14] sm:$0xf] %v145
  %178 = vst [vmem:[%s3 + $0x18] sm:$0xf] %v146
  %179 = vst [vmem:[%s3 + $0x1c] sm:$0xf] %v147
  %180 = vst [vmem:[%s3 + $0x20] sm:$0xf] %v148
  %181 = vst [vmem:[%s3 + $0x24] sm:$0xf] %v149
  %182 = vst [vmem:[%s3 + $0x28] sm:$0xf] %v150
  %183 = vst [vmem:[%s3 + $0x2c] sm:$0xf] %v151
  %184 = vst [vmem:[%s3 + $0x30] sm:$0xf] %v152
  %185 = vst [vmem:[%s3 + $0x34] sm:$0xf] %v153
  %186 = vst [vmem:[%s3 + $0x38] sm:$0xf] %v154
  %187 = vst [vmem:[%s3 + $0x3c] sm:$0xf] %v155
  // Predicated region
  $region14: #{encoder_forward.29} parent=0 // pred_check
    _
  $region15: #{encoder_forward.29} parent=0 // pred_check_branch
    %189 = sbr.rel (0) target = $region17
  $region16: #{encoder_forward.29} parent=0 // pred_region
    _
  $region17: #{encoder_forward.29} parent=0 // pred_fallthru
    _
  // Predicated region
  $region18: #{encoder_forward.29} parent=0 // pred_check
    _
  $region19: #{encoder_forward.29} parent=0 // pred_check_branch
    %191 = sbr.rel (0) target = $region21
  $region20: #{encoder_forward.29} parent=0 // pred_region
    _
  $region21: #{encoder_forward.29} parent=0 // pred_fallthru
    _

// kernel: encoder_forward.31
$region0: #{encoder_forward.31}
  #allocation0 [shape = 'u32[]', space=smem, size = 0x4, offset = 0x4, fixed_abs, tag = 'smem constant byte address 0x4 - core index']
  #allocation1 [shape = 'u32[144,128]{1,0:T(1,128)}', space=vmem, size = 0x12000, scoped, tag = 'internal scratch']
  %s0 = inlined_call_operand.vmem [shape: bf16[32,128], index: 0, kind: input, shape index: {}]
  %s1 = inlined_call_operand.vmem [shape: f32[1,128], index: 1, kind: output, shape index: {0}]
  %s2 = inlined_call_operand.vmem [shape: f32[1,128], index: 2, kind: output, shape index: {1}]
  %3 = xla_tuple %s1, %s2
  %s4 = sld [smem:[#allocation0]]
  $region26: #{encoder_forward.31} parent=0
    _
  %s6 = ssub.s32 1, %s4
  %s7 = scalar_select 0, %s6, %s4
  // Predicated region
  $region2: #{encoder_forward.31} parent=0 // pred_check
    _
  $region3: #{encoder_forward.31} parent=0 // pred_check_branch
    %9 = sbr.rel (0) target = $region5
  $region4: #{encoder_forward.31} parent=0 // pred_region
    %s10 = sadd.s32 0, 0
    %s11 = smul.u32 4, %s10
    %p12 = scmp.lt.s32.totalorder %s11, 3
    %s13 = scalar_select %p12, %s11, 3
    %s14 = smul.addr %s13, 4
    %s15 = scalar_lea.vmem %s0, %s14
    %s16 = sadd.s32 0, 0
    %s17 = smul.u32 4, %s16
  $region5: #{encoder_forward.31} parent=0 // pred_fallthru
    _
  %s18 = sadd.s32 0, 0
  %s19 = smul.u32 4, %s18
  %p20 = scmp.lt.s32.totalorder %s19, 3
  %s21 = scalar_select %p20, %s19, 3
  %s22 = smul.addr %s21, 4
  %s23 = scalar_lea.vmem %s0, %s22
  %s24 = sadd.s32 0, 0
  %s25 = smul.u32 4, %s24
  %p26 = scmp.lt.s32.totalorder %s25, 3
  %s27 = scalar_select %p26, %s25, 3
  %s28 = smul.addr %s27, 4
  %s29 = scalar_lea.vmem %s0, %s28
  %s30 = sadd.s32 0, 0
  %s31 = smul.u32 4, %s30
  %p32 = scmp.eq.s32.totalorder 0, 0
  // Predicated region
  $region6: #{encoder_forward.31} parent=0 // pred_check
    %p33 = pneg %p32
  $region7: #{encoder_forward.31} parent=0 // pred_check_branch
    %35 = sbr.rel (%p33) target = $region9
  $region8: #{encoder_forward.31} parent=0 // pred_region
    %36 = vst [vmem:[%s1] sm:$0x1] 0.0
    %37 = vst [vmem:[%s2] sm:$0x1] 0.0
  $region9: #{encoder_forward.31} parent=0 // pred_fallthru
    _
  %v38 = vld [vmem:[%s29] sm:$0xf]
  %v39 = vld [vmem:[%s29 + $0x4] sm:$0xf]
  %v40 = vld [vmem:[%s29 + $0x8] sm:$0xf]
  %v41 = vld [vmem:[%s29 + $0xc] sm:$0xf]
  %v42 = vunpack.c.l.bf16 %v38
  %v43 = vunpack.c.l.bf16 %v39
  %v44 = vunpack.c.l.bf16 %v40
  %v45 = vunpack.c.l.bf16 %v41
  %v46 = vld [vmem:[%s1] sm:$0x1]
  %v47 = vadd.f32 %v42, %v43
  %v48 = vadd.f32 %v47, %v44
  %v49 = vadd.f32 %v48, %v45
  %v50 = vrot.slane %v49, 4
  %v51 = vadd.f32 %v49, %v50
  %v52 = vrot.slane %v51, 2
  %v53 = vadd.f32 %v51, %v52
  %v54 = vrot.slane %v53, 1
  %v55 = vadd.f32 %v53, %v54
  %v56 = vadd.f32 %v46, %v55
  %57 = vst [vmem:[%s1] sm:$0x1] %v56
  %v58 = vld [vmem:[%s2] sm:$0x1]
  %v59 = vmul.f32 %v42, %v42
  %v60 = vmul.f32 %v43, %v43
  %v61 = vmul.f32 %v44, %v44
  %v62 = vmul.f32 %v45, %v45
  %v63 = vadd.f32 %v59, %v60
  %v64 = vadd.f32 %v63, %v61
  %v65 = vadd.f32 %v64, %v62
  %v66 = vrot.slane %v65, 4
  %v67 = vadd.f32 %v65, %v66
  %v68 = vrot.slane %v67, 2
  %v69 = vadd.f32 %v67, %v68
  %v70 = vrot.slane %v69, 1
  %v71 = vadd.f32 %v69, %v70
  %v72 = vadd.f32 %v58, %v71
  %73 = vst [vmem:[%s2] sm:$0x1] %v72
  // Predicated region
  $region10: #{encoder_forward.31} parent=0 // pred_check
    _
  $region11: #{encoder_forward.31} parent=0 // pred_check_branch
    %75 = sbr.rel (0) target = $region13
  $region12: #{encoder_forward.31} parent=0 // pred_region
    _
  $region13: #{encoder_forward.31} parent=0 // pred_fallthru
    _
  // Predicated region
  $region14: #{encoder_forward.31} parent=0 // pred_check
    _
  $region15: #{encoder_forward.31} parent=0 // pred_check_branch
    %77 = sbr.rel (0) target = $region17
  $region16: #{encoder_forward.31} parent=0 // pred_region
    _
  $region17: #{encoder_forward.31} parent=0 // pred_fallthru
    _
  // Predicated region
  $region18: #{encoder_forward.31} parent=0 // pred_check
    _
  $region19: #{encoder_forward.31} parent=0 // pred_check_branch
    %79 = sbr.rel (0) target = $region21
  $region20: #{encoder_forward.31} parent=0 // pred_region
    _
  $region21: #{encoder_forward.31} parent=0 // pred_fallthru
    _
  // Predicated region
  $region22: #{encoder_forward.31} parent=0 // pred_check
    _
  $region23: #{encoder_forward.31} parent=0 // pred_check_branch
    %81 = sbr.rel (0) target = $region25
  $region24: #{encoder_forward.31} parent=0 // pred_region
    _
  $region25: #{encoder_forward.31} parent=0 // pred_fallthru
    _

// kernel: encoder_forward.30
$region0: #{encoder_forward.30}
  #allocation0 [shape = 'u32[]', space=smem, size = 0x4, offset = 0x4, fixed_abs, tag = 'smem constant byte address 0x4 - core index']
  #allocation1 [shape = 'u32[144,128]{1,0:T(1,128)}', space=vmem, size = 0x12000, scoped, tag = 'internal scratch']
  #allocation2 [shape = 'f32[128,128]{1,0:T(8,128)}', space=vmem, size = 0x10000, scoped, tag = 'scratch operand']
  %s0 = inlined_call_operand.vmem [shape: bf16[128,384], index: 0, kind: input, shape index: {}]
  %s1 = inlined_call_operand.vmem [shape: bf16[384,128], index: 1, kind: input, shape index: {}]
  %s2 = inlined_call_operand.vmem [shape: bf16[128,128], index: 2, kind: output, shape index: {}]
  %s3 = sld [smem:[#allocation0]]
  $region26: #{encoder_forward.30} parent=0
    _
  %s5 = ssub.s32 1, %s3
  %s6 = scalar_select 0, %s5, %s3
  // Predicated region
  $region2: #{encoder_forward.30} parent=0 // pred_check
    _
  $region3: #{encoder_forward.30} parent=0 // pred_check_branch
    %8 = sbr.rel (0) target = $region5
  $region4: #{encoder_forward.30} parent=0 // pred_region
    _
  $region5: #{encoder_forward.30} parent=0 // pred_fallthru
    _
  // Predicated region
  $region6: #{encoder_forward.30} parent=0 // pred_check
    _
  $region7: #{encoder_forward.30} parent=0 // pred_check_branch
    %10 = sbr.rel (0) target = $region9
  $region8: #{encoder_forward.30} parent=0 // pred_region
    _
  $region9: #{encoder_forward.30} parent=0 // pred_fallthru
    _
  %p12 = scmp.eq.s32.totalorder 0, 0
  // Predicated region
  $region10: #{encoder_forward.30} parent=0 // pred_check
    %p13 = pneg %p12
  $region11: #{encoder_forward.30} parent=0 // pred_check_branch
    %15 = sbr.rel (%p13) target = $region13
  $region12: #{encoder_forward.30} parent=0 // pred_region
    %16 = vst [vmem:[#allocation2] sm:$0xff] 0.0
    %17 = vst [vmem:[#allocation2 + $0x8] sm:$0xff] 0.0
    %18 = vst [vmem:[#allocation2 + $0x10] sm:$0xff] 0.0
    %19 = vst [vmem:[#allocation2 + $0x18] sm:$0xff] 0.0
    %20 = vst [vmem:[#allocation2 + $0x20] sm:$0xff] 0.0
    %21 = vst [vmem:[#allocation2 + $0x28] sm:$0xff] 0.0
    %22 = vst [vmem:[#allocation2 + $0x30] sm:$0xff] 0.0
    %23 = vst [vmem:[#allocation2 + $0x38] sm:$0xff] 0.0
    %24 = vst [vmem:[#allocation2 + $0x40] sm:$0xff] 0.0
    %25 = vst [vmem:[#allocation2 + $0x48] sm:$0xff] 0.0
    %26 = vst [vmem:[#allocation2 + $0x50] sm:$0xff] 0.0
    %27 = vst [vmem:[#allocation2 + $0x58] sm:$0xff] 0.0
    %28 = vst [vmem:[#allocation2 + $0x60] sm:$0xff] 0.0
    %29 = vst [vmem:[#allocation2 + $0x68] sm:$0xff] 0.0
    %30 = vst [vmem:[#allocation2 + $0x70] sm:$0xff] 0.0
    %31 = vst [vmem:[#allocation2 + $0x78] sm:$0xff] 0.0
  $region13: #{encoder_forward.30} parent=0 // pred_fallthru
    _
  %v32 = vld [vmem:[#allocation2] sm:$0xff]
  %v33 = vld [vmem:[#allocation2 + $0x8] sm:$0xff]
  %v34 = vld [vmem:[#allocation2 + $0x10] sm:$0xff]
  %v35 = vld [vmem:[#allocation2 + $0x18] sm:$0xff]
  %v36 = vld [vmem:[#allocation2 + $0x20] sm:$0xff]
  %v37 = vld [vmem:[#allocation2 + $0x28] sm:$0xff]
  %v38 = vld [vmem:[#allocation2 + $0x30] sm:$0xff]
  %v39 = vld [vmem:[#allocation2 + $0x38] sm:$0xff]
  %v40 = vld [vmem:[#allocation2 + $0x40] sm:$0xff]
  %v41 = vld [vmem:[#allocation2 + $0x48] sm:$0xff]
  %v42 = vld [vmem:[#allocation2 + $0x50] sm:$0xff]
  %v43 = vld [vmem:[#allocation2 + $0x58] sm:$0xff]
  %v44 = vld [vmem:[#allocation2 + $0x60] sm:$0xff]
  %v45 = vld [vmem:[#allocation2 + $0x68] sm:$0xff]
  %v46 = vld [vmem:[#allocation2 + $0x70] sm:$0xff]
  %v47 = vld [vmem:[#allocation2 + $0x78] sm:$0xff]
  %v48 = vld [vmem:[%s0] sm:$0xff]
  %v49 = vld [vmem:[%s0 + $0x8] sm:$0xf]
  %v50 = vld [vmem:[%s0 + $0xc] sm:$0xff]
  %v51 = vld [vmem:[%s0 + $0x14] sm:$0xf]
  %v52 = vld [vmem:[%s0 + $0x18] sm:$0xff]
  %v53 = vld [vmem:[%s0 + $0x20] sm:$0xf]
  %v54 = vld [vmem:[%s0 + $0x24] sm:$0xff]
  %v55 = vld [vmem:[%s0 + $0x2c] sm:$0xf]
  %v56 = vld [vmem:[%s0 + $0x30] sm:$0xff]
  %v57 = vld [vmem:[%s0 + $0x38] sm:$0xf]
  %v58 = vld [vmem:[%s0 + $0x3c] sm:$0xff]
  %v59 = vld [vmem:[%s0 + $0x44] sm:$0xf]
  %v60 = vld [vmem:[%s0 + $0x48] sm:$0xff]
  %v61 = vld [vmem:[%s0 + $0x50] sm:$0xf]
  %v62 = vld [vmem:[%s0 + $0x54] sm:$0xff]
  %v63 = vld [vmem:[%s0 + $0x5c] sm:$0xf]
  %v64 = vld [vmem:[%s0 + $0x60] sm:$0xff]
  %v65 = vld [vmem:[%s0 + $0x68] sm:$0xf]
  %v66 = vld [vmem:[%s0 + $0x6c] sm:$0xff]
  %v67 = vld [vmem:[%s0 + $0x74] sm:$0xf]
  %v68 = vld [vmem:[%s0 + $0x78] sm:$0xff]
  %v69 = vld [vmem:[%s0 + $0x80] sm:$0xf]
  %v70 = vld [vmem:[%s0 + $0x84] sm:$0xff]
  %v71 = vld [vmem:[%s0 + $0x8c] sm:$0xf]
  %v72 = vld [vmem:[%s0 + $0x90] sm:$0xff]
  %v73 = vld [vmem:[%s0 + $0x98] sm:$0xf]
  %v74 = vld [vmem:[%s0 + $0x9c] sm:$0xff]
  %v75 = vld [vmem:[%s0 + $0xa4] sm:$0xf]
  %v76 = vld [vmem:[%s0 + $0xa8] sm:$0xff]
  %v77 = vld [vmem:[%s0 + $0xb0] sm:$0xf]
  %v78 = vld [vmem:[%s0 + $0xb4] sm:$0xff]
  %v79 = vld [vmem:[%s0 + $0xbc] sm:$0xf]
  %v80 = vld [vmem:[%s1] sm:$0xf]
  %v81 = vld [vmem:[%s1 + $0x4] sm:$0xf]
  %v82 = vld [vmem:[%s1 + $0x8] sm:$0xf]
  %v83 = vld [vmem:[%s1 + $0xc] sm:$0xf]
  %v84 = vld [vmem:[%s1 + $0x10] sm:$0xf]
  %v85 = vld [vmem:[%s1 + $0x14] sm:$0xf]
  %v86 = vld [vmem:[%s1 + $0x18] sm:$0xf]
  %v87 = vld [vmem:[%s1 + $0x1c] sm:$0xf]
  %v88 = vld [vmem:[%s1 + $0x20] sm:$0xf]
  %v89 = vld [vmem:[%s1 + $0x24] sm:$0xf]
  %v90 = vld [vmem:[%s1 + $0x28] sm:$0xf]
  %v91 = vld [vmem:[%s1 + $0x2c] sm:$0xf]
  %v92 = vld [vmem:[%s1 + $0x30] sm:$0xf]
  %v93 = vld [vmem:[%s1 + $0x34] sm:$0xf]
  %v94 = vld [vmem:[%s1 + $0x38] sm:$0xf]
  %v95 = vld [vmem:[%s1 + $0x3c] sm:$0xf]
  %v96 = vld [vmem:[%s1 + $0x40] sm:$0xf]
  %v97 = vld [vmem:[%s1 + $0x44] sm:$0xf]
  %v98 = vld [vmem:[%s1 + $0x48] sm:$0xf]
  %v99 = vld [vmem:[%s1 + $0x4c] sm:$0xf]
  %v100 = vld [vmem:[%s1 + $0x50] sm:$0xf]
  %v101 = vld [vmem:[%s1 + $0x54] sm:$0xf]
  %v102 = vld [vmem:[%s1 + $0x58] sm:$0xf]
  %v103 = vld [vmem:[%s1 + $0x5c] sm:$0xf]
  %v104 = vld [vmem:[%s1 + $0x60] sm:$0xf]
  %v105 = vld [vmem:[%s1 + $0x64] sm:$0xf]
  %v106 = vld [vmem:[%s1 + $0x68] sm:$0xf]
  %v107 = vld [vmem:[%s1 + $0x6c] sm:$0xf]
  %v108 = vld [vmem:[%s1 + $0x70] sm:$0xf]
  %v109 = vld [vmem:[%s1 + $0x74] sm:$0xf]
  %v110 = vld [vmem:[%s1 + $0x78] sm:$0xf]
  %v111 = vld [vmem:[%s1 + $0x7c] sm:$0xf]
  %v112 = vld [vmem:[%s1 + $0x80] sm:$0xf]
  %v113 = vld [vmem:[%s1 + $0x84] sm:$0xf]
  %v114 = vld [vmem:[%s1 + $0x88] sm:$0xf]
  %v115 = vld [vmem:[%s1 + $0x8c] sm:$0xf]
  %v116 = vld [vmem:[%s1 + $0x90] sm:$0xf]
  %v117 = vld [vmem:[%s1 + $0x94] sm:$0xf]
  %v118 = vld [vmem:[%s1 + $0x98] sm:$0xf]
  %v119 = vld [vmem:[%s1 + $0x9c] sm:$0xf]
  %v120 = vld [vmem:[%s1 + $0xa0] sm:$0xf]
  %v121 = vld [vmem:[%s1 + $0xa4] sm:$0xf]
  %v122 = vld [vmem:[%s1 + $0xa8] sm:$0xf]
  %v123 = vld [vmem:[%s1 + $0xac] sm:$0xf]
  %v124 = vld [vmem:[%s1 + $0xb0] sm:$0xf]
  %v125 = vld [vmem:[%s1 + $0xb4] sm:$0xf]
  %v126 = vld [vmem:[%s1 + $0xb8] sm:$0xf]
  %v127 = vld [vmem:[%s1 + $0xbc] sm:$0xf]
  %v160 = vunpack.c.l.b16 %v48
  %v161 = vunpack.c.h.b16 %v48
  %v162 = vunpack.c.l.b16 %v49
  %v163 = vunpack.c.l.b16 %v50
  %v164 = vunpack.c.h.b16 %v50
  %v165 = vunpack.c.l.b16 %v51
  %v166 = vunpack.c.l.b16 %v52
  %v167 = vunpack.c.h.b16 %v52
  %v168 = vunpack.c.l.b16 %v53
  %v169 = vunpack.c.l.b16 %v54
  %v170 = vunpack.c.h.b16 %v54
  %v171 = vunpack.c.l.b16 %v55
  %v172 = vunpack.c.l.b16 %v56
  %v173 = vunpack.c.h.b16 %v56
  %v174 = vunpack.c.l.b16 %v57
  %v175 = vunpack.c.l.b16 %v58
  %v176 = vunpack.c.h.b16 %v58
  %v177 = vunpack.c.l.b16 %v59
  %v178 = vunpack.c.l.b16 %v60
  %v179 = vunpack.c.h.b16 %v60
  %v180 = vunpack.c.l.b16 %v61
  %v181 = vunpack.c.l.b16 %v62
  %v182 = vunpack.c.h.b16 %v62
  %v183 = vunpack.c.l.b16 %v63
  %v184 = vunpack.c.l.b16 %v64
  %v185 = vunpack.c.h.b16 %v64
  %v186 = vunpack.c.l.b16 %v65
  %v187 = vunpack.c.l.b16 %v66
  %v188 = vunpack.c.h.b16 %v66
  %v189 = vunpack.c.l.b16 %v67
  %v190 = vunpack.c.l.b16 %v68
  %v191 = vunpack.c.h.b16 %v68
  %v192 = vunpack.c.l.b16 %v69
  %v193 = vunpack.c.l.b16 %v70
  %v194 = vunpack.c.h.b16 %v70
  %v195 = vunpack.c.l.b16 %v71
  %v196 = vunpack.c.l.b16 %v72
  %v197 = vunpack.c.h.b16 %v72
  %v198 = vunpack.c.l.b16 %v73
  %v199 = vunpack.c.l.b16 %v74
  %v200 = vunpack.c.h.b16 %v74
  %v201 = vunpack.c.l.b16 %v75
  %v202 = vunpack.c.l.b16 %v76
  %v203 = vunpack.c.h.b16 %v76
  %v204 = vunpack.c.l.b16 %v77
  %v205 = vunpack.c.l.b16 %v78
  %v206 = vunpack.c.h.b16 %v78
  %v207 = vunpack.c.l.b16 %v79
  %v208 = vpack.c.b16 %v163, %v160
  %v209 = vpack.c.b16 %v164, %v161
  %v210 = vpack.c.b16 %v165, %v162
  %v211 = vpack.c.b16 %v169, %v166
  %v212 = vpack.c.b16 %v170, %v167
  %v213 = vpack.c.b16 %v171, %v168
  %v214 = vpack.c.b16 %v175, %v172
  %v215 = vpack.c.b16 %v176, %v173
  %v216 = vpack.c.b16 %v177, %v174
  %v217 = vpack.c.b16 %v181, %v178
  %v218 = vpack.c.b16 %v182, %v179
  %v219 = vpack.c.b16 %v183, %v180
  %v220 = vpack.c.b16 %v187, %v184
  %v221 = vpack.c.b16 %v188, %v185
  %v222 = vpack.c.b16 %v189, %v186
  %v223 = vpack.c.b16 %v193, %v190
  %v224 = vpack.c.b16 %v194, %v191
  %v225 = vpack.c.b16 %v195, %v192
  %v226 = vpack.c.b16 %v199, %v196
  %v227 = vpack.c.b16 %v200, %v197
  %v228 = vpack.c.b16 %v201, %v198
  %v229 = vpack.c.b16 %v205, %v202
  %v230 = vpack.c.b16 %v206, %v203
  %v231 = vpack.c.b16 %v207, %v204
  %v304 = vunpack.c.l.b16 %v80
  %v305 = vunpack.c.l.b16 %v81
  %v306 = vunpack.c.l.b16 %v82
  %v307 = vunpack.c.l.b16 %v83
  %v308 = vunpack.c.l.b16 %v84
  %v309 = vunpack.c.l.b16 %v85
  %v310 = vunpack.c.l.b16 %v86
  %v311 = vunpack.c.l.b16 %v87
  %v312 = vunpack.c.l.b16 %v88
  %v313 = vunpack.c.l.b16 %v89
  %v314 = vunpack.c.l.b16 %v90
  %v315 = vunpack.c.l.b16 %v91
  %v316 = vunpack.c.l.b16 %v92
  %v317 = vunpack.c.l.b16 %v93
  %v318 = vunpack.c.l.b16 %v94
  %v319 = vunpack.c.l.b16 %v95
  %v320 = vunpack.c.l.b16 %v96
  %v321 = vunpack.c.l.b16 %v97
  %v322 = vunpack.c.l.b16 %v98
  %v323 = vunpack.c.l.b16 %v99
  %v324 = vunpack.c.l.b16 %v100
  %v325 = vunpack.c.l.b16 %v101
  %v326 = vunpack.c.l.b16 %v102
  %v327 = vunpack.c.l.b16 %v103
  %v328 = vunpack.c.l.b16 %v104
  %v329 = vunpack.c.l.b16 %v105
  %v330 = vunpack.c.l.b16 %v106
  %v331 = vunpack.c.l.b16 %v107
  %v332 = vunpack.c.l.b16 %v108
  %v333 = vunpack.c.l.b16 %v109
  %v334 = vunpack.c.l.b16 %v110
  %v335 = vunpack.c.l.b16 %v111
  %v336 = vunpack.c.l.b16 %v112
  %v337 = vunpack.c.l.b16 %v113
  %v338 = vunpack.c.l.b16 %v114
  %v339 = vunpack.c.l.b16 %v115
  %v340 = vunpack.c.l.b16 %v116
  %v341 = vunpack.c.l.b16 %v117
  %v342 = vunpack.c.l.b16 %v118
  %v343 = vunpack.c.l.b16 %v119
  %v344 = vunpack.c.l.b16 %v120
  %v345 = vunpack.c.l.b16 %v121
  %v346 = vunpack.c.l.b16 %v122
  %v347 = vunpack.c.l.b16 %v123
  %v348 = vunpack.c.l.b16 %v124
  %v349 = vunpack.c.l.b16 %v125
  %v350 = vunpack.c.l.b16 %v126
  %v351 = vunpack.c.l.b16 %v127
  %v352 = vpack.c.b16 %v305, %v304
  %v353 = vpack.c.b16 %v307, %v306
  %v354 = vpack.c.b16 %v309, %v308
  %v355 = vpack.c.b16 %v311, %v310
  %v356 = vpack.c.b16 %v313, %v312
  %v357 = vpack.c.b16 %v315, %v314
  %v358 = vpack.c.b16 %v317, %v316
  %v359 = vpack.c.b16 %v319, %v318
  %v360 = vpack.c.b16 %v321, %v320
  %v361 = vpack.c.b16 %v323, %v322
  %v362 = vpack.c.b16 %v325, %v324
  %v363 = vpack.c.b16 %v327, %v326
  %v364 = vpack.c.b16 %v329, %v328
  %v365 = vpack.c.b16 %v331, %v330
  %v366 = vpack.c.b16 %v333, %v332
  %v367 = vpack.c.b16 %v335, %v334
  %v368 = vpack.c.b16 %v337, %v336
  %v369 = vpack.c.b16 %v339, %v338
  %v370 = vpack.c.b16 %v341, %v340
  %v371 = vpack.c.b16 %v343, %v342
  %v372 = vpack.c.b16 %v345, %v344
  %v373 = vpack.c.b16 %v347, %v346
  %v374 = vpack.c.b16 %v349, %v348
  %v375 = vpack.c.b16 %v351, %v350
  %400 = vmatprep.subr.bf16.mxu0 0
  %401 = vmatpush1.bf16.msra.mxu0 %v352
  %402 = vmatprep.subr.bf16.mxu0 0
  %403 = vmatpush1.bf16.msra.mxu0 %v353
  %404 = vmatprep.subr.bf16.mxu0 0
  %405 = vmatpush1.bf16.msra.mxu0 %v354
  %406 = vmatprep.subr.bf16.mxu0 0
  %407 = vmatpush1.bf16.msra.mxu0 %v355
  %408 = vmatprep.subr.bf16.mxu0 0
  %409 = vmatpush1.bf16.msra.mxu0 %v356
  %410 = vmatprep.subr.bf16.mxu0 0
  %411 = vmatpush1.bf16.msra.mxu0 %v357
  %412 = vmatprep.subr.bf16.mxu0 0
  %413 = vmatpush1.bf16.msra.mxu0 %v358
  %414 = vmatprep.subr.bf16.mxu0 0
  %415 = vmatpush1.bf16.msra.mxu0 %v359
  %416 = vmatprep.subr.bf16.mxu0 0
  %417 = vmatpush1.bf16.msra.mxu0 %v360
  %418 = vmatprep.subr.bf16.mxu0 0
  %419 = vmatpush1.bf16.msra.mxu0 %v361
  %420 = vmatprep.subr.bf16.mxu0 0
  %421 = vmatpush1.bf16.msra.mxu0 %v362
  %422 = vmatprep.subr.bf16.mxu0 0
  %423 = vmatpush1.bf16.msra.mxu0 %v363
  %424 = vmatprep.subr.bf16.mxu0 0
  %425 = vmatpush1.bf16.msra.mxu0 %v364
  %426 = vmatprep.subr.bf16.mxu0 0
  %427 = vmatpush1.bf16.msra.mxu0 %v365
  %428 = vmatprep.subr.bf16.mxu0 0
  %429 = vmatpush1.bf16.msra.mxu0 %v366
  %430 = vmatprep.subr.bf16.mxu0 0
  %431 = vmatpush1.bf16.msra.mxu0 %v367
  %432 = vmatprep.mubr.bf16.mxu0 %v209
  %433 = vmatmul.mubr.bf16.gmra.mrb[0].mxu0 %v208
  %v434 = vpop.f32.mrb[0].mxu0
  %v435 = vadd.f32 0.0, %v434
  %v436 = vpop.f32.mrb[0].mxu0
  %v437 = vpop.f32.mrb[0].mxu0
  %v438 = vadd.f32 0.0, %v437
  %v439 = vpop.f32.mrb[0].mxu0
  %440 = vmatprep.mubr.bf16.mxu0 %v212
  %441 = vmatmul.mubr.bf16.gmra.mrb[0].mxu0 %v211
  %v442 = vpop.f32.mrb[0].mxu0
  %v443 = vadd.f32 0.0, %v442
  %v444 = vpop.f32.mrb[0].mxu0
  %v445 = vpop.f32.mrb[0].mxu0
  %v446 = vadd.f32 0.0, %v445
  %v447 = vpop.f32.mrb[0].mxu0
  %448 = vmatprep.mubr.bf16.mxu0 %v215
  %449 = vmatmul.mubr.bf16.gmra.mrb[0].mxu0 %v214
  %v450 = vpop.f32.mrb[0].mxu0
  %v451 = vadd.f32 0.0, %v450
  %v452 = vpop.f32.mrb[0].mxu0
  %v453 = vpop.f32.mrb[0].mxu0
  %v454 = vadd.f32 0.0, %v453
  %v455 = vpop.f32.mrb[0].mxu0
  %456 = vmatprep.mubr.bf16.mxu0 %v218
  %457 = vmatmul.mubr.bf16.gmra.mrb[0].mxu0 %v217
  %v458 = vpop.f32.mrb[0].mxu0
  %v459 = vadd.f32 0.0, %v458
  %v460 = vpop.f32.mrb[0].mxu0
  %v461 = vpop.f32.mrb[0].mxu0
  %v462 = vadd.f32 0.0, %v461
  %v463 = vpop.f32.mrb[0].mxu0
  %464 = vmatprep.mubr.bf16.mxu0 %v221
  %465 = vmatmul.mubr.bf16.gmra.mrb[0].mxu0 %v220
  %v466 = vpop.f32.mrb[0].mxu0
  %v467 = vadd.f32 0.0, %v466
  %v468 = vpop.f32.mrb[0].mxu0
  %v469 = vpop.f32.mrb[0].mxu0
  %v470 = vadd.f32 0.0, %v469
  %v471 = vpop.f32.mrb[0].mxu0
  %472 = vmatprep.mubr.bf16.mxu0 %v224
  %473 = vmatmul.mubr.bf16.gmra.mrb[0].mxu0 %v223
  %v474 = vpop.f32.mrb[0].mxu0
  %v475 = vadd.f32 0.0, %v474
  %v476 = vpop.f32.mrb[0].mxu0
  %v477 = vpop.f32.mrb[0].mxu0
  %v478 = vadd.f32 0.0, %v477
  %v479 = vpop.f32.mrb[0].mxu0
  %480 = vmatprep.mubr.bf16.mxu0 %v227
  %481 = vmatmul.mubr.bf16.gmra.mrb[0].mxu0 %v226
  %v482 = vpop.f32.mrb[0].mxu0
  %v483 = vadd.f32 0.0, %v482
  %v484 = vpop.f32.mrb[0].mxu0
  %v485 = vpop.f32.mrb[0].mxu0
  %v486 = vadd.f32 0.0, %v485
  %v487 = vpop.f32.mrb[0].mxu0
  %488 = vmatprep.mubr.bf16.mxu0 %v230
  %489 = vmatmul.mubr.bf16.gmra.mrb[0].mxu0 %v229
  %v490 = vpop.f32.mrb[0].mxu0
  %v491 = vadd.f32 0.0, %v490
  %v492 = vpop.f32.mrb[0].mxu0
  %v493 = vpop.f32.mrb[0].mxu0
  %v494 = vadd.f32 0.0, %v493
  %v495 = vpop.f32.mrb[0].mxu0
  %496 = vdwg.mxu0
  %497 = vmatprep.subr.bf16.mxu0 0
  %498 = vmatpush1.bf16.msra.mxu0 %v368
  %499 = vmatprep.subr.bf16.mxu0 0
  %500 = vmatpush1.bf16.msra.mxu0 %v369
  %501 = vmatprep.subr.bf16.mxu0 0
  %502 = vmatpush1.bf16.msra.mxu0 %v370
  %503 = vmatprep.subr.bf16.mxu0 0
  %504 = vmatpush1.bf16.msra.mxu0 %v371
  %505 = vmatprep.subr.bf16.mxu0 0
  %506 = vmatpush1.bf16.msra.mxu0 %v372
  %507 = vmatprep.subr.bf16.mxu0 0
  %508 = vmatpush1.bf16.msra.mxu0 %v373
  %509 = vmatprep.subr.bf16.mxu0 0
  %510 = vmatpush1.bf16.msra.mxu0 %v374
  %511 = vmatprep.subr.bf16.mxu0 0
  %512 = vmatpush1.bf16.msra.mxu0 %v375
  %513 = vmatprep.subr.bf16.mxu0 0
  %514 = vmatpush1.bf16.msra.mxu0 0
  %515 = vmatprep.subr.bf16.mxu0 0
  %516 = vmatpush1.bf16.msra.mxu0 0
  %517 = vmatprep.subr.bf16.mxu0 0
  %518 = vmatpush1.bf16.msra.mxu0 0
  %519 = vmatprep.subr.bf16.mxu0 0
  %520 = vmatpush1.bf16.msra.mxu0 0
  %521 = vmatprep.subr.bf16.mxu0 0
  %522 = vmatpush1.bf16.msra.mxu0 0
  %523 = vmatprep.subr.bf16.mxu0 0
  %524 = vmatpush1.bf16.msra.mxu0 0
  %525 = vmatprep.subr.bf16.mxu0 0
  %526 = vmatpush1.bf16.msra.mxu0 0
  %527 = vmatprep.subr.bf16.mxu0 0
  %528 = vmatpush1.bf16.msra.mxu0 0
  %529 = vmatprep.mubr.bf16.mxu0 0
  %530 = vmatmul.mubr.bf16.gmra.mrb[0].mxu0 %v210
  %v531 = vpop.f32.mrb[0].mxu0
  %v532 = vadd.f32 %v435, %v531
  %v533 = vpop.f32.mrb[0].mxu0
  %v534 = vpop.f32.mrb[0].mxu0
  %v535 = vadd.f32 %v438, %v534
  %v536 = vpop.f32.mrb[0].mxu0
  %537 = vmatprep.mubr.bf16.mxu0 0
  %538 = vmatmul.mubr.bf16.gmra.mrb[0].mxu0 %v213
  %v539 = vpop.f32.mrb[0].mxu0
  %v540 = vadd.f32 %v443, %v539
  %v541 = vpop.f32.mrb[0].mxu0
  %v542 = vpop.f32.mrb[0].mxu0
  %v543 = vadd.f32 %v446, %v542
  %v544 = vpop.f32.mrb[0].mxu0
  %545 = vmatprep.mubr.bf16.mxu0 0
  %546 = vmatmul.mubr.bf16.gmra.mrb[0].mxu0 %v216
  %v547 = vpop.f32.mrb[0].mxu0
  %v548 = vadd.f32 %v451, %v547
  %v549 = vpop.f32.mrb[0].mxu0
  %v550 = vpop.f32.mrb[0].mxu0
  %v551 = vadd.f32 %v454, %v550
  %v552 = vpop.f32.mrb[0].mxu0
  %553 = vmatprep.mubr.bf16.mxu0 0
  %554 = vmatmul.mubr.bf16.gmra.mrb[0].mxu0 %v219
  %v555 = vpop.f32.mrb[0].mxu0
  %v556 = vadd.f32 %v459, %v555
  %v557 = vpop.f32.mrb[0].mxu0
  %v558 = vpop.f32.mrb[0].mxu0
  %v559 = vadd.f32 %v462, %v558
  %v560 = vpop.f32.mrb[0].mxu0
  %561 = vmatprep.mubr.bf16.mxu0 0
  %562 = vmatmul.mubr.bf16.gmra.mrb[0].mxu0 %v222
  %v563 = vpop.f32.mrb[0].mxu0
  %v564 = vadd.f32 %v467, %v563
  %v565 = vpop.f32.mrb[0].mxu0
  %v566 = vpop.f32.mrb[0].mxu0
  %v567 = vadd.f32 %v470, %v566
  %v568 = vpop.f32.mrb[0].mxu0
  %569 = vmatprep.mubr.bf16.mxu0 0
  %570 = vmatmul.mubr.bf16.gmra.mrb[0].mxu0 %v225
  %v571 = vpop.f32.mrb[0].mxu0
  %v572 = vadd.f32 %v475, %v571
  %v573 = vpop.f32.mrb[0].mxu0
  %v574 = vpop.f32.mrb[0].mxu0
  %v575 = vadd.f32 %v478, %v574
  %v576 = vpop.f32.mrb[0].mxu0
  %577 = vmatprep.mubr.bf16.mxu0 0
  %578 = vmatmul.mubr.bf16.gmra.mrb[0].mxu0 %v228
  %v579 = vpop.f32.mrb[0].mxu0
  %v580 = vadd.f32 %v483, %v579
  %v581 = vpop.f32.mrb[0].mxu0
  %v582 = vpop.f32.mrb[0].mxu0
  %v583 = vadd.f32 %v486, %v582
  %v584 = vpop.f32.mrb[0].mxu0
  %585 = vmatprep.mubr.bf16.mxu0 0
  %586 = vmatmul.mubr.bf16.gmra.mrb[0].mxu0 %v231
  %v587 = vpop.f32.mrb[0].mxu0
  %v588 = vadd.f32 %v491, %v587
  %v589 = vpop.f32.mrb[0].mxu0
  %v590 = vpop.f32.mrb[0].mxu0
  %v591 = vadd.f32 %v494, %v590
  %v592 = vpop.f32.mrb[0].mxu0
  %593 = vdwg.mxu0
  %v594 = vadd.f32 %v32, %v532
  %v595 = vadd.f32 %v33, %v535
  %v596 = vadd.f32 %v34, %v540
  %v597 = vadd.f32 %v35, %v543
  %v598 = vadd.f32 %v36, %v548
  %v599 = vadd.f32 %v37, %v551
  %v600 = vadd.f32 %v38, %v556
  %v601 = vadd.f32 %v39, %v559
  %v602 = vadd.f32 %v40, %v564
  %v603 = vadd.f32 %v41, %v567
  %v604 = vadd.f32 %v42, %v572
  %v605 = vadd.f32 %v43, %v575
  %v606 = vadd.f32 %v44, %v580
  %v607 = vadd.f32 %v45, %v583
  %v608 = vadd.f32 %v46, %v588
  %v609 = vadd.f32 %v47, %v591
  %610 = vst [vmem:[#allocation2] sm:$0xff] %v594
  %611 = vst [vmem:[#allocation2 + $0x8] sm:$0xff] %v595
  %612 = vst [vmem:[#allocation2 + $0x10] sm:$0xff] %v596
  %613 = vst [vmem:[#allocation2 + $0x18] sm:$0xff] %v597
  %614 = vst [vmem:[#allocation2 + $0x20] sm:$0xff] %v598
  %615 = vst [vmem:[#allocation2 + $0x28] sm:$0xff] %v599
  %616 = vst [vmem:[#allocation2 + $0x30] sm:$0xff] %v600
  %617 = vst [vmem:[#allocation2 + $0x38] sm:$0xff] %v601
  %618 = vst [vmem:[#allocation2 + $0x40] sm:$0xff] %v602
  %619 = vst [vmem:[#allocation2 + $0x48] sm:$0xff] %v603
  %620 = vst [vmem:[#allocation2 + $0x50] sm:$0xff] %v604
  %621 = vst [vmem:[#allocation2 + $0x58] sm:$0xff] %v605
  %622 = vst [vmem:[#allocation2 + $0x60] sm:$0xff] %v606
  %623 = vst [vmem:[#allocation2 + $0x68] sm:$0xff] %v607
  %624 = vst [vmem:[#allocation2 + $0x70] sm:$0xff] %v608
  %625 = vst [vmem:[#allocation2 + $0x78] sm:$0xff] %v609
  // Predicated region
  $region14: #{encoder_forward.30} parent=0 // pred_check
    %p626 = pneg %p12
  $region15: #{encoder_forward.30} parent=0 // pred_check_branch
    %628 = sbr.rel (%p626) target = $region17
  $region16: #{encoder_forward.30} parent=0 // pred_region
    %v629 = vld [vmem:[#allocation2] sm:$0xff]
    %v630 = vld [vmem:[#allocation2 + $0x8] sm:$0xff]
    %v631 = vld [vmem:[#allocation2 + $0x10] sm:$0xff]
    %v632 = vld [vmem:[#allocation2 + $0x18] sm:$0xff]
    %v633 = vld [vmem:[#allocation2 + $0x20] sm:$0xff]
    %v634 = vld [vmem:[#allocation2 + $0x28] sm:$0xff]
    %v635 = vld [vmem:[#allocation2 + $0x30] sm:$0xff]
    %v636 = vld [vmem:[#allocation2 + $0x38] sm:$0xff]
    %v637 = vld [vmem:[#allocation2 + $0x40] sm:$0xff]
    %v638 = vld [vmem:[#allocation2 + $0x48] sm:$0xff]
    %v639 = vld [vmem:[#allocation2 + $0x50] sm:$0xff]
    %v640 = vld [vmem:[#allocation2 + $0x58] sm:$0xff]
    %v641 = vld [vmem:[#allocation2 + $0x60] sm:$0xff]
    %v642 = vld [vmem:[#allocation2 + $0x68] sm:$0xff]
    %v643 = vld [vmem:[#allocation2 + $0x70] sm:$0xff]
    %v644 = vld [vmem:[#allocation2 + $0x78] sm:$0xff]
    %v645 = vpack.c.bf16 %v630, %v629
    %v646 = vpack.c.bf16 %v632, %v631
    %v647 = vpack.c.bf16 %v634, %v633
    %v648 = vpack.c.bf16 %v636, %v635
    %v649 = vpack.c.bf16 %v638, %v637
    %v650 = vpack.c.bf16 %v640, %v639
    %v651 = vpack.c.bf16 %v642, %v641
    %v652 = vpack.c.bf16 %v644, %v643
    %v661 = vunpack.c.l.b16 %v645
    %v662 = vunpack.c.h.b16 %v645
    %v663 = vunpack.c.l.b16 %v646
    %v664 = vunpack.c.h.b16 %v646
    %v665 = vunpack.c.l.b16 %v647
    %v666 = vunpack.c.h.b16 %v647
    %v667 = vunpack.c.l.b16 %v648
    %v668 = vunpack.c.h.b16 %v648
    %v669 = vunpack.c.l.b16 %v649
    %v670 = vunpack.c.h.b16 %v649
    %v671 = vunpack.c.l.b16 %v650
    %v672 = vunpack.c.h.b16 %v650
    %v673 = vunpack.c.l.b16 %v651
    %v674 = vunpack.c.h.b16 %v651
    %v675 = vunpack.c.l.b16 %v652
    %v676 = vunpack.c.h.b16 %v652
    %v677 = vpack.c.b16 %v661, %v661
    %v678 = vpack.c.b16 %v662, %v662
    %v679 = vpack.c.b16 %v663, %v663
    %v680 = vpack.c.b16 %v664, %v664
    %v681 = vpack.c.b16 %v665, %v665
    %v682 = vpack.c.b16 %v666, %v666
    %v683 = vpack.c.b16 %v667, %v667
    %v684 = vpack.c.b16 %v668, %v668
    %v685 = vpack.c.b16 %v669, %v669
    %v686 = vpack.c.b16 %v670, %v670
    %v687 = vpack.c.b16 %v671, %v671
    %v688 = vpack.c.b16 %v672, %v672
    %v689 = vpack.c.b16 %v673, %v673
    %v690 = vpack.c.b16 %v674, %v674
    %v691 = vpack.c.b16 %v675, %v675
    %v692 = vpack.c.b16 %v676, %v676
    %709 = vst [vmem:[%s2] sm:$0xf] %v677
    %710 = vst [vmem:[%s2 + $0x4] sm:$0xf] %v678
    %711 = vst [vmem:[%s2 + $0x8] sm:$0xf] %v679
    %712 = vst [vmem:[%s2 + $0xc] sm:$0xf] %v680
    %713 = vst [vmem:[%s2 + $0x10] sm:$0xf] %v681
    %714 = vst [vmem:[%s2 + $0x14] sm:$0xf] %v682
    %715 = vst [vmem:[%s2 + $0x18] sm:$0xf] %v683
    %716 = vst [vmem:[%s2 + $0x1c] sm:$0xf] %v684
    %717 = vst [vmem:[%s2 + $0x20] sm:$0xf] %v685
    %718 = vst [vmem:[%s2 + $0x24] sm:$0xf] %v686
    %719 = vst [vmem:[%s2 + $0x28] sm:$0xf] %v687
    %720 = vst [vmem:[%s2 + $0x2c] sm:$0xf] %v688
    %721 = vst [vmem:[%s2 + $0x30] sm:$0xf] %v689
    %722 = vst [vmem:[%s2 + $0x34] sm:$0xf] %v690
    %723 = vst [vmem:[%s2 + $0x38] sm:$0xf] %v691
    %724 = vst [vmem:[%s2 + $0x3c] sm:$0xf] %v692
  $region17: #{encoder_forward.30} parent=0 // pred_fallthru
    _
  // Predicated region
  $region18: #{encoder_forward.30} parent=0 // pred_check
    _
  $region19: #{encoder_forward.30} parent=0 // pred_check_branch
    %726 = sbr.rel (0) target = $region21
  $region20: #{encoder_forward.30} parent=0 // pred_region
    _
  $region21: #{encoder_forward.30} parent=0 // pred_fallthru
    _
  // Predicated region
  $region22: #{encoder_forward.30} parent=0 // pred_check
    _
  $region23: #{encoder_forward.30} parent=0 // pred_check_branch
    %728 = sbr.rel (0) target = $region25
  $region24: #{encoder_forward.30} parent=0 // pred_region
    _
  $region25: #{encoder_forward.30} parent=0 // pred_fallthru
    _

// kernel: encoder_forward.32
$region0: #{encoder_forward.32}
  #allocation0 [shape = 'u32[]', space=smem, size = 0x4, offset = 0x4, fixed_abs, tag = 'smem constant byte address 0x4 - core index']
  #allocation1 [shape = 'u32[144,128]{1,0:T(1,128)}', space=vmem, size = 0x12000, scoped, tag = 'internal scratch']
  %s0 = inlined_call_operand.vmem [shape: bf16[32,128], index: 0, kind: input, shape index: {}]
  %s1 = inlined_call_operand.vmem [shape: f32[1,128], index: 1, kind: input, shape index: {}]
  %s2 = inlined_call_operand.vmem [shape: f32[1,128], index: 2, kind: input, shape index: {}]
  %s3 = inlined_call_operand.vmem [shape: bf16[32,128], index: 3, kind: output, shape index: {}]
  %s4 = sld [smem:[#allocation0]]
  $region22: #{encoder_forward.32} parent=0
    _
  %s6 = ssub.s32 1, %s4
  %s7 = scalar_select 0, %s6, %s4
  // Predicated region
  $region2: #{encoder_forward.32} parent=0 // pred_check
    _
  $region3: #{encoder_forward.32} parent=0 // pred_check_branch
    %9 = sbr.rel (0) target = $region5
  $region4: #{encoder_forward.32} parent=0 // pred_region
    _
  $region5: #{encoder_forward.32} parent=0 // pred_fallthru
    _
  // Predicated region
  $region6: #{encoder_forward.32} parent=0 // pred_check
    _
  $region7: #{encoder_forward.32} parent=0 // pred_check_branch
    %11 = sbr.rel (0) target = $region9
  $region8: #{encoder_forward.32} parent=0 // pred_region
    _
  $region9: #{encoder_forward.32} parent=0 // pred_fallthru
    _
  // Predicated region
  $region10: #{encoder_forward.32} parent=0 // pred_check
    _
  $region11: #{encoder_forward.32} parent=0 // pred_check_branch
    %13 = sbr.rel (0) target = $region13
  $region12: #{encoder_forward.32} parent=0 // pred_region
    _
  $region13: #{encoder_forward.32} parent=0 // pred_fallthru
    _
  %v14 = vld [vmem:[%s0] sm:$0xf]
  %v15 = vld [vmem:[%s0 + $0x4] sm:$0xf]
  %v16 = vld [vmem:[%s0 + $0x8] sm:$0xf]
  %v17 = vld [vmem:[%s0 + $0xc] sm:$0xf]
  %v18 = vunpack.c.l.bf16 %v14
  %v19 = vunpack.c.l.bf16 %v15
  %v20 = vunpack.c.l.bf16 %v16
  %v21 = vunpack.c.l.bf16 %v17
  %v22 = vld [vmem:[%s1] sm:$0x1]
  %v24 = vlaneseq
  %v25 = vshrl.u32 %v24, 7
  %v26 = vsub.s32 0, %v25
  %v27 = vrot.slane %v22, %v26
  %v29 = vmul.f32 %v18, %v27
  %v30 = vmul.f32 %v19, %v27
  %v31 = vmul.f32 %v20, %v27
  %v32 = vmul.f32 %v21, %v27
  %v33 = vld [vmem:[%s2] sm:$0x1]
  %v35 = vlaneseq
  %v36 = vshrl.u32 %v35, 7
  %v37 = vsub.s32 0, %v36
  %v38 = vrot.slane %v33, %v37
  %v40 = vadd.f32 %v29, %v38
  %v41 = vadd.f32 %v30, %v38
  %v42 = vadd.f32 %v31, %v38
  %v43 = vadd.f32 %v32, %v38
  %v44 = vmax.f32 %v40, 0.0
  %v45 = vmax.f32 %v41, 0.0
  %v46 = vmax.f32 %v42, 0.0
  %v47 = vmax.f32 %v43, 0.0
  %v48 = vpack.c.bf16 %v45, %v44
  %v49 = vpack.c.bf16 %v47, %v46
  %v52 = vunpack.c.l.b16 %v48
  %v53 = vunpack.c.h.b16 %v48
  %v54 = vunpack.c.l.b16 %v49
  %v55 = vunpack.c.h.b16 %v49
  %v56 = vpack.c.b16 %v52, %v52
  %v57 = vpack.c.b16 %v53, %v53
  %v58 = vpack.c.b16 %v54, %v54
  %v59 = vpack.c.b16 %v55, %v55
  %64 = vst [vmem:[%s3] sm:$0xf] %v56
  %65 = vst [vmem:[%s3 + $0x4] sm:$0xf] %v57
  %66 = vst [vmem:[%s3 + $0x8] sm:$0xf] %v58
  %67 = vst [vmem:[%s3 + $0xc] sm:$0xf] %v59
  // Predicated region
  $region14: #{encoder_forward.32} parent=0 // pred_check
    _
  $region15: #{encoder_forward.32} parent=0 // pred_check_branch
    %69 = sbr.rel (0) target = $region17
  $region16: #{encoder_forward.32} parent=0 // pred_region
    _
  $region17: #{encoder_forward.32} parent=0 // pred_fallthru
    _
  // Predicated region
  $region18: #{encoder_forward.32} parent=0 // pred_check
    _
  $region19: #{encoder_forward.32} parent=0 // pred_check_branch
    %71 = sbr.rel (0) target = $region21
  $region20: #{encoder_forward.32} parent=0 // pred_region
    _
  $region21: #{encoder_forward.32} parent=0 // pred_fallthru
    _

// kernel: encoder_forward.34
$region0: #{encoder_forward.34}
  #allocation0 [shape = 'u32[]', space=smem, size = 0x4, offset = 0x4, fixed_abs, tag = 'smem constant byte address 0x4 - core index']
  #allocation1 [shape = 'u32[144,128]{1,0:T(1,128)}', space=vmem, size = 0x12000, scoped, tag = 'internal scratch']
  #allocation2 [shape = 'f32[128,128]{1,0:T(8,128)}', space=vmem, size = 0x10000, scoped, tag = 'scratch operand']
  %s0 = inlined_call_operand.vmem [shape: bf16[128,128], index: 0, kind: input, shape index: {}]
  %s1 = inlined_call_operand.vmem [shape: bf16[128,128], index: 1, kind: input, shape index: {}]
  %s2 = inlined_call_operand.vmem [shape: bf16[128,128], index: 2, kind: output, shape index: {}]
  %s3 = sld [smem:[#allocation0]]
  $region26: #{encoder_forward.34} parent=0
    _
  %s5 = ssub.s32 1, %s3
  %s6 = scalar_select 0, %s5, %s3
  // Predicated region
  $region2: #{encoder_forward.34} parent=0 // pred_check
    _
  $region3: #{encoder_forward.34} parent=0 // pred_check_branch
    %8 = sbr.rel (0) target = $region5
  $region4: #{encoder_forward.34} parent=0 // pred_region
    _
  $region5: #{encoder_forward.34} parent=0 // pred_fallthru
    _
  // Predicated region
  $region6: #{encoder_forward.34} parent=0 // pred_check
    _
  $region7: #{encoder_forward.34} parent=0 // pred_check_branch
    %10 = sbr.rel (0) target = $region9
  $region8: #{encoder_forward.34} parent=0 // pred_region
    _
  $region9: #{encoder_forward.34} parent=0 // pred_fallthru
    _
  %p12 = scmp.eq.s32.totalorder 0, 0
  // Predicated region
  $region10: #{encoder_forward.34} parent=0 // pred_check
    %p13 = pneg %p12
  $region11: #{encoder_forward.34} parent=0 // pred_check_branch
    %15 = sbr.rel (%p13) target = $region13
  $region12: #{encoder_forward.34} parent=0 // pred_region
    %16 = vst [vmem:[#allocation2] sm:$0xff] 0.0
    %17 = vst [vmem:[#allocation2 + $0x8] sm:$0xff] 0.0
    %18 = vst [vmem:[#allocation2 + $0x10] sm:$0xff] 0.0
    %19 = vst [vmem:[#allocation2 + $0x18] sm:$0xff] 0.0
    %20 = vst [vmem:[#allocation2 + $0x20] sm:$0xff] 0.0
    %21 = vst [vmem:[#allocation2 + $0x28] sm:$0xff] 0.0
    %22 = vst [vmem:[#allocation2 + $0x30] sm:$0xff] 0.0
    %23 = vst [vmem:[#allocation2 + $0x38] sm:$0xff] 0.0
    %24 = vst [vmem:[#allocation2 + $0x40] sm:$0xff] 0.0
    %25 = vst [vmem:[#allocation2 + $0x48] sm:$0xff] 0.0
    %26 = vst [vmem:[#allocation2 + $0x50] sm:$0xff] 0.0
    %27 = vst [vmem:[#allocation2 + $0x58] sm:$0xff] 0.0
    %28 = vst [vmem:[#allocation2 + $0x60] sm:$0xff] 0.0
    %29 = vst [vmem:[#allocation2 + $0x68] sm:$0xff] 0.0
    %30 = vst [vmem:[#allocation2 + $0x70] sm:$0xff] 0.0
    %31 = vst [vmem:[#allocation2 + $0x78] sm:$0xff] 0.0
  $region13: #{encoder_forward.34} parent=0 // pred_fallthru
    _
  %v32 = vld [vmem:[#allocation2] sm:$0xff]
  %v33 = vld [vmem:[#allocation2 + $0x8] sm:$0xff]
  %v34 = vld [vmem:[#allocation2 + $0x10] sm:$0xff]
  %v35 = vld [vmem:[#allocation2 + $0x18] sm:$0xff]
  %v36 = vld [vmem:[#allocation2 + $0x20] sm:$0xff]
  %v37 = vld [vmem:[#allocation2 + $0x28] sm:$0xff]
  %v38 = vld [vmem:[#allocation2 + $0x30] sm:$0xff]
  %v39 = vld [vmem:[#allocation2 + $0x38] sm:$0xff]
  %v40 = vld [vmem:[#allocation2 + $0x40] sm:$0xff]
  %v41 = vld [vmem:[#allocation2 + $0x48] sm:$0xff]
  %v42 = vld [vmem:[#allocation2 + $0x50] sm:$0xff]
  %v43 = vld [vmem:[#allocation2 + $0x58] sm:$0xff]
  %v44 = vld [vmem:[#allocation2 + $0x60] sm:$0xff]
  %v45 = vld [vmem:[#allocation2 + $0x68] sm:$0xff]
  %v46 = vld [vmem:[#allocation2 + $0x70] sm:$0xff]
  %v47 = vld [vmem:[#allocation2 + $0x78] sm:$0xff]
  %v48 = vld [vmem:[%s0] sm:$0xf]
  %v49 = vld [vmem:[%s0 + $0x4] sm:$0xf]
  %v50 = vld [vmem:[%s0 + $0x8] sm:$0xf]
  %v51 = vld [vmem:[%s0 + $0xc] sm:$0xf]
  %v52 = vld [vmem:[%s0 + $0x10] sm:$0xf]
  %v53 = vld [vmem:[%s0 + $0x14] sm:$0xf]
  %v54 = vld [vmem:[%s0 + $0x18] sm:$0xf]
  %v55 = vld [vmem:[%s0 + $0x1c] sm:$0xf]
  %v56 = vld [vmem:[%s0 + $0x20] sm:$0xf]
  %v57 = vld [vmem:[%s0 + $0x24] sm:$0xf]
  %v58 = vld [vmem:[%s0 + $0x28] sm:$0xf]
  %v59 = vld [vmem:[%s0 + $0x2c] sm:$0xf]
  %v60 = vld [vmem:[%s0 + $0x30] sm:$0xf]
  %v61 = vld [vmem:[%s0 + $0x34] sm:$0xf]
  %v62 = vld [vmem:[%s0 + $0x38] sm:$0xf]
  %v63 = vld [vmem:[%s0 + $0x3c] sm:$0xf]
  %v64 = vld [vmem:[%s1] sm:$0xf]
  %v65 = vld [vmem:[%s1 + $0x4] sm:$0xf]
  %v66 = vld [vmem:[%s1 + $0x8] sm:$0xf]
  %v67 = vld [vmem:[%s1 + $0xc] sm:$0xf]
  %v68 = vld [vmem:[%s1 + $0x10] sm:$0xf]
  %v69 = vld [vmem:[%s1 + $0x14] sm:$0xf]
  %v70 = vld [vmem:[%s1 + $0x18] sm:$0xf]
  %v71 = vld [vmem:[%s1 + $0x1c] sm:$0xf]
  %v72 = vld [vmem:[%s1 + $0x20] sm:$0xf]
  %v73 = vld [vmem:[%s1 + $0x24] sm:$0xf]
  %v74 = vld [vmem:[%s1 + $0x28] sm:$0xf]
  %v75 = vld [vmem:[%s1 + $0x2c] sm:$0xf]
  %v76 = vld [vmem:[%s1 + $0x30] sm:$0xf]
  %v77 = vld [vmem:[%s1 + $0x34] sm:$0xf]
  %v78 = vld [vmem:[%s1 + $0x38] sm:$0xf]
  %v79 = vld [vmem:[%s1 + $0x3c] sm:$0xf]
  %v96 = vunpack.c.l.b16 %v48
  %v97 = vunpack.c.l.b16 %v49
  %v98 = vunpack.c.l.b16 %v50
  %v99 = vunpack.c.l.b16 %v51
  %v100 = vunpack.c.l.b16 %v52
  %v101 = vunpack.c.l.b16 %v53
  %v102 = vunpack.c.l.b16 %v54
  %v103 = vunpack.c.l.b16 %v55
  %v104 = vunpack.c.l.b16 %v56
  %v105 = vunpack.c.l.b16 %v57
  %v106 = vunpack.c.l.b16 %v58
  %v107 = vunpack.c.l.b16 %v59
  %v108 = vunpack.c.l.b16 %v60
  %v109 = vunpack.c.l.b16 %v61
  %v110 = vunpack.c.l.b16 %v62
  %v111 = vunpack.c.l.b16 %v63
  %v112 = vpack.c.b16 %v97, %v96
  %v113 = vpack.c.b16 %v99, %v98
  %v114 = vpack.c.b16 %v101, %v100
  %v115 = vpack.c.b16 %v103, %v102
  %v116 = vpack.c.b16 %v105, %v104
  %v117 = vpack.c.b16 %v107, %v106
  %v118 = vpack.c.b16 %v109, %v108
  %v119 = vpack.c.b16 %v111, %v110
  %v144 = vunpack.c.l.b16 %v64
  %v145 = vunpack.c.l.b16 %v65
  %v146 = vunpack.c.l.b16 %v66
  %v147 = vunpack.c.l.b16 %v67
  %v148 = vunpack.c.l.b16 %v68
  %v149 = vunpack.c.l.b16 %v69
  %v150 = vunpack.c.l.b16 %v70
  %v151 = vunpack.c.l.b16 %v71
  %v152 = vunpack.c.l.b16 %v72
  %v153 = vunpack.c.l.b16 %v73
  %v154 = vunpack.c.l.b16 %v74
  %v155 = vunpack.c.l.b16 %v75
  %v156 = vunpack.c.l.b16 %v76
  %v157 = vunpack.c.l.b16 %v77
  %v158 = vunpack.c.l.b16 %v78
  %v159 = vunpack.c.l.b16 %v79
  %v160 = vpack.c.b16 %v145, %v144
  %v161 = vpack.c.b16 %v147, %v146
  %v162 = vpack.c.b16 %v149, %v148
  %v163 = vpack.c.b16 %v151, %v150
  %v164 = vpack.c.b16 %v153, %v152
  %v165 = vpack.c.b16 %v155, %v154
  %v166 = vpack.c.b16 %v157, %v156
  %v167 = vpack.c.b16 %v159, %v158
  %176 = vmatprep.subr.bf16.mxu0 0
  %177 = vmatpush1.bf16.msra.mxu0 %v160
  %178 = vmatprep.subr.bf16.mxu0 0
  %179 = vmatpush1.bf16.msra.mxu0 %v161
  %180 = vmatprep.subr.bf16.mxu0 0
  %181 = vmatpush1.bf16.msra.mxu0 %v162
  %182 = vmatprep.subr.bf16.mxu0 0
  %183 = vmatpush1.bf16.msra.mxu0 %v163
  %184 = vmatprep.subr.bf16.mxu0 0
  %185 = vmatpush1.bf16.msra.mxu0 %v164
  %186 = vmatprep.subr.bf16.mxu0 0
  %187 = vmatpush1.bf16.msra.mxu0 %v165
  %188 = vmatprep.subr.bf16.mxu0 0
  %189 = vmatpush1.bf16.msra.mxu0 %v166
  %190 = vmatprep.subr.bf16.mxu0 0
  %191 = vmatpush1.bf16.msra.mxu0 %v167
  %192 = vmatprep.subr.bf16.mxu0 0
  %193 = vmatpush1.bf16.msra.mxu0 0
  %194 = vmatprep.subr.bf16.mxu0 0
  %195 = vmatpush1.bf16.msra.mxu0 0
  %196 = vmatprep.subr.bf16.mxu0 0
  %197 = vmatpush1.bf16.msra.mxu0 0
  %198 = vmatprep.subr.bf16.mxu0 0
  %199 = vmatpush1.bf16.msra.mxu0 0
  %200 = vmatprep.subr.bf16.mxu0 0
  %201 = vmatpush1.bf16.msra.mxu0 0
  %202 = vmatprep.subr.bf16.mxu0 0
  %203 = vmatpush1.bf16.msra.mxu0 0
  %204 = vmatprep.subr.bf16.mxu0 0
  %205 = vmatpush1.bf16.msra.mxu0 0
  %206 = vmatprep.subr.bf16.mxu0 0
  %207 = vmatpush1.bf16.msra.mxu0 0
  %208 = vmatprep.mubr.bf16.mxu0 0
  %209 = vmatmul.mubr.bf16.gmra.mrb[0].mxu0 %v112
  %v210 = vpop.f32.mrb[0].mxu0
  %v211 = vadd.f32 0.0, %v210
  %v212 = vpop.f32.mrb[0].mxu0
  %v213 = vpop.f32.mrb[0].mxu0
  %v214 = vadd.f32 0.0, %v213
  %v215 = vpop.f32.mrb[0].mxu0
  %216 = vmatprep.mubr.bf16.mxu0 0
  %217 = vmatmul.mubr.bf16.gmra.mrb[0].mxu0 %v113
  %v218 = vpop.f32.mrb[0].mxu0
  %v219 = vadd.f32 0.0, %v218
  %v220 = vpop.f32.mrb[0].mxu0
  %v221 = vpop.f32.mrb[0].mxu0
  %v222 = vadd.f32 0.0, %v221
  %v223 = vpop.f32.mrb[0].mxu0
  %224 = vmatprep.mubr.bf16.mxu0 0
  %225 = vmatmul.mubr.bf16.gmra.mrb[0].mxu0 %v114
  %v226 = vpop.f32.mrb[0].mxu0
  %v227 = vadd.f32 0.0, %v226
  %v228 = vpop.f32.mrb[0].mxu0
  %v229 = vpop.f32.mrb[0].mxu0
  %v230 = vadd.f32 0.0, %v229
  %v231 = vpop.f32.mrb[0].mxu0
  %232 = vmatprep.mubr.bf16.mxu0 0
  %233 = vmatmul.mubr.bf16.gmra.mrb[0].mxu0 %v115
  %v234 = vpop.f32.mrb[0].mxu0
  %v235 = vadd.f32 0.0, %v234
  %v236 = vpop.f32.mrb[0].mxu0
  %v237 = vpop.f32.mrb[0].mxu0
  %v238 = vadd.f32 0.0, %v237
  %v239 = vpop.f32.mrb[0].mxu0
  %240 = vmatprep.mubr.bf16.mxu0 0
  %241 = vmatmul.mubr.bf16.gmra.mrb[0].mxu0 %v116
  %v242 = vpop.f32.mrb[0].mxu0
  %v243 = vadd.f32 0.0, %v242
  %v244 = vpop.f32.mrb[0].mxu0
  %v245 = vpop.f32.mrb[0].mxu0
  %v246 = vadd.f32 0.0, %v245
  %v247 = vpop.f32.mrb[0].mxu0
  %248 = vmatprep.mubr.bf16.mxu0 0
  %249 = vmatmul.mubr.bf16.gmra.mrb[0].mxu0 %v117
  %v250 = vpop.f32.mrb[0].mxu0
  %v251 = vadd.f32 0.0, %v250
  %v252 = vpop.f32.mrb[0].mxu0
  %v253 = vpop.f32.mrb[0].mxu0
  %v254 = vadd.f32 0.0, %v253
  %v255 = vpop.f32.mrb[0].mxu0
  %256 = vmatprep.mubr.bf16.mxu0 0
  %257 = vmatmul.mubr.bf16.gmra.mrb[0].mxu0 %v118
  %v258 = vpop.f32.mrb[0].mxu0
  %v259 = vadd.f32 0.0, %v258
  %v260 = vpop.f32.mrb[0].mxu0
  %v261 = vpop.f32.mrb[0].mxu0
  %v262 = vadd.f32 0.0, %v261
  %v263 = vpop.f32.mrb[0].mxu0
  %264 = vmatprep.mubr.bf16.mxu0 0
  %265 = vmatmul.mubr.bf16.gmra.mrb[0].mxu0 %v119
  %v266 = vpop.f32.mrb[0].mxu0
  %v267 = vadd.f32 0.0, %v266
  %v268 = vpop.f32.mrb[0].mxu0
  %v269 = vpop.f32.mrb[0].mxu0
  %v270 = vadd.f32 0.0, %v269
  %v271 = vpop.f32.mrb[0].mxu0
  %272 = vdwg.mxu0
  %v273 = vadd.f32 %v32, %v211
  %v274 = vadd.f32 %v33, %v214
  %v275 = vadd.f32 %v34, %v219
  %v276 = vadd.f32 %v35, %v222
  %v277 = vadd.f32 %v36, %v227
  %v278 = vadd.f32 %v37, %v230
  %v279 = vadd.f32 %v38, %v235
  %v280 = vadd.f32 %v39, %v238
  %v281 = vadd.f32 %v40, %v243
  %v282 = vadd.f32 %v41, %v246
  %v283 = vadd.f32 %v42, %v251
  %v284 = vadd.f32 %v43, %v254
  %v285 = vadd.f32 %v44, %v259
  %v286 = vadd.f32 %v45, %v262
  %v287 = vadd.f32 %v46, %v267
  %v288 = vadd.f32 %v47, %v270
  %289 = vst [vmem:[#allocation2] sm:$0xff] %v273
  %290 = vst [vmem:[#allocation2 + $0x8] sm:$0xff] %v274
  %291 = vst [vmem:[#allocation2 + $0x10] sm:$0xff] %v275
  %292 = vst [vmem:[#allocation2 + $0x18] sm:$0xff] %v276
  %293 = vst [vmem:[#allocation2 + $0x20] sm:$0xff] %v277
  %294 = vst [vmem:[#allocation2 + $0x28] sm:$0xff] %v278
  %295 = vst [vmem:[#allocation2 + $0x30] sm:$0xff] %v279
  %296 = vst [vmem:[#allocation2 + $0x38] sm:$0xff] %v280
  %297 = vst [vmem:[#allocation2 + $0x40] sm:$0xff] %v281
  %298 = vst [vmem:[#allocation2 + $0x48] sm:$0xff] %v282
  %299 = vst [vmem:[#allocation2 + $0x50] sm:$0xff] %v283
  %300 = vst [vmem:[#allocation2 + $0x58] sm:$0xff] %v284
  %301 = vst [vmem:[#allocation2 + $0x60] sm:$0xff] %v285
  %302 = vst [vmem:[#allocation2 + $0x68] sm:$0xff] %v286
  %303 = vst [vmem:[#allocation2 + $0x70] sm:$0xff] %v287
  %304 = vst [vmem:[#allocation2 + $0x78] sm:$0xff] %v288
  // Predicated region
  $region14: #{encoder_forward.34} parent=0 // pred_check
    %p305 = pneg %p12
  $region15: #{encoder_forward.34} parent=0 // pred_check_branch
    %307 = sbr.rel (%p305) target = $region17
  $region16: #{encoder_forward.34} parent=0 // pred_region
    %v308 = vld [vmem:[#allocation2] sm:$0xff]
    %v309 = vld [vmem:[#allocation2 + $0x8] sm:$0xff]
    %v310 = vld [vmem:[#allocation2 + $0x10] sm:$0xff]
    %v311 = vld [vmem:[#allocation2 + $0x18] sm:$0xff]
    %v312 = vld [vmem:[#allocation2 + $0x20] sm:$0xff]
    %v313 = vld [vmem:[#allocation2 + $0x28] sm:$0xff]
    %v314 = vld [vmem:[#allocation2 + $0x30] sm:$0xff]
    %v315 = vld [vmem:[#allocation2 + $0x38] sm:$0xff]
    %v316 = vld [vmem:[#allocation2 + $0x40] sm:$0xff]
    %v317 = vld [vmem:[#allocation2 + $0x48] sm:$0xff]
    %v318 = vld [vmem:[#allocation2 + $0x50] sm:$0xff]
    %v319 = vld [vmem:[#allocation2 + $0x58] sm:$0xff]
    %v320 = vld [vmem:[#allocation2 + $0x60] sm:$0xff]
    %v321 = vld [vmem:[#allocation2 + $0x68] sm:$0xff]
    %v322 = vld [vmem:[#allocation2 + $0x70] sm:$0xff]
    %v323 = vld [vmem:[#allocation2 + $0x78] sm:$0xff]
    %v324 = vpack.c.bf16 %v309, %v308
    %v325 = vpack.c.bf16 %v311, %v310
    %v326 = vpack.c.bf16 %v313, %v312
    %v327 = vpack.c.bf16 %v315, %v314
    %v328 = vpack.c.bf16 %v317, %v316
    %v329 = vpack.c.bf16 %v319, %v318
    %v330 = vpack.c.bf16 %v321, %v320
    %v331 = vpack.c.bf16 %v323, %v322
    %v340 = vunpack.c.l.b16 %v324
    %v341 = vunpack.c.h.b16 %v324
    %v342 = vunpack.c.l.b16 %v325
    %v343 = vunpack.c.h.b16 %v325
    %v344 = vunpack.c.l.b16 %v326
    %v345 = vunpack.c.h.b16 %v326
    %v346 = vunpack.c.l.b16 %v327
    %v347 = vunpack.c.h.b16 %v327
    %v348 = vunpack.c.l.b16 %v328
    %v349 = vunpack.c.h.b16 %v328
    %v350 = vunpack.c.l.b16 %v329
    %v351 = vunpack.c.h.b16 %v329
    %v352 = vunpack.c.l.b16 %v330
    %v353 = vunpack.c.h.b16 %v330
    %v354 = vunpack.c.l.b16 %v331
    %v355 = vunpack.c.h.b16 %v331
    %v356 = vpack.c.b16 %v340, %v340
    %v357 = vpack.c.b16 %v341, %v341
    %v358 = vpack.c.b16 %v342, %v342
    %v359 = vpack.c.b16 %v343, %v343
    %v360 = vpack.c.b16 %v344, %v344
    %v361 = vpack.c.b16 %v345, %v345
    %v362 = vpack.c.b16 %v346, %v346
    %v363 = vpack.c.b16 %v347, %v347
    %v364 = vpack.c.b16 %v348, %v348
    %v365 = vpack.c.b16 %v349, %v349
    %v366 = vpack.c.b16 %v350, %v350
    %v367 = vpack.c.b16 %v351, %v351
    %v368 = vpack.c.b16 %v352, %v352
    %v369 = vpack.c.b16 %v353, %v353
    %v370 = vpack.c.b16 %v354, %v354
    %v371 = vpack.c.b16 %v355, %v355
    %388 = vst [vmem:[%s2] sm:$0xf] %v356
    %389 = vst [vmem:[%s2 + $0x4] sm:$0xf] %v357
    %390 = vst [vmem:[%s2 + $0x8] sm:$0xf] %v358
    %391 = vst [vmem:[%s2 + $0xc] sm:$0xf] %v359
    %392 = vst [vmem:[%s2 + $0x10] sm:$0xf] %v360
    %393 = vst [vmem:[%s2 + $0x14] sm:$0xf] %v361
    %394 = vst [vmem:[%s2 + $0x18] sm:$0xf] %v362
    %395 = vst [vmem:[%s2 + $0x1c] sm:$0xf] %v363
    %396 = vst [vmem:[%s2 + $0x20] sm:$0xf] %v364
    %397 = vst [vmem:[%s2 + $0x24] sm:$0xf] %v365
    %398 = vst [vmem:[%s2 + $0x28] sm:$0xf] %v366
    %399 = vst [vmem:[%s2 + $0x2c] sm:$0xf] %v367
    %400 = vst [vmem:[%s2 + $0x30] sm:$0xf] %v368
    %401 = vst [vmem:[%s2 + $0x34] sm:$0xf] %v369
    %402 = vst [vmem:[%s2 + $0x38] sm:$0xf] %v370
    %403 = vst [vmem:[%s2 + $0x3c] sm:$0xf] %v371
  $region17: #{encoder_forward.34} parent=0 // pred_fallthru
    _
  // Predicated region
  $region18: #{encoder_forward.34} parent=0 // pred_check
    _
  $region19: #{encoder_forward.34} parent=0 // pred_check_branch
    %405 = sbr.rel (0) target = $region21
  $region20: #{encoder_forward.34} parent=0 // pred_region
    _
  $region21: #{encoder_forward.34} parent=0 // pred_fallthru
    _
  // Predicated region
  $region22: #{encoder_forward.34} parent=0 // pred_check
    _
  $region23: #{encoder_forward.34} parent=0 // pred_check_branch
    %407 = sbr.rel (0) target = $region25
  $region24: #{encoder_forward.34} parent=0 // pred_region
    _
  $region25: #{encoder_forward.34} parent=0 // pred_fallthru
    _

// kernel: eq.15
$region0: #{eq.15}
  %s0 = inlined_call_operand.vmem [shape: s32[2,1,16,16], index: 0, kind: input, shape index: {}]
  %s1 = inlined_call_operand.vmem [shape: s32[2,256], index: 1, kind: output, shape index: {}]
  $region1: #{eq.15} parent=0
    #allocation0 [shape = 'u8[8192]{0}', space=vmem, size = 0x2000, scoped, tag = 'scoped mem for output reshape']
    %v2 = vld [vmem:[%s0] ss:$8 sm:$0xf]
    %vm3 = vcmask 130048
    %4 = vst.msk [vmem:[#allocation0] ss:$8 sm:$0x3] %vm3, %v2
    %s5 = scalar_lea.vmem [#allocation0], 4294967281
    %6 = vst.msk [vmem:[%s5] ss:$8 sm:$0xc] %vm3, %v2
    %s7 = scalar_lea.vmem %s0, 7
    %s8 = smov 3
    %v9 = vld [vmem:[%s7] ss:$16 sm:%s8]
    %s10 = scalar_lea.vmem %s0, 4294967279
    %s11 = smov 12
    %v12 = vld [vmem:[%s10] ss:$16 sm:%s11]
    %vm13 = vcmask 1043458
    %v14 = vsel %vm13, %v12, %v9
    %15 = vrot.lane.b32.xlu0 %v14, 112
    %v16 = vpop.permute.xlu0 %15
    %vm17 = vcmask 1048448
    %18 = vst.msk [vmem:[#allocation0] sm:$0x3] %vm17, %v16
    %s19 = scalar_lea.vmem [#allocation0], 6
    %20 = vst.msk [vmem:[%s19] sm:$0xc] %vm17, %v16
    %s21 = scalar_lea.vmem %s0, 6
    %s22 = smov 3
    %v23 = vld [vmem:[%s21] ss:$16 sm:%s22]
    %s24 = scalar_lea.vmem %s0, 4294967278
    %s25 = smov 12
    %v26 = vld [vmem:[%s24] ss:$16 sm:%s25]
    %vm27 = vcmask 1043458
    %v28 = vsel %vm27, %v26, %v23
    %29 = vrot.lane.b32.xlu0 %v28, 96
    %v30 = vpop.permute.xlu0 %29
    %vm31 = vcmask 917248
    %32 = vst.msk [vmem:[#allocation0] sm:$0x3] %vm31, %v30
    %s33 = scalar_lea.vmem [#allocation0], 6
    %34 = vst.msk [vmem:[%s33] sm:$0xc] %vm31, %v30
    %s35 = scalar_lea.vmem %s0, 5
    %s36 = smov 3
    %v37 = vld [vmem:[%s35] ss:$16 sm:%s36]
    %s38 = scalar_lea.vmem %s0, 4294967277
    %s39 = smov 12
    %v40 = vld [vmem:[%s38] ss:$16 sm:%s39]
    %vm41 = vcmask 1043458
    %v42 = vsel %vm41, %v40, %v37
    %43 = vrot.lane.b32.xlu0 %v42, 80
    %v44 = vpop.permute.xlu0 %43
    %vm45 = vcmask 786048
    %46 = vst.msk [vmem:[#allocation0] sm:$0x3] %vm45, %v44
    %s47 = scalar_lea.vmem [#allocation0], 6
    %48 = vst.msk [vmem:[%s47] sm:$0xc] %vm45, %v44
    %s49 = scalar_lea.vmem %s0, 4
    %s50 = smov 3
    %v51 = vld [vmem:[%s49] ss:$16 sm:%s50]
    %s52 = scalar_lea.vmem %s0, 4294967276
    %s53 = smov 12
    %v54 = vld [vmem:[%s52] ss:$16 sm:%s53]
    %vm55 = vcmask 1043458
    %v56 = vsel %vm55, %v54, %v51
    %57 = vrot.lane.b32.xlu0 %v56, 64
    %v58 = vpop.permute.xlu0 %57
    %vm59 = vcmask 654848
    %60 = vst.msk [vmem:[#allocation0] sm:$0x3] %vm59, %v58
    %s61 = scalar_lea.vmem [#allocation0], 6
    %62 = vst.msk [vmem:[%s61] sm:$0xc] %vm59, %v58
    %s63 = scalar_lea.vmem %s0, 3
    %s64 = smov 3
    %v65 = vld [vmem:[%s63] ss:$16 sm:%s64]
    %s66 = scalar_lea.vmem %s0, 4294967275
    %s67 = smov 12
    %v68 = vld [vmem:[%s66] ss:$16 sm:%s67]
    %vm69 = vcmask 1043458
    %v70 = vsel %vm69, %v68, %v65
    %71 = vrot.lane.b32.xlu0 %v70, 48
    %v72 = vpop.permute.xlu0 %71
    %vm73 = vcmask 523648
    %74 = vst.msk [vmem:[#allocation0] sm:$0x3] %vm73, %v72
    %s75 = scalar_lea.vmem [#allocation0], 6
    %76 = vst.msk [vmem:[%s75] sm:$0xc] %vm73, %v72
    %s77 = scalar_lea.vmem %s0, 2
    %s78 = smov 3
    %v79 = vld [vmem:[%s77] ss:$16 sm:%s78]
    %s80 = scalar_lea.vmem %s0, 4294967274
    %s81 = smov 12
    %v82 = vld [vmem:[%s80] ss:$16 sm:%s81]
    %vm83 = vcmask 1043458
    %v84 = vsel %vm83, %v82, %v79
    %85 = vrot.lane.b32.xlu0 %v84, 32
    %v86 = vpop.permute.xlu0 %85
    %vm87 = vcmask 392448
    %88 = vst.msk [vmem:[#allocation0] sm:$0x3] %vm87, %v86
    %s89 = scalar_lea.vmem [#allocation0], 6
    %90 = vst.msk [vmem:[%s89] sm:$0xc] %vm87, %v86
    %s91 = scalar_lea.vmem %s0, 1
    %s92 = smov 3
    %v93 = vld [vmem:[%s91] ss:$16 sm:%s92]
    %s94 = scalar_lea.vmem %s0, 4294967273
    %s95 = smov 12
    %v96 = vld [vmem:[%s94] ss:$16 sm:%s95]
    %vm97 = vcmask 1043458
    %v98 = vsel %vm97, %v96, %v93
    %99 = vrot.lane.b32.xlu0 %v98, 16
    %v100 = vpop.permute.xlu0 %99
    %vm101 = vcmask 261248
    %102 = vst.msk [vmem:[#allocation0] sm:$0x3] %vm101, %v100
    %s103 = scalar_lea.vmem [#allocation0], 6
    %104 = vst.msk [vmem:[%s103] sm:$0xc] %vm101, %v100
    %s106 = sshllo.u32 0, 2
    %v108 = vld [vmem:[#allocation0] sm:%s106]
    %s109 = sshllo.u32 0, 2
    %110 = vst [vmem:[%s1] sm:%s109] %v108
    %s111 = scalar_lea.vmem [#allocation0], 8
    %v112 = vld [vmem:[%s111] sm:%s106]
    %s113 = sshllo.u32 0, 2
    %s114 = scalar_lea.vmem %s1, 2
    %115 = vst [vmem:[%s114] sm:%s113] %v112

// kernel: encoder_forward.45
$region0: #{encoder_forward.45}
  #allocation0 [shape = 'u32[]', space=smem, size = 0x4, offset = 0x4, fixed_abs, tag = 'smem constant byte address 0x4 - core index']
  #allocation1 [shape = 'u32[144,128]{1,0:T(1,128)}', space=vmem, size = 0x12000, scoped, tag = 'internal scratch']
  #allocation2 [shape = 'f32[256,128]{1,0:T(8,128)}', space=vmem, size = 0x20000, scoped, tag = 'scratch operand']
  %s0 = inlined_call_operand.vmem [shape: bf16[512,896], index: 0, kind: input, shape index: {}]
  %s1 = inlined_call_operand.vmem [shape: bf16[896,128], index: 1, kind: input, shape index: {}]
  %s2 = inlined_call_operand.vmem [shape: f32[1,128], index: 2, kind: input, shape index: {}]
  %s3 = inlined_call_operand.vmem [shape: f32[512,128], index: 3, kind: output, shape index: {}]
  %s4 = sld [smem:[#allocation0]]
  $region94: #{encoder_forward.45} parent=0
    _
  %s6 = ssub.s32 1, %s4
  %s7 = scalar_select 0, %s6, %s4
  $region1: #{encoder_forward.45} parent=0
    #allocation3 [shape = 'u8[131072]{0}', space=vmem, size = 0x20000, scoped, tag = 'input window, operand 0']
    loop: start=0, step=1, limit=16
    $region2: #{encoder_forward.45} parent=1 // loop_pre_header
      _
    $region3: #{encoder_forward.45} parent=1 // loop_header
      %s9 = sphi 0, %s13
      %p10 = scmp.ge.s32.totalorder %s9, 16
      %s16 = sphi 0, %s35
      %s17 = sphi 0, %s31
      %s18 = sphi 0, %s27
      %s19 = sphi 0, %s16
      %s20 = sphi 0, %s17
      %s21 = sphi 0, %s18
      %s22 = sphi 0, %s19
      %s23 = sphi 0, %s20
      %s24 = sphi 0, %s21
      %s40 = sphi 0, %s42
      %s43 = sphi 0, %s40
      %s44 = sphi 0, %s43
      %s60 = sphi 0, %s44
      %s68 = sphi 0, %s70
      %s71 = sphi 0, %s68
      %s72 = sphi 0, %s71
      %s88 = sphi 0, %s72
      %s94 = sphi 0, %s96
      %s97 = sphi 0, %s94
      %s98 = sphi 0, %s97
      %s114 = sphi 0, %s98
      %s122 = sphi 0, %s124
      %s125 = sphi 0, %s122
      %s126 = sphi 0, %s125
      %s142 = sphi 0, %s126
    $region4: #{encoder_forward.45} parent=1 // loop_header_branch
      %12 = sbr.rel (%p10) target = $region8
    $region5: #{encoder_forward.45} parent=1 // loop_body
      %s14 = ssub.s32 %s9, 1
      %s15 = ssub.s32 %s9, 2
      %s25 = sadd.s32 1, %s18
      %p26 = scmp.ge.s32.totalorder %s25, 7
      %s27 = scalar_select %p26, 0, %s25
      %s28 = sadd.s32 1, %s17
      %s29 = scalar_select %p26, %s28, %s17
      %p30 = scmp.ge.s32.totalorder %s29, 1
      %s31 = scalar_select %p30, 0, %s29
      %s32 = sadd.s32 1, %s16
      %s33 = scalar_select %p30, %s32, %s16
      %p34 = scmp.ge.s32.totalorder %s33, 2
      %s35 = scalar_select %p34, 0, %s33
      %s36 = ssub.s32 %s16, %s35
      %s37 = ssub.s32 %s18, %s27
      %s38 = sor.u32 %s36, %s37
      %p39 = scmp.eq.s32.totalorder %s38, 0
      %s41 = sadd.s32 %s40, 1
      %s42 = scalar_select %p39, %s40, %s41
      %p45 = pneg %p39
      %p46 = scmp.eq.s32.totalorder %s9, 13
      %p47 = por %p45, %p46
      %p48 = scmp.ne.s32.totalorder %s40, %s43
      %p49 = scmp.eq.s32.totalorder %s9, 0
      %p50 = por %p48, %p49
      %p51 = scmp.ne.s32.totalorder %s40, %s43
      %p52 = scmp.eq.s32.totalorder %s14, 13
      %p53 = por %p51, %p52
      %p54 = scmp.ne.s32.totalorder %s43, %s44
      %p55 = scmp.eq.s32.totalorder %s14, 0
      %p56 = por %p54, %p55
      %p57 = scmp.ne.s32.totalorder %s43, %s44
      %p58 = scmp.eq.s32.totalorder %s15, 13
      %p59 = por %p57, %p58
      %p61 = scmp.ne.s32.totalorder %s44, %s60
      %p62 = scmp.eq.s32.totalorder %s15, 0
      %p63 = por %p61, %p62
      %s64 = ssub.s32 %s18, %s27
      %s65 = ssub.s32 %s17, %s31
      %s66 = sor.u32 %s64, %s65
      %p67 = scmp.eq.s32.totalorder %s66, 0
      %s69 = sadd.s32 %s68, 1
      %s70 = scalar_select %p67, %s68, %s69
      %p73 = pneg %p67
      %p74 = scmp.eq.s32.totalorder %s9, 13
      %p75 = por %p73, %p74
      %p76 = scmp.ne.s32.totalorder %s68, %s71
      %p77 = scmp.eq.s32.totalorder %s9, 0
      %p78 = por %p76, %p77
      %p79 = scmp.ne.s32.totalorder %s68, %s71
      %p80 = scmp.eq.s32.totalorder %s14, 13
      %p81 = por %p79, %p80
      %p82 = scmp.ne.s32.totalorder %s71, %s72
      %p83 = scmp.eq.s32.totalorder %s14, 0
      %p84 = por %p82, %p83
      %p85 = scmp.ne.s32.totalorder %s71, %s72
      %p86 = scmp.eq.s32.totalorder %s15, 13
      %p87 = por %p85, %p86
      %p89 = scmp.ne.s32.totalorder %s72, %s88
      %p90 = scmp.eq.s32.totalorder %s15, 0
      %p91 = por %p89, %p90
      %s92 = ssub.s32 %s17, %s31
      %p93 = scmp.eq.s32.totalorder %s92, 0
      %s95 = sadd.s32 %s94, 1
      %s96 = scalar_select %p93, %s94, %s95
      %p99 = pneg %p93
      %p100 = scmp.eq.s32.totalorder %s9, 13
      %p101 = por %p99, %p100
      %p102 = scmp.ne.s32.totalorder %s94, %s97
      %p103 = scmp.eq.s32.totalorder %s9, 0
      %p104 = por %p102, %p103
      %p105 = scmp.ne.s32.totalorder %s94, %s97
      %p106 = scmp.eq.s32.totalorder %s14, 13
      %p107 = por %p105, %p106
      %p108 = scmp.ne.s32.totalorder %s97, %s98
      %p109 = scmp.eq.s32.totalorder %s14, 0
      %p110 = por %p108, %p109
      %p111 = scmp.ne.s32.totalorder %s97, %s98
      %p112 = scmp.eq.s32.totalorder %s15, 13
      %p113 = por %p111, %p112
      %p115 = scmp.ne.s32.totalorder %s98, %s114
      %p116 = scmp.eq.s32.totalorder %s15, 0
      %p117 = por %p115, %p116
      %s118 = ssub.s32 %s16, %s35
      %s119 = ssub.s32 %s17, %s31
      %s120 = sor.u32 %s118, %s119
      %p121 = scmp.eq.s32.totalorder %s120, 0
      %s123 = sadd.s32 %s122, 1
      %s124 = scalar_select %p121, %s122, %s123
      %p127 = pneg %p121
      %p128 = scmp.eq.s32.totalorder %s9, 13
      %p129 = por %p127, %p128
      %p130 = scmp.ne.s32.totalorder %s122, %s125
      %p131 = scmp.eq.s32.totalorder %s9, 0
      %p132 = por %p130, %p131
      %p133 = scmp.ne.s32.totalorder %s122, %s125
      %p134 = scmp.eq.s32.totalorder %s14, 13
      %p135 = por %p133, %p134
      %p136 = scmp.ne.s32.totalorder %s125, %s126
      %p137 = scmp.eq.s32.totalorder %s14, 0
      %p138 = por %p136, %p137
      %p139 = scmp.ne.s32.totalorder %s125, %s126
      %p140 = scmp.eq.s32.totalorder %s15, 13
      %p141 = por %p139, %p140
      %p143 = scmp.ne.s32.totalorder %s126, %s142
      %p144 = scmp.eq.s32.totalorder %s15, 0
      %p145 = por %p143, %p144
      %p146 = scmp.le.s32.totalorder 1, %s9
      %p147 = scmp.lt.s32.totalorder %s9, 15
      %p148 = pnand %p146, %p147
      %p149 = pneg %p148
      // Predicated region
      $region9: #{encoder_forward.45} parent=5 // pred_check
        _
      $region10: #{encoder_forward.45} parent=5 // pred_check_branch
        %151 = sbr.rel (%p148) target = $region12
      $region11: #{encoder_forward.45} parent=5 // pred_region
        %s152 = ssub.s32 %s9, 1
        // Predicated region
        $region13: #{encoder_forward.45} parent=11 // pred_check
          %p153 = pneg %p110
        $region14: #{encoder_forward.45} parent=11 // pred_check_branch
          %155 = sbr.rel (%p153) target = $region16
        $region15: #{encoder_forward.45} parent=11 // pred_region
          %p156 = scmp.lt.s32.totalorder %s20, 0
          %s157 = scalar_select %p156, %s20, 0
          %s158 = scalar_lea.vmem %s2, %s157
        $region16: #{encoder_forward.45} parent=11 // pred_fallthru
          _
      $region12: #{encoder_forward.45} parent=5 // pred_fallthru
        _
      %p159 = scmp.lt.s32.totalorder %s9, 14
      // Predicated region
      $region17: #{encoder_forward.45} parent=5 // pred_check
        %p160 = pneg %p159
      $region18: #{encoder_forward.45} parent=5 // pred_check_branch
        %162 = sbr.rel (%p160) target = $region20
      $region19: #{encoder_forward.45} parent=5 // pred_region
        // Predicated region
        $region21: #{encoder_forward.45} parent=19 // pred_check
          %p163 = pneg %p50
        $region22: #{encoder_forward.45} parent=19 // pred_check_branch
          %165 = sbr.rel (%p163) target = $region24
        $region23: #{encoder_forward.45} parent=19 // pred_region
          %s166 = sand.u32 %s40, 1
          %s167 = sand.u32 %s40, 1
          %s168 = smul.addr %s167, 128
          %s169 = scalar_lea.vmem [#allocation3], %s168
          %s170 = smul.u32 32, %s16
          %s171 = smul.addr %s170, 7
          %s172 = sadd.s32 %s18, %s171
          %s173 = smul.addr %s172, 4
          %s174 = scalar_lea.vmem %s0, %s173
          // Predicated region
          $region25: #{encoder_forward.45} parent=23 // pred_check
            _
          $region26: #{encoder_forward.45} parent=23 // pred_check_branch
            %176 = sbr.rel (0) target = $region28
          $region27: #{encoder_forward.45} parent=23 // pred_region
            // Predicated region
            $region29: #{encoder_forward.45} parent=27 // pred_check
              _
            $region30: #{encoder_forward.45} parent=27 // pred_check_branch
              %178 = sbr.rel target = $region32
            $region31: #{encoder_forward.45} parent=27 // pred_region
              // Predicated region
              $region44: #{encoder_forward.45} parent=31 // pred_check
                _
              $region45: #{encoder_forward.45} parent=31 // pred_check_branch
                %255 = sbr.rel (0) target = $region47
              $region46: #{encoder_forward.45} parent=31 // pred_region
                loop: start=0, step=1, limit=1
                $region48: #{encoder_forward.45} parent=46 // loop_pre_header
                  _
                $region49: #{encoder_forward.45} parent=46 // loop_header
                  %s257 = sphi 0, %s261
                  %p258 = scmp.ge.s32.totalorder %s257, 1
                  %s262 = sphi %s174, %s174
                  %s263 = sphi %s169, %s169
                $region50: #{encoder_forward.45} parent=46 // loop_header_branch
                  %260 = sbr.rel (%p258) target = $region54
                $region51: #{encoder_forward.45} parent=46 // loop_body
                  _
                $region52: #{encoder_forward.45} parent=46 // loop_footer
                  %s261 = sadd.s32 1, %s257
                $region53: #{encoder_forward.45} parent=46 // loop_footer_branch
                  %256 = sbr.rel target = $region49
                $region54: #{encoder_forward.45} parent=46 // loop_exit
                  _
                loop: start=0, step=1, limit=1
                $region55: #{encoder_forward.45} parent=46 // loop_pre_header
                  _
                $region56: #{encoder_forward.45} parent=46 // loop_header
                  %s266 = sphi 0, %s270
                  %p267 = scmp.ge.s32.totalorder %s266, 1
                  %s271 = sphi %s174, %s174
                  %s272 = sphi %s169, %s169
                $region57: #{encoder_forward.45} parent=46 // loop_header_branch
                  %269 = sbr.rel (%p267) target = $region61
                $region58: #{encoder_forward.45} parent=46 // loop_body
                  %v273 = vld [vmem:[%s271] sm:$0xf]
                  %274 = vst [vmem:[%s272] sm:$0xf] %v273
                  %v275 = vld [vmem:[%s271 + $0x1c] sm:$0xf]
                  %276 = vst [vmem:[%s272 + $0x4] sm:$0xf] %v275
                  %v277 = vld [vmem:[%s271 + $0x38] sm:$0xf]
                  %278 = vst [vmem:[%s272 + $0x8] sm:$0xf] %v277
                  %v279 = vld [vmem:[%s271 + $0x54] sm:$0xf]
                  %280 = vst [vmem:[%s272 + $0xc] sm:$0xf] %v279
                  %v281 = vld [vmem:[%s271 + $0x70] sm:$0xf]
                  %282 = vst [vmem:[%s272 + $0x10] sm:$0xf] %v281
                  %v283 = vld [vmem:[%s271 + $0x8c] sm:$0xf]
                  %284 = vst [vmem:[%s272 + $0x14] sm:$0xf] %v283
                  %v285 = vld [vmem:[%s271 + $0xa8] sm:$0xf]
                  %286 = vst [vmem:[%s272 + $0x18] sm:$0xf] %v285
                  %v287 = vld [vmem:[%s271 + $0xc4] sm:$0xf]
                  %288 = vst [vmem:[%s272 + $0x1c] sm:$0xf] %v287
                  %v289 = vld [vmem:[%s271 + $0xe0] sm:$0xf]
                  %290 = vst [vmem:[%s272 + $0x20] sm:$0xf] %v289
                  %v291 = vld [vmem:[%s271 + $0xfc] sm:$0xf]
                  %292 = vst [vmem:[%s272 + $0x24] sm:$0xf] %v291
                  %v293 = vld [vmem:[%s271 + $0x118] sm:$0xf]
                  %294 = vst [vmem:[%s272 + $0x28] sm:$0xf] %v293
                  %v295 = vld [vmem:[%s271 + $0x134] sm:$0xf]
                  %296 = vst [vmem:[%s272 + $0x2c] sm:$0xf] %v295
                  %v297 = vld [vmem:[%s271 + $0x150] sm:$0xf]
                  %298 = vst [vmem:[%s272 + $0x30] sm:$0xf] %v297
                  %v299 = vld [vmem:[%s271 + $0x16c] sm:$0xf]
                  %300 = vst [vmem:[%s272 + $0x34] sm:$0xf] %v299
                  %v301 = vld [vmem:[%s271 + $0x188] sm:$0xf]
                  %302 = vst [vmem:[%s272 + $0x38] sm:$0xf] %v301
                  %v303 = vld [vmem:[%s271 + $0x1a4] sm:$0xf]
                  %304 = vst [vmem:[%s272 + $0x3c] sm:$0xf] %v303
                  %v305 = vld [vmem:[%s271 + $0x1c0] sm:$0xf]
                  %306 = vst [vmem:[%s272 + $0x40] sm:$0xf] %v305
                  %v307 = vld [vmem:[%s271 + $0x1dc] sm:$0xf]
                  %308 = vst [vmem:[%s272 + $0x44] sm:$0xf] %v307
                  %v309 = vld [vmem:[%s271 + $0x1f8] sm:$0xf]
                  %310 = vst [vmem:[%s272 + $0x48] sm:$0xf] %v309
                  %v311 = vld [vmem:[%s271 + $0x214] sm:$0xf]
                  %312 = vst [vmem:[%s272 + $0x4c] sm:$0xf] %v311
                  %v313 = vld [vmem:[%s271 + $0x230] sm:$0xf]
                  %314 = vst [vmem:[%s272 + $0x50] sm:$0xf] %v313
                  %v315 = vld [vmem:[%s271 + $0x24c] sm:$0xf]
                  %316 = vst [vmem:[%s272 + $0x54] sm:$0xf] %v315
                  %v317 = vld [vmem:[%s271 + $0x268] sm:$0xf]
                  %318 = vst [vmem:[%s272 + $0x58] sm:$0xf] %v317
                  %v319 = vld [vmem:[%s271 + $0x284] sm:$0xf]
                  %320 = vst [vmem:[%s272 + $0x5c] sm:$0xf] %v319
                  %v321 = vld [vmem:[%s271 + $0x2a0] sm:$0xf]
                  %322 = vst [vmem:[%s272 + $0x60] sm:$0xf] %v321
                  %v323 = vld [vmem:[%s271 + $0x2bc] sm:$0xf]
                  %324 = vst [vmem:[%s272 + $0x64] sm:$0xf] %v323
                  %v325 = vld [vmem:[%s271 + $0x2d8] sm:$0xf]
                  %326 = vst [vmem:[%s272 + $0x68] sm:$0xf] %v325
                  %v327 = vld [vmem:[%s271 + $0x2f4] sm:$0xf]
                  %328 = vst [vmem:[%s272 + $0x6c] sm:$0xf] %v327
                  %v329 = vld [vmem:[%s271 + $0x310] sm:$0xf]
                  %330 = vst [vmem:[%s272 + $0x70] sm:$0xf] %v329
                  %v331 = vld [vmem:[%s271 + $0x32c] sm:$0xf]
                  %332 = vst [vmem:[%s272 + $0x74] sm:$0xf] %v331
                  %v333 = vld [vmem:[%s271 + $0x348] sm:$0xf]
                  %334 = vst [vmem:[%s272 + $0x78] sm:$0xf] %v333
                  %v335 = vld [vmem:[%s271 + $0x364] sm:$0xf]
                  %336 = vst [vmem:[%s272 + $0x7c] sm:$0xf] %v335
                $region59: #{encoder_forward.45} parent=46 // loop_footer
                  %s270 = sadd.s32 1, %s266
                $region60: #{encoder_forward.45} parent=46 // loop_footer_branch
                  %265 = sbr.rel target = $region56
                $region61: #{encoder_forward.45} parent=46 // loop_exit
                  _
              $region47: #{encoder_forward.45} parent=31 // pred_fallthru
                _
            $region32: #{encoder_forward.45} parent=27 // pred_fallthru
              _
            // Predicated region
            $region33: #{encoder_forward.45} parent=27 // pred_check
              _
            $region34: #{encoder_forward.45} parent=27 // pred_check_branch
              %180 = sbr.rel (0) target = $region36
            $region35: #{encoder_forward.45} parent=27 // pred_region
              loop: start=0, step=1, limit=1
              $region37: #{encoder_forward.45} parent=35 // loop_pre_header
                _
              $region38: #{encoder_forward.45} parent=35 // loop_header
                %s183 = sphi 0, %s187
                %p184 = scmp.ge.s32.totalorder %s183, 1
                %s188 = sphi %s174, %s174
                %s189 = sphi %s169, %s169
              $region39: #{encoder_forward.45} parent=35 // loop_header_branch
                %186 = sbr.rel (%p184) target = $region43
              $region40: #{encoder_forward.45} parent=35 // loop_body
                %v190 = vld [vmem:[%s188] sm:$0xf]
                %191 = vst [vmem:[%s189] sm:$0xf] %v190
                %v192 = vld [vmem:[%s188 + $0x1c] sm:$0xf]
                %193 = vst [vmem:[%s189 + $0x4] sm:$0xf] %v192
                %v194 = vld [vmem:[%s188 + $0x38] sm:$0xf]
                %195 = vst [vmem:[%s189 + $0x8] sm:$0xf] %v194
                %v196 = vld [vmem:[%s188 + $0x54] sm:$0xf]
                %197 = vst [vmem:[%s189 + $0xc] sm:$0xf] %v196
                %v198 = vld [vmem:[%s188 + $0x70] sm:$0xf]
                %199 = vst [vmem:[%s189 + $0x10] sm:$0xf] %v198
                %v200 = vld [vmem:[%s188 + $0x8c] sm:$0xf]
                %201 = vst [vmem:[%s189 + $0x14] sm:$0xf] %v200
                %v202 = vld [vmem:[%s188 + $0xa8] sm:$0xf]
                %203 = vst [vmem:[%s189 + $0x18] sm:$0xf] %v202
                %v204 = vld [vmem:[%s188 + $0xc4] sm:$0xf]
                %205 = vst [vmem:[%s189 + $0x1c] sm:$0xf] %v204
                %v206 = vld [vmem:[%s188 + $0xe0] sm:$0xf]
                %207 = vst [vmem:[%s189 + $0x20] sm:$0xf] %v206
                %v208 = vld [vmem:[%s188 + $0xfc] sm:$0xf]
                %209 = vst [vmem:[%s189 + $0x24] sm:$0xf] %v208
                %v210 = vld [vmem:[%s188 + $0x118] sm:$0xf]
                %211 = vst [vmem:[%s189 + $0x28] sm:$0xf] %v210
                %v212 = vld [vmem:[%s188 + $0x134] sm:$0xf]
                %213 = vst [vmem:[%s189 + $0x2c] sm:$0xf] %v212
                %v214 = vld [vmem:[%s188 + $0x150] sm:$0xf]
                %215 = vst [vmem:[%s189 + $0x30] sm:$0xf] %v214
                %v216 = vld [vmem:[%s188 + $0x16c] sm:$0xf]
                %217 = vst [vmem:[%s189 + $0x34] sm:$0xf] %v216
                %v218 = vld [vmem:[%s188 + $0x188] sm:$0xf]
                %219 = vst [vmem:[%s189 + $0x38] sm:$0xf] %v218
                %v220 = vld [vmem:[%s188 + $0x1a4] sm:$0xf]
                %221 = vst [vmem:[%s189 + $0x3c] sm:$0xf] %v220
                %v222 = vld [vmem:[%s188 + $0x1c0] sm:$0xf]
                %223 = vst [vmem:[%s189 + $0x40] sm:$0xf] %v222
                %v224 = vld [vmem:[%s188 + $0x1dc] sm:$0xf]
                %225 = vst [vmem:[%s189 + $0x44] sm:$0xf] %v224
                %v226 = vld [vmem:[%s188 + $0x1f8] sm:$0xf]
                %227 = vst [vmem:[%s189 + $0x48] sm:$0xf] %v226
                %v228 = vld [vmem:[%s188 + $0x214] sm:$0xf]
                %229 = vst [vmem:[%s189 + $0x4c] sm:$0xf] %v228
                %v230 = vld [vmem:[%s188 + $0x230] sm:$0xf]
                %231 = vst [vmem:[%s189 + $0x50] sm:$0xf] %v230
                %v232 = vld [vmem:[%s188 + $0x24c] sm:$0xf]
                %233 = vst [vmem:[%s189 + $0x54] sm:$0xf] %v232
                %v234 = vld [vmem:[%s188 + $0x268] sm:$0xf]
                %235 = vst [vmem:[%s189 + $0x58] sm:$0xf] %v234
                %v236 = vld [vmem:[%s188 + $0x284] sm:$0xf]
                %237 = vst [vmem:[%s189 + $0x5c] sm:$0xf] %v236
                %v238 = vld [vmem:[%s188 + $0x2a0] sm:$0xf]
                %239 = vst [vmem:[%s189 + $0x60] sm:$0xf] %v238
                %v240 = vld [vmem:[%s188 + $0x2bc] sm:$0xf]
                %241 = vst [vmem:[%s189 + $0x64] sm:$0xf] %v240
                %v242 = vld [vmem:[%s188 + $0x2d8] sm:$0xf]
                %243 = vst [vmem:[%s189 + $0x68] sm:$0xf] %v242
                %v244 = vld [vmem:[%s188 + $0x2f4] sm:$0xf]
                %245 = vst [vmem:[%s189 + $0x6c] sm:$0xf] %v244
                %v246 = vld [vmem:[%s188 + $0x310] sm:$0xf]
                %247 = vst [vmem:[%s189 + $0x70] sm:$0xf] %v246
                %v248 = vld [vmem:[%s188 + $0x32c] sm:$0xf]
                %249 = vst [vmem:[%s189 + $0x74] sm:$0xf] %v248
                %v250 = vld [vmem:[%s188 + $0x348] sm:$0xf]
                %251 = vst [vmem:[%s189 + $0x78] sm:$0xf] %v250
                %v252 = vld [vmem:[%s188 + $0x364] sm:$0xf]
                %253 = vst [vmem:[%s189 + $0x7c] sm:$0xf] %v252
              $region41: #{encoder_forward.45} parent=35 // loop_footer
                %s187 = sadd.s32 1, %s183
              $region42: #{encoder_forward.45} parent=35 // loop_footer_branch
                %182 = sbr.rel target = $region38
              $region43: #{encoder_forward.45} parent=35 // loop_exit
                _
            $region36: #{encoder_forward.45} parent=27 // pred_fallthru
              _
          $region28: #{encoder_forward.45} parent=23 // pred_fallthru
            _
          %337 = vnop
        $region24: #{encoder_forward.45} parent=19 // pred_fallthru
          _
        // Predicated region
        $region62: #{encoder_forward.45} parent=19 // pred_check
          %p338 = pneg %p78
        $region63: #{encoder_forward.45} parent=19 // pred_check_branch
          %340 = sbr.rel (%p338) target = $region65
        $region64: #{encoder_forward.45} parent=19 // pred_region
          %s341 = smul.u32 16, %s18
          %p342 = scmp.lt.s32.totalorder %s341, 111
          %s343 = scalar_select %p342, %s341, 111
          %p344 = scmp.lt.s32.totalorder %s17, 0
          %s345 = scalar_select %p344, %s17, 0
          %s346 = sadd.s32 %s345, %s343
          %s347 = smul.addr %s346, 4
          %s348 = scalar_lea.vmem %s1, %s347
          %s349 = smul.u32 16, %s18
        $region65: #{encoder_forward.45} parent=19 // pred_fallthru
          _
      $region20: #{encoder_forward.45} parent=5 // pred_fallthru
        _
      %p350 = scmp.le.s32.totalorder 1, %s9
      %p351 = scmp.lt.s32.totalorder %s9, 15
      %p352 = pnand %p350, %p351
      %p353 = pneg %p352
      // Predicated region
      $region66: #{encoder_forward.45} parent=5 // pred_check
        _
      $region67: #{encoder_forward.45} parent=5 // pred_check_branch
        %355 = sbr.rel (%p352) target = $region69
      $region68: #{encoder_forward.45} parent=5 // pred_region
        %s356 = ssub.s32 %s9, 1
        %s357 = sand.u32 %s43, 1
        %s358 = sand.u32 %s43, 1
        %s359 = smul.addr %s358, 128
        %s360 = scalar_lea.vmem [#allocation3], %s359
        // Predicated region
        $region70: #{encoder_forward.45} parent=68 // pred_check
          %p361 = pneg %p56
        $region71: #{encoder_forward.45} parent=68 // pred_check_branch
          %363 = sbr.rel (%p361) target = $region73
        $region72: #{encoder_forward.45} parent=68 // pred_region
          _
        $region73: #{encoder_forward.45} parent=68 // pred_fallthru
          _
        %s364 = sand.u32 %s43, 1
        %s365 = sand.u32 %s43, 1
        %s366 = smul.addr %s365, 128
        %s367 = scalar_lea.vmem [#allocation3], %s366
        %p368 = pneg %p56
        %p369 = pneg %p53
        %s370 = smul.u32 16, %s21
        %p371 = scmp.lt.s32.totalorder %s370, 111
        %s372 = scalar_select %p371, %s370, 111
        %p373 = scmp.lt.s32.totalorder %s20, 0
        %s374 = scalar_select %p373, %s20, 0
        %s375 = sadd.s32 %s374, %s372
        %s376 = smul.addr %s375, 4
        %s377 = scalar_lea.vmem %s1, %s376
        %p378 = pneg %p84
        %p379 = pneg %p81
        %p380 = scmp.lt.s32.totalorder %s20, 0
        %s381 = scalar_select %p380, %s20, 0
        %s382 = scalar_lea.vmem %s2, %s381
        %p383 = pneg %p110
        %p384 = pneg %p107
        %p385 = pneg %p138
        %p386 = pneg %p135
        %s387 = smul.u32 32, %s19
        %p388 = scmp.lt.s32.totalorder %s387, 63
        %s389 = scalar_select %p388, %s387, 63
        %p390 = scmp.lt.s32.totalorder %s20, 0
        %s391 = scalar_select %p390, %s20, 0
        %s392 = sadd.s32 %s391, %s389
        %s393 = smul.addr %s392, 8
        %s394 = scalar_lea.vmem %s3, %s393
        %s395 = smul.u32 32, %s19
        %s396 = smul.u32 16, %s21
        %p397 = scmp.lt.s32.totalorder %s396, 111
        %s398 = scalar_select %p397, %s396, 111
        %p399 = scmp.lt.s32.totalorder %s20, 0
        %s400 = scalar_select %p399, %s20, 0
        %s401 = sadd.s32 %s400, %s398
        %s402 = smul.addr %s401, 4
        %s403 = scalar_lea.vmem %s1, %s402
        %s404 = smul.u32 16, %s21
        %p405 = scmp.lt.s32.totalorder %s20, 0
        %s406 = scalar_select %p405, %s20, 0
        %s407 = scalar_lea.vmem %s2, %s406
        %s408 = smul.u32 32, %s19
        %p409 = scmp.lt.s32.totalorder %s408, 63
        %s410 = scalar_select %p409, %s408, 63
        %p411 = scmp.lt.s32.totalorder %s20, 0
        %s412 = scalar_select %p411, %s20, 0
        %s413 = sadd.s32 %s412, %s410
        %s414 = smul.addr %s413, 8
        %s415 = scalar_lea.vmem %s3, %s414
        %s416 = smul.u32 32, %s19
        %p418 = scmp.eq.s32.totalorder %s21, 0
        // Predicated region
        $region74: #{encoder_forward.45} parent=68 // pred_check
          %p419 = pneg %p418
        $region75: #{encoder_forward.45} parent=68 // pred_check_branch
          %421 = sbr.rel (%p419) target = $region77
        $region76: #{encoder_forward.45} parent=68 // pred_region
          %422 = vst [vmem:[#allocation2] sm:$0xff] 0.0
          %423 = vst [vmem:[#allocation2 + $0x8] sm:$0xff] 0.0
          %424 = vst [vmem:[#allocation2 + $0x10] sm:$0xff] 0.0
          %425 = vst [vmem:[#allocation2 + $0x18] sm:$0xff] 0.0
          %426 = vst [vmem:[#allocation2 + $0x20] sm:$0xff] 0.0
          %427 = vst [vmem:[#allocation2 + $0x28] sm:$0xff] 0.0
          %428 = vst [vmem:[#allocation2 + $0x30] sm:$0xff] 0.0
          %429 = vst [vmem:[#allocation2 + $0x38] sm:$0xff] 0.0
          %430 = vst [vmem:[#allocation2 + $0x40] sm:$0xff] 0.0
          %431 = vst [vmem:[#allocation2 + $0x48] sm:$0xff] 0.0
          %432 = vst [vmem:[#allocation2 + $0x50] sm:$0xff] 0.0
          %433 = vst [vmem:[#allocation2 + $0x58] sm:$0xff] 0.0
          %434 = vst [vmem:[#allocation2 + $0x60] sm:$0xff] 0.0
          %435 = vst [vmem:[#allocation2 + $0x68] sm:$0xff] 0.0
          %436 = vst [vmem:[#allocation2 + $0x70] sm:$0xff] 0.0
          %437 = vst [vmem:[#allocation2 + $0x78] sm:$0xff] 0.0
          %438 = vst [vmem:[#allocation2 + $0x80] sm:$0xff] 0.0
          %439 = vst [vmem:[#allocation2 + $0x88] sm:$0xff] 0.0
          %440 = vst [vmem:[#allocation2 + $0x90] sm:$0xff] 0.0
          %441 = vst [vmem:[#allocation2 + $0x98] sm:$0xff] 0.0
          %442 = vst [vmem:[#allocation2 + $0xa0] sm:$0xff] 0.0
          %443 = vst [vmem:[#allocation2 + $0xa8] sm:$0xff] 0.0
          %444 = vst [vmem:[#allocation2 + $0xb0] sm:$0xff] 0.0
          %445 = vst [vmem:[#allocation2 + $0xb8] sm:$0xff] 0.0
          %446 = vst [vmem:[#allocation2 + $0xc0] sm:$0xff] 0.0
          %447 = vst [vmem:[#allocation2 + $0xc8] sm:$0xff] 0.0
          %448 = vst [vmem:[#allocation2 + $0xd0] sm:$0xff] 0.0
          %449 = vst [vmem:[#allocation2 + $0xd8] sm:$0xff] 0.0
          %450 = vst [vmem:[#allocation2 + $0xe0] sm:$0xff] 0.0
          %451 = vst [vmem:[#allocation2 + $0xe8] sm:$0xff] 0.0
          %452 = vst [vmem:[#allocation2 + $0xf0] sm:$0xff] 0.0
          %453 = vst [vmem:[#allocation2 + $0xf8] sm:$0xff] 0.0
        $region77: #{encoder_forward.45} parent=68 // pred_fallthru
          _
        %v454 = vld [vmem:[#allocation2] sm:$0xff]
        %v455 = vld [vmem:[#allocation2 + $0x8] sm:$0xff]
        %v456 = vld [vmem:[#allocation2 + $0x10] sm:$0xff]
        %v457 = vld [vmem:[#allocation2 + $0x18] sm:$0xff]
        %v458 = vld [vmem:[#allocation2 + $0x20] sm:$0xff]
        %v459 = vld [vmem:[#allocation2 + $0x28] sm:$0xff]
        %v460 = vld [vmem:[#allocation2 + $0x30] sm:$0xff]
        %v461 = vld [vmem:[#allocation2 + $0x38] sm:$0xff]
        %v462 = vld [vmem:[#allocation2 + $0x40] sm:$0xff]
        %v463 = vld [vmem:[#allocation2 + $0x48] sm:$0xff]
        %v464 = vld [vmem:[#allocation2 + $0x50] sm:$0xff]
        %v465 = vld [vmem:[#allocation2 + $0x58] sm:$0xff]
        %v466 = vld [vmem:[#allocation2 + $0x60] sm:$0xff]
        %v467 = vld [vmem:[#allocation2 + $0x68] sm:$0xff]
        %v468 = vld [vmem:[#allocation2 + $0x70] sm:$0xff]
        %v469 = vld [vmem:[#allocation2 + $0x78] sm:$0xff]
        %v470 = vld [vmem:[#allocation2 + $0x80] sm:$0xff]
        %v471 = vld [vmem:[#allocation2 + $0x88] sm:$0xff]
        %v472 = vld [vmem:[#allocation2 + $0x90] sm:$0xff]
        %v473 = vld [vmem:[#allocation2 + $0x98] sm:$0xff]
        %v474 = vld [vmem:[#allocation2 + $0xa0] sm:$0xff]
        %v475 = vld [vmem:[#allocation2 + $0xa8] sm:$0xff]
        %v476 = vld [vmem:[#allocation2 + $0xb0] sm:$0xff]
        %v477 = vld [vmem:[#allocation2 + $0xb8] sm:$0xff]
        %v478 = vld [vmem:[#allocation2 + $0xc0] sm:$0xff]
        %v479 = vld [vmem:[#allocation2 + $0xc8] sm:$0xff]
        %v480 = vld [vmem:[#allocation2 + $0xd0] sm:$0xff]
        %v481 = vld [vmem:[#allocation2 + $0xd8] sm:$0xff]
        %v482 = vld [vmem:[#allocation2 + $0xe0] sm:$0xff]
        %v483 = vld [vmem:[#allocation2 + $0xe8] sm:$0xff]
        %v484 = vld [vmem:[#allocation2 + $0xf0] sm:$0xff]
        %v485 = vld [vmem:[#allocation2 + $0xf8] sm:$0xff]
        %v486 = vld [vmem:[%s360] sm:$0xf]
        %v487 = vld [vmem:[%s360 + $0x4] sm:$0xf]
        %v488 = vld [vmem:[%s360 + $0x8] sm:$0xf]
        %v489 = vld [vmem:[%s360 + $0xc] sm:$0xf]
        %v490 = vld [vmem:[%s360 + $0x10] sm:$0xf]
        %v491 = vld [vmem:[%s360 + $0x14] sm:$0xf]
        %v492 = vld [vmem:[%s360 + $0x18] sm:$0xf]
        %v493 = vld [vmem:[%s360 + $0x1c] sm:$0xf]
        %v494 = vld [vmem:[%s360 + $0x20] sm:$0xf]
        %v495 = vld [vmem:[%s360 + $0x24] sm:$0xf]
        %v496 = vld [vmem:[%s360 + $0x28] sm:$0xf]
        %v497 = vld [vmem:[%s360 + $0x2c] sm:$0xf]
        %v498 = vld [vmem:[%s360 + $0x30] sm:$0xf]
        %v499 = vld [vmem:[%s360 + $0x34] sm:$0xf]
        %v500 = vld [vmem:[%s360 + $0x38] sm:$0xf]
        %v501 = vld [vmem:[%s360 + $0x3c] sm:$0xf]
        %v502 = vld [vmem:[%s360 + $0x40] sm:$0xf]
        %v503 = vld [vmem:[%s360 + $0x44] sm:$0xf]
        %v504 = vld [vmem:[%s360 + $0x48] sm:$0xf]
        %v505 = vld [vmem:[%s360 + $0x4c] sm:$0xf]
        %v506 = vld [vmem:[%s360 + $0x50] sm:$0xf]
        %v507 = vld [vmem:[%s360 + $0x54] sm:$0xf]
        %v508 = vld [vmem:[%s360 + $0x58] sm:$0xf]
        %v509 = vld [vmem:[%s360 + $0x5c] sm:$0xf]
        %v510 = vld [vmem:[%s360 + $0x60] sm:$0xf]
        %v511 = vld [vmem:[%s360 + $0x64] sm:$0xf]
        %v512 = vld [vmem:[%s360 + $0x68] sm:$0xf]
        %v513 = vld [vmem:[%s360 + $0x6c] sm:$0xf]
        %v514 = vld [vmem:[%s360 + $0x70] sm:$0xf]
        %v515 = vld [vmem:[%s360 + $0x74] sm:$0xf]
        %v516 = vld [vmem:[%s360 + $0x78] sm:$0xf]
        %v517 = vld [vmem:[%s360 + $0x7c] sm:$0xf]
        %v518 = vld [vmem:[%s403] sm:$0xf]
        %v519 = vld [vmem:[%s403 + $0x4] sm:$0xf]
        %v520 = vld [vmem:[%s403 + $0x8] sm:$0xf]
        %v521 = vld [vmem:[%s403 + $0xc] sm:$0xf]
        %v522 = vld [vmem:[%s403 + $0x10] sm:$0xf]
        %v523 = vld [vmem:[%s403 + $0x14] sm:$0xf]
        %v524 = vld [vmem:[%s403 + $0x18] sm:$0xf]
        %v525 = vld [vmem:[%s403 + $0x1c] sm:$0xf]
        %v526 = vld [vmem:[%s403 + $0x20] sm:$0xf]
        %v527 = vld [vmem:[%s403 + $0x24] sm:$0xf]
        %v528 = vld [vmem:[%s403 + $0x28] sm:$0xf]
        %v529 = vld [vmem:[%s403 + $0x2c] sm:$0xf]
        %v530 = vld [vmem:[%s403 + $0x30] sm:$0xf]
        %v531 = vld [vmem:[%s403 + $0x34] sm:$0xf]
        %v532 = vld [vmem:[%s403 + $0x38] sm:$0xf]
        %v533 = vld [vmem:[%s403 + $0x3c] sm:$0xf]
        %v566 = vunpack.c.l.b16 %v486
        %v567 = vunpack.c.l.b16 %v487
        %v568 = vunpack.c.l.b16 %v488
        %v569 = vunpack.c.l.b16 %v489
        %v570 = vunpack.c.l.b16 %v490
        %v571 = vunpack.c.l.b16 %v491
        %v572 = vunpack.c.l.b16 %v492
        %v573 = vunpack.c.l.b16 %v493
        %v574 = vunpack.c.l.b16 %v494
        %v575 = vunpack.c.l.b16 %v495
        %v576 = vunpack.c.l.b16 %v496
        %v577 = vunpack.c.l.b16 %v497
        %v578 = vunpack.c.l.b16 %v498
        %v579 = vunpack.c.l.b16 %v499
        %v580 = vunpack.c.l.b16 %v500
        %v581 = vunpack.c.l.b16 %v501
        %v582 = vunpack.c.l.b16 %v502
        %v583 = vunpack.c.l.b16 %v503
        %v584 = vunpack.c.l.b16 %v504
        %v585 = vunpack.c.l.b16 %v505
        %v586 = vunpack.c.l.b16 %v506
        %v587 = vunpack.c.l.b16 %v507
        %v588 = vunpack.c.l.b16 %v508
        %v589 = vunpack.c.l.b16 %v509
        %v590 = vunpack.c.l.b16 %v510
        %v591 = vunpack.c.l.b16 %v511
        %v592 = vunpack.c.l.b16 %v512
        %v593 = vunpack.c.l.b16 %v513
        %v594 = vunpack.c.l.b16 %v514
        %v595 = vunpack.c.l.b16 %v515
        %v596 = vunpack.c.l.b16 %v516
        %v597 = vunpack.c.l.b16 %v517
        %v598 = vpack.c.b16 %v567, %v566
        %v599 = vpack.c.b16 %v569, %v568
        %v600 = vpack.c.b16 %v571, %v570
        %v601 = vpack.c.b16 %v573, %v572
        %v602 = vpack.c.b16 %v575, %v574
        %v603 = vpack.c.b16 %v577, %v576
        %v604 = vpack.c.b16 %v579, %v578
        %v605 = vpack.c.b16 %v581, %v580
        %v606 = vpack.c.b16 %v583, %v582
        %v607 = vpack.c.b16 %v585, %v584
        %v608 = vpack.c.b16 %v587, %v586
        %v609 = vpack.c.b16 %v589, %v588
        %v610 = vpack.c.b16 %v591, %v590
        %v611 = vpack.c.b16 %v593, %v592
        %v612 = vpack.c.b16 %v595, %v594
        %v613 = vpack.c.b16 %v597, %v596
        %v646 = vunpack.c.l.b16 %v518
        %v647 = vunpack.c.l.b16 %v519
        %v648 = vunpack.c.l.b16 %v520
        %v649 = vunpack.c.l.b16 %v521
        %v650 = vunpack.c.l.b16 %v522
        %v651 = vunpack.c.l.b16 %v523
        %v652 = vunpack.c.l.b16 %v524
        %v653 = vunpack.c.l.b16 %v525
        %v654 = vunpack.c.l.b16 %v526
        %v655 = vunpack.c.l.b16 %v527
        %v656 = vunpack.c.l.b16 %v528
        %v657 = vunpack.c.l.b16 %v529
        %v658 = vunpack.c.l.b16 %v530
        %v659 = vunpack.c.l.b16 %v531
        %v660 = vunpack.c.l.b16 %v532
        %v661 = vunpack.c.l.b16 %v533
        %v662 = vpack.c.b16 %v647, %v646
        %v663 = vpack.c.b16 %v649, %v648
        %v664 = vpack.c.b16 %v651, %v650
        %v665 = vpack.c.b16 %v653, %v652
        %v666 = vpack.c.b16 %v655, %v654
        %v667 = vpack.c.b16 %v657, %v656
        %v668 = vpack.c.b16 %v659, %v658
        %v669 = vpack.c.b16 %v661, %v660
        %678 = vmatprep.subr.bf16.mxu0 0
        %679 = vmatpush1.bf16.msra.mxu0 %v662
        %680 = vmatprep.subr.bf16.mxu0 0
        %681 = vmatpush1.bf16.msra.mxu0 %v663
        %682 = vmatprep.subr.bf16.mxu0 0
        %683 = vmatpush1.bf16.msra.mxu0 %v664
        %684 = vmatprep.subr.bf16.mxu0 0
        %685 = vmatpush1.bf16.msra.mxu0 %v665
        %686 = vmatprep.subr.bf16.mxu0 0
        %687 = vmatpush1.bf16.msra.mxu0 %v666
        %688 = vmatprep.subr.bf16.mxu0 0
        %689 = vmatpush1.bf16.msra.mxu0 %v667
        %690 = vmatprep.subr.bf16.mxu0 0
        %691 = vmatpush1.bf16.msra.mxu0 %v668
        %692 = vmatprep.subr.bf16.mxu0 0
        %693 = vmatpush1.bf16.msra.mxu0 %v669
        %694 = vmatprep.subr.bf16.mxu0 0
        %695 = vmatpush1.bf16.msra.mxu0 0
        %696 = vmatprep.subr.bf16.mxu0 0
        %697 = vmatpush1.bf16.msra.mxu0 0
        %698 = vmatprep.subr.bf16.mxu0 0
        %699 = vmatpush1.bf16.msra.mxu0 0
        %700 = vmatprep.subr.bf16.mxu0 0
        %701 = vmatpush1.bf16.msra.mxu0 0
        %702 = vmatprep.subr.bf16.mxu0 0
        %703 = vmatpush1.bf16.msra.mxu0 0
        %704 = vmatprep.subr.bf16.mxu0 0
        %705 = vmatpush1.bf16.msra.mxu0 0
        %706 = vmatprep.subr.bf16.mxu0 0
        %707 = vmatpush1.bf16.msra.mxu0 0
        %708 = vmatprep.subr.bf16.mxu0 0
        %709 = vmatpush1.bf16.msra.mxu0 0
        %710 = vmatprep.mubr.bf16.mxu0 0
        %711 = vmatmul.mubr.bf16.gmra.mrb[0].mxu0 %v598
        %v712 = vpop.f32.mrb[0].mxu0
        %v713 = vadd.f32 0.0, %v712
        %v714 = vpop.f32.mrb[0].mxu0
        %v715 = vpop.f32.mrb[0].mxu0
        %v716 = vadd.f32 0.0, %v715
        %v717 = vpop.f32.mrb[0].mxu0
        %718 = vmatprep.mubr.bf16.mxu0 0
        %719 = vmatmul.mubr.bf16.gmra.mrb[0].mxu0 %v599
        %v720 = vpop.f32.mrb[0].mxu0
        %v721 = vadd.f32 0.0, %v720
        %v722 = vpop.f32.mrb[0].mxu0
        %v723 = vpop.f32.mrb[0].mxu0
        %v724 = vadd.f32 0.0, %v723
        %v725 = vpop.f32.mrb[0].mxu0
        %726 = vmatprep.mubr.bf16.mxu0 0
        %727 = vmatmul.mubr.bf16.gmra.mrb[0].mxu0 %v600
        %v728 = vpop.f32.mrb[0].mxu0
        %v729 = vadd.f32 0.0, %v728
        %v730 = vpop.f32.mrb[0].mxu0
        %v731 = vpop.f32.mrb[0].mxu0
        %v732 = vadd.f32 0.0, %v731
        %v733 = vpop.f32.mrb[0].mxu0
        %734 = vmatprep.mubr.bf16.mxu0 0
        %735 = vmatmul.mubr.bf16.gmra.mrb[0].mxu0 %v601
        %v736 = vpop.f32.mrb[0].mxu0
        %v737 = vadd.f32 0.0, %v736
        %v738 = vpop.f32.mrb[0].mxu0
        %v739 = vpop.f32.mrb[0].mxu0
        %v740 = vadd.f32 0.0, %v739
        %v741 = vpop.f32.mrb[0].mxu0
        %742 = vmatprep.mubr.bf16.mxu0 0
        %743 = vmatmul.mubr.bf16.gmra.mrb[0].mxu0 %v602
        %v744 = vpop.f32.mrb[0].mxu0
        %v745 = vadd.f32 0.0, %v744
        %v746 = vpop.f32.mrb[0].mxu0
        %v747 = vpop.f32.mrb[0].mxu0
        %v748 = vadd.f32 0.0, %v747
        %v749 = vpop.f32.mrb[0].mxu0
        %750 = vmatprep.mubr.bf16.mxu0 0
        %751 = vmatmul.mubr.bf16.gmra.mrb[0].mxu0 %v603
        %v752 = vpop.f32.mrb[0].mxu0
        %v753 = vadd.f32 0.0, %v752
        %v754 = vpop.f32.mrb[0].mxu0
        %v755 = vpop.f32.mrb[0].mxu0
        %v756 = vadd.f32 0.0, %v755
        %v757 = vpop.f32.mrb[0].mxu0
        %758 = vmatprep.mubr.bf16.mxu0 0
        %759 = vmatmul.mubr.bf16.gmra.mrb[0].mxu0 %v604
        %v760 = vpop.f32.mrb[0].mxu0
        %v761 = vadd.f32 0.0, %v760
        %v762 = vpop.f32.mrb[0].mxu0
        %v763 = vpop.f32.mrb[0].mxu0
        %v764 = vadd.f32 0.0, %v763
        %v765 = vpop.f32.mrb[0].mxu0
        %766 = vmatprep.mubr.bf16.mxu0 0
        %767 = vmatmul.mubr.bf16.gmra.mrb[0].mxu0 %v605
        %v768 = vpop.f32.mrb[0].mxu0
        %v769 = vadd.f32 0.0, %v768
        %v770 = vpop.f32.mrb[0].mxu0
        %v771 = vpop.f32.mrb[0].mxu0
        %v772 = vadd.f32 0.0, %v771
        %v773 = vpop.f32.mrb[0].mxu0
        %774 = vmatprep.mubr.bf16.mxu0 0
        %775 = vmatmul.mubr.bf16.gmra.mrb[0].mxu0 %v606
        %v776 = vpop.f32.mrb[0].mxu0
        %v777 = vadd.f32 0.0, %v776
        %v778 = vpop.f32.mrb[0].mxu0
        %v779 = vpop.f32.mrb[0].mxu0
        %v780 = vadd.f32 0.0, %v779
        %v781 = vpop.f32.mrb[0].mxu0
        %782 = vmatprep.mubr.bf16.mxu0 0
        %783 = vmatmul.mubr.bf16.gmra.mrb[0].mxu0 %v607
        %v784 = vpop.f32.mrb[0].mxu0
        %v785 = vadd.f32 0.0, %v784
        %v786 = vpop.f32.mrb[0].mxu0
        %v787 = vpop.f32.mrb[0].mxu0
        %v788 = vadd.f32 0.0, %v787
        %v789 = vpop.f32.mrb[0].mxu0
        %790 = vmatprep.mubr.bf16.mxu0 0
        %791 = vmatmul.mubr.bf16.gmra.mrb[0].mxu0 %v608
        %v792 = vpop.f32.mrb[0].mxu0
        %v793 = vadd.f32 0.0, %v792
        %v794 = vpop.f32.mrb[0].mxu0
        %v795 = vpop.f32.mrb[0].mxu0
        %v796 = vadd.f32 0.0, %v795
        %v797 = vpop.f32.mrb[0].mxu0
        %798 = vmatprep.mubr.bf16.mxu0 0
        %799 = vmatmul.mubr.bf16.gmra.mrb[0].mxu0 %v609
        %v800 = vpop.f32.mrb[0].mxu0
        %v801 = vadd.f32 0.0, %v800
        %v802 = vpop.f32.mrb[0].mxu0
        %v803 = vpop.f32.mrb[0].mxu0
        %v804 = vadd.f32 0.0, %v803
        %v805 = vpop.f32.mrb[0].mxu0
        %806 = vmatprep.mubr.bf16.mxu0 0
        %807 = vmatmul.mubr.bf16.gmra.mrb[0].mxu0 %v610
        %v808 = vpop.f32.mrb[0].mxu0
        %v809 = vadd.f32 0.0, %v808
        %v810 = vpop.f32.mrb[0].mxu0
        %v811 = vpop.f32.mrb[0].mxu0
        %v812 = vadd.f32 0.0, %v811
        %v813 = vpop.f32.mrb[0].mxu0
        %814 = vmatprep.mubr.bf16.mxu0 0
        %815 = vmatmul.mubr.bf16.gmra.mrb[0].mxu0 %v611
        %v816 = vpop.f32.mrb[0].mxu0
        %v817 = vadd.f32 0.0, %v816
        %v818 = vpop.f32.mrb[0].mxu0
        %v819 = vpop.f32.mrb[0].mxu0
        %v820 = vadd.f32 0.0, %v819
        %v821 = vpop.f32.mrb[0].mxu0
        %822 = vmatprep.mubr.bf16.mxu0 0
        %823 = vmatmul.mubr.bf16.gmra.mrb[0].mxu0 %v612
        %v824 = vpop.f32.mrb[0].mxu0
        %v825 = vadd.f32 0.0, %v824
        %v826 = vpop.f32.mrb[0].mxu0
        %v827 = vpop.f32.mrb[0].mxu0
        %v828 = vadd.f32 0.0, %v827
        %v829 = vpop.f32.mrb[0].mxu0
        %830 = vmatprep.mubr.bf16.mxu0 0
        %831 = vmatmul.mubr.bf16.gmra.mrb[0].mxu0 %v613
        %v832 = vpop.f32.mrb[0].mxu0
        %v833 = vadd.f32 0.0, %v832
        %v834 = vpop.f32.mrb[0].mxu0
        %v835 = vpop.f32.mrb[0].mxu0
        %v836 = vadd.f32 0.0, %v835
        %v837 = vpop.f32.mrb[0].mxu0
        %838 = vdwg.mxu0
        %v839 = vadd.f32 %v454, %v713
        %v840 = vadd.f32 %v455, %v716
        %v841 = vadd.f32 %v456, %v721
        %v842 = vadd.f32 %v457, %v724
        %v843 = vadd.f32 %v458, %v729
        %v844 = vadd.f32 %v459, %v732
        %v845 = vadd.f32 %v460, %v737
        %v846 = vadd.f32 %v461, %v740
        %v847 = vadd.f32 %v462, %v745
        %v848 = vadd.f32 %v463, %v748
        %v849 = vadd.f32 %v464, %v753
        %v850 = vadd.f32 %v465, %v756
        %v851 = vadd.f32 %v466, %v761
        %v852 = vadd.f32 %v467, %v764
        %v853 = vadd.f32 %v468, %v769
        %v854 = vadd.f32 %v469, %v772
        %v855 = vadd.f32 %v470, %v777
        %v856 = vadd.f32 %v471, %v780
        %v857 = vadd.f32 %v472, %v785
        %v858 = vadd.f32 %v473, %v788
        %v859 = vadd.f32 %v474, %v793
        %v860 = vadd.f32 %v475, %v796
        %v861 = vadd.f32 %v476, %v801
        %v862 = vadd.f32 %v477, %v804
        %v863 = vadd.f32 %v478, %v809
        %v864 = vadd.f32 %v479, %v812
        %v865 = vadd.f32 %v480, %v817
        %v866 = vadd.f32 %v481, %v820
        %v867 = vadd.f32 %v482, %v825
        %v868 = vadd.f32 %v483, %v828
        %v869 = vadd.f32 %v484, %v833
        %v870 = vadd.f32 %v485, %v836
        %871 = vst [vmem:[#allocation2] sm:$0xff] %v839
        %872 = vst [vmem:[#allocation2 + $0x8] sm:$0xff] %v840
        %873 = vst [vmem:[#allocation2 + $0x10] sm:$0xff] %v841
        %874 = vst [vmem:[#allocation2 + $0x18] sm:$0xff] %v842
        %875 = vst [vmem:[#allocation2 + $0x20] sm:$0xff] %v843
        %876 = vst [vmem:[#allocation2 + $0x28] sm:$0xff] %v844
        %877 = vst [vmem:[#allocation2 + $0x30] sm:$0xff] %v845
        %878 = vst [vmem:[#allocation2 + $0x38] sm:$0xff] %v846
        %879 = vst [vmem:[#allocation2 + $0x40] sm:$0xff] %v847
        %880 = vst [vmem:[#allocation2 + $0x48] sm:$0xff] %v848
        %881 = vst [vmem:[#allocation2 + $0x50] sm:$0xff] %v849
        %882 = vst [vmem:[#allocation2 + $0x58] sm:$0xff] %v850
        %883 = vst [vmem:[#allocation2 + $0x60] sm:$0xff] %v851
        %884 = vst [vmem:[#allocation2 + $0x68] sm:$0xff] %v852
        %885 = vst [vmem:[#allocation2 + $0x70] sm:$0xff] %v853
        %886 = vst [vmem:[#allocation2 + $0x78] sm:$0xff] %v854
        %887 = vst [vmem:[#allocation2 + $0x80] sm:$0xff] %v855
        %888 = vst [vmem:[#allocation2 + $0x88] sm:$0xff] %v856
        %889 = vst [vmem:[#allocation2 + $0x90] sm:$0xff] %v857
        %890 = vst [vmem:[#allocation2 + $0x98] sm:$0xff] %v858
        %891 = vst [vmem:[#allocation2 + $0xa0] sm:$0xff] %v859
        %892 = vst [vmem:[#allocation2 + $0xa8] sm:$0xff] %v860
        %893 = vst [vmem:[#allocation2 + $0xb0] sm:$0xff] %v861
        %894 = vst [vmem:[#allocation2 + $0xb8] sm:$0xff] %v862
        %895 = vst [vmem:[#allocation2 + $0xc0] sm:$0xff] %v863
        %896 = vst [vmem:[#allocation2 + $0xc8] sm:$0xff] %v864
        %897 = vst [vmem:[#allocation2 + $0xd0] sm:$0xff] %v865
        %898 = vst [vmem:[#allocation2 + $0xd8] sm:$0xff] %v866
        %899 = vst [vmem:[#allocation2 + $0xe0] sm:$0xff] %v867
        %900 = vst [vmem:[#allocation2 + $0xe8] sm:$0xff] %v868
        %901 = vst [vmem:[#allocation2 + $0xf0] sm:$0xff] %v869
        %902 = vst [vmem:[#allocation2 + $0xf8] sm:$0xff] %v870
        %p903 = scmp.eq.s32.totalorder %s21, 6
        // Predicated region
        $region78: #{encoder_forward.45} parent=68 // pred_check
          %p904 = pneg %p903
        $region79: #{encoder_forward.45} parent=68 // pred_check_branch
          %906 = sbr.rel (%p904) target = $region81
        $region80: #{encoder_forward.45} parent=68 // pred_region
          %v907 = vld [vmem:[#allocation2] sm:$0xff]
          %v908 = vld [vmem:[#allocation2 + $0x8] sm:$0xff]
          %v909 = vld [vmem:[#allocation2 + $0x10] sm:$0xff]
          %v910 = vld [vmem:[#allocation2 + $0x18] sm:$0xff]
          %v911 = vld [vmem:[#allocation2 + $0x20] sm:$0xff]
          %v912 = vld [vmem:[#allocation2 + $0x28] sm:$0xff]
          %v913 = vld [vmem:[#allocation2 + $0x30] sm:$0xff]
          %v914 = vld [vmem:[#allocation2 + $0x38] sm:$0xff]
          %v915 = vld [vmem:[#allocation2 + $0x40] sm:$0xff]
          %v916 = vld [vmem:[#allocation2 + $0x48] sm:$0xff]
          %v917 = vld [vmem:[#allocation2 + $0x50] sm:$0xff]
          %v918 = vld [vmem:[#allocation2 + $0x58] sm:$0xff]
          %v919 = vld [vmem:[#allocation2 + $0x60] sm:$0xff]
          %v920 = vld [vmem:[#allocation2 + $0x68] sm:$0xff]
          %v921 = vld [vmem:[#allocation2 + $0x70] sm:$0xff]
          %v922 = vld [vmem:[#allocation2 + $0x78] sm:$0xff]
          %v923 = vld [vmem:[#allocation2 + $0x80] sm:$0xff]
          %v924 = vld [vmem:[#allocation2 + $0x88] sm:$0xff]
          %v925 = vld [vmem:[#allocation2 + $0x90] sm:$0xff]
          %v926 = vld [vmem:[#allocation2 + $0x98] sm:$0xff]
          %v927 = vld [vmem:[#allocation2 + $0xa0] sm:$0xff]
          %v928 = vld [vmem:[#allocation2 + $0xa8] sm:$0xff]
          %v929 = vld [vmem:[#allocation2 + $0xb0] sm:$0xff]
          %v930 = vld [vmem:[#allocation2 + $0xb8] sm:$0xff]
          %v931 = vld [vmem:[#allocation2 + $0xc0] sm:$0xff]
          %v932 = vld [vmem:[#allocation2 + $0xc8] sm:$0xff]
          %v933 = vld [vmem:[#allocation2 + $0xd0] sm:$0xff]
          %v934 = vld [vmem:[#allocation2 + $0xd8] sm:$0xff]
          %v935 = vld [vmem:[#allocation2 + $0xe0] sm:$0xff]
          %v936 = vld [vmem:[#allocation2 + $0xe8] sm:$0xff]
          %v937 = vld [vmem:[#allocation2 + $0xf0] sm:$0xff]
          %v938 = vld [vmem:[#allocation2 + $0xf8] sm:$0xff]
          %v939 = vld [vmem:[%s407] sm:$0x1]
          %v941 = vlaneseq
          %v942 = vshrl.u32 %v941, 7
          %v943 = vsub.s32 0, %v942
          %v944 = vrot.slane %v939, %v943
          %v946 = vadd.f32 %v907, %v944
          %v947 = vadd.f32 %v908, %v944
          %v948 = vadd.f32 %v909, %v944
          %v949 = vadd.f32 %v910, %v944
          %v950 = vadd.f32 %v911, %v944
          %v951 = vadd.f32 %v912, %v944
          %v952 = vadd.f32 %v913, %v944
          %v953 = vadd.f32 %v914, %v944
          %v954 = vadd.f32 %v915, %v944
          %v955 = vadd.f32 %v916, %v944
          %v956 = vadd.f32 %v917, %v944
          %v957 = vadd.f32 %v918, %v944
          %v958 = vadd.f32 %v919, %v944
          %v959 = vadd.f32 %v920, %v944
          %v960 = vadd.f32 %v921, %v944
          %v961 = vadd.f32 %v922, %v944
          %v962 = vadd.f32 %v923, %v944
          %v963 = vadd.f32 %v924, %v944
          %v964 = vadd.f32 %v925, %v944
          %v965 = vadd.f32 %v926, %v944
          %v966 = vadd.f32 %v927, %v944
          %v967 = vadd.f32 %v928, %v944
          %v968 = vadd.f32 %v929, %v944
          %v969 = vadd.f32 %v930, %v944
          %v970 = vadd.f32 %v931, %v944
          %v971 = vadd.f32 %v932, %v944
          %v972 = vadd.f32 %v933, %v944
          %v973 = vadd.f32 %v934, %v944
          %v974 = vadd.f32 %v935, %v944
          %v975 = vadd.f32 %v936, %v944
          %v976 = vadd.f32 %v937, %v944
          %v977 = vadd.f32 %v938, %v944
          %v978 = vtanh.pop %v946
          %v979 = vtanh.pop %v947
          %v980 = vtanh.pop %v948
          %v981 = vtanh.pop %v949
          %v982 = vtanh.pop %v950
          %v983 = vtanh.pop %v951
          %v984 = vtanh.pop %v952
          %v985 = vtanh.pop %v953
          %v986 = vtanh.pop %v954
          %v987 = vtanh.pop %v955
          %v988 = vtanh.pop %v956
          %v989 = vtanh.pop %v957
          %v990 = vtanh.pop %v958
          %v991 = vtanh.pop %v959
          %v992 = vtanh.pop %v960
          %v993 = vtanh.pop %v961
          %v994 = vtanh.pop %v962
          %v995 = vtanh.pop %v963
          %v996 = vtanh.pop %v964
          %v997 = vtanh.pop %v965
          %v998 = vtanh.pop %v966
          %v999 = vtanh.pop %v967
          %v1000 = vtanh.pop %v968
          %v1001 = vtanh.pop %v969
          %v1002 = vtanh.pop %v970
          %v1003 = vtanh.pop %v971
          %v1004 = vtanh.pop %v972
          %v1005 = vtanh.pop %v973
          %v1006 = vtanh.pop %v974
          %v1007 = vtanh.pop %v975
          %v1008 = vtanh.pop %v976
          %v1009 = vtanh.pop %v977
          %1010 = vst [vmem:[%s415] sm:$0xff] %v978
          %1011 = vst [vmem:[%s415 + $0x8] sm:$0xff] %v979
          %1012 = vst [vmem:[%s415 + $0x10] sm:$0xff] %v980
          %1013 = vst [vmem:[%s415 + $0x18] sm:$0xff] %v981
          %1014 = vst [vmem:[%s415 + $0x20] sm:$0xff] %v982
          %1015 = vst [vmem:[%s415 + $0x28] sm:$0xff] %v983
          %1016 = vst [vmem:[%s415 + $0x30] sm:$0xff] %v984
          %1017 = vst [vmem:[%s415 + $0x38] sm:$0xff] %v985
          %1018 = vst [vmem:[%s415 + $0x40] sm:$0xff] %v986
          %1019 = vst [vmem:[%s415 + $0x48] sm:$0xff] %v987
          %1020 = vst [vmem:[%s415 + $0x50] sm:$0xff] %v988
          %1021 = vst [vmem:[%s415 + $0x58] sm:$0xff] %v989
          %1022 = vst [vmem:[%s415 + $0x60] sm:$0xff] %v990
          %1023 = vst [vmem:[%s415 + $0x68] sm:$0xff] %v991
          %1024 = vst [vmem:[%s415 + $0x70] sm:$0xff] %v992
          %1025 = vst [vmem:[%s415 + $0x78] sm:$0xff] %v993
          %1026 = vst [vmem:[%s415 + $0x80] sm:$0xff] %v994
          %1027 = vst [vmem:[%s415 + $0x88] sm:$0xff] %v995
          %1028 = vst [vmem:[%s415 + $0x90] sm:$0xff] %v996
          %1029 = vst [vmem:[%s415 + $0x98] sm:$0xff] %v997
          %1030 = vst [vmem:[%s415 + $0xa0] sm:$0xff] %v998
          %1031 = vst [vmem:[%s415 + $0xa8] sm:$0xff] %v999
          %1032 = vst [vmem:[%s415 + $0xb0] sm:$0xff] %v1000
          %1033 = vst [vmem:[%s415 + $0xb8] sm:$0xff] %v1001
          %1034 = vst [vmem:[%s415 + $0xc0] sm:$0xff] %v1002
          %1035 = vst [vmem:[%s415 + $0xc8] sm:$0xff] %v1003
          %1036 = vst [vmem:[%s415 + $0xd0] sm:$0xff] %v1004
          %1037 = vst [vmem:[%s415 + $0xd8] sm:$0xff] %v1005
          %1038 = vst [vmem:[%s415 + $0xe0] sm:$0xff] %v1006
          %1039 = vst [vmem:[%s415 + $0xe8] sm:$0xff] %v1007
          %1040 = vst [vmem:[%s415 + $0xf0] sm:$0xff] %v1008
          %1041 = vst [vmem:[%s415 + $0xf8] sm:$0xff] %v1009
        $region81: #{encoder_forward.45} parent=68 // pred_fallthru
          _
        %s1042 = smul.u32 32, %s19
        %p1043 = scmp.lt.s32.totalorder %s1042, 63
        %s1044 = scalar_select %p1043, %s1042, 63
        %p1045 = scmp.lt.s32.totalorder %s20, 0
        %s1046 = scalar_select %p1045, %s20, 0
        %s1047 = sadd.s32 %s1046, %s1044
        %s1048 = smul.addr %s1047, 8
        %s1049 = scalar_lea.vmem %s3, %s1048
        // Predicated region
        $region82: #{encoder_forward.45} parent=68 // pred_check
          %p1050 = pneg %p135
        $region83: #{encoder_forward.45} parent=68 // pred_check_branch
          %1052 = sbr.rel (%p1050) target = $region85
        $region84: #{encoder_forward.45} parent=68 // pred_region
          %s1053 = smul.u32 32, %s19
        $region85: #{encoder_forward.45} parent=68 // pred_fallthru
          _
      $region69: #{encoder_forward.45} parent=5 // pred_fallthru
        _
      %p1054 = scmp.le.s32.totalorder 2, %s9
      // Predicated region
      $region86: #{encoder_forward.45} parent=5 // pred_check
        %p1055 = pneg %p1054
      $region87: #{encoder_forward.45} parent=5 // pred_check_branch
        %1057 = sbr.rel (%p1055) target = $region89
      $region88: #{encoder_forward.45} parent=5 // pred_region
        %s1058 = ssub.s32 %s9, 2
        // Predicated region
        $region90: #{encoder_forward.45} parent=88 // pred_check
          %p1059 = pneg %p141
        $region91: #{encoder_forward.45} parent=88 // pred_check_branch
          %1061 = sbr.rel (%p1059) target = $region93
        $region92: #{encoder_forward.45} parent=88 // pred_region
          %s1062 = smul.u32 32, %s22
          %p1063 = scmp.lt.s32.totalorder %s1062, 63
          %s1064 = scalar_select %p1063, %s1062, 63
          %p1065 = scmp.lt.s32.totalorder %s23, 0
          %s1066 = scalar_select %p1065, %s23, 0
          %s1067 = sadd.s32 %s1066, %s1064
          %s1068 = smul.addr %s1067, 8
          %s1069 = scalar_lea.vmem %s3, %s1068
        $region93: #{encoder_forward.45} parent=88 // pred_fallthru
          _
      $region89: #{encoder_forward.45} parent=5 // pred_fallthru
        _
    $region6: #{encoder_forward.45} parent=1 // loop_footer
      %s13 = sadd.s32 1, %s9
    $region7: #{encoder_forward.45} parent=1 // loop_footer_branch
      %8 = sbr.rel target = $region3
    $region8: #{encoder_forward.45} parent=1 // loop_exit
      _

// kernel: encoder_forward.46
$region0: #{encoder_forward.46}
  #allocation0 [shape = 'u32[]', space=smem, size = 0x4, offset = 0x4, fixed_abs, tag = 'smem constant byte address 0x4 - core index']
  #allocation1 [shape = 'u32[144,128]{1,0:T(1,128)}', space=vmem, size = 0x12000, scoped, tag = 'internal scratch']
  #allocation2 [shape = 'f32[128,128]{1,0:T(8,128)}', space=vmem, size = 0x10000, scoped, tag = 'scratch operand']
  %s0 = inlined_call_operand.vmem [shape: f32[2,128,256], index: 0, kind: input, shape index: {}]
  %s1 = inlined_call_operand.vmem [shape: f32[2,256,128], index: 1, kind: input, shape index: {}]
  %s2 = inlined_call_operand.vmem [shape: f32[2,128,128], index: 2, kind: output, shape index: {}]
  %s3 = sld [smem:[#allocation0]]
  $region49: #{encoder_forward.46} parent=0
    _
  %s5 = ssub.s32 1, %s3
  %s6 = scalar_select 0, %s5, %s3
  loop: start=0, step=1, limit=4
  $region2: #{encoder_forward.46} parent=0 // loop_pre_header
    _
  $region3: #{encoder_forward.46} parent=0 // loop_header
    %s8 = sphi 0, %s12
    %p9 = scmp.ge.s32.totalorder %s8, 4
    %s15 = sphi 0, %s27
    %s16 = sphi 0, %s23
    %s17 = sphi 0, %s15
    %s18 = sphi 0, %s16
    %s19 = sphi 0, %s17
    %s20 = sphi 0, %s18
    %s32 = sphi 0, %s34
    %s35 = sphi 0, %s32
    %s36 = sphi 0, %s35
    %s52 = sphi 0, %s36
    %s60 = sphi 0, %s62
    %s63 = sphi 0, %s60
    %s64 = sphi 0, %s63
    %s80 = sphi 0, %s64
    %s86 = sphi 0, %s88
    %s89 = sphi 0, %s86
    %s90 = sphi 0, %s89
    %s106 = sphi 0, %s90
  $region4: #{encoder_forward.46} parent=0 // loop_header_branch
    %11 = sbr.rel (%p9) target = $region8
  $region5: #{encoder_forward.46} parent=0 // loop_body
    %s13 = ssub.s32 %s8, 1
    %s14 = ssub.s32 %s8, 2
    %s21 = sadd.s32 1, %s16
    %p22 = scmp.ge.s32.totalorder %s21, 1
    %s23 = scalar_select %p22, 0, %s21
    %s24 = sadd.s32 1, %s15
    %s25 = scalar_select %p22, %s24, %s15
    %p26 = scmp.ge.s32.totalorder %s25, 2
    %s27 = scalar_select %p26, 0, %s25
    %s28 = ssub.s32 %s15, %s27
    %s29 = ssub.s32 %s16, %s23
    %s30 = sor.u32 %s28, %s29
    %p31 = scmp.eq.s32.totalorder %s30, 0
    %s33 = sadd.s32 %s32, 1
    %s34 = scalar_select %p31, %s32, %s33
    %p37 = pneg %p31
    %p38 = scmp.eq.s32.totalorder %s8, 1
    %p39 = por %p37, %p38
    %p40 = scmp.ne.s32.totalorder %s32, %s35
    %p41 = scmp.eq.s32.totalorder %s8, 0
    %p42 = por %p40, %p41
    %p43 = scmp.ne.s32.totalorder %s32, %s35
    %p44 = scmp.eq.s32.totalorder %s13, 1
    %p45 = por %p43, %p44
    %p46 = scmp.ne.s32.totalorder %s35, %s36
    %p47 = scmp.eq.s32.totalorder %s13, 0
    %p48 = por %p46, %p47
    %p49 = scmp.ne.s32.totalorder %s35, %s36
    %p50 = scmp.eq.s32.totalorder %s14, 1
    %p51 = por %p49, %p50
    %p53 = scmp.ne.s32.totalorder %s36, %s52
    %p54 = scmp.eq.s32.totalorder %s14, 0
    %p55 = por %p53, %p54
    %s56 = ssub.s32 %s15, %s27
    %s57 = ssub.s32 %s16, %s23
    %s58 = sor.u32 %s56, %s57
    %p59 = scmp.eq.s32.totalorder %s58, 0
    %s61 = sadd.s32 %s60, 1
    %s62 = scalar_select %p59, %s60, %s61
    %p65 = pneg %p59
    %p66 = scmp.eq.s32.totalorder %s8, 1
    %p67 = por %p65, %p66
    %p68 = scmp.ne.s32.totalorder %s60, %s63
    %p69 = scmp.eq.s32.totalorder %s8, 0
    %p70 = por %p68, %p69
    %p71 = scmp.ne.s32.totalorder %s60, %s63
    %p72 = scmp.eq.s32.totalorder %s13, 1
    %p73 = por %p71, %p72
    %p74 = scmp.ne.s32.totalorder %s63, %s64
    %p75 = scmp.eq.s32.totalorder %s13, 0
    %p76 = por %p74, %p75
    %p77 = scmp.ne.s32.totalorder %s63, %s64
    %p78 = scmp.eq.s32.totalorder %s14, 1
    %p79 = por %p77, %p78
    %p81 = scmp.ne.s32.totalorder %s64, %s80
    %p82 = scmp.eq.s32.totalorder %s14, 0
    %p83 = por %p81, %p82
    %s84 = ssub.s32 %s15, %s27
    %p85 = scmp.eq.s32.totalorder %s84, 0
    %s87 = sadd.s32 %s86, 1
    %s88 = scalar_select %p85, %s86, %s87
    %p91 = pneg %p85
    %p92 = scmp.eq.s32.totalorder %s8, 1
    %p93 = por %p91, %p92
    %p94 = scmp.ne.s32.totalorder %s86, %s89
    %p95 = scmp.eq.s32.totalorder %s8, 0
    %p96 = por %p94, %p95
    %p97 = scmp.ne.s32.totalorder %s86, %s89
    %p98 = scmp.eq.s32.totalorder %s13, 1
    %p99 = por %p97, %p98
    %p100 = scmp.ne.s32.totalorder %s89, %s90
    %p101 = scmp.eq.s32.totalorder %s13, 0
    %p102 = por %p100, %p101
    %p103 = scmp.ne.s32.totalorder %s89, %s90
    %p104 = scmp.eq.s32.totalorder %s14, 1
    %p105 = por %p103, %p104
    %p107 = scmp.ne.s32.totalorder %s90, %s106
    %p108 = scmp.eq.s32.totalorder %s14, 0
    %p109 = por %p107, %p108
    %p110 = scmp.le.s32.totalorder 1, %s8
    %p111 = scmp.lt.s32.totalorder %s8, 3
    %p112 = pnand %p110, %p111
    %p113 = pneg %p112
    // Predicated region
    $region9: #{encoder_forward.46} parent=5 // pred_check
      _
    $region10: #{encoder_forward.46} parent=5 // pred_check_branch
      %115 = sbr.rel (%p112) target = $region12
    $region11: #{encoder_forward.46} parent=5 // pred_region
      %s116 = ssub.s32 %s8, 1
    $region12: #{encoder_forward.46} parent=5 // pred_fallthru
      _
    %p117 = scmp.lt.s32.totalorder %s8, 2
    // Predicated region
    $region13: #{encoder_forward.46} parent=5 // pred_check
      %p118 = pneg %p117
    $region14: #{encoder_forward.46} parent=5 // pred_check_branch
      %120 = sbr.rel (%p118) target = $region16
    $region15: #{encoder_forward.46} parent=5 // pred_region
      // Predicated region
      $region17: #{encoder_forward.46} parent=15 // pred_check
        %p121 = pneg %p42
      $region18: #{encoder_forward.46} parent=15 // pred_check_branch
        %123 = sbr.rel (%p121) target = $region20
      $region19: #{encoder_forward.46} parent=15 // pred_region
        %s124 = smul.u32 2, %s16
        %p125 = scmp.lt.s32.totalorder %s15, 1
        %s126 = scalar_select %p125, %s15, 1
        %p127 = scmp.lt.s32.totalorder %s124, 1
        %s128 = scalar_select %p127, %s124, 1
        %s129 = smul.addr %s126, 32
        %s130 = sadd.s32 %s128, %s129
        %s131 = smul.addr %s130, 8
        %s132 = scalar_lea.vmem %s0, %s131
        %s133 = smul.u32 2, %s16
      $region20: #{encoder_forward.46} parent=15 // pred_fallthru
        _
      // Predicated region
      $region21: #{encoder_forward.46} parent=15 // pred_check
        %p134 = pneg %p70
      $region22: #{encoder_forward.46} parent=15 // pred_check_branch
        %136 = sbr.rel (%p134) target = $region24
      $region23: #{encoder_forward.46} parent=15 // pred_region
        %s137 = smul.u32 32, %s16
        %p138 = scmp.lt.s32.totalorder %s15, 1
        %s139 = scalar_select %p138, %s15, 1
        %p140 = scmp.lt.s32.totalorder %s137, 31
        %s141 = scalar_select %p140, %s137, 31
        %s142 = smul.addr %s139, 32
        %s143 = sadd.s32 %s141, %s142
        %s144 = smul.addr %s143, 8
        %s145 = scalar_lea.vmem %s1, %s144
        %s146 = smul.u32 32, %s16
      $region24: #{encoder_forward.46} parent=15 // pred_fallthru
        _
    $region16: #{encoder_forward.46} parent=5 // pred_fallthru
      _
    %p147 = scmp.le.s32.totalorder 1, %s8
    %p148 = scmp.lt.s32.totalorder %s8, 3
    %p149 = pnand %p147, %p148
    %p150 = pneg %p149
    // Predicated region
    $region25: #{encoder_forward.46} parent=5 // pred_check
      _
    $region26: #{encoder_forward.46} parent=5 // pred_check_branch
      %152 = sbr.rel (%p149) target = $region28
    $region27: #{encoder_forward.46} parent=5 // pred_region
      %s153 = ssub.s32 %s8, 1
      %s154 = smul.u32 2, %s18
      %p155 = scmp.lt.s32.totalorder %s17, 1
      %s156 = scalar_select %p155, %s17, 1
      %p157 = scmp.lt.s32.totalorder %s154, 1
      %s158 = scalar_select %p157, %s154, 1
      %s159 = smul.addr %s156, 32
      %s160 = sadd.s32 %s158, %s159
      %s161 = smul.addr %s160, 8
      %s162 = scalar_lea.vmem %s0, %s161
      %p163 = pneg %p48
      %p164 = pneg %p45
      %s165 = smul.u32 32, %s18
      %p166 = scmp.lt.s32.totalorder %s17, 1
      %s167 = scalar_select %p166, %s17, 1
      %p168 = scmp.lt.s32.totalorder %s165, 31
      %s169 = scalar_select %p168, %s165, 31
      %s170 = smul.addr %s167, 32
      %s171 = sadd.s32 %s169, %s170
      %s172 = smul.addr %s171, 8
      %s173 = scalar_lea.vmem %s1, %s172
      %p174 = pneg %p76
      %p175 = pneg %p73
      %p176 = pneg %p102
      %p177 = pneg %p99
      %p178 = scmp.lt.s32.totalorder %s17, 1
      %s179 = scalar_select %p178, %s17, 1
      %s180 = smul.addr %s179, 16
      %s181 = smul.addr %s180, 8
      %s182 = scalar_lea.vmem %s2, %s181
      %s183 = smul.u32 2, %s18
      %p184 = scmp.lt.s32.totalorder %s17, 1
      %s185 = scalar_select %p184, %s17, 1
      %p186 = scmp.lt.s32.totalorder %s183, 1
      %s187 = scalar_select %p186, %s183, 1
      %s188 = smul.addr %s185, 32
      %s189 = sadd.s32 %s187, %s188
      %s190 = smul.addr %s189, 8
      %s191 = scalar_lea.vmem %s0, %s190
      %s192 = smul.u32 2, %s18
      %s193 = smul.u32 32, %s18
      %p194 = scmp.lt.s32.totalorder %s17, 1
      %s195 = scalar_select %p194, %s17, 1
      %p196 = scmp.lt.s32.totalorder %s193, 31
      %s197 = scalar_select %p196, %s193, 31
      %s198 = smul.addr %s195, 32
      %s199 = sadd.s32 %s197, %s198
      %s200 = smul.addr %s199, 8
      %s201 = scalar_lea.vmem %s1, %s200
      %s202 = smul.u32 32, %s18
      %p203 = scmp.lt.s32.totalorder %s17, 1
      %s204 = scalar_select %p203, %s17, 1
      %s205 = smul.addr %s204, 16
      %s206 = smul.addr %s205, 8
      %s207 = scalar_lea.vmem %s2, %s206
      %p208 = scmp.eq.s32.totalorder %s18, 0
      // Predicated region
      $region29: #{encoder_forward.46} parent=27 // pred_check
        %p209 = pneg %p208
      $region30: #{encoder_forward.46} parent=27 // pred_check_branch
        %211 = sbr.rel (%p209) target = $region32
      $region31: #{encoder_forward.46} parent=27 // pred_region
        %212 = vst [vmem:[#allocation2] sm:$0xff] 0.0
        %213 = vst [vmem:[#allocation2 + $0x8] sm:$0xff] 0.0
        %214 = vst [vmem:[#allocation2 + $0x10] sm:$0xff] 0.0
        %215 = vst [vmem:[#allocation2 + $0x18] sm:$0xff] 0.0
        %216 = vst [vmem:[#allocation2 + $0x20] sm:$0xff] 0.0
        %217 = vst [vmem:[#allocation2 + $0x28] sm:$0xff] 0.0
        %218 = vst [vmem:[#allocation2 + $0x30] sm:$0xff] 0.0
        %219 = vst [vmem:[#allocation2 + $0x38] sm:$0xff] 0.0
        %220 = vst [vmem:[#allocation2 + $0x40] sm:$0xff] 0.0
        %221 = vst [vmem:[#allocation2 + $0x48] sm:$0xff] 0.0
        %222 = vst [vmem:[#allocation2 + $0x50] sm:$0xff] 0.0
        %223 = vst [vmem:[#allocation2 + $0x58] sm:$0xff] 0.0
        %224 = vst [vmem:[#allocation2 + $0x60] sm:$0xff] 0.0
        %225 = vst [vmem:[#allocation2 + $0x68] sm:$0xff] 0.0
        %226 = vst [vmem:[#allocation2 + $0x70] sm:$0xff] 0.0
        %227 = vst [vmem:[#allocation2 + $0x78] sm:$0xff] 0.0
      $region32: #{encoder_forward.46} parent=27 // pred_fallthru
        _
      %v228 = vld [vmem:[#allocation2] sm:$0xff]
      %v229 = vld [vmem:[#allocation2 + $0x8] sm:$0xff]
      %v230 = vld [vmem:[#allocation2 + $0x10] sm:$0xff]
      %v231 = vld [vmem:[#allocation2 + $0x18] sm:$0xff]
      %v232 = vld [vmem:[#allocation2 + $0x20] sm:$0xff]
      %v233 = vld [vmem:[#allocation2 + $0x28] sm:$0xff]
      %v234 = vld [vmem:[#allocation2 + $0x30] sm:$0xff]
      %v235 = vld [vmem:[#allocation2 + $0x38] sm:$0xff]
      %v236 = vld [vmem:[#allocation2 + $0x40] sm:$0xff]
      %v237 = vld [vmem:[#allocation2 + $0x48] sm:$0xff]
      %v238 = vld [vmem:[#allocation2 + $0x50] sm:$0xff]
      %v239 = vld [vmem:[#allocation2 + $0x58] sm:$0xff]
      %v240 = vld [vmem:[#allocation2 + $0x60] sm:$0xff]
      %v241 = vld [vmem:[#allocation2 + $0x68] sm:$0xff]
      %v242 = vld [vmem:[#allocation2 + $0x70] sm:$0xff]
      %v243 = vld [vmem:[#allocation2 + $0x78] sm:$0xff]
      %v244 = vld [vmem:[%s191] sm:$0xff]
      %v245 = vld [vmem:[%s191 + $0x8] sm:$0xff]
      %v246 = vld [vmem:[%s191 + $0x10] sm:$0xff]
      %v247 = vld [vmem:[%s191 + $0x18] sm:$0xff]
      %v248 = vld [vmem:[%s191 + $0x20] sm:$0xff]
      %v249 = vld [vmem:[%s191 + $0x28] sm:$0xff]
      %v250 = vld [vmem:[%s191 + $0x30] sm:$0xff]
      %v251 = vld [vmem:[%s191 + $0x38] sm:$0xff]
      %v252 = vld [vmem:[%s191 + $0x40] sm:$0xff]
      %v253 = vld [vmem:[%s191 + $0x48] sm:$0xff]
      %v254 = vld [vmem:[%s191 + $0x50] sm:$0xff]
      %v255 = vld [vmem:[%s191 + $0x58] sm:$0xff]
      %v256 = vld [vmem:[%s191 + $0x60] sm:$0xff]
      %v257 = vld [vmem:[%s191 + $0x68] sm:$0xff]
      %v258 = vld [vmem:[%s191 + $0x70] sm:$0xff]
      %v259 = vld [vmem:[%s191 + $0x78] sm:$0xff]
      %v260 = vld [vmem:[%s191 + $0x80] sm:$0xff]
      %v261 = vld [vmem:[%s191 + $0x88] sm:$0xff]
      %v262 = vld [vmem:[%s191 + $0x90] sm:$0xff]
      %v263 = vld [vmem:[%s191 + $0x98] sm:$0xff]
      %v264 = vld [vmem:[%s191 + $0xa0] sm:$0xff]
      %v265 = vld [vmem:[%s191 + $0xa8] sm:$0xff]
      %v266 = vld [vmem:[%s191 + $0xb0] sm:$0xff]
      %v267 = vld [vmem:[%s191 + $0xb8] sm:$0xff]
      %v268 = vld [vmem:[%s191 + $0xc0] sm:$0xff]
      %v269 = vld [vmem:[%s191 + $0xc8] sm:$0xff]
      %v270 = vld [vmem:[%s191 + $0xd0] sm:$0xff]
      %v271 = vld [vmem:[%s191 + $0xd8] sm:$0xff]
      %v272 = vld [vmem:[%s191 + $0xe0] sm:$0xff]
      %v273 = vld [vmem:[%s191 + $0xe8] sm:$0xff]
      %v274 = vld [vmem:[%s191 + $0xf0] sm:$0xff]
      %v275 = vld [vmem:[%s191 + $0xf8] sm:$0xff]
      %v276 = vld [vmem:[%s201] sm:$0xff]
      %v277 = vld [vmem:[%s201 + $0x8] sm:$0xff]
      %v278 = vld [vmem:[%s201 + $0x10] sm:$0xff]
      %v279 = vld [vmem:[%s201 + $0x18] sm:$0xff]
      %v280 = vld [vmem:[%s201 + $0x20] sm:$0xff]
      %v281 = vld [vmem:[%s201 + $0x28] sm:$0xff]
      %v282 = vld [vmem:[%s201 + $0x30] sm:$0xff]
      %v283 = vld [vmem:[%s201 + $0x38] sm:$0xff]
      %v284 = vld [vmem:[%s201 + $0x40] sm:$0xff]
      %v285 = vld [vmem:[%s201 + $0x48] sm:$0xff]
      %v286 = vld [vmem:[%s201 + $0x50] sm:$0xff]
      %v287 = vld [vmem:[%s201 + $0x58] sm:$0xff]
      %v288 = vld [vmem:[%s201 + $0x60] sm:$0xff]
      %v289 = vld [vmem:[%s201 + $0x68] sm:$0xff]
      %v290 = vld [vmem:[%s201 + $0x70] sm:$0xff]
      %v291 = vld [vmem:[%s201 + $0x78] sm:$0xff]
      %v292 = vld [vmem:[%s201 + $0x80] sm:$0xff]
      %v293 = vld [vmem:[%s201 + $0x88] sm:$0xff]
      %v294 = vld [vmem:[%s201 + $0x90] sm:$0xff]
      %v295 = vld [vmem:[%s201 + $0x98] sm:$0xff]
      %v296 = vld [vmem:[%s201 + $0xa0] sm:$0xff]
      %v297 = vld [vmem:[%s201 + $0xa8] sm:$0xff]
      %v298 = vld [vmem:[%s201 + $0xb0] sm:$0xff]
      %v299 = vld [vmem:[%s201 + $0xb8] sm:$0xff]
      %v300 = vld [vmem:[%s201 + $0xc0] sm:$0xff]
      %v301 = vld [vmem:[%s201 + $0xc8] sm:$0xff]
      %v302 = vld [vmem:[%s201 + $0xd0] sm:$0xff]
      %v303 = vld [vmem:[%s201 + $0xd8] sm:$0xff]
      %v304 = vld [vmem:[%s201 + $0xe0] sm:$0xff]
      %v305 = vld [vmem:[%s201 + $0xe8] sm:$0xff]
      %v306 = vld [vmem:[%s201 + $0xf0] sm:$0xff]
      %v307 = vld [vmem:[%s201 + $0xf8] sm:$0xff]
      %308 = vmatprep.subr.mxu0 0.0
      %309 = vmatpush1.msra.mxu0 %v276
      %310 = vmatprep.subr.mxu0 0.0
      %311 = vmatpush1.msra.mxu0 %v277
      %312 = vmatprep.subr.mxu0 0.0
      %313 = vmatpush1.msra.mxu0 %v278
      %314 = vmatprep.subr.mxu0 0.0
      %315 = vmatpush1.msra.mxu0 %v279
      %316 = vmatprep.subr.mxu0 0.0
      %317 = vmatpush1.msra.mxu0 %v280
      %318 = vmatprep.subr.mxu0 0.0
      %319 = vmatpush1.msra.mxu0 %v281
      %320 = vmatprep.subr.mxu0 0.0
      %321 = vmatpush1.msra.mxu0 %v282
      %322 = vmatprep.subr.mxu0 0.0
      %323 = vmatpush1.msra.mxu0 %v283
      %324 = vmatprep.subr.mxu0 0.0
      %325 = vmatpush1.msra.mxu0 %v284
      %326 = vmatprep.subr.mxu0 0.0
      %327 = vmatpush1.msra.mxu0 %v285
      %328 = vmatprep.subr.mxu0 0.0
      %329 = vmatpush1.msra.mxu0 %v286
      %330 = vmatprep.subr.mxu0 0.0
      %331 = vmatpush1.msra.mxu0 %v287
      %332 = vmatprep.subr.mxu0 0.0
      %333 = vmatpush1.msra.mxu0 %v288
      %334 = vmatprep.subr.mxu0 0.0
      %335 = vmatpush1.msra.mxu0 %v289
      %336 = vmatprep.subr.mxu0 0.0
      %337 = vmatpush1.msra.mxu0 %v290
      %338 = vmatprep.subr.mxu0 0.0
      %339 = vmatpush1.msra.mxu0 %v291
      %340 = vmatprep.subr.mxu0 0.0
      %341 = vmatpush1.msra.mxu0 %v292
      %342 = vmatprep.subr.mxu0 0.0
      %343 = vmatpush1.msra.mxu0 %v293
      %344 = vmatprep.subr.mxu0 0.0
      %345 = vmatpush1.msra.mxu0 %v294
      %346 = vmatprep.subr.mxu0 0.0
      %347 = vmatpush1.msra.mxu0 %v295
      %348 = vmatprep.subr.mxu0 0.0
      %349 = vmatpush1.msra.mxu0 %v296
      %350 = vmatprep.subr.mxu0 0.0
      %351 = vmatpush1.msra.mxu0 %v297
      %352 = vmatprep.subr.mxu0 0.0
      %353 = vmatpush1.msra.mxu0 %v298
      %354 = vmatprep.subr.mxu0 0.0
      %355 = vmatpush1.msra.mxu0 %v299
      %356 = vmatprep.subr.mxu0 0.0
      %357 = vmatpush1.msra.mxu0 %v300
      %358 = vmatprep.subr.mxu0 0.0
      %359 = vmatpush1.msra.mxu0 %v301
      %360 = vmatprep.subr.mxu0 0.0
      %361 = vmatpush1.msra.mxu0 %v302
      %362 = vmatprep.subr.mxu0 0.0
      %363 = vmatpush1.msra.mxu0 %v303
      %364 = vmatprep.subr.mxu0 0.0
      %365 = vmatpush1.msra.mxu0 %v304
      %366 = vmatprep.subr.mxu0 0.0
      %367 = vmatpush1.msra.mxu0 %v305
      %368 = vmatprep.subr.mxu0 0.0
      %369 = vmatpush1.msra.mxu0 %v306
      %370 = vmatprep.subr.mxu0 0.0
      %371 = vmatpush1.msra.mxu0 %v307
      %372 = vmatprep.mubr.f32.mxu0 %v245
      %373 = vmatmul.mubr.f32.gmra.mrb[0].mxu0 %v244
      %v374 = vpop.f32.mrb[0].mxu0
      %v375 = vadd.f32 0.0, %v374
      %v376 = vpop.f32.mrb[0].mxu0
      %377 = vmatprep.mubr.f32.mxu0 %v247
      %378 = vmatmul.mubr.f32.gmra.mrb[0].mxu0 %v246
      %v379 = vpop.f32.mrb[0].mxu0
      %v380 = vadd.f32 0.0, %v379
      %v381 = vpop.f32.mrb[0].mxu0
      %382 = vmatprep.mubr.f32.mxu0 %v249
      %383 = vmatmul.mubr.f32.gmra.mrb[0].mxu0 %v248
      %v384 = vpop.f32.mrb[0].mxu0
      %v385 = vadd.f32 0.0, %v384
      %v386 = vpop.f32.mrb[0].mxu0
      %387 = vmatprep.mubr.f32.mxu0 %v251
      %388 = vmatmul.mubr.f32.gmra.mrb[0].mxu0 %v250
      %v389 = vpop.f32.mrb[0].mxu0
      %v390 = vadd.f32 0.0, %v389
      %v391 = vpop.f32.mrb[0].mxu0
      %392 = vmatprep.mubr.f32.mxu0 %v253
      %393 = vmatmul.mubr.f32.gmra.mrb[0].mxu0 %v252
      %v394 = vpop.f32.mrb[0].mxu0
      %v395 = vadd.f32 0.0, %v394
      %v396 = vpop.f32.mrb[0].mxu0
      %397 = vmatprep.mubr.f32.mxu0 %v255
      %398 = vmatmul.mubr.f32.gmra.mrb[0].mxu0 %v254
      %v399 = vpop.f32.mrb[0].mxu0
      %v400 = vadd.f32 0.0, %v399
      %v401 = vpop.f32.mrb[0].mxu0
      %402 = vmatprep.mubr.f32.mxu0 %v257
      %403 = vmatmul.mubr.f32.gmra.mrb[0].mxu0 %v256
      %v404 = vpop.f32.mrb[0].mxu0
      %v405 = vadd.f32 0.0, %v404
      %v406 = vpop.f32.mrb[0].mxu0
      %407 = vmatprep.mubr.f32.mxu0 %v259
      %408 = vmatmul.mubr.f32.gmra.mrb[0].mxu0 %v258
      %v409 = vpop.f32.mrb[0].mxu0
      %v410 = vadd.f32 0.0, %v409
      %v411 = vpop.f32.mrb[0].mxu0
      %412 = vmatprep.mubr.f32.mxu0 %v261
      %413 = vmatmul.mubr.f32.gmra.mrb[0].mxu0 %v260
      %v414 = vpop.f32.mrb[0].mxu0
      %v415 = vadd.f32 0.0, %v414
      %v416 = vpop.f32.mrb[0].mxu0
      %417 = vmatprep.mubr.f32.mxu0 %v263
      %418 = vmatmul.mubr.f32.gmra.mrb[0].mxu0 %v262
      %v419 = vpop.f32.mrb[0].mxu0
      %v420 = vadd.f32 0.0, %v419
      %v421 = vpop.f32.mrb[0].mxu0
      %422 = vmatprep.mubr.f32.mxu0 %v265
      %423 = vmatmul.mubr.f32.gmra.mrb[0].mxu0 %v264
      %v424 = vpop.f32.mrb[0].mxu0
      %v425 = vadd.f32 0.0, %v424
      %v426 = vpop.f32.mrb[0].mxu0
      %427 = vmatprep.mubr.f32.mxu0 %v267
      %428 = vmatmul.mubr.f32.gmra.mrb[0].mxu0 %v266
      %v429 = vpop.f32.mrb[0].mxu0
      %v430 = vadd.f32 0.0, %v429
      %v431 = vpop.f32.mrb[0].mxu0
      %432 = vmatprep.mubr.f32.mxu0 %v269
      %433 = vmatmul.mubr.f32.gmra.mrb[0].mxu0 %v268
      %v434 = vpop.f32.mrb[0].mxu0
      %v435 = vadd.f32 0.0, %v434
      %v436 = vpop.f32.mrb[0].mxu0
      %437 = vmatprep.mubr.f32.mxu0 %v271
      %438 = vmatmul.mubr.f32.gmra.mrb[0].mxu0 %v270
      %v439 = vpop.f32.mrb[0].mxu0
      %v440 = vadd.f32 0.0, %v439
      %v441 = vpop.f32.mrb[0].mxu0
      %442 = vmatprep.mubr.f32.mxu0 %v273
      %443 = vmatmul.mubr.f32.gmra.mrb[0].mxu0 %v272
      %v444 = vpop.f32.mrb[0].mxu0
      %v445 = vadd.f32 0.0, %v444
      %v446 = vpop.f32.mrb[0].mxu0
      %447 = vmatprep.mubr.f32.mxu0 %v275
      %448 = vmatmul.mubr.f32.gmra.mrb[0].mxu0 %v274
      %v449 = vpop.f32.mrb[0].mxu0
      %v450 = vadd.f32 0.0, %v449
      %v451 = vpop.f32.mrb[0].mxu0
      %452 = vdwg.mxu0
      %v453 = vadd.f32 %v228, %v375
      %v454 = vadd.f32 %v229, %v380
      %v455 = vadd.f32 %v230, %v385
      %v456 = vadd.f32 %v231, %v390
      %v457 = vadd.f32 %v232, %v395
      %v458 = vadd.f32 %v233, %v400
      %v459 = vadd.f32 %v234, %v405
      %v460 = vadd.f32 %v235, %v410
      %v461 = vadd.f32 %v236, %v415
      %v462 = vadd.f32 %v237, %v420
      %v463 = vadd.f32 %v238, %v425
      %v464 = vadd.f32 %v239, %v430
      %v465 = vadd.f32 %v240, %v435
      %v466 = vadd.f32 %v241, %v440
      %v467 = vadd.f32 %v242, %v445
      %v468 = vadd.f32 %v243, %v450
      %469 = vst [vmem:[#allocation2] sm:$0xff] %v453
      %470 = vst [vmem:[#allocation2 + $0x8] sm:$0xff] %v454
      %471 = vst [vmem:[#allocation2 + $0x10] sm:$0xff] %v455
      %472 = vst [vmem:[#allocation2 + $0x18] sm:$0xff] %v456
      %473 = vst [vmem:[#allocation2 + $0x20] sm:$0xff] %v457
      %474 = vst [vmem:[#allocation2 + $0x28] sm:$0xff] %v458
      %475 = vst [vmem:[#allocation2 + $0x30] sm:$0xff] %v459
      %476 = vst [vmem:[#allocation2 + $0x38] sm:$0xff] %v460
      %477 = vst [vmem:[#allocation2 + $0x40] sm:$0xff] %v461
      %478 = vst [vmem:[#allocation2 + $0x48] sm:$0xff] %v462
      %479 = vst [vmem:[#allocation2 + $0x50] sm:$0xff] %v463
      %480 = vst [vmem:[#allocation2 + $0x58] sm:$0xff] %v464
      %481 = vst [vmem:[#allocation2 + $0x60] sm:$0xff] %v465
      %482 = vst [vmem:[#allocation2 + $0x68] sm:$0xff] %v466
      %483 = vst [vmem:[#allocation2 + $0x70] sm:$0xff] %v467
      %484 = vst [vmem:[#allocation2 + $0x78] sm:$0xff] %v468
      // Predicated region
      $region33: #{encoder_forward.46} parent=27 // pred_check
        %p485 = pneg %p208
      $region34: #{encoder_forward.46} parent=27 // pred_check_branch
        %487 = sbr.rel (%p485) target = $region36
      $region35: #{encoder_forward.46} parent=27 // pred_region
        %v488 = vld [vmem:[#allocation2] sm:$0xff]
        %v489 = vld [vmem:[#allocation2 + $0x8] sm:$0xff]
        %v490 = vld [vmem:[#allocation2 + $0x10] sm:$0xff]
        %v491 = vld [vmem:[#allocation2 + $0x18] sm:$0xff]
        %v492 = vld [vmem:[#allocation2 + $0x20] sm:$0xff]
        %v493 = vld [vmem:[#allocation2 + $0x28] sm:$0xff]
        %v494 = vld [vmem:[#allocation2 + $0x30] sm:$0xff]
        %v495 = vld [vmem:[#allocation2 + $0x38] sm:$0xff]
        %v496 = vld [vmem:[#allocation2 + $0x40] sm:$0xff]
        %v497 = vld [vmem:[#allocation2 + $0x48] sm:$0xff]
        %v498 = vld [vmem:[#allocation2 + $0x50] sm:$0xff]
        %v499 = vld [vmem:[#allocation2 + $0x58] sm:$0xff]
        %v500 = vld [vmem:[#allocation2 + $0x60] sm:$0xff]
        %v501 = vld [vmem:[#allocation2 + $0x68] sm:$0xff]
        %v502 = vld [vmem:[#allocation2 + $0x70] sm:$0xff]
        %v503 = vld [vmem:[#allocation2 + $0x78] sm:$0xff]
        %504 = vst [vmem:[%s207] sm:$0xff] %v488
        %505 = vst [vmem:[%s207 + $0x8] sm:$0xff] %v489
        %506 = vst [vmem:[%s207 + $0x10] sm:$0xff] %v490
        %507 = vst [vmem:[%s207 + $0x18] sm:$0xff] %v491
        %508 = vst [vmem:[%s207 + $0x20] sm:$0xff] %v492
        %509 = vst [vmem:[%s207 + $0x28] sm:$0xff] %v493
        %510 = vst [vmem:[%s207 + $0x30] sm:$0xff] %v494
        %511 = vst [vmem:[%s207 + $0x38] sm:$0xff] %v495
        %512 = vst [vmem:[%s207 + $0x40] sm:$0xff] %v496
        %513 = vst [vmem:[%s207 + $0x48] sm:$0xff] %v497
        %514 = vst [vmem:[%s207 + $0x50] sm:$0xff] %v498
        %515 = vst [vmem:[%s207 + $0x58] sm:$0xff] %v499
        %516 = vst [vmem:[%s207 + $0x60] sm:$0xff] %v500
        %517 = vst [vmem:[%s207 + $0x68] sm:$0xff] %v501
        %518 = vst [vmem:[%s207 + $0x70] sm:$0xff] %v502
        %519 = vst [vmem:[%s207 + $0x78] sm:$0xff] %v503
      $region36: #{encoder_forward.46} parent=27 // pred_fallthru
        _
      %p520 = scmp.lt.s32.totalorder %s17, 1
      %s521 = scalar_select %p520, %s17, 1
      %s522 = smul.addr %s521, 16
      %s523 = smul.addr %s522, 8
      %s524 = scalar_lea.vmem %s2, %s523
      // Predicated region
      $region37: #{encoder_forward.46} parent=27 // pred_check
        %p525 = pneg %p99
      $region38: #{encoder_forward.46} parent=27 // pred_check_branch
        %527 = sbr.rel (%p525) target = $region40
      $region39: #{encoder_forward.46} parent=27 // pred_region
        _
      $region40: #{encoder_forward.46} parent=27 // pred_fallthru
        _
    $region28: #{encoder_forward.46} parent=5 // pred_fallthru
      _
    %p528 = scmp.le.s32.totalorder 2, %s8
    // Predicated region
    $region41: #{encoder_forward.46} parent=5 // pred_check
      %p529 = pneg %p528
    $region42: #{encoder_forward.46} parent=5 // pred_check_branch
      %531 = sbr.rel (%p529) target = $region44
    $region43: #{encoder_forward.46} parent=5 // pred_region
      %s532 = ssub.s32 %s8, 2
      // Predicated region
      $region45: #{encoder_forward.46} parent=43 // pred_check
        %p533 = pneg %p105
      $region46: #{encoder_forward.46} parent=43 // pred_check_branch
        %535 = sbr.rel (%p533) target = $region48
      $region47: #{encoder_forward.46} parent=43 // pred_region
        %p536 = scmp.lt.s32.totalorder %s19, 1
        %s537 = scalar_select %p536, %s19, 1
        %s538 = smul.addr %s537, 16
        %s539 = smul.addr %s538, 8
        %s540 = scalar_lea.vmem %s2, %s539
      $region48: #{encoder_forward.46} parent=43 // pred_fallthru
        _
    $region44: #{encoder_forward.46} parent=5 // pred_fallthru
      _
  $region6: #{encoder_forward.46} parent=0 // loop_footer
    %s12 = sadd.s32 1, %s8
  $region7: #{encoder_forward.46} parent=0 // loop_footer_branch
    %7 = sbr.rel target = $region3
  $region8: #{encoder_forward.46} parent=0 // loop_exit
    _

// kernel: encoder_forward.47
$region0: #{encoder_forward.47}
  #allocation0 [shape = 'u32[]', space=smem, size = 0x4, offset = 0x4, fixed_abs, tag = 'smem constant byte address 0x4 - core index']
  #allocation1 [shape = 'u32[144,128]{1,0:T(1,128)}', space=vmem, size = 0x12000, scoped, tag = 'internal scratch']
  %s0 = inlined_call_operand.vmem [shape: f32[2,256,128], index: 0, kind: input, shape index: {}]
  %s1 = inlined_call_operand.vmem [shape: f32[2,128,128], index: 1, kind: input, shape index: {}]
  %s2 = inlined_call_operand.vmem [shape: f32[2,256,128], index: 2, kind: output, shape index: {}]
  %s3 = sld [smem:[#allocation0]]
  $region41: #{encoder_forward.47} parent=0
    _
  %s5 = ssub.s32 1, %s3
  %s6 = scalar_select 0, %s5, %s3
  loop: start=0, step=1, limit=4
  $region2: #{encoder_forward.47} parent=0 // loop_pre_header
    _
  $region3: #{encoder_forward.47} parent=0 // loop_header
    %s8 = sphi 0, %s12
    %p9 = scmp.ge.s32.totalorder %s8, 4
    %s15 = sphi 0, %s27
    %s16 = sphi 0, %s23
    %s17 = sphi 0, %s15
    %s18 = sphi 0, %s16
    %s19 = sphi 0, %s17
    %s20 = sphi 0, %s18
    %s32 = sphi 0, %s34
    %s35 = sphi 0, %s32
    %s36 = sphi 0, %s35
    %s52 = sphi 0, %s36
    %s58 = sphi 0, %s60
    %s61 = sphi 0, %s58
    %s62 = sphi 0, %s61
    %s78 = sphi 0, %s62
    %s86 = sphi 0, %s88
    %s89 = sphi 0, %s86
    %s90 = sphi 0, %s89
    %s106 = sphi 0, %s90
  $region4: #{encoder_forward.47} parent=0 // loop_header_branch
    %11 = sbr.rel (%p9) target = $region8
  $region5: #{encoder_forward.47} parent=0 // loop_body
    %s13 = ssub.s32 %s8, 1
    %s14 = ssub.s32 %s8, 2
    %s21 = sadd.s32 1, %s16
    %p22 = scmp.ge.s32.totalorder %s21, 1
    %s23 = scalar_select %p22, 0, %s21
    %s24 = sadd.s32 1, %s15
    %s25 = scalar_select %p22, %s24, %s15
    %p26 = scmp.ge.s32.totalorder %s25, 2
    %s27 = scalar_select %p26, 0, %s25
    %s28 = ssub.s32 %s15, %s27
    %s29 = ssub.s32 %s16, %s23
    %s30 = sor.u32 %s28, %s29
    %p31 = scmp.eq.s32.totalorder %s30, 0
    %s33 = sadd.s32 %s32, 1
    %s34 = scalar_select %p31, %s32, %s33
    %p37 = pneg %p31
    %p38 = scmp.eq.s32.totalorder %s8, 1
    %p39 = por %p37, %p38
    %p40 = scmp.ne.s32.totalorder %s32, %s35
    %p41 = scmp.eq.s32.totalorder %s8, 0
    %p42 = por %p40, %p41
    %p43 = scmp.ne.s32.totalorder %s32, %s35
    %p44 = scmp.eq.s32.totalorder %s13, 1
    %p45 = por %p43, %p44
    %p46 = scmp.ne.s32.totalorder %s35, %s36
    %p47 = scmp.eq.s32.totalorder %s13, 0
    %p48 = por %p46, %p47
    %p49 = scmp.ne.s32.totalorder %s35, %s36
    %p50 = scmp.eq.s32.totalorder %s14, 1
    %p51 = por %p49, %p50
    %p53 = scmp.ne.s32.totalorder %s36, %s52
    %p54 = scmp.eq.s32.totalorder %s14, 0
    %p55 = por %p53, %p54
    %s56 = ssub.s32 %s15, %s27
    %p57 = scmp.eq.s32.totalorder %s56, 0
    %s59 = sadd.s32 %s58, 1
    %s60 = scalar_select %p57, %s58, %s59
    %p63 = pneg %p57
    %p64 = scmp.eq.s32.totalorder %s8, 1
    %p65 = por %p63, %p64
    %p66 = scmp.ne.s32.totalorder %s58, %s61
    %p67 = scmp.eq.s32.totalorder %s8, 0
    %p68 = por %p66, %p67
    %p69 = scmp.ne.s32.totalorder %s58, %s61
    %p70 = scmp.eq.s32.totalorder %s13, 1
    %p71 = por %p69, %p70
    %p72 = scmp.ne.s32.totalorder %s61, %s62
    %p73 = scmp.eq.s32.totalorder %s13, 0
    %p74 = por %p72, %p73
    %p75 = scmp.ne.s32.totalorder %s61, %s62
    %p76 = scmp.eq.s32.totalorder %s14, 1
    %p77 = por %p75, %p76
    %p79 = scmp.ne.s32.totalorder %s62, %s78
    %p80 = scmp.eq.s32.totalorder %s14, 0
    %p81 = por %p79, %p80
    %s82 = ssub.s32 %s15, %s27
    %s83 = ssub.s32 %s16, %s23
    %s84 = sor.u32 %s82, %s83
    %p85 = scmp.eq.s32.totalorder %s84, 0
    %s87 = sadd.s32 %s86, 1
    %s88 = scalar_select %p85, %s86, %s87
    %p91 = pneg %p85
    %p92 = scmp.eq.s32.totalorder %s8, 1
    %p93 = por %p91, %p92
    %p94 = scmp.ne.s32.totalorder %s86, %s89
    %p95 = scmp.eq.s32.totalorder %s8, 0
    %p96 = por %p94, %p95
    %p97 = scmp.ne.s32.totalorder %s86, %s89
    %p98 = scmp.eq.s32.totalorder %s13, 1
    %p99 = por %p97, %p98
    %p100 = scmp.ne.s32.totalorder %s89, %s90
    %p101 = scmp.eq.s32.totalorder %s13, 0
    %p102 = por %p100, %p101
    %p103 = scmp.ne.s32.totalorder %s89, %s90
    %p104 = scmp.eq.s32.totalorder %s14, 1
    %p105 = por %p103, %p104
    %p107 = scmp.ne.s32.totalorder %s90, %s106
    %p108 = scmp.eq.s32.totalorder %s14, 0
    %p109 = por %p107, %p108
    %p110 = scmp.le.s32.totalorder 1, %s8
    %p111 = scmp.lt.s32.totalorder %s8, 3
    %p112 = pnand %p110, %p111
    %p113 = pneg %p112
    // Predicated region
    $region9: #{encoder_forward.47} parent=5 // pred_check
      _
    $region10: #{encoder_forward.47} parent=5 // pred_check_branch
      %115 = sbr.rel (%p112) target = $region12
    $region11: #{encoder_forward.47} parent=5 // pred_region
      %s116 = ssub.s32 %s8, 1
    $region12: #{encoder_forward.47} parent=5 // pred_fallthru
      _
    %p117 = scmp.lt.s32.totalorder %s8, 2
    // Predicated region
    $region13: #{encoder_forward.47} parent=5 // pred_check
      %p118 = pneg %p117
    $region14: #{encoder_forward.47} parent=5 // pred_check_branch
      %120 = sbr.rel (%p118) target = $region16
    $region15: #{encoder_forward.47} parent=5 // pred_region
      // Predicated region
      $region17: #{encoder_forward.47} parent=15 // pred_check
        %p121 = pneg %p42
      $region18: #{encoder_forward.47} parent=15 // pred_check_branch
        %123 = sbr.rel (%p121) target = $region20
      $region19: #{encoder_forward.47} parent=15 // pred_region
        %s124 = smul.u32 32, %s16
        %p125 = scmp.lt.s32.totalorder %s15, 1
        %s126 = scalar_select %p125, %s15, 1
        %p127 = scmp.lt.s32.totalorder %s124, 31
        %s128 = scalar_select %p127, %s124, 31
        %s129 = smul.addr %s126, 32
        %s130 = sadd.s32 %s128, %s129
        %s131 = smul.addr %s130, 8
        %s132 = scalar_lea.vmem %s0, %s131
        %s133 = smul.u32 32, %s16
      $region20: #{encoder_forward.47} parent=15 // pred_fallthru
        _
      // Predicated region
      $region21: #{encoder_forward.47} parent=15 // pred_check
        %p134 = pneg %p68
      $region22: #{encoder_forward.47} parent=15 // pred_check_branch
        %136 = sbr.rel (%p134) target = $region24
      $region23: #{encoder_forward.47} parent=15 // pred_region
        %p137 = scmp.lt.s32.totalorder %s15, 1
        %s138 = scalar_select %p137, %s15, 1
        %s139 = smul.addr %s138, 16
        %s140 = smul.addr %s139, 8
        %s141 = scalar_lea.vmem %s1, %s140
      $region24: #{encoder_forward.47} parent=15 // pred_fallthru
        _
    $region16: #{encoder_forward.47} parent=5 // pred_fallthru
      _
    %p142 = scmp.le.s32.totalorder 1, %s8
    %p143 = scmp.lt.s32.totalorder %s8, 3
    %p144 = pnand %p142, %p143
    %p145 = pneg %p144
    // Predicated region
    $region25: #{encoder_forward.47} parent=5 // pred_check
      _
    $region26: #{encoder_forward.47} parent=5 // pred_check_branch
      %147 = sbr.rel (%p144) target = $region28
    $region27: #{encoder_forward.47} parent=5 // pred_region
      %s148 = ssub.s32 %s8, 1
      %s149 = smul.u32 32, %s18
      %p150 = scmp.lt.s32.totalorder %s17, 1
      %s151 = scalar_select %p150, %s17, 1
      %p152 = scmp.lt.s32.totalorder %s149, 31
      %s153 = scalar_select %p152, %s149, 31
      %s154 = smul.addr %s151, 32
      %s155 = sadd.s32 %s153, %s154
      %s156 = smul.addr %s155, 8
      %s157 = scalar_lea.vmem %s0, %s156
      %p158 = pneg %p48
      %p159 = pneg %p45
      %p160 = scmp.lt.s32.totalorder %s17, 1
      %s161 = scalar_select %p160, %s17, 1
      %s162 = smul.addr %s161, 16
      %s163 = smul.addr %s162, 8
      %s164 = scalar_lea.vmem %s1, %s163
      %p165 = pneg %p74
      %p166 = pneg %p71
      %p167 = pneg %p102
      %p168 = pneg %p99
      %s169 = smul.u32 32, %s18
      %p170 = scmp.lt.s32.totalorder %s17, 1
      %s171 = scalar_select %p170, %s17, 1
      %p172 = scmp.lt.s32.totalorder %s169, 31
      %s173 = scalar_select %p172, %s169, 31
      %s174 = smul.addr %s171, 32
      %s175 = sadd.s32 %s173, %s174
      %s176 = smul.addr %s175, 8
      %s177 = scalar_lea.vmem %s2, %s176
      %s178 = smul.u32 32, %s18
      %p179 = scmp.lt.s32.totalorder %s17, 1
      %s180 = scalar_select %p179, %s17, 1
      %p181 = scmp.lt.s32.totalorder %s178, 31
      %s182 = scalar_select %p181, %s178, 31
      %s183 = smul.addr %s180, 32
      %s184 = sadd.s32 %s182, %s183
      %s185 = smul.addr %s184, 8
      %s186 = scalar_lea.vmem %s0, %s185
      %s187 = smul.u32 32, %s18
      %p188 = scmp.lt.s32.totalorder %s17, 1
      %s189 = scalar_select %p188, %s17, 1
      %s190 = smul.addr %s189, 16
      %s191 = smul.addr %s190, 8
      %s192 = scalar_lea.vmem %s1, %s191
      %s193 = smul.u32 32, %s18
      %p194 = scmp.lt.s32.totalorder %s17, 1
      %s195 = scalar_select %p194, %s17, 1
      %p196 = scmp.lt.s32.totalorder %s193, 31
      %s197 = scalar_select %p196, %s193, 31
      %s198 = smul.addr %s195, 32
      %s199 = sadd.s32 %s197, %s198
      %s200 = smul.addr %s199, 8
      %s201 = scalar_lea.vmem %s2, %s200
      %s202 = smul.u32 32, %s18
      %v203 = vld [vmem:[%s186] sm:$0xff]
      %v204 = vld [vmem:[%s186 + $0x8] sm:$0xff]
      %v205 = vld [vmem:[%s186 + $0x10] sm:$0xff]
      %v206 = vld [vmem:[%s186 + $0x18] sm:$0xff]
      %v207 = vld [vmem:[%s186 + $0x20] sm:$0xff]
      %v208 = vld [vmem:[%s186 + $0x28] sm:$0xff]
      %v209 = vld [vmem:[%s186 + $0x30] sm:$0xff]
      %v210 = vld [vmem:[%s186 + $0x38] sm:$0xff]
      %v211 = vld [vmem:[%s186 + $0x40] sm:$0xff]
      %v212 = vld [vmem:[%s186 + $0x48] sm:$0xff]
      %v213 = vld [vmem:[%s186 + $0x50] sm:$0xff]
      %v214 = vld [vmem:[%s186 + $0x58] sm:$0xff]
      %v215 = vld [vmem:[%s186 + $0x60] sm:$0xff]
      %v216 = vld [vmem:[%s186 + $0x68] sm:$0xff]
      %v217 = vld [vmem:[%s186 + $0x70] sm:$0xff]
      %v218 = vld [vmem:[%s186 + $0x78] sm:$0xff]
      %v219 = vld [vmem:[%s186 + $0x80] sm:$0xff]
      %v220 = vld [vmem:[%s186 + $0x88] sm:$0xff]
      %v221 = vld [vmem:[%s186 + $0x90] sm:$0xff]
      %v222 = vld [vmem:[%s186 + $0x98] sm:$0xff]
      %v223 = vld [vmem:[%s186 + $0xa0] sm:$0xff]
      %v224 = vld [vmem:[%s186 + $0xa8] sm:$0xff]
      %v225 = vld [vmem:[%s186 + $0xb0] sm:$0xff]
      %v226 = vld [vmem:[%s186 + $0xb8] sm:$0xff]
      %v227 = vld [vmem:[%s186 + $0xc0] sm:$0xff]
      %v228 = vld [vmem:[%s186 + $0xc8] sm:$0xff]
      %v229 = vld [vmem:[%s186 + $0xd0] sm:$0xff]
      %v230 = vld [vmem:[%s186 + $0xd8] sm:$0xff]
      %v231 = vld [vmem:[%s186 + $0xe0] sm:$0xff]
      %v232 = vld [vmem:[%s186 + $0xe8] sm:$0xff]
      %v233 = vld [vmem:[%s186 + $0xf0] sm:$0xff]
      %v234 = vld [vmem:[%s186 + $0xf8] sm:$0xff]
      %v235 = vld [vmem:[%s192] sm:$0xff]
      %v236 = vld [vmem:[%s192 + $0x8] sm:$0xff]
      %v237 = vld [vmem:[%s192 + $0x10] sm:$0xff]
      %v238 = vld [vmem:[%s192 + $0x18] sm:$0xff]
      %v239 = vld [vmem:[%s192 + $0x20] sm:$0xff]
      %v240 = vld [vmem:[%s192 + $0x28] sm:$0xff]
      %v241 = vld [vmem:[%s192 + $0x30] sm:$0xff]
      %v242 = vld [vmem:[%s192 + $0x38] sm:$0xff]
      %v243 = vld [vmem:[%s192 + $0x40] sm:$0xff]
      %v244 = vld [vmem:[%s192 + $0x48] sm:$0xff]
      %v245 = vld [vmem:[%s192 + $0x50] sm:$0xff]
      %v246 = vld [vmem:[%s192 + $0x58] sm:$0xff]
      %v247 = vld [vmem:[%s192 + $0x60] sm:$0xff]
      %v248 = vld [vmem:[%s192 + $0x68] sm:$0xff]
      %v249 = vld [vmem:[%s192 + $0x70] sm:$0xff]
      %v250 = vld [vmem:[%s192 + $0x78] sm:$0xff]
      %251 = vmatprep.subr.mxu0 0.0
      %252 = vmatpush1.msra.mxu0 %v235
      %253 = vmatprep.subr.mxu0 0.0
      %254 = vmatpush1.msra.mxu0 %v236
      %255 = vmatprep.subr.mxu0 0.0
      %256 = vmatpush1.msra.mxu0 %v237
      %257 = vmatprep.subr.mxu0 0.0
      %258 = vmatpush1.msra.mxu0 %v238
      %259 = vmatprep.subr.mxu0 0.0
      %260 = vmatpush1.msra.mxu0 %v239
      %261 = vmatprep.subr.mxu0 0.0
      %262 = vmatpush1.msra.mxu0 %v240
      %263 = vmatprep.subr.mxu0 0.0
      %264 = vmatpush1.msra.mxu0 %v241
      %265 = vmatprep.subr.mxu0 0.0
      %266 = vmatpush1.msra.mxu0 %v242
      %267 = vmatprep.subr.mxu0 0.0
      %268 = vmatpush1.msra.mxu0 %v243
      %269 = vmatprep.subr.mxu0 0.0
      %270 = vmatpush1.msra.mxu0 %v244
      %271 = vmatprep.subr.mxu0 0.0
      %272 = vmatpush1.msra.mxu0 %v245
      %273 = vmatprep.subr.mxu0 0.0
      %274 = vmatpush1.msra.mxu0 %v246
      %275 = vmatprep.subr.mxu0 0.0
      %276 = vmatpush1.msra.mxu0 %v247
      %277 = vmatprep.subr.mxu0 0.0
      %278 = vmatpush1.msra.mxu0 %v248
      %279 = vmatprep.subr.mxu0 0.0
      %280 = vmatpush1.msra.mxu0 %v249
      %281 = vmatprep.subr.mxu0 0.0
      %282 = vmatpush1.msra.mxu0 %v250
      %283 = vmatprep.subr.mxu0 0.0
      %284 = vmatpush1.msra.mxu0 0.0
      %285 = vmatprep.subr.mxu0 0.0
      %286 = vmatpush1.msra.mxu0 0.0
      %287 = vmatprep.subr.mxu0 0.0
      %288 = vmatpush1.msra.mxu0 0.0
      %289 = vmatprep.subr.mxu0 0.0
      %290 = vmatpush1.msra.mxu0 0.0
      %291 = vmatprep.subr.mxu0 0.0
      %292 = vmatpush1.msra.mxu0 0.0
      %293 = vmatprep.subr.mxu0 0.0
      %294 = vmatpush1.msra.mxu0 0.0
      %295 = vmatprep.subr.mxu0 0.0
      %296 = vmatpush1.msra.mxu0 0.0
      %297 = vmatprep.subr.mxu0 0.0
      %298 = vmatpush1.msra.mxu0 0.0
      %299 = vmatprep.subr.mxu0 0.0
      %300 = vmatpush1.msra.mxu0 0.0
      %301 = vmatprep.subr.mxu0 0.0
      %302 = vmatpush1.msra.mxu0 0.0
      %303 = vmatprep.subr.mxu0 0.0
      %304 = vmatpush1.msra.mxu0 0.0
      %305 = vmatprep.subr.mxu0 0.0
      %306 = vmatpush1.msra.mxu0 0.0
      %307 = vmatprep.subr.mxu0 0.0
      %308 = vmatpush1.msra.mxu0 0.0
      %309 = vmatprep.subr.mxu0 0.0
      %310 = vmatpush1.msra.mxu0 0.0
      %311 = vmatprep.subr.mxu0 0.0
      %312 = vmatpush1.msra.mxu0 0.0
      %313 = vmatprep.subr.mxu0 0.0
      %314 = vmatpush1.msra.mxu0 0.0
      %315 = vmatprep.mubr.f32.mxu0 0.0
      %316 = vmatmul.mubr.f32.gmra.mrb[0].mxu0 %v203
      %v317 = vpop.f32.mrb[0].mxu0
      %v318 = vadd.f32 0.0, %v317
      %v319 = vpop.f32.mrb[0].mxu0
      %320 = vmatprep.mubr.f32.mxu0 0.0
      %321 = vmatmul.mubr.f32.gmra.mrb[0].mxu0 %v204
      %v322 = vpop.f32.mrb[0].mxu0
      %v323 = vadd.f32 0.0, %v322
      %v324 = vpop.f32.mrb[0].mxu0
      %325 = vmatprep.mubr.f32.mxu0 0.0
      %326 = vmatmul.mubr.f32.gmra.mrb[0].mxu0 %v205
      %v327 = vpop.f32.mrb[0].mxu0
      %v328 = vadd.f32 0.0, %v327
      %v329 = vpop.f32.mrb[0].mxu0
      %330 = vmatprep.mubr.f32.mxu0 0.0
      %331 = vmatmul.mubr.f32.gmra.mrb[0].mxu0 %v206
      %v332 = vpop.f32.mrb[0].mxu0
      %v333 = vadd.f32 0.0, %v332
      %v334 = vpop.f32.mrb[0].mxu0
      %335 = vmatprep.mubr.f32.mxu0 0.0
      %336 = vmatmul.mubr.f32.gmra.mrb[0].mxu0 %v207
      %v337 = vpop.f32.mrb[0].mxu0
      %v338 = vadd.f32 0.0, %v337
      %v339 = vpop.f32.mrb[0].mxu0
      %340 = vmatprep.mubr.f32.mxu0 0.0
      %341 = vmatmul.mubr.f32.gmra.mrb[0].mxu0 %v208
      %v342 = vpop.f32.mrb[0].mxu0
      %v343 = vadd.f32 0.0, %v342
      %v344 = vpop.f32.mrb[0].mxu0
      %345 = vmatprep.mubr.f32.mxu0 0.0
      %346 = vmatmul.mubr.f32.gmra.mrb[0].mxu0 %v209
      %v347 = vpop.f32.mrb[0].mxu0
      %v348 = vadd.f32 0.0, %v347
      %v349 = vpop.f32.mrb[0].mxu0
      %350 = vmatprep.mubr.f32.mxu0 0.0
      %351 = vmatmul.mubr.f32.gmra.mrb[0].mxu0 %v210
      %v352 = vpop.f32.mrb[0].mxu0
      %v353 = vadd.f32 0.0, %v352
      %v354 = vpop.f32.mrb[0].mxu0
      %355 = vmatprep.mubr.f32.mxu0 0.0
      %356 = vmatmul.mubr.f32.gmra.mrb[0].mxu0 %v211
      %v357 = vpop.f32.mrb[0].mxu0
      %v358 = vadd.f32 0.0, %v357
      %v359 = vpop.f32.mrb[0].mxu0
      %360 = vmatprep.mubr.f32.mxu0 0.0
      %361 = vmatmul.mubr.f32.gmra.mrb[0].mxu0 %v212
      %v362 = vpop.f32.mrb[0].mxu0
      %v363 = vadd.f32 0.0, %v362
      %v364 = vpop.f32.mrb[0].mxu0
      %365 = vmatprep.mubr.f32.mxu0 0.0
      %366 = vmatmul.mubr.f32.gmra.mrb[0].mxu0 %v213
      %v367 = vpop.f32.mrb[0].mxu0
      %v368 = vadd.f32 0.0, %v367
      %v369 = vpop.f32.mrb[0].mxu0
      %370 = vmatprep.mubr.f32.mxu0 0.0
      %371 = vmatmul.mubr.f32.gmra.mrb[0].mxu0 %v214
      %v372 = vpop.f32.mrb[0].mxu0
      %v373 = vadd.f32 0.0, %v372
      %v374 = vpop.f32.mrb[0].mxu0
      %375 = vmatprep.mubr.f32.mxu0 0.0
      %376 = vmatmul.mubr.f32.gmra.mrb[0].mxu0 %v215
      %v377 = vpop.f32.mrb[0].mxu0
      %v378 = vadd.f32 0.0, %v377
      %v379 = vpop.f32.mrb[0].mxu0
      %380 = vmatprep.mubr.f32.mxu0 0.0
      %381 = vmatmul.mubr.f32.gmra.mrb[0].mxu0 %v216
      %v382 = vpop.f32.mrb[0].mxu0
      %v383 = vadd.f32 0.0, %v382
      %v384 = vpop.f32.mrb[0].mxu0
      %385 = vmatprep.mubr.f32.mxu0 0.0
      %386 = vmatmul.mubr.f32.gmra.mrb[0].mxu0 %v217
      %v387 = vpop.f32.mrb[0].mxu0
      %v388 = vadd.f32 0.0, %v387
      %v389 = vpop.f32.mrb[0].mxu0
      %390 = vmatprep.mubr.f32.mxu0 0.0
      %391 = vmatmul.mubr.f32.gmra.mrb[0].mxu0 %v218
      %v392 = vpop.f32.mrb[0].mxu0
      %v393 = vadd.f32 0.0, %v392
      %v394 = vpop.f32.mrb[0].mxu0
      %395 = vmatprep.mubr.f32.mxu0 0.0
      %396 = vmatmul.mubr.f32.gmra.mrb[0].mxu0 %v219
      %v397 = vpop.f32.mrb[0].mxu0
      %v398 = vadd.f32 0.0, %v397
      %v399 = vpop.f32.mrb[0].mxu0
      %400 = vmatprep.mubr.f32.mxu0 0.0
      %401 = vmatmul.mubr.f32.gmra.mrb[0].mxu0 %v220
      %v402 = vpop.f32.mrb[0].mxu0
      %v403 = vadd.f32 0.0, %v402
      %v404 = vpop.f32.mrb[0].mxu0
      %405 = vmatprep.mubr.f32.mxu0 0.0
      %406 = vmatmul.mubr.f32.gmra.mrb[0].mxu0 %v221
      %v407 = vpop.f32.mrb[0].mxu0
      %v408 = vadd.f32 0.0, %v407
      %v409 = vpop.f32.mrb[0].mxu0
      %410 = vmatprep.mubr.f32.mxu0 0.0
      %411 = vmatmul.mubr.f32.gmra.mrb[0].mxu0 %v222
      %v412 = vpop.f32.mrb[0].mxu0
      %v413 = vadd.f32 0.0, %v412
      %v414 = vpop.f32.mrb[0].mxu0
      %415 = vmatprep.mubr.f32.mxu0 0.0
      %416 = vmatmul.mubr.f32.gmra.mrb[0].mxu0 %v223
      %v417 = vpop.f32.mrb[0].mxu0
      %v418 = vadd.f32 0.0, %v417
      %v419 = vpop.f32.mrb[0].mxu0
      %420 = vmatprep.mubr.f32.mxu0 0.0
      %421 = vmatmul.mubr.f32.gmra.mrb[0].mxu0 %v224
      %v422 = vpop.f32.mrb[0].mxu0
      %v423 = vadd.f32 0.0, %v422
      %v424 = vpop.f32.mrb[0].mxu0
      %425 = vmatprep.mubr.f32.mxu0 0.0
      %426 = vmatmul.mubr.f32.gmra.mrb[0].mxu0 %v225
      %v427 = vpop.f32.mrb[0].mxu0
      %v428 = vadd.f32 0.0, %v427
      %v429 = vpop.f32.mrb[0].mxu0
      %430 = vmatprep.mubr.f32.mxu0 0.0
      %431 = vmatmul.mubr.f32.gmra.mrb[0].mxu0 %v226
      %v432 = vpop.f32.mrb[0].mxu0
      %v433 = vadd.f32 0.0, %v432
      %v434 = vpop.f32.mrb[0].mxu0
      %435 = vmatprep.mubr.f32.mxu0 0.0
      %436 = vmatmul.mubr.f32.gmra.mrb[0].mxu0 %v227
      %v437 = vpop.f32.mrb[0].mxu0
      %v438 = vadd.f32 0.0, %v437
      %v439 = vpop.f32.mrb[0].mxu0
      %440 = vmatprep.mubr.f32.mxu0 0.0
      %441 = vmatmul.mubr.f32.gmra.mrb[0].mxu0 %v228
      %v442 = vpop.f32.mrb[0].mxu0
      %v443 = vadd.f32 0.0, %v442
      %v444 = vpop.f32.mrb[0].mxu0
      %445 = vmatprep.mubr.f32.mxu0 0.0
      %446 = vmatmul.mubr.f32.gmra.mrb[0].mxu0 %v229
      %v447 = vpop.f32.mrb[0].mxu0
      %v448 = vadd.f32 0.0, %v447
      %v449 = vpop.f32.mrb[0].mxu0
      %450 = vmatprep.mubr.f32.mxu0 0.0
      %451 = vmatmul.mubr.f32.gmra.mrb[0].mxu0 %v230
      %v452 = vpop.f32.mrb[0].mxu0
      %v453 = vadd.f32 0.0, %v452
      %v454 = vpop.f32.mrb[0].mxu0
      %455 = vmatprep.mubr.f32.mxu0 0.0
      %456 = vmatmul.mubr.f32.gmra.mrb[0].mxu0 %v231
      %v457 = vpop.f32.mrb[0].mxu0
      %v458 = vadd.f32 0.0, %v457
      %v459 = vpop.f32.mrb[0].mxu0
      %460 = vmatprep.mubr.f32.mxu0 0.0
      %461 = vmatmul.mubr.f32.gmra.mrb[0].mxu0 %v232
      %v462 = vpop.f32.mrb[0].mxu0
      %v463 = vadd.f32 0.0, %v462
      %v464 = vpop.f32.mrb[0].mxu0
      %465 = vmatprep.mubr.f32.mxu0 0.0
      %466 = vmatmul.mubr.f32.gmra.mrb[0].mxu0 %v233
      %v467 = vpop.f32.mrb[0].mxu0
      %v468 = vadd.f32 0.0, %v467
      %v469 = vpop.f32.mrb[0].mxu0
      %470 = vmatprep.mubr.f32.mxu0 0.0
      %471 = vmatmul.mubr.f32.gmra.mrb[0].mxu0 %v234
      %v472 = vpop.f32.mrb[0].mxu0
      %v473 = vadd.f32 0.0, %v472
      %v474 = vpop.f32.mrb[0].mxu0
      %475 = vdwg.mxu0
      %476 = vst [vmem:[%s201] sm:$0xff] %v318
      %477 = vst [vmem:[%s201 + $0x8] sm:$0xff] %v323
      %478 = vst [vmem:[%s201 + $0x10] sm:$0xff] %v328
      %479 = vst [vmem:[%s201 + $0x18] sm:$0xff] %v333
      %480 = vst [vmem:[%s201 + $0x20] sm:$0xff] %v338
      %481 = vst [vmem:[%s201 + $0x28] sm:$0xff] %v343
      %482 = vst [vmem:[%s201 + $0x30] sm:$0xff] %v348
      %483 = vst [vmem:[%s201 + $0x38] sm:$0xff] %v353
      %484 = vst [vmem:[%s201 + $0x40] sm:$0xff] %v358
      %485 = vst [vmem:[%s201 + $0x48] sm:$0xff] %v363
      %486 = vst [vmem:[%s201 + $0x50] sm:$0xff] %v368
      %487 = vst [vmem:[%s201 + $0x58] sm:$0xff] %v373
      %488 = vst [vmem:[%s201 + $0x60] sm:$0xff] %v378
      %489 = vst [vmem:[%s201 + $0x68] sm:$0xff] %v383
      %490 = vst [vmem:[%s201 + $0x70] sm:$0xff] %v388
      %491 = vst [vmem:[%s201 + $0x78] sm:$0xff] %v393
      %492 = vst [vmem:[%s201 + $0x80] sm:$0xff] %v398
      %493 = vst [vmem:[%s201 + $0x88] sm:$0xff] %v403
      %494 = vst [vmem:[%s201 + $0x90] sm:$0xff] %v408
      %495 = vst [vmem:[%s201 + $0x98] sm:$0xff] %v413
      %496 = vst [vmem:[%s201 + $0xa0] sm:$0xff] %v418
      %497 = vst [vmem:[%s201 + $0xa8] sm:$0xff] %v423
      %498 = vst [vmem:[%s201 + $0xb0] sm:$0xff] %v428
      %499 = vst [vmem:[%s201 + $0xb8] sm:$0xff] %v433
      %500 = vst [vmem:[%s201 + $0xc0] sm:$0xff] %v438
      %501 = vst [vmem:[%s201 + $0xc8] sm:$0xff] %v443
      %502 = vst [vmem:[%s201 + $0xd0] sm:$0xff] %v448
      %503 = vst [vmem:[%s201 + $0xd8] sm:$0xff] %v453
      %504 = vst [vmem:[%s201 + $0xe0] sm:$0xff] %v458
      %505 = vst [vmem:[%s201 + $0xe8] sm:$0xff] %v463
      %506 = vst [vmem:[%s201 + $0xf0] sm:$0xff] %v468
      %507 = vst [vmem:[%s201 + $0xf8] sm:$0xff] %v473
      %s508 = smul.u32 32, %s18
      %p509 = scmp.lt.s32.totalorder %s17, 1
      %s510 = scalar_select %p509, %s17, 1
      %p511 = scmp.lt.s32.totalorder %s508, 31
      %s512 = scalar_select %p511, %s508, 31
      %s513 = smul.addr %s510, 32
      %s514 = sadd.s32 %s512, %s513
      %s515 = smul.addr %s514, 8
      %s516 = scalar_lea.vmem %s2, %s515
      // Predicated region
      $region29: #{encoder_forward.47} parent=27 // pred_check
        %p517 = pneg %p99
      $region30: #{encoder_forward.47} parent=27 // pred_check_branch
        %519 = sbr.rel (%p517) target = $region32
      $region31: #{encoder_forward.47} parent=27 // pred_region
        %s520 = smul.u32 32, %s18
      $region32: #{encoder_forward.47} parent=27 // pred_fallthru
        _
    $region28: #{encoder_forward.47} parent=5 // pred_fallthru
      _
    %p521 = scmp.le.s32.totalorder 2, %s8
    // Predicated region
    $region33: #{encoder_forward.47} parent=5 // pred_check
      %p522 = pneg %p521
    $region34: #{encoder_forward.47} parent=5 // pred_check_branch
      %524 = sbr.rel (%p522) target = $region36
    $region35: #{encoder_forward.47} parent=5 // pred_region
      %s525 = ssub.s32 %s8, 2
      // Predicated region
      $region37: #{encoder_forward.47} parent=35 // pred_check
        %p526 = pneg %p105
      $region38: #{encoder_forward.47} parent=35 // pred_check_branch
        %528 = sbr.rel (%p526) target = $region40
      $region39: #{encoder_forward.47} parent=35 // pred_region
        %s529 = smul.u32 32, %s20
        %p530 = scmp.lt.s32.totalorder %s19, 1
        %s531 = scalar_select %p530, %s19, 1
        %p532 = scmp.lt.s32.totalorder %s529, 31
        %s533 = scalar_select %p532, %s529, 31
        %s534 = smul.addr %s531, 32
        %s535 = sadd.s32 %s533, %s534
        %s536 = smul.addr %s535, 8
        %s537 = scalar_lea.vmem %s2, %s536
      $region40: #{encoder_forward.47} parent=35 // pred_fallthru
        _
    $region36: #{encoder_forward.47} parent=5 // pred_fallthru
      _
  $region6: #{encoder_forward.47} parent=0 // loop_footer
    %s12 = sadd.s32 1, %s8
  $region7: #{encoder_forward.47} parent=0 // loop_footer_branch
    %7 = sbr.rel target = $region3
  $region8: #{encoder_forward.47} parent=0 // loop_exit
    _

</llo_original>
